<compile_context>
chip_gen: v6e
topology: v6e:2x2x1
jax: 0.10.0
libtpu: 0.0.40
codegen_flags: <defaults>
</compile_context>

<pallas_src>
import math

import jax
import jax.numpy as jnp
import numpy as np
from jax.experimental import pallas as pl
from jax.experimental.pallas import tpu as pltpu

HID = 64          # hid_dim == z_dim == 64 for C4Net(64, 64)
CIN = 3           # RGB input
IMG = 16          # input spatial size used in the demo

# per-block input spatial sizes: 16 -> 8 -> 4 -> 2
_HW = [(16, 16), (8, 8), (4, 4), (2, 2)]


def _slab_len(H, W):
    """Per-image padded slab length: lead (W+3) + H rows of stride (W+2) + trailing
    (W+1), rounded up to a sublane multiple of 8."""
    need = (W + 3) + H * (W + 2) + (W + 1)
    return ((need + 7) // 8) * 8


def _pool_span(H, W, stride):
    """Number of flat conv-output positions (row stride `stride`) the 2x2/2 max-pool
    ever selects from: the last selected index is (H-2)*stride + (W-2)."""
    return (H - 2) * stride + W - 1


def _restage_matrix(h_cur, w_cur, stride_cur, w_dst, l_dst):
    """0/1 matrix mapping the 4-way-max map of the current block (flat layout with
    row stride `stride_cur`) to the FULL padded slab of the next block (l_dst rows,
    row stride w_dst+2, data starting at row w_dst+3).  Destination pad rows map to
    all-zero rows, so the restage matmul also (re)writes the zero padding."""
    ho, wo = h_cur // 2, w_cur // 2
    mlen = _pool_span(h_cur, w_cur, stride_cur)
    lead = w_dst + 3
    r = np.zeros((l_dst, mlen), np.float32)
    for yo in range(ho):
        for xo in range(wo):
            r[lead + yo * (w_dst + 2) + xo, 2 * yo * stride_cur + 2 * xo] = 1.0
    return jnp.asarray(r, dtype=jnp.bfloat16)


# ----------------------------------------------------------------------------
# The fused kernel: one grid step == a tile of B images through all four blocks.
# ----------------------------------------------------------------------------
def _make_kernel(B):
    (H2, W2), (H3, W3), (H4, W4) = _HW[1], _HW[2], _HW[3]
    L2, L3, L4 = _slab_len(H2, W2), _slab_len(H3, W3), _slab_len(H4, W4)
    f32, bf16 = jnp.float32, jnp.bfloat16

    def conv_block(slab_ref, H, W, L, w_ref, base, shift):
        """3x3 'same' conv + folded-BN shift + ReLU over the batch of per-image
        padded slabs (row stride W+2, zero pads): 9 accumulating bf16 MXU matmuls
        whose M dimension spans the whole batch tile.  No wrap masks needed."""
        stride, lead = W + 2, W + 3
        m_rows = (B - 1) * L + H * stride - 2
        acc = None
        for t in range(9):
            ky, kx = divmod(t, 3)
            off = lead + (ky - 1) * stride + (kx - 1)
            v = slab_ref[off:off + m_rows, :].astype(bf16)
            d = jnp.dot(v, w_ref[base + t], preferred_element_type=f32)
            acc = d if acc is None else acc + d
        return jnp.maximum(acc + shift, 0.0)

    def pool_restage(z, period, stride, mlen, r_ref, dst_ref, l_dst):
        """MaxPool2d(2) + restage: 4-way max of shifted views of the conv output,
        then a per-image 0/1 matmul scatters the pooled pixels into the next block's
        padded slab (rewriting its zero pads) as one aligned f32 store per image."""
        mp = (B - 1) * period + mlen
        m = jnp.maximum(jnp.maximum(z[0:mp], z[1:1 + mp]),
                        jnp.maximum(z[stride:stride + mp], z[stride + 1:stride + 1 + mp]))
        m = m.astype(bf16)
        r = r_ref[...]
        for b in range(B):
            mb = m[b * period:b * period + mlen]
            dst_ref[b * l_dst:(b + 1) * l_dst, :] = jnp.dot(
                r, mb, preferred_element_type=f32)

    def kernel(x_ref, w1_ref, w234_ref, s1_ref, s2_ref, s3_ref, s4_ref,
               r2_ref, r3_ref, r4_ref, o_ref, slab2, slab3, slab4):
        # ---- block 1 : 16x16x3 -> 8x8x64 : one im2col matmul -------------------
        xc = x_ref[...].reshape(B * IMG * IMG, 32)                    # bf16 columns
        z = jnp.maximum(
            jnp.dot(xc, w1_ref[...], preferred_element_type=f32) + s1_ref[...], 0.0)
        pool_restage(z, IMG * IMG, IMG, _pool_span(IMG, IMG, IMG), r2_ref, slab2, L2)

        # ---- block 2 : 8x8x64 -> 4x4x64 ----------------------------------------
        z = conv_block(slab2, H2, W2, L2, w234_ref, 0, s2_ref[...])
        pool_restage(z, L2, W2 + 2, _pool_span(H2, W2, W2 + 2), r3_ref, slab3, L3)

        # ---- block 3 : 4x4x64 -> 2x2x64 ----------------------------------------
        z = conv_block(slab3, H3, W3, L3, w234_ref, 9, s3_ref[...])
        pool_restage(z, L3, W3 + 2, _pool_span(H3, W3, W3 + 2), r4_ref, slab4, L4)

        # ---- block 4 : 2x2x64 -> 1x1x64 ; MaxPool2d(2) of a 2x2 map == 4-pixel max
        z = conv_block(slab4, H4, W4, L4, w234_ref, 18, s4_ref[...])
        mp = (B - 1) * L4 + 1
        m = jnp.maximum(jnp.maximum(z[0:mp], z[1:1 + mp]),
                        jnp.maximum(z[W4 + 2:W4 + 2 + mp], z[W4 + 3:W4 + 3 + mp]))
        o_ref[0] = jnp.concatenate([m[b * L4:b * L4 + 1] for b in range(B)], axis=0)

    return kernel


# ----------------------------------------------------------------------------
# Parameter construction / folding (BatchNorm in eval mode, folded offline).
# ----------------------------------------------------------------------------
def init_block_params(key, cin, cout):
    k1, k2, k3, k4, k5, k6 = jax.random.split(key, 6)
    w = jax.random.normal(k1, (cout, cin, 3, 3), jnp.float32) / math.sqrt(9 * cin)
    b = 0.05 * jax.random.normal(k2, (cout,), jnp.float32)
    gamma = 1.0 + 0.1 * jax.random.normal(k3, (cout,), jnp.float32)
    beta = 0.1 * jax.random.normal(k4, (cout,), jnp.float32)
    rmean = 0.1 * jax.random.normal(k5, (cout,), jnp.float32)
    rvar = 1.0 + 0.1 * jax.random.uniform(k6, (cout,), jnp.float32)
    return (w, b, gamma, beta, rmean, rvar)


def _fold_block_params(raw, eps=1e-5):
    """Fold conv bias + eval-mode BatchNorm into (per-tap weights, per-channel shift)."""
    w, b, gamma, beta, rmean, rvar = raw
    cout, cin = w.shape[0], w.shape[1]
    scale = gamma / jnp.sqrt(rvar + eps)                       # (Cout,)
    shift = (beta + (b - rmean) * scale).reshape(1, cout)      # (1, Cout)  f32
    # torch (Cout, Cin, kh, kw) -> (kh, kw, Cin, Cout) -> (9, Cin, Cout), scale folded.
    w_taps = jnp.transpose(w, (2, 3, 1, 0)).reshape(9, cin, cout)
    return w_taps * scale.reshape(1, 1, cout), shift


# ----------------------------------------------------------------------------
# Full EncoderC4 forward (Pallas) and a pure-JAX reference.
# ----------------------------------------------------------------------------
def encoder_c4_pallas(x_nchw, raw_params, block_batch=None):
    N = x_nchw.shape[0]
    # B images per grid step; keep the grid length >= 2 so v7x's 2nd TensorCore has work.
    B = block_batch or max(1, min(8, N // 2))
    steps = -(-N // B)
    n_pad = steps * B
    if n_pad != N:
        x_nchw = jnp.pad(x_nchw, ((0, n_pad - N), (0, 0), (0, 0), (0, 0)))

    (w1, s1), (w2, s2), (w3, s3), (w4, s4) = [_fold_block_params(r) for r in raw_params]
    # block-1 weights as an im2col matrix (27 = 3x3 taps x 3 channels, padded to 32)
    w1col = jnp.pad(w1.reshape(9 * CIN, HID),
                    ((0, 32 - 9 * CIN), (0, 0))).astype(jnp.bfloat16)       # (32, 64)
    w234 = jnp.concatenate([w2, w3, w4], axis=0).astype(jnp.bfloat16)       # (27, 64, 64)

    # Wrapper-side im2col of the tiny RGB input (layout plumbing only): (N, 256, 32)
    # bf16 columns, last-dim order (ky, kx, cin) matching w1col.
    xh = jnp.transpose(x_nchw, (0, 2, 3, 1))                                # NHWC
    xp = jnp.pad(xh, ((0, 0), (1, 1), (1, 1), (0, 0)))
    cols = [xp[:, ky:ky + IMG, kx:kx + IMG, :] for ky in range(3) for kx in range(3)]
    xcol = jnp.concatenate(cols, axis=-1).reshape(n_pad, IMG * IMG, 9 * CIN)
    xcol = jnp.pad(xcol, ((0, 0), (0, 0), (0, 32 - 9 * CIN))).astype(jnp.bfloat16)

    (H2, W2), (H3, W3), (H4, W4) = _HW[1], _HW[2], _HW[3]
    L2, L3, L4 = _slab_len(H2, W2), _slab_len(H3, W3), _slab_len(H4, W4)
    r2 = _restage_matrix(IMG, IMG, IMG, W2, L2)       # block1 pool -> slab2
    r3 = _restage_matrix(H2, W2, W2 + 2, W3, L3)      # block2 pool -> slab3
    r4 = _restage_matrix(H3, W3, W3 + 2, W4, L4)      # block3 pool -> slab4

    c2 = lambda n: (0, 0)
    c3 = lambda n: (0, 0, 0)
    out = pl.pallas_call(
        _make_kernel(B),
        out_shape=jax.ShapeDtypeStruct((steps, B, HID), jnp.float32),
        grid=(steps,),
        in_specs=[
            pl.BlockSpec((B, IMG * IMG, 32), lambda n: (n, 0, 0)),   # im2col'd input
            pl.BlockSpec((32, HID), c2),                             # block-1 weights
            pl.BlockSpec((27, HID, HID), c3),                        # block 2..4 weights
            pl.BlockSpec((1, HID), c2),                              # BN shift 1
            pl.BlockSpec((1, HID), c2),                              # BN shift 2
            pl.BlockSpec((1, HID), c2),                              # BN shift 3
            pl.BlockSpec((1, HID), c2),                              # BN shift 4
            pl.BlockSpec(r2.shape, c2),                              # pool+restage 1->2
            pl.BlockSpec(r3.shape, c2),                              # pool+restage 2->3
            pl.BlockSpec(r4.shape, c2),                              # pool+restage 3->4
        ],
        out_specs=pl.BlockSpec((1, B, HID), lambda n: (n, 0, 0)),
        scratch_shapes=[
            pltpu.VMEM((B * L2, HID), jnp.float32),    # block-2 input slab
            pltpu.VMEM((B * L3, HID), jnp.float32),    # block-3 input slab
            pltpu.VMEM((B * L4, HID), jnp.float32),    # block-4 input slab
        ],
        compiler_params=pltpu.CompilerParams(dimension_semantics=("parallel",)),
    )(xcol, w1col, w234, s1, s2, s3, s4, r2, r3, r4)
    # final spatial is 1x1, so flatten(NCHW) == (N, 64)
    return out.reshape(n_pad, HID)[:N]


def encoder_c4_reference(x_nchw, raw_params, eps=1e-5):
    x = jnp.transpose(x_nchw, (0, 2, 3, 1))
    for (w, b, gamma, beta, rmean, rvar) in raw_params:
        w_hwio = jnp.transpose(w, (2, 3, 1, 0))
        y = jax.lax.conv_general_dilated(
            x, w_hwio, (1, 1), "SAME",
            dimension_numbers=("NHWC", "HWIO", "NHWC")) + b
        y = gamma * (y - rmean) / jnp.sqrt(rvar + eps) + beta
        y = jnp.maximum(y, 0.0)
        y = jax.lax.reduce_window(y, -jnp.inf, jax.lax.max,
                                  (1, 2, 2, 1), (1, 2, 2, 1), "VALID")
        x = y
    x = jnp.transpose(x, (0, 3, 1, 2))
    return x.reshape(x.shape[0], -1)


if __name__ == "__main__":
    key = jax.random.PRNGKey(0)
    k_x, k_p = jax.random.split(key)

    # RGB image batch (N, 3, 16, 16); N=8 exercises batch tiling (B=4, grid=2).
    N = 8
    x = jax.random.normal(k_x, (N, CIN, IMG, IMG), jnp.float32)

    chans = [(CIN, HID), (HID, HID), (HID, HID), (HID, HID)]   # C4Net(64, 64)
    block_keys = jax.random.split(k_p, 4)
    raw_params = [init_block_params(bk, ci, co)
                  for bk, (ci, co) in zip(block_keys, chans)]

    fwd = jax.jit(encoder_c4_pallas)
    out = jax.block_until_ready(fwd(x, raw_params))
    ref = jax.block_until_ready(encoder_c4_reference(x, raw_params))

    assert out.shape == (N, HID), out.shape
    # bf16 MXU operands (per perf review), f32 accumulation: tolerance sized for
    # bf16 rounding of weights/inputs/pooled activations through 4 conv blocks.
    np.testing.assert_allclose(np.asarray(out), np.asarray(ref), rtol=3e-2, atol=3e-2)
    print("KERNEL_OK")
</pallas_src>

<mosaic_0001>
module attributes {stable_mosaic.version = 11 : i64} {
  func.func @kernel(%arg0: i32, %arg1: memref<4x256x32xbf16, #tpu.memory_space<vmem>>, %arg2: memref<32x64xbf16, #tpu.memory_space<vmem>>, %arg3: memref<27x64x64xbf16, #tpu.memory_space<vmem>>, %arg4: memref<1x64xf32, #tpu.memory_space<vmem>>, %arg5: memref<1x64xf32, #tpu.memory_space<vmem>>, %arg6: memref<1x64xf32, #tpu.memory_space<vmem>>, %arg7: memref<1x64xf32, #tpu.memory_space<vmem>>, %arg8: memref<104x239xbf16, #tpu.memory_space<vmem>>, %arg9: memref<40x67xbf16, #tpu.memory_space<vmem>>, %arg10: memref<16x15xbf16, #tpu.memory_space<vmem>>, %arg11: memref<1x4x64xf32, #tpu.memory_space<vmem>>, %arg12: memref<416x64xf32, #tpu.memory_space<vmem>>, %arg13: memref<160x64xf32, #tpu.memory_space<vmem>>, %arg14: memref<64x64xf32, #tpu.memory_space<vmem>>) attributes {dimension_semantics = [#tpu.dimension_semantics<parallel>], iteration_bounds = array<i64: 2>, scalar_prefetch = 0 : i64, scratch_operands = 3 : i64, tpu.core_type = #tpu.core_type<tc>, window_params = [{transform_indices = @transform_0, window_bounds = array<i64: 4, 256, 32>}, {pipeline_mode = #tpu.pipeline_mode<synchronous>, transform_indices = @transform_1, window_bounds = array<i64: 32, 64>}, {pipeline_mode = #tpu.pipeline_mode<synchronous>, transform_indices = @transform_2, window_bounds = array<i64: 27, 64, 64>}, {pipeline_mode = #tpu.pipeline_mode<synchronous>, transform_indices = @transform_3, window_bounds = array<i64: 1, 64>}, {pipeline_mode = #tpu.pipeline_mode<synchronous>, transform_indices = @transform_4, window_bounds = array<i64: 1, 64>}, {pipeline_mode = #tpu.pipeline_mode<synchronous>, transform_indices = @transform_5, window_bounds = array<i64: 1, 64>}, {pipeline_mode = #tpu.pipeline_mode<synchronous>, transform_indices = @transform_6, window_bounds = array<i64: 1, 64>}, {pipeline_mode = #tpu.pipeline_mode<synchronous>, transform_indices = @transform_7, window_bounds = array<i64: 104, 239>}, {pipeline_mode = #tpu.pipeline_mode<synchronous>, transform_indices = @transform_8, window_bounds = array<i64: 40, 67>}, {pipeline_mode = #tpu.pipeline_mode<synchronous>, transform_indices = @transform_9, window_bounds = array<i64: 16, 15>}, {transform_indices = @transform_10, window_bounds = array<i64: 1, 4, 64>}]} {
    %c0 = arith.constant 0 : index
    %c0_0 = arith.constant 0 : index
    %c0_1 = arith.constant 0 : index
    %0 = vector.load %arg1[%c0, %c0_0, %c0_1] : memref<4x256x32xbf16, #tpu.memory_space<vmem>>, vector<4x256x32xbf16>
    %1 = vector.shape_cast %0 : vector<4x256x32xbf16> to vector<1024x32xbf16>
    %c0_2 = arith.constant 0 : index
    %c0_3 = arith.constant 0 : index
    %2 = vector.load %arg2[%c0_2, %c0_3] : memref<32x64xbf16, #tpu.memory_space<vmem>>, vector<32x64xbf16>
    %cst = arith.constant dense<0.000000e+00> : vector<1024x64xf32>
    %3 = tpu.matmul %1, %2, %cst {dimension_numbers = #tpu.dot_dimension_numbers<[1], [0], [0], [1], [0, 0, 1, 1], [], []>} : vector<1024x32xbf16>, vector<32x64xbf16>, vector<1024x64xf32> -> vector<1024x64xf32>
    %c0_4 = arith.constant 0 : index
    %c0_5 = arith.constant 0 : index
    %4 = vector.load %arg4[%c0_4, %c0_5] : memref<1x64xf32, #tpu.memory_space<vmem>>, vector<1x64xf32>
    %5 = vector.broadcast %4 : vector<1x64xf32> to vector<1024x64xf32>
    %6 = arith.addf %3, %5 : vector<1024x64xf32>
    %cst_6 = arith.constant 0.000000e+00 : f32
    %7 = vector.broadcast %cst_6 : f32 to vector<1024x64xf32>
    %8 = arith.maximumf %6, %7 : vector<1024x64xf32>
    %9 = vector.extract_strided_slice %8 {offsets = [0, 0], sizes = [1007, 64], strides = [1, 1]} : vector<1024x64xf32> to vector<1007x64xf32>
    %10 = vector.extract_strided_slice %8 {offsets = [1, 0], sizes = [1007, 64], strides = [1, 1]} : vector<1024x64xf32> to vector<1007x64xf32>
    %11 = arith.maximumf %9, %10 : vector<1007x64xf32>
    %12 = vector.extract_strided_slice %8 {offsets = [16, 0], sizes = [1007, 64], strides = [1, 1]} : vector<1024x64xf32> to vector<1007x64xf32>
    %13 = vector.extract_strided_slice %8 {offsets = [17, 0], sizes = [1007, 64], strides = [1, 1]} : vector<1024x64xf32> to vector<1007x64xf32>
    %14 = arith.maximumf %12, %13 : vector<1007x64xf32>
    %15 = arith.maximumf %11, %14 : vector<1007x64xf32>
    %16 = arith.truncf %15 : vector<1007x64xf32> to vector<1007x64xbf16>
    %c0_7 = arith.constant 0 : index
    %c0_8 = arith.constant 0 : index
    %17 = vector.load %arg8[%c0_7, %c0_8] : memref<104x239xbf16, #tpu.memory_space<vmem>>, vector<104x239xbf16>
    %18 = vector.extract_strided_slice %16 {offsets = [0, 0], sizes = [239, 64], strides = [1, 1]} : vector<1007x64xbf16> to vector<239x64xbf16>
    %cst_9 = arith.constant dense<0.000000e+00> : vector<104x64xf32>
    %19 = tpu.matmul %17, %18, %cst_9 {dimension_numbers = #tpu.dot_dimension_numbers<[1], [0], [0], [1], [0, 0, 1, 1], [], []>} : vector<104x239xbf16>, vector<239x64xbf16>, vector<104x64xf32> -> vector<104x64xf32>
    %c0_10 = arith.constant 0 : index
    %c0_11 = arith.constant 0 : index
    %20 = vector.load %arg12[%c0_10, %c0_11] : memref<416x64xf32, #tpu.memory_space<vmem>>, vector<104x64xf32>
    tpu.vector_store %arg12[%c0_10, %c0_11], %19 {strides = array<i32>} : memref<416x64xf32, #tpu.memory_space<vmem>>, vector<104x64xf32>,
    %21 = vector.extract_strided_slice %16 {offsets = [256, 0], sizes = [239, 64], strides = [1, 1]} : vector<1007x64xbf16> to vector<239x64xbf16>
    %cst_12 = arith.constant dense<0.000000e+00> : vector<104x64xf32>
    %22 = tpu.matmul %17, %21, %cst_12 {dimension_numbers = #tpu.dot_dimension_numbers<[1], [0], [0], [1], [0, 0, 1, 1], [], []>} : vector<104x239xbf16>, vector<239x64xbf16>, vector<104x64xf32> -> vector<104x64xf32>
    %c104 = arith.constant 104 : index
    %c0_13 = arith.constant 0 : index
    %23 = vector.load %arg12[%c104, %c0_13] : memref<416x64xf32, #tpu.memory_space<vmem>>, vector<104x64xf32>
    tpu.vector_store %arg12[%c104, %c0_13], %22 {strides = array<i32>} : memref<416x64xf32, #tpu.memory_space<vmem>>, vector<104x64xf32>,
    %24 = vector.extract_strided_slice %16 {offsets = [512, 0], sizes = [239, 64], strides = [1, 1]} : vector<1007x64xbf16> to vector<239x64xbf16>
    %cst_14 = arith.constant dense<0.000000e+00> : vector<104x64xf32>
    %25 = tpu.matmul %17, %24, %cst_14 {dimension_numbers = #tpu.dot_dimension_numbers<[1], [0], [0], [1], [0, 0, 1, 1], [], []>} : vector<104x239xbf16>, vector<239x64xbf16>, vector<104x64xf32> -> vector<104x64xf32>
    %c208 = arith.constant 208 : index
    %c0_15 = arith.constant 0 : index
    %26 = vector.load %arg12[%c208, %c0_15] : memref<416x64xf32, #tpu.memory_space<vmem>>, vector<104x64xf32>
    tpu.vector_store %arg12[%c208, %c0_15], %25 {strides = array<i32>} : memref<416x64xf32, #tpu.memory_space<vmem>>, vector<104x64xf32>,
    %27 = vector.extract_strided_slice %16 {offsets = [768, 0], sizes = [239, 64], strides = [1, 1]} : vector<1007x64xbf16> to vector<239x64xbf16>
    %cst_16 = arith.constant dense<0.000000e+00> : vector<104x64xf32>
    %28 = tpu.matmul %17, %27, %cst_16 {dimension_numbers = #tpu.dot_dimension_numbers<[1], [0], [0], [1], [0, 0, 1, 1], [], []>} : vector<104x239xbf16>, vector<239x64xbf16>, vector<104x64xf32> -> vector<104x64xf32>
    %c312 = arith.constant 312 : index
    %c0_17 = arith.constant 0 : index
    %29 = vector.load %arg12[%c312, %c0_17] : memref<416x64xf32, #tpu.memory_space<vmem>>, vector<104x64xf32>
    tpu.vector_store %arg12[%c312, %c0_17], %28 {strides = array<i32>} : memref<416x64xf32, #tpu.memory_space<vmem>>, vector<104x64xf32>,
    %c0_18 = arith.constant 0 : index
    %c0_19 = arith.constant 0 : index
    %30 = vector.load %arg5[%c0_18, %c0_19] : memref<1x64xf32, #tpu.memory_space<vmem>>, vector<1x64xf32>
    %c0_20 = arith.constant 0 : index
    %c0_21 = arith.constant 0 : index
    %31 = vector.load %arg12[%c0_20, %c0_21] : memref<416x64xf32, #tpu.memory_space<vmem>>, vector<390x64xf32>
    %32 = arith.truncf %31 : vector<390x64xf32> to vector<390x64xbf16>
    %c0_22 = arith.constant 0 : index
    %c0_23 = arith.constant 0 : index
    %c0_24 = arith.constant 0 : index
    %33 = vector.load %arg3[%c0_22, %c0_23, %c0_24] : memref<27x64x64xbf16, #tpu.memory_space<vmem>>, vector<1x64x64xbf16>
    %34 = vector.shape_cast %33 : vector<1x64x64xbf16> to vector<64x64xbf16>
    %cst_25 = arith.constant dense<0.000000e+00> : vector<390x64xf32>
    %35 = tpu.matmul %32, %34, %cst_25 {dimension_numbers = #tpu.dot_dimension_numbers<[1], [0], [0], [1], [0, 0, 1, 1], [], []>} : vector<390x64xbf16>, vector<64x64xbf16>, vector<390x64xf32> -> vector<390x64xf32>
    %c1 = arith.constant 1 : index
    %c0_26 = arith.constant 0 : index
    %36 = vector.load %arg12[%c1, %c0_26] : memref<416x64xf32, #tpu.memory_space<vmem>>, vector<390x64xf32>
    %37 = arith.truncf %36 : vector<390x64xf32> to vector<390x64xbf16>
    %c1_27 = arith.constant 1 : index
    %c0_28 = arith.constant 0 : index
    %c0_29 = arith.constant 0 : index
    %38 = vector.load %arg3[%c1_27, %c0_28, %c0_29] : memref<27x64x64xbf16, #tpu.memory_space<vmem>>, vector<1x64x64xbf16>
    %39 = vector.shape_cast %38 : vector<1x64x64xbf16> to vector<64x64xbf16>
    %cst_30 = arith.constant dense<0.000000e+00> : vector<390x64xf32>
    %40 = tpu.matmul %37, %39, %cst_30 {dimension_numbers = #tpu.dot_dimension_numbers<[1], [0], [0], [1], [0, 0, 1, 1], [], []>} : vector<390x64xbf16>, vector<64x64xbf16>, vector<390x64xf32> -> vector<390x64xf32>
    %41 = arith.addf %35, %40 : vector<390x64xf32>
    %c2 = arith.constant 2 : index
    %c0_31 = arith.constant 0 : index
    %42 = vector.load %arg12[%c2, %c0_31] : memref<416x64xf32, #tpu.memory_space<vmem>>, vector<390x64xf32>
    %43 = arith.truncf %42 : vector<390x64xf32> to vector<390x64xbf16>
    %c2_32 = arith.constant 2 : index
    %c0_33 = arith.constant 0 : index
    %c0_34 = arith.constant 0 : index
    %44 = vector.load %arg3[%c2_32, %c0_33, %c0_34] : memref<27x64x64xbf16, #tpu.memory_space<vmem>>, vector<1x64x64xbf16>
    %45 = vector.shape_cast %44 : vector<1x64x64xbf16> to vector<64x64xbf16>
    %cst_35 = arith.constant dense<0.000000e+00> : vector<390x64xf32>
    %46 = tpu.matmul %43, %45, %cst_35 {dimension_numbers = #tpu.dot_dimension_numbers<[1], [0], [0], [1], [0, 0, 1, 1], [], []>} : vector<390x64xbf16>, vector<64x64xbf16>, vector<390x64xf32> -> vector<390x64xf32>
    %47 = arith.addf %41, %46 : vector<390x64xf32>
    %c10 = arith.constant 10 : index
    %c0_36 = arith.constant 0 : index
    %48 = vector.load %arg12[%c10, %c0_36] : memref<416x64xf32, #tpu.memory_space<vmem>>, vector<390x64xf32>
    %49 = arith.truncf %48 : vector<390x64xf32> to vector<390x64xbf16>
    %c3 = arith.constant 3 : index
    %c0_37 = arith.constant 0 : index
    %c0_38 = arith.constant 0 : index
    %50 = vector.load %arg3[%c3, %c0_37, %c0_38] : memref<27x64x64xbf16, #tpu.memory_space<vmem>>, vector<1x64x64xbf16>
    %51 = vector.shape_cast %50 : vector<1x64x64xbf16> to vector<64x64xbf16>
    %cst_39 = arith.constant dense<0.000000e+00> : vector<390x64xf32>
    %52 = tpu.matmul %49, %51, %cst_39 {dimension_numbers = #tpu.dot_dimension_numbers<[1], [0], [0], [1], [0, 0, 1, 1], [], []>} : vector<390x64xbf16>, vector<64x64xbf16>, vector<390x64xf32> -> vector<390x64xf32>
    %53 = arith.addf %47, %52 : vector<390x64xf32>
    %c11 = arith.constant 11 : index
    %c0_40 = arith.constant 0 : index
    %54 = vector.load %arg12[%c11, %c0_40] : memref<416x64xf32, #tpu.memory_space<vmem>>, vector<390x64xf32>
    %55 = arith.truncf %54 : vector<390x64xf32> to vector<390x64xbf16>
    %c4 = arith.constant 4 : index
    %c0_41 = arith.constant 0 : index
    %c0_42 = arith.constant 0 : index
    %56 = vector.load %arg3[%c4, %c0_41, %c0_42] : memref<27x64x64xbf16, #tpu.memory_space<vmem>>, vector<1x64x64xbf16>
    %57 = vector.shape_cast %56 : vector<1x64x64xbf16> to vector<64x64xbf16>
    %cst_43 = arith.constant dense<0.000000e+00> : vector<390x64xf32>
    %58 = tpu.matmul %55, %57, %cst_43 {dimension_numbers = #tpu.dot_dimension_numbers<[1], [0], [0], [1], [0, 0, 1, 1], [], []>} : vector<390x64xbf16>, vector<64x64xbf16>, vector<390x64xf32> -> vector<390x64xf32>
    %59 = arith.addf %53, %58 : vector<390x64xf32>
    %c12 = arith.constant 12 : index
    %c0_44 = arith.constant 0 : index
    %60 = vector.load %arg12[%c12, %c0_44] : memref<416x64xf32, #tpu.memory_space<vmem>>, vector<390x64xf32>
    %61 = arith.truncf %60 : vector<390x64xf32> to vector<390x64xbf16>
    %c5 = arith.constant 5 : index
    %c0_45 = arith.constant 0 : index
    %c0_46 = arith.constant 0 : index
    %62 = vector.load %arg3[%c5, %c0_45, %c0_46] : memref<27x64x64xbf16, #tpu.memory_space<vmem>>, vector<1x64x64xbf16>
    %63 = vector.shape_cast %62 : vector<1x64x64xbf16> to vector<64x64xbf16>
    %cst_47 = arith.constant dense<0.000000e+00> : vector<390x64xf32>
    %64 = tpu.matmul %61, %63, %cst_47 {dimension_numbers = #tpu.dot_dimension_numbers<[1], [0], [0], [1], [0, 0, 1, 1], [], []>} : vector<390x64xbf16>, vector<64x64xbf16>, vector<390x64xf32> -> vector<390x64xf32>
    %65 = arith.addf %59, %64 : vector<390x64xf32>
    %c20 = arith.constant 20 : index
    %c0_48 = arith.constant 0 : index
    %66 = vector.load %arg12[%c20, %c0_48] : memref<416x64xf32, #tpu.memory_space<vmem>>, vector<390x64xf32>
    %67 = arith.truncf %66 : vector<390x64xf32> to vector<390x64xbf16>
    %c6 = arith.constant 6 : index
    %c0_49 = arith.constant 0 : index
    %c0_50 = arith.constant 0 : index
    %68 = vector.load %arg3[%c6, %c0_49, %c0_50] : memref<27x64x64xbf16, #tpu.memory_space<vmem>>, vector<1x64x64xbf16>
    %69 = vector.shape_cast %68 : vector<1x64x64xbf16> to vector<64x64xbf16>
    %cst_51 = arith.constant dense<0.000000e+00> : vector<390x64xf32>
    %70 = tpu.matmul %67, %69, %cst_51 {dimension_numbers = #tpu.dot_dimension_numbers<[1], [0], [0], [1], [0, 0, 1, 1], [], []>} : vector<390x64xbf16>, vector<64x64xbf16>, vector<390x64xf32> -> vector<390x64xf32>
    %71 = arith.addf %65, %70 : vector<390x64xf32>
    %c21 = arith.constant 21 : index
    %c0_52 = arith.constant 0 : index
    %72 = vector.load %arg12[%c21, %c0_52] : memref<416x64xf32, #tpu.memory_space<vmem>>, vector<390x64xf32>
    %73 = arith.truncf %72 : vector<390x64xf32> to vector<390x64xbf16>
    %c7 = arith.constant 7 : index
    %c0_53 = arith.constant 0 : index
    %c0_54 = arith.constant 0 : index
    %74 = vector.load %arg3[%c7, %c0_53, %c0_54] : memref<27x64x64xbf16, #tpu.memory_space<vmem>>, vector<1x64x64xbf16>
    %75 = vector.shape_cast %74 : vector<1x64x64xbf16> to vector<64x64xbf16>
    %cst_55 = arith.constant dense<0.000000e+00> : vector<390x64xf32>
    %76 = tpu.matmul %73, %75, %cst_55 {dimension_numbers = #tpu.dot_dimension_numbers<[1], [0], [0], [1], [0, 0, 1, 1], [], []>} : vector<390x64xbf16>, vector<64x64xbf16>, vector<390x64xf32> -> vector<390x64xf32>
    %77 = arith.addf %71, %76 : vector<390x64xf32>
    %c22 = arith.constant 22 : index
    %c0_56 = arith.constant 0 : index
    %78 = vector.load %arg12[%c22, %c0_56] : memref<416x64xf32, #tpu.memory_space<vmem>>, vector<390x64xf32>
    %79 = arith.truncf %78 : vector<390x64xf32> to vector<390x64xbf16>
    %c8 = arith.constant 8 : index
    %c0_57 = arith.constant 0 : index
    %c0_58 = arith.constant 0 : index
    %80 = vector.load %arg3[%c8, %c0_57, %c0_58] : memref<27x64x64xbf16, #tpu.memory_space<vmem>>, vector<1x64x64xbf16>
    %81 = vector.shape_cast %80 : vector<1x64x64xbf16> to vector<64x64xbf16>
    %cst_59 = arith.constant dense<0.000000e+00> : vector<390x64xf32>
    %82 = tpu.matmul %79, %81, %cst_59 {dimension_numbers = #tpu.dot_dimension_numbers<[1], [0], [0], [1], [0, 0, 1, 1], [], []>} : vector<390x64xbf16>, vector<64x64xbf16>, vector<390x64xf32> -> vector<390x64xf32>
    %83 = arith.addf %77, %82 : vector<390x64xf32>
    %84 = vector.broadcast %30 : vector<1x64xf32> to vector<390x64xf32>
    %85 = arith.addf %83, %84 : vector<390x64xf32>
    %cst_60 = arith.constant 0.000000e+00 : f32
    %86 = vector.broadcast %cst_60 : f32 to vector<390x64xf32>
    %87 = arith.maximumf %85, %86 : vector<390x64xf32>
    %88 = vector.extract_strided_slice %87 {offsets = [0, 0], sizes = [379, 64], strides = [1, 1]} : vector<390x64xf32> to vector<379x64xf32>
    %89 = vector.extract_strided_slice %87 {offsets = [1, 0], sizes = [379, 64], strides = [1, 1]} : vector<390x64xf32> to vector<379x64xf32>
    %90 = arith.maximumf %88, %89 : vector<379x64xf32>
    %91 = vector.extract_strided_slice %87 {offsets = [10, 0], sizes = [379, 64], strides = [1, 1]} : vector<390x64xf32> to vector<379x64xf32>
    %92 = vector.extract_strided_slice %87 {offsets = [11, 0], sizes = [379, 64], strides = [1, 1]} : vector<390x64xf32> to vector<379x64xf32>
    %93 = arith.maximumf %91, %92 : vector<379x64xf32>
    %94 = arith.maximumf %90, %93 : vector<379x64xf32>
    %95 = arith.truncf %94 : vector<379x64xf32> to vector<379x64xbf16>
    %c0_61 = arith.constant 0 : index
    %c0_62 = arith.constant 0 : index
    %96 = vector.load %arg9[%c0_61, %c0_62] : memref<40x67xbf16, #tpu.memory_space<vmem>>, vector<40x67xbf16>
    %97 = vector.extract_strided_slice %95 {offsets = [0, 0], sizes = [67, 64], strides = [1, 1]} : vector<379x64xbf16> to vector<67x64xbf16>
    %cst_63 = arith.constant dense<0.000000e+00> : vector<40x64xf32>
    %98 = tpu.matmul %96, %97, %cst_63 {dimension_numbers = #tpu.dot_dimension_numbers<[1], [0], [0], [1], [0, 0, 1, 1], [], []>} : vector<40x67xbf16>, vector<67x64xbf16>, vector<40x64xf32> -> vector<40x64xf32>
    %c0_64 = arith.constant 0 : index
    %c0_65 = arith.constant 0 : index
    %99 = vector.load %arg13[%c0_64, %c0_65] : memref<160x64xf32, #tpu.memory_space<vmem>>, vector<40x64xf32>
    tpu.vector_store %arg13[%c0_64, %c0_65], %98 {strides = array<i32>} : memref<160x64xf32, #tpu.memory_space<vmem>>, vector<40x64xf32>,
    %100 = vector.extract_strided_slice %95 {offsets = [104, 0], sizes = [67, 64], strides = [1, 1]} : vector<379x64xbf16> to vector<67x64xbf16>
    %cst_66 = arith.constant dense<0.000000e+00> : vector<40x64xf32>
    %101 = tpu.matmul %96, %100, %cst_66 {dimension_numbers = #tpu.dot_dimension_numbers<[1], [0], [0], [1], [0, 0, 1, 1], [], []>} : vector<40x67xbf16>, vector<67x64xbf16>, vector<40x64xf32> -> vector<40x64xf32>
    %c40 = arith.constant 40 : index
    %c0_67 = arith.constant 0 : index
    %102 = vector.load %arg13[%c40, %c0_67] : memref<160x64xf32, #tpu.memory_space<vmem>>, vector<40x64xf32>
    tpu.vector_store %arg13[%c40, %c0_67], %101 {strides = array<i32>} : memref<160x64xf32, #tpu.memory_space<vmem>>, vector<40x64xf32>,
    %103 = vector.extract_strided_slice %95 {offsets = [208, 0], sizes = [67, 64], strides = [1, 1]} : vector<379x64xbf16> to vector<67x64xbf16>
    %cst_68 = arith.constant dense<0.000000e+00> : vector<40x64xf32>
    %104 = tpu.matmul %96, %103, %cst_68 {dimension_numbers = #tpu.dot_dimension_numbers<[1], [0], [0], [1], [0, 0, 1, 1], [], []>} : vector<40x67xbf16>, vector<67x64xbf16>, vector<40x64xf32> -> vector<40x64xf32>
    %c80 = arith.constant 80 : index
    %c0_69 = arith.constant 0 : index
    %105 = vector.load %arg13[%c80, %c0_69] : memref<160x64xf32, #tpu.memory_space<vmem>>, vector<40x64xf32>
    tpu.vector_store %arg13[%c80, %c0_69], %104 {strides = array<i32>} : memref<160x64xf32, #tpu.memory_space<vmem>>, vector<40x64xf32>,
    %106 = vector.extract_strided_slice %95 {offsets = [312, 0], sizes = [67, 64], strides = [1, 1]} : vector<379x64xbf16> to vector<67x64xbf16>
    %cst_70 = arith.constant dense<0.000000e+00> : vector<40x64xf32>
    %107 = tpu.matmul %96, %106, %cst_70 {dimension_numbers = #tpu.dot_dimension_numbers<[1], [0], [0], [1], [0, 0, 1, 1], [], []>} : vector<40x67xbf16>, vector<67x64xbf16>, vector<40x64xf32> -> vector<40x64xf32>
    %c120 = arith.constant 120 : index
    %c0_71 = arith.constant 0 : index
    %108 = vector.load %arg13[%c120, %c0_71] : memref<160x64xf32, #tpu.memory_space<vmem>>, vector<40x64xf32>
    tpu.vector_store %arg13[%c120, %c0_71], %107 {strides = array<i32>} : memref<160x64xf32, #tpu.memory_space<vmem>>, vector<40x64xf32>,
    %c0_72 = arith.constant 0 : index
    %c0_73 = arith.constant 0 : index
    %109 = vector.load %arg6[%c0_72, %c0_73] : memref<1x64xf32, #tpu.memory_space<vmem>>, vector<1x64xf32>
    %c0_74 = arith.constant 0 : index
    %c0_75 = arith.constant 0 : index
    %110 = vector.load %arg13[%c0_74, %c0_75] : memref<160x64xf32, #tpu.memory_space<vmem>>, vector<142x64xf32>
    %111 = arith.truncf %110 : vector<142x64xf32> to vector<142x64xbf16>
    %c9 = arith.constant 9 : index
    %c0_76 = arith.constant 0 : index
    %c0_77 = arith.constant 0 : index
    %112 = vector.load %arg3[%c9, %c0_76, %c0_77] : memref<27x64x64xbf16, #tpu.memory_space<vmem>>, vector<1x64x64xbf16>
    %113 = vector.shape_cast %112 : vector<1x64x64xbf16> to vector<64x64xbf16>
    %cst_78 = arith.constant dense<0.000000e+00> : vector<142x64xf32>
    %114 = tpu.matmul %111, %113, %cst_78 {dimension_numbers = #tpu.dot_dimension_numbers<[1], [0], [0], [1], [0, 0, 1, 1], [], []>} : vector<142x64xbf16>, vector<64x64xbf16>, vector<142x64xf32> -> vector<142x64xf32>
    %c1_79 = arith.constant 1 : index
    %c0_80 = arith.constant 0 : index
    %115 = vector.load %arg13[%c1_79, %c0_80] : memref<160x64xf32, #tpu.memory_space<vmem>>, vector<142x64xf32>
    %116 = arith.truncf %115 : vector<142x64xf32> to vector<142x64xbf16>
    %c10_81 = arith.constant 10 : index
    %c0_82 = arith.constant 0 : index
    %c0_83 = arith.constant 0 : index
    %117 = vector.load %arg3[%c10_81, %c0_82, %c0_83] : memref<27x64x64xbf16, #tpu.memory_space<vmem>>, vector<1x64x64xbf16>
    %118 = vector.shape_cast %117 : vector<1x64x64xbf16> to vector<64x64xbf16>
    %cst_84 = arith.constant dense<0.000000e+00> : vector<142x64xf32>
    %119 = tpu.matmul %116, %118, %cst_84 {dimension_numbers = #tpu.dot_dimension_numbers<[1], [0], [0], [1], [0, 0, 1, 1], [], []>} : vector<142x64xbf16>, vector<64x64xbf16>, vector<142x64xf32> -> vector<142x64xf32>
    %120 = arith.addf %114, %119 : vector<142x64xf32>
    %c2_85 = arith.constant 2 : index
    %c0_86 = arith.constant 0 : index
    %121 = vector.load %arg13[%c2_85, %c0_86] : memref<160x64xf32, #tpu.memory_space<vmem>>, vector<142x64xf32>
    %122 = arith.truncf %121 : vector<142x64xf32> to vector<142x64xbf16>
    %c11_87 = arith.constant 11 : index
    %c0_88 = arith.constant 0 : index
    %c0_89 = arith.constant 0 : index
    %123 = vector.load %arg3[%c11_87, %c0_88, %c0_89] : memref<27x64x64xbf16, #tpu.memory_space<vmem>>, vector<1x64x64xbf16>
    %124 = vector.shape_cast %123 : vector<1x64x64xbf16> to vector<64x64xbf16>
    %cst_90 = arith.constant dense<0.000000e+00> : vector<142x64xf32>
    %125 = tpu.matmul %122, %124, %cst_90 {dimension_numbers = #tpu.dot_dimension_numbers<[1], [0], [0], [1], [0, 0, 1, 1], [], []>} : vector<142x64xbf16>, vector<64x64xbf16>, vector<142x64xf32> -> vector<142x64xf32>
    %126 = arith.addf %120, %125 : vector<142x64xf32>
    %c6_91 = arith.constant 6 : index
    %c0_92 = arith.constant 0 : index
    %127 = vector.load %arg13[%c6_91, %c0_92] : memref<160x64xf32, #tpu.memory_space<vmem>>, vector<142x64xf32>
    %128 = arith.truncf %127 : vector<142x64xf32> to vector<142x64xbf16>
    %c12_93 = arith.constant 12 : index
    %c0_94 = arith.constant 0 : index
    %c0_95 = arith.constant 0 : index
    %129 = vector.load %arg3[%c12_93, %c0_94, %c0_95] : memref<27x64x64xbf16, #tpu.memory_space<vmem>>, vector<1x64x64xbf16>
    %130 = vector.shape_cast %129 : vector<1x64x64xbf16> to vector<64x64xbf16>
    %cst_96 = arith.constant dense<0.000000e+00> : vector<142x64xf32>
    %131 = tpu.matmul %128, %130, %cst_96 {dimension_numbers = #tpu.dot_dimension_numbers<[1], [0], [0], [1], [0, 0, 1, 1], [], []>} : vector<142x64xbf16>, vector<64x64xbf16>, vector<142x64xf32> -> vector<142x64xf32>
    %132 = arith.addf %126, %131 : vector<142x64xf32>
    %c7_97 = arith.constant 7 : index
    %c0_98 = arith.constant 0 : index
    %133 = vector.load %arg13[%c7_97, %c0_98] : memref<160x64xf32, #tpu.memory_space<vmem>>, vector<142x64xf32>
    %134 = arith.truncf %133 : vector<142x64xf32> to vector<142x64xbf16>
    %c13 = arith.constant 13 : index
    %c0_99 = arith.constant 0 : index
    %c0_100 = arith.constant 0 : index
    %135 = vector.load %arg3[%c13, %c0_99, %c0_100] : memref<27x64x64xbf16, #tpu.memory_space<vmem>>, vector<1x64x64xbf16>
    %136 = vector.shape_cast %135 : vector<1x64x64xbf16> to vector<64x64xbf16>
    %cst_101 = arith.constant dense<0.000000e+00> : vector<142x64xf32>
    %137 = tpu.matmul %134, %136, %cst_101 {dimension_numbers = #tpu.dot_dimension_numbers<[1], [0], [0], [1], [0, 0, 1, 1], [], []>} : vector<142x64xbf16>, vector<64x64xbf16>, vector<142x64xf32> -> vector<142x64xf32>
    %138 = arith.addf %132, %137 : vector<142x64xf32>
    %c8_102 = arith.constant 8 : index
    %c0_103 = arith.constant 0 : index
    %139 = vector.load %arg13[%c8_102, %c0_103] : memref<160x64xf32, #tpu.memory_space<vmem>>, vector<142x64xf32>
    %140 = arith.truncf %139 : vector<142x64xf32> to vector<142x64xbf16>
    %c14 = arith.constant 14 : index
    %c0_104 = arith.constant 0 : index
    %c0_105 = arith.constant 0 : index
    %141 = vector.load %arg3[%c14, %c0_104, %c0_105] : memref<27x64x64xbf16, #tpu.memory_space<vmem>>, vector<1x64x64xbf16>
    %142 = vector.shape_cast %141 : vector<1x64x64xbf16> to vector<64x64xbf16>
    %cst_106 = arith.constant dense<0.000000e+00> : vector<142x64xf32>
    %143 = tpu.matmul %140, %142, %cst_106 {dimension_numbers = #tpu.dot_dimension_numbers<[1], [0], [0], [1], [0, 0, 1, 1], [], []>} : vector<142x64xbf16>, vector<64x64xbf16>, vector<142x64xf32> -> vector<142x64xf32>
    %144 = arith.addf %138, %143 : vector<142x64xf32>
    %c12_107 = arith.constant 12 : index
    %c0_108 = arith.constant 0 : index
    %145 = vector.load %arg13[%c12_107, %c0_108] : memref<160x64xf32, #tpu.memory_space<vmem>>, vector<142x64xf32>
    %146 = arith.truncf %145 : vector<142x64xf32> to vector<142x64xbf16>
    %c15 = arith.constant 15 : index
    %c0_109 = arith.constant 0 : index
    %c0_110 = arith.constant 0 : index
    %147 = vector.load %arg3[%c15, %c0_109, %c0_110] : memref<27x64x64xbf16, #tpu.memory_space<vmem>>, vector<1x64x64xbf16>
    %148 = vector.shape_cast %147 : vector<1x64x64xbf16> to vector<64x64xbf16>
    %cst_111 = arith.constant dense<0.000000e+00> : vector<142x64xf32>
    %149 = tpu.matmul %146, %148, %cst_111 {dimension_numbers = #tpu.dot_dimension_numbers<[1], [0], [0], [1], [0, 0, 1, 1], [], []>} : vector<142x64xbf16>, vector<64x64xbf16>, vector<142x64xf32> -> vector<142x64xf32>
    %150 = arith.addf %144, %149 : vector<142x64xf32>
    %c13_112 = arith.constant 13 : index
    %c0_113 = arith.constant 0 : index
    %151 = vector.load %arg13[%c13_112, %c0_113] : memref<160x64xf32, #tpu.memory_space<vmem>>, vector<142x64xf32>
    %152 = arith.truncf %151 : vector<142x64xf32> to vector<142x64xbf16>
    %c16 = arith.constant 16 : index
    %c0_114 = arith.constant 0 : index
    %c0_115 = arith.constant 0 : index
    %153 = vector.load %arg3[%c16, %c0_114, %c0_115] : memref<27x64x64xbf16, #tpu.memory_space<vmem>>, vector<1x64x64xbf16>
    %154 = vector.shape_cast %153 : vector<1x64x64xbf16> to vector<64x64xbf16>
    %cst_116 = arith.constant dense<0.000000e+00> : vector<142x64xf32>
    %155 = tpu.matmul %152, %154, %cst_116 {dimension_numbers = #tpu.dot_dimension_numbers<[1], [0], [0], [1], [0, 0, 1, 1], [], []>} : vector<142x64xbf16>, vector<64x64xbf16>, vector<142x64xf32> -> vector<142x64xf32>
    %156 = arith.addf %150, %155 : vector<142x64xf32>
    %c14_117 = arith.constant 14 : index
    %c0_118 = arith.constant 0 : index
    %157 = vector.load %arg13[%c14_117, %c0_118] : memref<160x64xf32, #tpu.memory_space<vmem>>, vector<142x64xf32>
    %158 = arith.truncf %157 : vector<142x64xf32> to vector<142x64xbf16>
    %c17 = arith.constant 17 : index
    %c0_119 = arith.constant 0 : index
    %c0_120 = arith.constant 0 : index
    %159 = vector.load %arg3[%c17, %c0_119, %c0_120] : memref<27x64x64xbf16, #tpu.memory_space<vmem>>, vector<1x64x64xbf16>
    %160 = vector.shape_cast %159 : vector<1x64x64xbf16> to vector<64x64xbf16>
    %cst_121 = arith.constant dense<0.000000e+00> : vector<142x64xf32>
    %161 = tpu.matmul %158, %160, %cst_121 {dimension_numbers = #tpu.dot_dimension_numbers<[1], [0], [0], [1], [0, 0, 1, 1], [], []>} : vector<142x64xbf16>, vector<64x64xbf16>, vector<142x64xf32> -> vector<142x64xf32>
    %162 = arith.addf %156, %161 : vector<142x64xf32>
    %163 = vector.broadcast %109 : vector<1x64xf32> to vector<142x64xf32>
    %164 = arith.addf %162, %163 : vector<142x64xf32>
    %cst_122 = arith.constant 0.000000e+00 : f32
    %165 = vector.broadcast %cst_122 : f32 to vector<142x64xf32>
    %166 = arith.maximumf %164, %165 : vector<142x64xf32>
    %167 = vector.extract_strided_slice %166 {offsets = [0, 0], sizes = [135, 64], strides = [1, 1]} : vector<142x64xf32> to vector<135x64xf32>
    %168 = vector.extract_strided_slice %166 {offsets = [1, 0], sizes = [135, 64], strides = [1, 1]} : vector<142x64xf32> to vector<135x64xf32>
    %169 = arith.maximumf %167, %168 : vector<135x64xf32>
    %170 = vector.extract_strided_slice %166 {offsets = [6, 0], sizes = [135, 64], strides = [1, 1]} : vector<142x64xf32> to vector<135x64xf32>
    %171 = vector.extract_strided_slice %166 {offsets = [7, 0], sizes = [135, 64], strides = [1, 1]} : vector<142x64xf32> to vector<135x64xf32>
    %172 = arith.maximumf %170, %171 : vector<135x64xf32>
    %173 = arith.maximumf %169, %172 : vector<135x64xf32>
    %174 = arith.truncf %173 : vector<135x64xf32> to vector<135x64xbf16>
    %c0_123 = arith.constant 0 : index
    %c0_124 = arith.constant 0 : index
    %175 = vector.load %arg10[%c0_123, %c0_124] : memref<16x15xbf16, #tpu.memory_space<vmem>>, vector<16x15xbf16>
    %176 = vector.extract_strided_slice %174 {offsets = [0, 0], sizes = [15, 64], strides = [1, 1]} : vector<135x64xbf16> to vector<15x64xbf16>
    %cst_125 = arith.constant dense<0.000000e+00> : vector<16x64xf32>
    %177 = tpu.matmul %175, %176, %cst_125 {dimension_numbers = #tpu.dot_dimension_numbers<[1], [0], [0], [1], [0, 0, 1, 1], [], []>} : vector<16x15xbf16>, vector<15x64xbf16>, vector<16x64xf32> -> vector<16x64xf32>
    %c0_126 = arith.constant 0 : index
    %c0_127 = arith.constant 0 : index
    %178 = vector.load %arg14[%c0_126, %c0_127] : memref<64x64xf32, #tpu.memory_space<vmem>>, vector<16x64xf32>
    tpu.vector_store %arg14[%c0_126, %c0_127], %177 {strides = array<i32>} : memref<64x64xf32, #tpu.memory_space<vmem>>, vector<16x64xf32>,
    %179 = vector.extract_strided_slice %174 {offsets = [40, 0], sizes = [15, 64], strides = [1, 1]} : vector<135x64xbf16> to vector<15x64xbf16>
    %cst_128 = arith.constant dense<0.000000e+00> : vector<16x64xf32>
    %180 = tpu.matmul %175, %179, %cst_128 {dimension_numbers = #tpu.dot_dimension_numbers<[1], [0], [0], [1], [0, 0, 1, 1], [], []>} : vector<16x15xbf16>, vector<15x64xbf16>, vector<16x64xf32> -> vector<16x64xf32>
    %c16_129 = arith.constant 16 : index
    %c0_130 = arith.constant 0 : index
    %181 = vector.load %arg14[%c16_129, %c0_130] : memref<64x64xf32, #tpu.memory_space<vmem>>, vector<16x64xf32>
    tpu.vector_store %arg14[%c16_129, %c0_130], %180 {strides = array<i32>} : memref<64x64xf32, #tpu.memory_space<vmem>>, vector<16x64xf32>,
    %182 = vector.extract_strided_slice %174 {offsets = [80, 0], sizes = [15, 64], strides = [1, 1]} : vector<135x64xbf16> to vector<15x64xbf16>
    %cst_131 = arith.constant dense<0.000000e+00> : vector<16x64xf32>
    %183 = tpu.matmul %175, %182, %cst_131 {dimension_numbers = #tpu.dot_dimension_numbers<[1], [0], [0], [1], [0, 0, 1, 1], [], []>} : vector<16x15xbf16>, vector<15x64xbf16>, vector<16x64xf32> -> vector<16x64xf32>
    %c32 = arith.constant 32 : index
    %c0_132 = arith.constant 0 : index
    %184 = vector.load %arg14[%c32, %c0_132] : memref<64x64xf32, #tpu.memory_space<vmem>>, vector<16x64xf32>
    tpu.vector_store %arg14[%c32, %c0_132], %183 {strides = array<i32>} : memref<64x64xf32, #tpu.memory_space<vmem>>, vector<16x64xf32>,
    %185 = vector.extract_strided_slice %174 {offsets = [120, 0], sizes = [15, 64], strides = [1, 1]} : vector<135x64xbf16> to vector<15x64xbf16>
    %cst_133 = arith.constant dense<0.000000e+00> : vector<16x64xf32>
    %186 = tpu.matmul %175, %185, %cst_133 {dimension_numbers = #tpu.dot_dimension_numbers<[1], [0], [0], [1], [0, 0, 1, 1], [], []>} : vector<16x15xbf16>, vector<15x64xbf16>, vector<16x64xf32> -> vector<16x64xf32>
    %c48 = arith.constant 48 : index
    %c0_134 = arith.constant 0 : index
    %187 = vector.load %arg14[%c48, %c0_134] : memref<64x64xf32, #tpu.memory_space<vmem>>, vector<16x64xf32>
    tpu.vector_store %arg14[%c48, %c0_134], %186 {strides = array<i32>} : memref<64x64xf32, #tpu.memory_space<vmem>>, vector<16x64xf32>,
    %c0_135 = arith.constant 0 : index
    %c0_136 = arith.constant 0 : index
    %188 = vector.load %arg7[%c0_135, %c0_136] : memref<1x64xf32, #tpu.memory_space<vmem>>, vector<1x64xf32>
    %c0_137 = arith.constant 0 : index
    %c0_138 = arith.constant 0 : index
    %189 = vector.load %arg14[%c0_137, %c0_138] : memref<64x64xf32, #tpu.memory_space<vmem>>, vector<54x64xf32>
    %190 = arith.truncf %189 : vector<54x64xf32> to vector<54x64xbf16>
    %c18 = arith.constant 18 : index
    %c0_139 = arith.constant 0 : index
    %c0_140 = arith.constant 0 : index
    %191 = vector.load %arg3[%c18, %c0_139, %c0_140] : memref<27x64x64xbf16, #tpu.memory_space<vmem>>, vector<1x64x64xbf16>
    %192 = vector.shape_cast %191 : vector<1x64x64xbf16> to vector<64x64xbf16>
    %cst_141 = arith.constant dense<0.000000e+00> : vector<54x64xf32>
    %193 = tpu.matmul %190, %192, %cst_141 {dimension_numbers = #tpu.dot_dimension_numbers<[1], [0], [0], [1], [0, 0, 1, 1], [], []>} : vector<54x64xbf16>, vector<64x64xbf16>, vector<54x64xf32> -> vector<54x64xf32>
    %c1_142 = arith.constant 1 : index
    %c0_143 = arith.constant 0 : index
    %194 = vector.load %arg14[%c1_142, %c0_143] : memref<64x64xf32, #tpu.memory_space<vmem>>, vector<54x64xf32>
    %195 = arith.truncf %194 : vector<54x64xf32> to vector<54x64xbf16>
    %c19 = arith.constant 19 : index
    %c0_144 = arith.constant 0 : index
    %c0_145 = arith.constant 0 : index
    %196 = vector.load %arg3[%c19, %c0_144, %c0_145] : memref<27x64x64xbf16, #tpu.memory_space<vmem>>, vector<1x64x64xbf16>
    %197 = vector.shape_cast %196 : vector<1x64x64xbf16> to vector<64x64xbf16>
    %cst_146 = arith.constant dense<0.000000e+00> : vector<54x64xf32>
    %198 = tpu.matmul %195, %197, %cst_146 {dimension_numbers = #tpu.dot_dimension_numbers<[1], [0], [0], [1], [0, 0, 1, 1], [], []>} : vector<54x64xbf16>, vector<64x64xbf16>, vector<54x64xf32> -> vector<54x64xf32>
    %199 = arith.addf %193, %198 : vector<54x64xf32>
    %c2_147 = arith.constant 2 : index
    %c0_148 = arith.constant 0 : index
    %200 = vector.load %arg14[%c2_147, %c0_148] : memref<64x64xf32, #tpu.memory_space<vmem>>, vector<54x64xf32>
    %201 = arith.truncf %200 : vector<54x64xf32> to vector<54x64xbf16>
    %c20_149 = arith.constant 20 : index
    %c0_150 = arith.constant 0 : index
    %c0_151 = arith.constant 0 : index
    %202 = vector.load %arg3[%c20_149, %c0_150, %c0_151] : memref<27x64x64xbf16, #tpu.memory_space<vmem>>, vector<1x64x64xbf16>
    %203 = vector.shape_cast %202 : vector<1x64x64xbf16> to vector<64x64xbf16>
    %cst_152 = arith.constant dense<0.000000e+00> : vector<54x64xf32>
    %204 = tpu.matmul %201, %203, %cst_152 {dimension_numbers = #tpu.dot_dimension_numbers<[1], [0], [0], [1], [0, 0, 1, 1], [], []>} : vector<54x64xbf16>, vector<64x64xbf16>, vector<54x64xf32> -> vector<54x64xf32>
    %205 = arith.addf %199, %204 : vector<54x64xf32>
    %c4_153 = arith.constant 4 : index
    %c0_154 = arith.constant 0 : index
    %206 = vector.load %arg14[%c4_153, %c0_154] : memref<64x64xf32, #tpu.memory_space<vmem>>, vector<54x64xf32>
    %207 = arith.truncf %206 : vector<54x64xf32> to vector<54x64xbf16>
    %c21_155 = arith.constant 21 : index
    %c0_156 = arith.constant 0 : index
    %c0_157 = arith.constant 0 : index
    %208 = vector.load %arg3[%c21_155, %c0_156, %c0_157] : memref<27x64x64xbf16, #tpu.memory_space<vmem>>, vector<1x64x64xbf16>
    %209 = vector.shape_cast %208 : vector<1x64x64xbf16> to vector<64x64xbf16>
    %cst_158 = arith.constant dense<0.000000e+00> : vector<54x64xf32>
    %210 = tpu.matmul %207, %209, %cst_158 {dimension_numbers = #tpu.dot_dimension_numbers<[1], [0], [0], [1], [0, 0, 1, 1], [], []>} : vector<54x64xbf16>, vector<64x64xbf16>, vector<54x64xf32> -> vector<54x64xf32>
    %211 = arith.addf %205, %210 : vector<54x64xf32>
    %c5_159 = arith.constant 5 : index
    %c0_160 = arith.constant 0 : index
    %212 = vector.load %arg14[%c5_159, %c0_160] : memref<64x64xf32, #tpu.memory_space<vmem>>, vector<54x64xf32>
    %213 = arith.truncf %212 : vector<54x64xf32> to vector<54x64xbf16>
    %c22_161 = arith.constant 22 : index
    %c0_162 = arith.constant 0 : index
    %c0_163 = arith.constant 0 : index
    %214 = vector.load %arg3[%c22_161, %c0_162, %c0_163] : memref<27x64x64xbf16, #tpu.memory_space<vmem>>, vector<1x64x64xbf16>
    %215 = vector.shape_cast %214 : vector<1x64x64xbf16> to vector<64x64xbf16>
    %cst_164 = arith.constant dense<0.000000e+00> : vector<54x64xf32>
    %216 = tpu.matmul %213, %215, %cst_164 {dimension_numbers = #tpu.dot_dimension_numbers<[1], [0], [0], [1], [0, 0, 1, 1], [], []>} : vector<54x64xbf16>, vector<64x64xbf16>, vector<54x64xf32> -> vector<54x64xf32>
    %217 = arith.addf %211, %216 : vector<54x64xf32>
    %c6_165 = arith.constant 6 : index
    %c0_166 = arith.constant 0 : index
    %218 = vector.load %arg14[%c6_165, %c0_166] : memref<64x64xf32, #tpu.memory_space<vmem>>, vector<54x64xf32>
    %219 = arith.truncf %218 : vector<54x64xf32> to vector<54x64xbf16>
    %c23 = arith.constant 23 : index
    %c0_167 = arith.constant 0 : index
    %c0_168 = arith.constant 0 : index
    %220 = vector.load %arg3[%c23, %c0_167, %c0_168] : memref<27x64x64xbf16, #tpu.memory_space<vmem>>, vector<1x64x64xbf16>
    %221 = vector.shape_cast %220 : vector<1x64x64xbf16> to vector<64x64xbf16>
    %cst_169 = arith.constant dense<0.000000e+00> : vector<54x64xf32>
    %222 = tpu.matmul %219, %221, %cst_169 {dimension_numbers = #tpu.dot_dimension_numbers<[1], [0], [0], [1], [0, 0, 1, 1], [], []>} : vector<54x64xbf16>, vector<64x64xbf16>, vector<54x64xf32> -> vector<54x64xf32>
    %223 = arith.addf %217, %222 : vector<54x64xf32>
    %c8_170 = arith.constant 8 : index
    %c0_171 = arith.constant 0 : index
    %224 = vector.load %arg14[%c8_170, %c0_171] : memref<64x64xf32, #tpu.memory_space<vmem>>, vector<54x64xf32>
    %225 = arith.truncf %224 : vector<54x64xf32> to vector<54x64xbf16>
    %c24 = arith.constant 24 : index
    %c0_172 = arith.constant 0 : index
    %c0_173 = arith.constant 0 : index
    %226 = vector.load %arg3[%c24, %c0_172, %c0_173] : memref<27x64x64xbf16, #tpu.memory_space<vmem>>, vector<1x64x64xbf16>
    %227 = vector.shape_cast %226 : vector<1x64x64xbf16> to vector<64x64xbf16>
    %cst_174 = arith.constant dense<0.000000e+00> : vector<54x64xf32>
    %228 = tpu.matmul %225, %227, %cst_174 {dimension_numbers = #tpu.dot_dimension_numbers<[1], [0], [0], [1], [0, 0, 1, 1], [], []>} : vector<54x64xbf16>, vector<64x64xbf16>, vector<54x64xf32> -> vector<54x64xf32>
    %229 = arith.addf %223, %228 : vector<54x64xf32>
    %c9_175 = arith.constant 9 : index
    %c0_176 = arith.constant 0 : index
    %230 = vector.load %arg14[%c9_175, %c0_176] : memref<64x64xf32, #tpu.memory_space<vmem>>, vector<54x64xf32>
    %231 = arith.truncf %230 : vector<54x64xf32> to vector<54x64xbf16>
    %c25 = arith.constant 25 : index
    %c0_177 = arith.constant 0 : index
    %c0_178 = arith.constant 0 : index
    %232 = vector.load %arg3[%c25, %c0_177, %c0_178] : memref<27x64x64xbf16, #tpu.memory_space<vmem>>, vector<1x64x64xbf16>
    %233 = vector.shape_cast %232 : vector<1x64x64xbf16> to vector<64x64xbf16>
    %cst_179 = arith.constant dense<0.000000e+00> : vector<54x64xf32>
    %234 = tpu.matmul %231, %233, %cst_179 {dimension_numbers = #tpu.dot_dimension_numbers<[1], [0], [0], [1], [0, 0, 1, 1], [], []>} : vector<54x64xbf16>, vector<64x64xbf16>, vector<54x64xf32> -> vector<54x64xf32>
    %235 = arith.addf %229, %234 : vector<54x64xf32>
    %c10_180 = arith.constant 10 : index
    %c0_181 = arith.constant 0 : index
    %236 = vector.load %arg14[%c10_180, %c0_181] : memref<64x64xf32, #tpu.memory_space<vmem>>, vector<54x64xf32>
    %237 = arith.truncf %236 : vector<54x64xf32> to vector<54x64xbf16>
    %c26 = arith.constant 26 : index
    %c0_182 = arith.constant 0 : index
    %c0_183 = arith.constant 0 : index
    %238 = vector.load %arg3[%c26, %c0_182, %c0_183] : memref<27x64x64xbf16, #tpu.memory_space<vmem>>, vector<1x64x64xbf16>
    %239 = vector.shape_cast %238 : vector<1x64x64xbf16> to vector<64x64xbf16>
    %cst_184 = arith.constant dense<0.000000e+00> : vector<54x64xf32>
    %240 = tpu.matmul %237, %239, %cst_184 {dimension_numbers = #tpu.dot_dimension_numbers<[1], [0], [0], [1], [0, 0, 1, 1], [], []>} : vector<54x64xbf16>, vector<64x64xbf16>, vector<54x64xf32> -> vector<54x64xf32>
    %241 = arith.addf %235, %240 : vector<54x64xf32>
    %242 = vector.broadcast %188 : vector<1x64xf32> to vector<54x64xf32>
    %243 = arith.addf %241, %242 : vector<54x64xf32>
    %cst_185 = arith.constant 0.000000e+00 : f32
    %244 = vector.broadcast %cst_185 : f32 to vector<54x64xf32>
    %245 = arith.maximumf %243, %244 : vector<54x64xf32>
    %246 = vector.extract_strided_slice %245 {offsets = [0, 0], sizes = [49, 64], strides = [1, 1]} : vector<54x64xf32> to vector<49x64xf32>
    %247 = vector.extract_strided_slice %245 {offsets = [1, 0], sizes = [49, 64], strides = [1, 1]} : vector<54x64xf32> to vector<49x64xf32>
    %248 = arith.maximumf %246, %247 : vector<49x64xf32>
    %249 = vector.extract_strided_slice %245 {offsets = [4, 0], sizes = [49, 64], strides = [1, 1]} : vector<54x64xf32> to vector<49x64xf32>
    %250 = vector.extract_strided_slice %245 {offsets = [5, 0], sizes = [49, 64], strides = [1, 1]} : vector<54x64xf32> to vector<49x64xf32>
    %251 = arith.maximumf %249, %250 : vector<49x64xf32>
    %252 = arith.maximumf %248, %251 : vector<49x64xf32>
    %253 = vector.extract_strided_slice %252 {offsets = [0, 0], sizes = [1, 64], strides = [1, 1]} : vector<49x64xf32> to vector<1x64xf32>
    %254 = vector.extract_strided_slice %252 {offsets = [16, 0], sizes = [1, 64], strides = [1, 1]} : vector<49x64xf32> to vector<1x64xf32>
    %255 = vector.extract_strided_slice %252 {offsets = [32, 0], sizes = [1, 64], strides = [1, 1]} : vector<49x64xf32> to vector<1x64xf32>
    %256 = vector.extract_strided_slice %252 {offsets = [48, 0], sizes = [1, 64], strides = [1, 1]} : vector<49x64xf32> to vector<1x64xf32>
    %257 = tpu.concatenate %253, %254, %255, %256 in 0 : vector<1x64xf32>, vector<1x64xf32>, vector<1x64xf32>, vector<1x64xf32> -> vector<4x64xf32>
    %c0_186 = arith.constant 0 : index
    %c0_187 = arith.constant 0 : index
    %c0_188 = arith.constant 0 : index
    %258 = vector.load %arg11[%c0_186, %c0_187, %c0_188] : memref<1x4x64xf32, #tpu.memory_space<vmem>>, vector<1x4x64xf32>
    %259 = vector.shape_cast %258 : vector<1x4x64xf32> to vector<4x64xf32>
    %260 = vector.shape_cast %257 : vector<4x64xf32> to vector<1x4x64xf32>
    tpu.vector_store %arg11[%c0_186, %c0_187, %c0_188], %260 {strides = array<i32>} : memref<1x4x64xf32, #tpu.memory_space<vmem>>, vector<1x4x64xf32>,
    return
  }
  func.func @transform_0(%arg0: i32) -> (i32, i32, i32) {
    %c0_i32 = arith.constant 0 : i32
    %c0_i32_0 = arith.constant 0 : i32
    %c0_i32_1 = arith.constant 0 : i32
    return %arg0, %c0_i32, %c0_i32_0 : i32, i32, i32
  }
  func.func @transform_1(%arg0: i32) -> (i32, i32) {
    %c0_i32 = arith.constant 0 : i32
    %c0_i32_0 = arith.constant 0 : i32
    %c0_i32_1 = arith.constant 0 : i32
    return %c0_i32, %c0_i32_0 : i32, i32
  }
  func.func @transform_2(%arg0: i32) -> (i32, i32, i32) {
    %c0_i32 = arith.constant 0 : i32
    %c0_i32_0 = arith.constant 0 : i32
    %c0_i32_1 = arith.constant 0 : i32
    %c0_i32_2 = arith.constant 0 : i32
    return %c0_i32, %c0_i32_0, %c0_i32_1 : i32, i32, i32
  }
  func.func @transform_3(%arg0: i32) -> (i32, i32) {
    %c0_i32 = arith.constant 0 : i32
    %c0_i32_0 = arith.constant 0 : i32
    %c0_i32_1 = arith.constant 0 : i32
    return %c0_i32, %c0_i32_0 : i32, i32
  }
  func.func @transform_4(%arg0: i32) -> (i32, i32) {
    %c0_i32 = arith.constant 0 : i32
    %c0_i32_0 = arith.constant 0 : i32
    %c0_i32_1 = arith.constant 0 : i32
    return %c0_i32, %c0_i32_0 : i32, i32
  }
  func.func @transform_5(%arg0: i32) -> (i32, i32) {
    %c0_i32 = arith.constant 0 : i32
    %c0_i32_0 = arith.constant 0 : i32
    %c0_i32_1 = arith.constant 0 : i32
    return %c0_i32, %c0_i32_0 : i32, i32
  }
  func.func @transform_6(%arg0: i32) -> (i32, i32) {
    %c0_i32 = arith.constant 0 : i32
    %c0_i32_0 = arith.constant 0 : i32
    %c0_i32_1 = arith.constant 0 : i32
    return %c0_i32, %c0_i32_0 : i32, i32
  }
  func.func @transform_7(%arg0: i32) -> (i32, i32) {
    %c0_i32 = arith.constant 0 : i32
    %c0_i32_0 = arith.constant 0 : i32
    %c0_i32_1 = arith.constant 0 : i32
    return %c0_i32, %c0_i32_0 : i32, i32
  }
  func.func @transform_8(%arg0: i32) -> (i32, i32) {
    %c0_i32 = arith.constant 0 : i32
    %c0_i32_0 = arith.constant 0 : i32
    %c0_i32_1 = arith.constant 0 : i32
    return %c0_i32, %c0_i32_0 : i32, i32
  }
  func.func @transform_9(%arg0: i32) -> (i32, i32) {
    %c0_i32 = arith.constant 0 : i32
    %c0_i32_0 = arith.constant 0 : i32
    %c0_i32_1 = arith.constant 0 : i32
    return %c0_i32, %c0_i32_0 : i32, i32
  }
  func.func @transform_10(%arg0: i32) -> (i32, i32, i32) {
    %c0_i32 = arith.constant 0 : i32
    %c0_i32_0 = arith.constant 0 : i32
    %c0_i32_1 = arith.constant 0 : i32
    return %arg0, %c0_i32, %c0_i32_0 : i32, i32, i32
  }
}

</mosaic_0001>

<llo_original>
// kernel: encoder_c4_pallas.1
$region0: #{encoder_c4_pallas.1}
  #allocation0 [shape = 'u32[]', space=smem, size = 0x4, offset = 0x4, fixed_abs, tag = 'smem constant byte address 0x4 - core index']
  #allocation1 [shape = 'u32[144,128]{1,0:T(1,128)}', space=vmem, size = 0x12000, scoped, tag = 'internal scratch']
  #allocation2 [shape = 'f32[416,64]{1,0:T(8,128)}', space=vmem, size = 0x34000, scoped, tag = 'scratch operand']
  #allocation3 [shape = 'f32[160,64]{1,0:T(8,128)}', space=vmem, size = 0x14000, scoped, tag = 'scratch operand']
  #allocation4 [shape = 'f32[64,64]{1,0:T(8,128)}', space=vmem, size = 0x8000, scoped, tag = 'scratch operand']
  %s0 = inlined_call_operand.vmem [shape: bf16[8,256,32], index: 0, kind: input, shape index: {}]
  %s1 = inlined_call_operand.vmem [shape: bf16[32,64], index: 1, kind: input, shape index: {}]
  %s2 = inlined_call_operand.vmem [shape: bf16[27,64,64], index: 2, kind: input, shape index: {}]
  %s3 = inlined_call_operand.vmem [shape: f32[1,64], index: 3, kind: input, shape index: {}]
  %s4 = inlined_call_operand.vmem [shape: f32[1,64], index: 4, kind: input, shape index: {}]
  %s5 = inlined_call_operand.vmem [shape: f32[1,64], index: 5, kind: input, shape index: {}]
  %s6 = inlined_call_operand.vmem [shape: f32[1,64], index: 6, kind: input, shape index: {}]
  %s7 = inlined_call_operand.vmem [shape: bf16[104,239], index: 7, kind: input, shape index: {}]
  %s8 = inlined_call_operand.vmem [shape: bf16[40,67], index: 8, kind: input, shape index: {}]
  %s9 = inlined_call_operand.vmem [shape: bf16[16,15], index: 9, kind: input, shape index: {}]
  %s10 = inlined_call_operand.hbm [shape: f32[2,4,64], index: 10, kind: output, shape index: {}]
  %s11 = sld [smem:[#allocation0]]
  $region73: #{encoder_c4_pallas.1} parent=0
    _
  %s13 = ssub.s32 1, %s11
  %s14 = scalar_select 0, %s13, %s11
  $region1: #{encoder_c4_pallas.1} parent=0
    #allocation5 [shape = 'u8[4096]{0}', space=vmem, size = 0x1000, scoped, tag = 'output window, operand 0']
    #allocation6 [shape = 's32[2]{0}', space=sflag, size = 0x8, scoped, tag = 'scoped memory for encoder_c4_pallas.1']
    %15 = vsyncpa [#allocation6], 0
    %s16 = scalar_lea.sflag [#allocation6], 1
    %17 = vsyncpa %s16, 0
    loop: start=0, step=1, limit=4
    $region2: #{encoder_c4_pallas.1} parent=1 // loop_pre_header
      _
    $region3: #{encoder_c4_pallas.1} parent=1 // loop_header
      %s19 = sphi 0, %s23
      %p20 = scmp.ge.s32.totalorder %s19, 4
      %s29 = sphi 0, %s31
      %s32 = sphi 0, %s29
      %s33 = sphi 0, %s32
      %s49 = sphi 0, %s33
      %s53 = sphi 0, %s53
      %s55 = sphi 0, %s53
      %s56 = sphi 0, %s55
      %s70 = sphi 0, %s56
      %s74 = sphi 0, %s74
      %s76 = sphi 0, %s74
      %s77 = sphi 0, %s76
      %s91 = sphi 0, %s77
      %s95 = sphi 0, %s95
      %s97 = sphi 0, %s95
      %s98 = sphi 0, %s97
      %s112 = sphi 0, %s98
      %s116 = sphi 0, %s116
      %s118 = sphi 0, %s116
      %s119 = sphi 0, %s118
      %s133 = sphi 0, %s119
      %s137 = sphi 0, %s137
      %s139 = sphi 0, %s137
      %s140 = sphi 0, %s139
      %s154 = sphi 0, %s140
      %s158 = sphi 0, %s158
      %s160 = sphi 0, %s158
      %s161 = sphi 0, %s160
      %s175 = sphi 0, %s161
      %s179 = sphi 0, %s179
      %s181 = sphi 0, %s179
      %s182 = sphi 0, %s181
      %s196 = sphi 0, %s182
      %s200 = sphi 0, %s200
      %s202 = sphi 0, %s200
      %s203 = sphi 0, %s202
      %s217 = sphi 0, %s203
      %s221 = sphi 0, %s221
      %s223 = sphi 0, %s221
      %s224 = sphi 0, %s223
      %s238 = sphi 0, %s224
      %s244 = sphi 0, %s246
      %s247 = sphi 0, %s244
      %s248 = sphi 0, %s247
      %s264 = sphi 0, %s248
    $region4: #{encoder_c4_pallas.1} parent=1 // loop_header_branch
      %22 = sbr.rel (%p20) target = $region8
    $region5: #{encoder_c4_pallas.1} parent=1 // loop_body
      %s24 = ssub.s32 %s19, 1
      %s25 = ssub.s32 %s19, 2
      %s26 = sadd.s32 %s19, 1
      %s27 = ssub.s32 %s19, %s26
      %p28 = scmp.eq.s32.totalorder %s27, 0
      %s30 = sadd.s32 %s29, 1
      %s31 = scalar_select %p28, %s29, %s30
      %p34 = pneg %p28
      %p35 = scmp.eq.s32.totalorder %s19, 1
      %p36 = por %p34, %p35
      %p37 = scmp.ne.s32.totalorder %s29, %s32
      %p38 = scmp.eq.s32.totalorder %s19, 0
      %p39 = por %p37, %p38
      %p40 = scmp.ne.s32.totalorder %s29, %s32
      %p41 = scmp.eq.s32.totalorder %s24, 1
      %p42 = por %p40, %p41
      %p43 = scmp.ne.s32.totalorder %s32, %s33
      %p44 = scmp.eq.s32.totalorder %s24, 0
      %p45 = por %p43, %p44
      %p46 = scmp.ne.s32.totalorder %s32, %s33
      %p47 = scmp.eq.s32.totalorder %s25, 1
      %p48 = por %p46, %p47
      %p50 = scmp.ne.s32.totalorder %s33, %s49
      %p51 = scmp.eq.s32.totalorder %s25, 0
      %p52 = por %p50, %p51
      %s54 = sadd.s32 %s53, 1
      %p57 = scmp.eq.s32.totalorder %s19, 1
      %p58 = scmp.ne.s32.totalorder %s53, %s55
      %p59 = scmp.eq.s32.totalorder %s19, 0
      %p60 = por %p58, %p59
      %p61 = scmp.ne.s32.totalorder %s53, %s55
      %p62 = scmp.eq.s32.totalorder %s24, 1
      %p63 = por %p61, %p62
      %p64 = scmp.ne.s32.totalorder %s55, %s56
      %p65 = scmp.eq.s32.totalorder %s24, 0
      %p66 = por %p64, %p65
      %p67 = scmp.ne.s32.totalorder %s55, %s56
      %p68 = scmp.eq.s32.totalorder %s25, 1
      %p69 = por %p67, %p68
      %p71 = scmp.ne.s32.totalorder %s56, %s70
      %p72 = scmp.eq.s32.totalorder %s25, 0
      %p73 = por %p71, %p72
      %s75 = sadd.s32 %s74, 1
      %p78 = scmp.eq.s32.totalorder %s19, 1
      %p79 = scmp.ne.s32.totalorder %s74, %s76
      %p80 = scmp.eq.s32.totalorder %s19, 0
      %p81 = por %p79, %p80
      %p82 = scmp.ne.s32.totalorder %s74, %s76
      %p83 = scmp.eq.s32.totalorder %s24, 1
      %p84 = por %p82, %p83
      %p85 = scmp.ne.s32.totalorder %s76, %s77
      %p86 = scmp.eq.s32.totalorder %s24, 0
      %p87 = por %p85, %p86
      %p88 = scmp.ne.s32.totalorder %s76, %s77
      %p89 = scmp.eq.s32.totalorder %s25, 1
      %p90 = por %p88, %p89
      %p92 = scmp.ne.s32.totalorder %s77, %s91
      %p93 = scmp.eq.s32.totalorder %s25, 0
      %p94 = por %p92, %p93
      %s96 = sadd.s32 %s95, 1
      %p99 = scmp.eq.s32.totalorder %s19, 1
      %p100 = scmp.ne.s32.totalorder %s95, %s97
      %p101 = scmp.eq.s32.totalorder %s19, 0
      %p102 = por %p100, %p101
      %p103 = scmp.ne.s32.totalorder %s95, %s97
      %p104 = scmp.eq.s32.totalorder %s24, 1
      %p105 = por %p103, %p104
      %p106 = scmp.ne.s32.totalorder %s97, %s98
      %p107 = scmp.eq.s32.totalorder %s24, 0
      %p108 = por %p106, %p107
      %p109 = scmp.ne.s32.totalorder %s97, %s98
      %p110 = scmp.eq.s32.totalorder %s25, 1
      %p111 = por %p109, %p110
      %p113 = scmp.ne.s32.totalorder %s98, %s112
      %p114 = scmp.eq.s32.totalorder %s25, 0
      %p115 = por %p113, %p114
      %s117 = sadd.s32 %s116, 1
      %p120 = scmp.eq.s32.totalorder %s19, 1
      %p121 = scmp.ne.s32.totalorder %s116, %s118
      %p122 = scmp.eq.s32.totalorder %s19, 0
      %p123 = por %p121, %p122
      %p124 = scmp.ne.s32.totalorder %s116, %s118
      %p125 = scmp.eq.s32.totalorder %s24, 1
      %p126 = por %p124, %p125
      %p127 = scmp.ne.s32.totalorder %s118, %s119
      %p128 = scmp.eq.s32.totalorder %s24, 0
      %p129 = por %p127, %p128
      %p130 = scmp.ne.s32.totalorder %s118, %s119
      %p131 = scmp.eq.s32.totalorder %s25, 1
      %p132 = por %p130, %p131
      %p134 = scmp.ne.s32.totalorder %s119, %s133
      %p135 = scmp.eq.s32.totalorder %s25, 0
      %p136 = por %p134, %p135
      %s138 = sadd.s32 %s137, 1
      %p141 = scmp.eq.s32.totalorder %s19, 1
      %p142 = scmp.ne.s32.totalorder %s137, %s139
      %p143 = scmp.eq.s32.totalorder %s19, 0
      %p144 = por %p142, %p143
      %p145 = scmp.ne.s32.totalorder %s137, %s139
      %p146 = scmp.eq.s32.totalorder %s24, 1
      %p147 = por %p145, %p146
      %p148 = scmp.ne.s32.totalorder %s139, %s140
      %p149 = scmp.eq.s32.totalorder %s24, 0
      %p150 = por %p148, %p149
      %p151 = scmp.ne.s32.totalorder %s139, %s140
      %p152 = scmp.eq.s32.totalorder %s25, 1
      %p153 = por %p151, %p152
      %p155 = scmp.ne.s32.totalorder %s140, %s154
      %p156 = scmp.eq.s32.totalorder %s25, 0
      %p157 = por %p155, %p156
      %s159 = sadd.s32 %s158, 1
      %p162 = scmp.eq.s32.totalorder %s19, 1
      %p163 = scmp.ne.s32.totalorder %s158, %s160
      %p164 = scmp.eq.s32.totalorder %s19, 0
      %p165 = por %p163, %p164
      %p166 = scmp.ne.s32.totalorder %s158, %s160
      %p167 = scmp.eq.s32.totalorder %s24, 1
      %p168 = por %p166, %p167
      %p169 = scmp.ne.s32.totalorder %s160, %s161
      %p170 = scmp.eq.s32.totalorder %s24, 0
      %p171 = por %p169, %p170
      %p172 = scmp.ne.s32.totalorder %s160, %s161
      %p173 = scmp.eq.s32.totalorder %s25, 1
      %p174 = por %p172, %p173
      %p176 = scmp.ne.s32.totalorder %s161, %s175
      %p177 = scmp.eq.s32.totalorder %s25, 0
      %p178 = por %p176, %p177
      %s180 = sadd.s32 %s179, 1
      %p183 = scmp.eq.s32.totalorder %s19, 1
      %p184 = scmp.ne.s32.totalorder %s179, %s181
      %p185 = scmp.eq.s32.totalorder %s19, 0
      %p186 = por %p184, %p185
      %p187 = scmp.ne.s32.totalorder %s179, %s181
      %p188 = scmp.eq.s32.totalorder %s24, 1
      %p189 = por %p187, %p188
      %p190 = scmp.ne.s32.totalorder %s181, %s182
      %p191 = scmp.eq.s32.totalorder %s24, 0
      %p192 = por %p190, %p191
      %p193 = scmp.ne.s32.totalorder %s181, %s182
      %p194 = scmp.eq.s32.totalorder %s25, 1
      %p195 = por %p193, %p194
      %p197 = scmp.ne.s32.totalorder %s182, %s196
      %p198 = scmp.eq.s32.totalorder %s25, 0
      %p199 = por %p197, %p198
      %s201 = sadd.s32 %s200, 1
      %p204 = scmp.eq.s32.totalorder %s19, 1
      %p205 = scmp.ne.s32.totalorder %s200, %s202
      %p206 = scmp.eq.s32.totalorder %s19, 0
      %p207 = por %p205, %p206
      %p208 = scmp.ne.s32.totalorder %s200, %s202
      %p209 = scmp.eq.s32.totalorder %s24, 1
      %p210 = por %p208, %p209
      %p211 = scmp.ne.s32.totalorder %s202, %s203
      %p212 = scmp.eq.s32.totalorder %s24, 0
      %p213 = por %p211, %p212
      %p214 = scmp.ne.s32.totalorder %s202, %s203
      %p215 = scmp.eq.s32.totalorder %s25, 1
      %p216 = por %p214, %p215
      %p218 = scmp.ne.s32.totalorder %s203, %s217
      %p219 = scmp.eq.s32.totalorder %s25, 0
      %p220 = por %p218, %p219
      %s222 = sadd.s32 %s221, 1
      %p225 = scmp.eq.s32.totalorder %s19, 1
      %p226 = scmp.ne.s32.totalorder %s221, %s223
      %p227 = scmp.eq.s32.totalorder %s19, 0
      %p228 = por %p226, %p227
      %p229 = scmp.ne.s32.totalorder %s221, %s223
      %p230 = scmp.eq.s32.totalorder %s24, 1
      %p231 = por %p229, %p230
      %p232 = scmp.ne.s32.totalorder %s223, %s224
      %p233 = scmp.eq.s32.totalorder %s24, 0
      %p234 = por %p232, %p233
      %p235 = scmp.ne.s32.totalorder %s223, %s224
      %p236 = scmp.eq.s32.totalorder %s25, 1
      %p237 = por %p235, %p236
      %p239 = scmp.ne.s32.totalorder %s224, %s238
      %p240 = scmp.eq.s32.totalorder %s25, 0
      %p241 = por %p239, %p240
      %s242 = ssub.s32 %s19, %s26
      %p243 = scmp.eq.s32.totalorder %s242, 0
      %s245 = sadd.s32 %s244, 1
      %s246 = scalar_select %p243, %s244, %s245
      %p249 = pneg %p243
      %p250 = scmp.eq.s32.totalorder %s19, 1
      %p251 = por %p249, %p250
      %p252 = scmp.ne.s32.totalorder %s244, %s247
      %p253 = scmp.eq.s32.totalorder %s19, 0
      %p254 = por %p252, %p253
      %p255 = scmp.ne.s32.totalorder %s244, %s247
      %p256 = scmp.eq.s32.totalorder %s24, 1
      %p257 = por %p255, %p256
      %p258 = scmp.ne.s32.totalorder %s247, %s248
      %p259 = scmp.eq.s32.totalorder %s24, 0
      %p260 = por %p258, %p259
      %p261 = scmp.ne.s32.totalorder %s247, %s248
      %p262 = scmp.eq.s32.totalorder %s25, 1
      %p263 = por %p261, %p262
      %p265 = scmp.ne.s32.totalorder %s248, %s264
      %p266 = scmp.eq.s32.totalorder %s25, 0
      %p267 = por %p265, %p266
      %p268 = scmp.le.s32.totalorder 1, %s19
      %p269 = scmp.lt.s32.totalorder %s19, 3
      %p270 = pnand %p268, %p269
      %p271 = pneg %p270
      // Predicated region
      $region9: #{encoder_c4_pallas.1} parent=5 // pred_check
        _
      $region10: #{encoder_c4_pallas.1} parent=5 // pred_check_branch
        %273 = sbr.rel (%p270) target = $region12
      $region11: #{encoder_c4_pallas.1} parent=5 // pred_region
        %s274 = ssub.s32 %s19, 1
        // Predicated region
        $region13: #{encoder_c4_pallas.1} parent=11 // pred_check
          %p275 = pneg %p66
        $region14: #{encoder_c4_pallas.1} parent=11 // pred_check_branch
          %277 = sbr.rel (%p275) target = $region16
        $region15: #{encoder_c4_pallas.1} parent=11 // pred_region
          _
        $region16: #{encoder_c4_pallas.1} parent=11 // pred_fallthru
          _
        // Predicated region
        $region17: #{encoder_c4_pallas.1} parent=11 // pred_check
          %p278 = pneg %p87
        $region18: #{encoder_c4_pallas.1} parent=11 // pred_check_branch
          %280 = sbr.rel (%p278) target = $region20
        $region19: #{encoder_c4_pallas.1} parent=11 // pred_region
          _
        $region20: #{encoder_c4_pallas.1} parent=11 // pred_fallthru
          _
        // Predicated region
        $region21: #{encoder_c4_pallas.1} parent=11 // pred_check
          %p281 = pneg %p108
        $region22: #{encoder_c4_pallas.1} parent=11 // pred_check_branch
          %283 = sbr.rel (%p281) target = $region24
        $region23: #{encoder_c4_pallas.1} parent=11 // pred_region
          _
        $region24: #{encoder_c4_pallas.1} parent=11 // pred_fallthru
          _
        // Predicated region
        $region25: #{encoder_c4_pallas.1} parent=11 // pred_check
          %p284 = pneg %p129
        $region26: #{encoder_c4_pallas.1} parent=11 // pred_check_branch
          %286 = sbr.rel (%p284) target = $region28
        $region27: #{encoder_c4_pallas.1} parent=11 // pred_region
          _
        $region28: #{encoder_c4_pallas.1} parent=11 // pred_fallthru
          _
        // Predicated region
        $region29: #{encoder_c4_pallas.1} parent=11 // pred_check
          %p287 = pneg %p150
        $region30: #{encoder_c4_pallas.1} parent=11 // pred_check_branch
          %289 = sbr.rel (%p287) target = $region32
        $region31: #{encoder_c4_pallas.1} parent=11 // pred_region
          _
        $region32: #{encoder_c4_pallas.1} parent=11 // pred_fallthru
          _
        // Predicated region
        $region33: #{encoder_c4_pallas.1} parent=11 // pred_check
          %p290 = pneg %p171
        $region34: #{encoder_c4_pallas.1} parent=11 // pred_check_branch
          %292 = sbr.rel (%p290) target = $region36
        $region35: #{encoder_c4_pallas.1} parent=11 // pred_region
          _
        $region36: #{encoder_c4_pallas.1} parent=11 // pred_fallthru
          _
        // Predicated region
        $region37: #{encoder_c4_pallas.1} parent=11 // pred_check
          %p293 = pneg %p192
        $region38: #{encoder_c4_pallas.1} parent=11 // pred_check_branch
          %295 = sbr.rel (%p293) target = $region40
        $region39: #{encoder_c4_pallas.1} parent=11 // pred_region
          _
        $region40: #{encoder_c4_pallas.1} parent=11 // pred_fallthru
          _
        // Predicated region
        $region41: #{encoder_c4_pallas.1} parent=11 // pred_check
          %p296 = pneg %p213
        $region42: #{encoder_c4_pallas.1} parent=11 // pred_check_branch
          %298 = sbr.rel (%p296) target = $region44
        $region43: #{encoder_c4_pallas.1} parent=11 // pred_region
          _
        $region44: #{encoder_c4_pallas.1} parent=11 // pred_fallthru
          _
        // Predicated region
        $region45: #{encoder_c4_pallas.1} parent=11 // pred_check
          %p299 = pneg %p234
        $region46: #{encoder_c4_pallas.1} parent=11 // pred_check_branch
          %301 = sbr.rel (%p299) target = $region48
        $region47: #{encoder_c4_pallas.1} parent=11 // pred_region
          _
        $region48: #{encoder_c4_pallas.1} parent=11 // pred_fallthru
          _
      $region12: #{encoder_c4_pallas.1} parent=5 // pred_fallthru
        _
      %p302 = scmp.lt.s32.totalorder %s19, 2
      // Predicated region
      $region49: #{encoder_c4_pallas.1} parent=5 // pred_check
        %p303 = pneg %p302
      $region50: #{encoder_c4_pallas.1} parent=5 // pred_check_branch
        %305 = sbr.rel (%p303) target = $region52
      $region51: #{encoder_c4_pallas.1} parent=5 // pred_region
        // Predicated region
        $region53: #{encoder_c4_pallas.1} parent=51 // pred_check
          %p306 = pneg %p39
        $region54: #{encoder_c4_pallas.1} parent=51 // pred_check_branch
          %308 = sbr.rel (%p306) target = $region56
        $region55: #{encoder_c4_pallas.1} parent=51 // pred_region
          %s309 = smul.u32 4, %s19
          %p310 = scmp.lt.s32.totalorder %s309, 7
          %s311 = scalar_select %p310, %s309, 7
          %s312 = smul.addr %s311, 32
          %s313 = smul.addr %s312, 4
          %s314 = scalar_lea.vmem %s0, %s313
          %s315 = smul.u32 4, %s19
        $region56: #{encoder_c4_pallas.1} parent=51 // pred_fallthru
          _
      $region52: #{encoder_c4_pallas.1} parent=5 // pred_fallthru
        _
      %p316 = scmp.le.s32.totalorder 1, %s19
      %p317 = scmp.lt.s32.totalorder %s19, 3
      %p318 = pnand %p316, %p317
      %p319 = pneg %p318
      // Predicated region
      $region57: #{encoder_c4_pallas.1} parent=5 // pred_check
        _
      $region58: #{encoder_c4_pallas.1} parent=5 // pred_check_branch
        %321 = sbr.rel (%p318) target = $region60
      $region59: #{encoder_c4_pallas.1} parent=5 // pred_region
        %s322 = ssub.s32 %s19, 1
        %s323 = smul.u32 4, %s24
        %p324 = scmp.lt.s32.totalorder %s323, 7
        %s325 = scalar_select %p324, %s323, 7
        %s326 = smul.addr %s325, 32
        %s327 = smul.addr %s326, 4
        %s328 = scalar_lea.vmem %s0, %s327
        %p329 = pneg %p45
        %p330 = pneg %p42
        %p331 = pneg %p66
        %p332 = pneg %p63
        %p333 = pneg %p87
        %p334 = pneg %p84
        %p335 = pneg %p108
        %p336 = pneg %p105
        %p337 = pneg %p129
        %p338 = pneg %p126
        %p339 = pneg %p150
        %p340 = pneg %p147
        %p341 = pneg %p171
        %p342 = pneg %p168
        %p343 = pneg %p192
        %p344 = pneg %p189
        %p345 = pneg %p213
        %p346 = pneg %p210
        %p347 = pneg %p234
        %p348 = pneg %p231
        %p349 = pneg %p260
        %p350 = pneg %p257
        %s351 = sand.u32 %s247, 1
        %s352 = scalar_lea.sflag [#allocation6], %s351
        %s353 = sand.u32 %s247, 1
        %s354 = smul.addr %s353, 4
        %s355 = scalar_lea.vmem [#allocation5], %s354
        %s356 = smul.u32 4, %s24
        %p357 = scmp.lt.s32.totalorder %s356, 7
        %s358 = scalar_select %p357, %s356, 7
        %s359 = smul.addr %s358, 32
        %s360 = smul.addr %s359, 4
        %s361 = scalar_lea.vmem %s0, %s360
        %s362 = smul.u32 4, %s24
        %v364 = vld [vmem:[%s361] sm:$0xf]
        %v365 = vld [vmem:[%s361 + $0x4] sm:$0xf]
        %v366 = vld [vmem:[%s361 + $0x8] sm:$0xf]
        %v367 = vld [vmem:[%s361 + $0xc] sm:$0xf]
        %v368 = vld [vmem:[%s361 + $0x10] sm:$0xf]
        %v369 = vld [vmem:[%s361 + $0x14] sm:$0xf]
        %v370 = vld [vmem:[%s361 + $0x18] sm:$0xf]
        %v371 = vld [vmem:[%s361 + $0x1c] sm:$0xf]
        %v372 = vld [vmem:[%s361 + $0x20] sm:$0xf]
        %v373 = vld [vmem:[%s361 + $0x24] sm:$0xf]
        %v374 = vld [vmem:[%s361 + $0x28] sm:$0xf]
        %v375 = vld [vmem:[%s361 + $0x2c] sm:$0xf]
        %v376 = vld [vmem:[%s361 + $0x30] sm:$0xf]
        %v377 = vld [vmem:[%s361 + $0x34] sm:$0xf]
        %v378 = vld [vmem:[%s361 + $0x38] sm:$0xf]
        %v379 = vld [vmem:[%s361 + $0x3c] sm:$0xf]
        %v380 = vld [vmem:[%s361 + $0x40] sm:$0xf]
        %v381 = vld [vmem:[%s361 + $0x44] sm:$0xf]
        %v382 = vld [vmem:[%s361 + $0x48] sm:$0xf]
        %v383 = vld [vmem:[%s361 + $0x4c] sm:$0xf]
        %v384 = vld [vmem:[%s361 + $0x50] sm:$0xf]
        %v385 = vld [vmem:[%s361 + $0x54] sm:$0xf]
        %v386 = vld [vmem:[%s361 + $0x58] sm:$0xf]
        %v387 = vld [vmem:[%s361 + $0x5c] sm:$0xf]
        %v388 = vld [vmem:[%s361 + $0x60] sm:$0xf]
        %v389 = vld [vmem:[%s361 + $0x64] sm:$0xf]
        %v390 = vld [vmem:[%s361 + $0x68] sm:$0xf]
        %v391 = vld [vmem:[%s361 + $0x6c] sm:$0xf]
        %v392 = vld [vmem:[%s361 + $0x70] sm:$0xf]
        %v393 = vld [vmem:[%s361 + $0x74] sm:$0xf]
        %v394 = vld [vmem:[%s361 + $0x78] sm:$0xf]
        %v395 = vld [vmem:[%s361 + $0x7c] sm:$0xf]
        %v396 = vld [vmem:[%s361 + $0x80] sm:$0xf]
        %v397 = vld [vmem:[%s361 + $0x84] sm:$0xf]
        %v398 = vld [vmem:[%s361 + $0x88] sm:$0xf]
        %v399 = vld [vmem:[%s361 + $0x8c] sm:$0xf]
        %v400 = vld [vmem:[%s361 + $0x90] sm:$0xf]
        %v401 = vld [vmem:[%s361 + $0x94] sm:$0xf]
        %v402 = vld [vmem:[%s361 + $0x98] sm:$0xf]
        %v403 = vld [vmem:[%s361 + $0x9c] sm:$0xf]
        %v404 = vld [vmem:[%s361 + $0xa0] sm:$0xf]
        %v405 = vld [vmem:[%s361 + $0xa4] sm:$0xf]
        %v406 = vld [vmem:[%s361 + $0xa8] sm:$0xf]
        %v407 = vld [vmem:[%s361 + $0xac] sm:$0xf]
        %v408 = vld [vmem:[%s361 + $0xb0] sm:$0xf]
        %v409 = vld [vmem:[%s361 + $0xb4] sm:$0xf]
        %v410 = vld [vmem:[%s361 + $0xb8] sm:$0xf]
        %v411 = vld [vmem:[%s361 + $0xbc] sm:$0xf]
        %v412 = vld [vmem:[%s361 + $0xc0] sm:$0xf]
        %v413 = vld [vmem:[%s361 + $0xc4] sm:$0xf]
        %v414 = vld [vmem:[%s361 + $0xc8] sm:$0xf]
        %v415 = vld [vmem:[%s361 + $0xcc] sm:$0xf]
        %v416 = vld [vmem:[%s361 + $0xd0] sm:$0xf]
        %v417 = vld [vmem:[%s361 + $0xd4] sm:$0xf]
        %v418 = vld [vmem:[%s361 + $0xd8] sm:$0xf]
        %v419 = vld [vmem:[%s361 + $0xdc] sm:$0xf]
        %v420 = vld [vmem:[%s361 + $0xe0] sm:$0xf]
        %v421 = vld [vmem:[%s361 + $0xe4] sm:$0xf]
        %v422 = vld [vmem:[%s361 + $0xe8] sm:$0xf]
        %v423 = vld [vmem:[%s361 + $0xec] sm:$0xf]
        %v424 = vld [vmem:[%s361 + $0xf0] sm:$0xf]
        %v425 = vld [vmem:[%s361 + $0xf4] sm:$0xf]
        %v426 = vld [vmem:[%s361 + $0xf8] sm:$0xf]
        %v427 = vld [vmem:[%s361 + $0xfc] sm:$0xf]
        %v428 = vld [vmem:[%s361 + $0x100] sm:$0xf]
        %v429 = vld [vmem:[%s361 + $0x104] sm:$0xf]
        %v430 = vld [vmem:[%s361 + $0x108] sm:$0xf]
        %v431 = vld [vmem:[%s361 + $0x10c] sm:$0xf]
        %v432 = vld [vmem:[%s361 + $0x110] sm:$0xf]
        %v433 = vld [vmem:[%s361 + $0x114] sm:$0xf]
        %v434 = vld [vmem:[%s361 + $0x118] sm:$0xf]
        %v435 = vld [vmem:[%s361 + $0x11c] sm:$0xf]
        %v436 = vld [vmem:[%s361 + $0x120] sm:$0xf]
        %v437 = vld [vmem:[%s361 + $0x124] sm:$0xf]
        %v438 = vld [vmem:[%s361 + $0x128] sm:$0xf]
        %v439 = vld [vmem:[%s361 + $0x12c] sm:$0xf]
        %v440 = vld [vmem:[%s361 + $0x130] sm:$0xf]
        %v441 = vld [vmem:[%s361 + $0x134] sm:$0xf]
        %v442 = vld [vmem:[%s361 + $0x138] sm:$0xf]
        %v443 = vld [vmem:[%s361 + $0x13c] sm:$0xf]
        %v444 = vld [vmem:[%s361 + $0x140] sm:$0xf]
        %v445 = vld [vmem:[%s361 + $0x144] sm:$0xf]
        %v446 = vld [vmem:[%s361 + $0x148] sm:$0xf]
        %v447 = vld [vmem:[%s361 + $0x14c] sm:$0xf]
        %v448 = vld [vmem:[%s361 + $0x150] sm:$0xf]
        %v449 = vld [vmem:[%s361 + $0x154] sm:$0xf]
        %v450 = vld [vmem:[%s361 + $0x158] sm:$0xf]
        %v451 = vld [vmem:[%s361 + $0x15c] sm:$0xf]
        %v452 = vld [vmem:[%s361 + $0x160] sm:$0xf]
        %v453 = vld [vmem:[%s361 + $0x164] sm:$0xf]
        %v454 = vld [vmem:[%s361 + $0x168] sm:$0xf]
        %v455 = vld [vmem:[%s361 + $0x16c] sm:$0xf]
        %v456 = vld [vmem:[%s361 + $0x170] sm:$0xf]
        %v457 = vld [vmem:[%s361 + $0x174] sm:$0xf]
        %v458 = vld [vmem:[%s361 + $0x178] sm:$0xf]
        %v459 = vld [vmem:[%s361 + $0x17c] sm:$0xf]
        %v460 = vld [vmem:[%s361 + $0x180] sm:$0xf]
        %v461 = vld [vmem:[%s361 + $0x184] sm:$0xf]
        %v462 = vld [vmem:[%s361 + $0x188] sm:$0xf]
        %v463 = vld [vmem:[%s361 + $0x18c] sm:$0xf]
        %v464 = vld [vmem:[%s361 + $0x190] sm:$0xf]
        %v465 = vld [vmem:[%s361 + $0x194] sm:$0xf]
        %v466 = vld [vmem:[%s361 + $0x198] sm:$0xf]
        %v467 = vld [vmem:[%s361 + $0x19c] sm:$0xf]
        %v468 = vld [vmem:[%s361 + $0x1a0] sm:$0xf]
        %v469 = vld [vmem:[%s361 + $0x1a4] sm:$0xf]
        %v470 = vld [vmem:[%s361 + $0x1a8] sm:$0xf]
        %v471 = vld [vmem:[%s361 + $0x1ac] sm:$0xf]
        %v472 = vld [vmem:[%s361 + $0x1b0] sm:$0xf]
        %v473 = vld [vmem:[%s361 + $0x1b4] sm:$0xf]
        %v474 = vld [vmem:[%s361 + $0x1b8] sm:$0xf]
        %v475 = vld [vmem:[%s361 + $0x1bc] sm:$0xf]
        %v476 = vld [vmem:[%s361 + $0x1c0] sm:$0xf]
        %v477 = vld [vmem:[%s361 + $0x1c4] sm:$0xf]
        %v478 = vld [vmem:[%s361 + $0x1c8] sm:$0xf]
        %v479 = vld [vmem:[%s361 + $0x1cc] sm:$0xf]
        %v480 = vld [vmem:[%s361 + $0x1d0] sm:$0xf]
        %v481 = vld [vmem:[%s361 + $0x1d4] sm:$0xf]
        %v482 = vld [vmem:[%s361 + $0x1d8] sm:$0xf]
        %v483 = vld [vmem:[%s361 + $0x1dc] sm:$0xf]
        %v484 = vld [vmem:[%s361 + $0x1e0] sm:$0xf]
        %v485 = vld [vmem:[%s361 + $0x1e4] sm:$0xf]
        %v486 = vld [vmem:[%s361 + $0x1e8] sm:$0xf]
        %v487 = vld [vmem:[%s361 + $0x1ec] sm:$0xf]
        %v488 = vld [vmem:[%s361 + $0x1f0] sm:$0xf]
        %v489 = vld [vmem:[%s361 + $0x1f4] sm:$0xf]
        %v490 = vld [vmem:[%s361 + $0x1f8] sm:$0xf]
        %v491 = vld [vmem:[%s361 + $0x1fc] sm:$0xf]
        %v492 = vld [vmem:[%s1] sm:$0xf]
        %v493 = vld [vmem:[%s1 + $0x4] sm:$0xf]
        %v494 = vld [vmem:[%s1 + $0x8] sm:$0xf]
        %v495 = vld [vmem:[%s1 + $0xc] sm:$0xf]
        %v496 = vld [vmem:[%s3] sm:$0x1]
        %v498 = vlaneseq
        %v499 = vshrl.u32 %v498, 7
        %v500 = vsub.s32 0, %v499
        %v501 = vrot.slane %v496, %v500
        %v631 = vunpack.c.l.b16 %v364
        %v632 = vunpack.c.l.b16 %v365
        %v633 = vunpack.c.l.b16 %v366
        %v634 = vunpack.c.l.b16 %v367
        %v635 = vunpack.c.l.b16 %v368
        %v636 = vunpack.c.l.b16 %v369
        %v637 = vunpack.c.l.b16 %v370
        %v638 = vunpack.c.l.b16 %v371
        %v639 = vunpack.c.l.b16 %v372
        %v640 = vunpack.c.l.b16 %v373
        %v641 = vunpack.c.l.b16 %v374
        %v642 = vunpack.c.l.b16 %v375
        %v643 = vunpack.c.l.b16 %v376
        %v644 = vunpack.c.l.b16 %v377
        %v645 = vunpack.c.l.b16 %v378
        %v646 = vunpack.c.l.b16 %v379
        %v647 = vunpack.c.l.b16 %v380
        %v648 = vunpack.c.l.b16 %v381
        %v649 = vunpack.c.l.b16 %v382
        %v650 = vunpack.c.l.b16 %v383
        %v651 = vunpack.c.l.b16 %v384
        %v652 = vunpack.c.l.b16 %v385
        %v653 = vunpack.c.l.b16 %v386
        %v654 = vunpack.c.l.b16 %v387
        %v655 = vunpack.c.l.b16 %v388
        %v656 = vunpack.c.l.b16 %v389
        %v657 = vunpack.c.l.b16 %v390
        %v658 = vunpack.c.l.b16 %v391
        %v659 = vunpack.c.l.b16 %v392
        %v660 = vunpack.c.l.b16 %v393
        %v661 = vunpack.c.l.b16 %v394
        %v662 = vunpack.c.l.b16 %v395
        %v663 = vunpack.c.l.b16 %v396
        %v664 = vunpack.c.l.b16 %v397
        %v665 = vunpack.c.l.b16 %v398
        %v666 = vunpack.c.l.b16 %v399
        %v667 = vunpack.c.l.b16 %v400
        %v668 = vunpack.c.l.b16 %v401
        %v669 = vunpack.c.l.b16 %v402
        %v670 = vunpack.c.l.b16 %v403
        %v671 = vunpack.c.l.b16 %v404
        %v672 = vunpack.c.l.b16 %v405
        %v673 = vunpack.c.l.b16 %v406
        %v674 = vunpack.c.l.b16 %v407
        %v675 = vunpack.c.l.b16 %v408
        %v676 = vunpack.c.l.b16 %v409
        %v677 = vunpack.c.l.b16 %v410
        %v678 = vunpack.c.l.b16 %v411
        %v679 = vunpack.c.l.b16 %v412
        %v680 = vunpack.c.l.b16 %v413
        %v681 = vunpack.c.l.b16 %v414
        %v682 = vunpack.c.l.b16 %v415
        %v683 = vunpack.c.l.b16 %v416
        %v684 = vunpack.c.l.b16 %v417
        %v685 = vunpack.c.l.b16 %v418
        %v686 = vunpack.c.l.b16 %v419
        %v687 = vunpack.c.l.b16 %v420
        %v688 = vunpack.c.l.b16 %v421
        %v689 = vunpack.c.l.b16 %v422
        %v690 = vunpack.c.l.b16 %v423
        %v691 = vunpack.c.l.b16 %v424
        %v692 = vunpack.c.l.b16 %v425
        %v693 = vunpack.c.l.b16 %v426
        %v694 = vunpack.c.l.b16 %v427
        %v695 = vunpack.c.l.b16 %v428
        %v696 = vunpack.c.l.b16 %v429
        %v697 = vunpack.c.l.b16 %v430
        %v698 = vunpack.c.l.b16 %v431
        %v699 = vunpack.c.l.b16 %v432
        %v700 = vunpack.c.l.b16 %v433
        %v701 = vunpack.c.l.b16 %v434
        %v702 = vunpack.c.l.b16 %v435
        %v703 = vunpack.c.l.b16 %v436
        %v704 = vunpack.c.l.b16 %v437
        %v705 = vunpack.c.l.b16 %v438
        %v706 = vunpack.c.l.b16 %v439
        %v707 = vunpack.c.l.b16 %v440
        %v708 = vunpack.c.l.b16 %v441
        %v709 = vunpack.c.l.b16 %v442
        %v710 = vunpack.c.l.b16 %v443
        %v711 = vunpack.c.l.b16 %v444
        %v712 = vunpack.c.l.b16 %v445
        %v713 = vunpack.c.l.b16 %v446
        %v714 = vunpack.c.l.b16 %v447
        %v715 = vunpack.c.l.b16 %v448
        %v716 = vunpack.c.l.b16 %v449
        %v717 = vunpack.c.l.b16 %v450
        %v718 = vunpack.c.l.b16 %v451
        %v719 = vunpack.c.l.b16 %v452
        %v720 = vunpack.c.l.b16 %v453
        %v721 = vunpack.c.l.b16 %v454
        %v722 = vunpack.c.l.b16 %v455
        %v723 = vunpack.c.l.b16 %v456
        %v724 = vunpack.c.l.b16 %v457
        %v725 = vunpack.c.l.b16 %v458
        %v726 = vunpack.c.l.b16 %v459
        %v727 = vunpack.c.l.b16 %v460
        %v728 = vunpack.c.l.b16 %v461
        %v729 = vunpack.c.l.b16 %v462
        %v730 = vunpack.c.l.b16 %v463
        %v731 = vunpack.c.l.b16 %v464
        %v732 = vunpack.c.l.b16 %v465
        %v733 = vunpack.c.l.b16 %v466
        %v734 = vunpack.c.l.b16 %v467
        %v735 = vunpack.c.l.b16 %v468
        %v736 = vunpack.c.l.b16 %v469
        %v737 = vunpack.c.l.b16 %v470
        %v738 = vunpack.c.l.b16 %v471
        %v739 = vunpack.c.l.b16 %v472
        %v740 = vunpack.c.l.b16 %v473
        %v741 = vunpack.c.l.b16 %v474
        %v742 = vunpack.c.l.b16 %v475
        %v743 = vunpack.c.l.b16 %v476
        %v744 = vunpack.c.l.b16 %v477
        %v745 = vunpack.c.l.b16 %v478
        %v746 = vunpack.c.l.b16 %v479
        %v747 = vunpack.c.l.b16 %v480
        %v748 = vunpack.c.l.b16 %v481
        %v749 = vunpack.c.l.b16 %v482
        %v750 = vunpack.c.l.b16 %v483
        %v751 = vunpack.c.l.b16 %v484
        %v752 = vunpack.c.l.b16 %v485
        %v753 = vunpack.c.l.b16 %v486
        %v754 = vunpack.c.l.b16 %v487
        %v755 = vunpack.c.l.b16 %v488
        %v756 = vunpack.c.l.b16 %v489
        %v757 = vunpack.c.l.b16 %v490
        %v758 = vunpack.c.l.b16 %v491
        %v759 = vpack.c.b16 %v632, %v631
        %v760 = vpack.c.b16 %v634, %v633
        %v761 = vpack.c.b16 %v636, %v635
        %v762 = vpack.c.b16 %v638, %v637
        %v763 = vpack.c.b16 %v640, %v639
        %v764 = vpack.c.b16 %v642, %v641
        %v765 = vpack.c.b16 %v644, %v643
        %v766 = vpack.c.b16 %v646, %v645
        %v767 = vpack.c.b16 %v648, %v647
        %v768 = vpack.c.b16 %v650, %v649
        %v769 = vpack.c.b16 %v652, %v651
        %v770 = vpack.c.b16 %v654, %v653
        %v771 = vpack.c.b16 %v656, %v655
        %v772 = vpack.c.b16 %v658, %v657
        %v773 = vpack.c.b16 %v660, %v659
        %v774 = vpack.c.b16 %v662, %v661
        %v775 = vpack.c.b16 %v664, %v663
        %v776 = vpack.c.b16 %v666, %v665
        %v777 = vpack.c.b16 %v668, %v667
        %v778 = vpack.c.b16 %v670, %v669
        %v779 = vpack.c.b16 %v672, %v671
        %v780 = vpack.c.b16 %v674, %v673
        %v781 = vpack.c.b16 %v676, %v675
        %v782 = vpack.c.b16 %v678, %v677
        %v783 = vpack.c.b16 %v680, %v679
        %v784 = vpack.c.b16 %v682, %v681
        %v785 = vpack.c.b16 %v684, %v683
        %v786 = vpack.c.b16 %v686, %v685
        %v787 = vpack.c.b16 %v688, %v687
        %v788 = vpack.c.b16 %v690, %v689
        %v789 = vpack.c.b16 %v692, %v691
        %v790 = vpack.c.b16 %v694, %v693
        %v791 = vpack.c.b16 %v696, %v695
        %v792 = vpack.c.b16 %v698, %v697
        %v793 = vpack.c.b16 %v700, %v699
        %v794 = vpack.c.b16 %v702, %v701
        %v795 = vpack.c.b16 %v704, %v703
        %v796 = vpack.c.b16 %v706, %v705
        %v797 = vpack.c.b16 %v708, %v707
        %v798 = vpack.c.b16 %v710, %v709
        %v799 = vpack.c.b16 %v712, %v711
        %v800 = vpack.c.b16 %v714, %v713
        %v801 = vpack.c.b16 %v716, %v715
        %v802 = vpack.c.b16 %v718, %v717
        %v803 = vpack.c.b16 %v720, %v719
        %v804 = vpack.c.b16 %v722, %v721
        %v805 = vpack.c.b16 %v724, %v723
        %v806 = vpack.c.b16 %v726, %v725
        %v807 = vpack.c.b16 %v728, %v727
        %v808 = vpack.c.b16 %v730, %v729
        %v809 = vpack.c.b16 %v732, %v731
        %v810 = vpack.c.b16 %v734, %v733
        %v811 = vpack.c.b16 %v736, %v735
        %v812 = vpack.c.b16 %v738, %v737
        %v813 = vpack.c.b16 %v740, %v739
        %v814 = vpack.c.b16 %v742, %v741
        %v815 = vpack.c.b16 %v744, %v743
        %v816 = vpack.c.b16 %v746, %v745
        %v817 = vpack.c.b16 %v748, %v747
        %v818 = vpack.c.b16 %v750, %v749
        %v819 = vpack.c.b16 %v752, %v751
        %v820 = vpack.c.b16 %v754, %v753
        %v821 = vpack.c.b16 %v756, %v755
        %v822 = vpack.c.b16 %v758, %v757
        %v827 = vunpack.c.l.b16 %v492
        %v828 = vunpack.c.l.b16 %v493
        %v829 = vunpack.c.l.b16 %v494
        %v830 = vunpack.c.l.b16 %v495
        %v831 = vpack.c.b16 %v828, %v827
        %v832 = vpack.c.b16 %v830, %v829
        %vm835 = vcmask 261120
        %v837 = vsel %vm835, %v759, 0
        %v840 = vsel %vm835, %v760, 0
        %v843 = vsel %vm835, %v761, 0
        %v846 = vsel %vm835, %v762, 0
        %v849 = vsel %vm835, %v763, 0
        %v852 = vsel %vm835, %v764, 0
        %v855 = vsel %vm835, %v765, 0
        %v858 = vsel %vm835, %v766, 0
        %v861 = vsel %vm835, %v767, 0
        %v864 = vsel %vm835, %v768, 0
        %v867 = vsel %vm835, %v769, 0
        %v870 = vsel %vm835, %v770, 0
        %v873 = vsel %vm835, %v771, 0
        %v876 = vsel %vm835, %v772, 0
        %v879 = vsel %vm835, %v773, 0
        %v882 = vsel %vm835, %v774, 0
        %v885 = vsel %vm835, %v775, 0
        %v888 = vsel %vm835, %v776, 0
        %v891 = vsel %vm835, %v777, 0
        %v894 = vsel %vm835, %v778, 0
        %v897 = vsel %vm835, %v779, 0
        %v900 = vsel %vm835, %v780, 0
        %v903 = vsel %vm835, %v781, 0
        %v906 = vsel %vm835, %v782, 0
        %v909 = vsel %vm835, %v783, 0
        %v912 = vsel %vm835, %v784, 0
        %v915 = vsel %vm835, %v785, 0
        %v918 = vsel %vm835, %v786, 0
        %v921 = vsel %vm835, %v787, 0
        %v924 = vsel %vm835, %v788, 0
        %v927 = vsel %vm835, %v789, 0
        %v930 = vsel %vm835, %v790, 0
        %v933 = vsel %vm835, %v791, 0
        %v936 = vsel %vm835, %v792, 0
        %v939 = vsel %vm835, %v793, 0
        %v942 = vsel %vm835, %v794, 0
        %v945 = vsel %vm835, %v795, 0
        %v948 = vsel %vm835, %v796, 0
        %v951 = vsel %vm835, %v797, 0
        %v954 = vsel %vm835, %v798, 0
        %v957 = vsel %vm835, %v799, 0
        %v960 = vsel %vm835, %v800, 0
        %v963 = vsel %vm835, %v801, 0
        %v966 = vsel %vm835, %v802, 0
        %v969 = vsel %vm835, %v803, 0
        %v972 = vsel %vm835, %v804, 0
        %v975 = vsel %vm835, %v805, 0
        %v978 = vsel %vm835, %v806, 0
        %v981 = vsel %vm835, %v807, 0
        %v984 = vsel %vm835, %v808, 0
        %v987 = vsel %vm835, %v809, 0
        %v990 = vsel %vm835, %v810, 0
        %v993 = vsel %vm835, %v811, 0
        %v996 = vsel %vm835, %v812, 0
        %v999 = vsel %vm835, %v813, 0
        %v1002 = vsel %vm835, %v814, 0
        %v1005 = vsel %vm835, %v815, 0
        %v1008 = vsel %vm835, %v816, 0
        %v1011 = vsel %vm835, %v817, 0
        %v1014 = vsel %vm835, %v818, 0
        %v1017 = vsel %vm835, %v819, 0
        %v1020 = vsel %vm835, %v820, 0
        %v1023 = vsel %vm835, %v821, 0
        %v1026 = vsel %vm835, %v822, 0
        %1028 = vmatprep.subr.bf16.mxu0 0
        %1029 = vmatpush1.bf16.msra.mxu0 0
        %1030 = vmatprep.subr.bf16.mxu0 0
        %1031 = vmatpush1.bf16.msra.mxu0 0
        %1032 = vmatprep.subr.bf16.mxu0 0
        %1033 = vmatpush1.bf16.msra.mxu0 0
        %1034 = vmatprep.subr.bf16.mxu0 0
        %1035 = vmatpush1.bf16.msra.mxu0 0
        %1036 = vmatprep.subr.bf16.mxu0 0
        %1037 = vmatpush1.bf16.msra.mxu0 0
        %1038 = vmatprep.subr.bf16.mxu0 0
        %1039 = vmatpush1.bf16.msra.mxu0 0
        %1040 = vmatprep.subr.bf16.mxu0 0
        %1041 = vmatpush1.bf16.msra.mxu0 %v832
        %1042 = vmatprep.subr.bf16.mxu0 0
        %1043 = vmatpush1.bf16.msra.mxu0 %v831
        %1044 = vmatprep.subr.bf16.mxu0 0
        %1045 = vmatpush2.bf16.msra.mxu0 0
        %1046 = vmatprep.subr.bf16.mxu0 0
        %1047 = vmatpush2.bf16.msra.mxu0 0
        %1048 = vmatprep.subr.bf16.mxu0 0
        %1049 = vmatpush2.bf16.msra.mxu0 0
        %1050 = vmatprep.subr.bf16.mxu0 0
        %1051 = vmatpush2.bf16.msra.mxu0 0
        %1052 = vmatprep.subr.bf16.mxu0 0
        %1053 = vmatpush2.bf16.msra.mxu0 0
        %1054 = vmatprep.subr.bf16.mxu0 0
        %1055 = vmatpush2.bf16.msra.mxu0 0
        %1056 = vmatprep.subr.bf16.mxu0 0
        %1057 = vmatpush2.bf16.msra.mxu0 0
        %1058 = vmatprep.subr.bf16.mxu0 0
        %1059 = vmatpush2.bf16.msra.mxu0 0
        %1060 = vmatprep.mubr.bf16.mxu0 0
        %1061 = vmatmul.mubr.bf16.gmra.mxu0 %v837
        %v1062 = vpop.f32.mrf.mxu0
        %v1063 = vadd.f32 %v501, %v1062
        %v1064 = vpop.f32.mrf.mxu0
        %v1065 = vpop.f32.mrf.mxu0
        %v1066 = vadd.f32 %v501, %v1065
        %v1067 = vpop.f32.mrf.mxu0
        %1068 = vmatprep.mubr.bf16.mxu0 0
        %1069 = vmatmul.mubr.bf16.gmra.mxu0 %v840
        %v1070 = vpop.f32.mrf.mxu0
        %v1071 = vadd.f32 %v501, %v1070
        %v1072 = vpop.f32.mrf.mxu0
        %v1073 = vpop.f32.mrf.mxu0
        %v1074 = vadd.f32 %v501, %v1073
        %v1075 = vpop.f32.mrf.mxu0
        %1076 = vmatprep.mubr.bf16.mxu0 0
        %1077 = vmatmul.mubr.bf16.gmra.mxu0 %v843
        %v1078 = vpop.f32.mrf.mxu0
        %v1079 = vadd.f32 %v501, %v1078
        %v1080 = vpop.f32.mrf.mxu0
        %v1081 = vpop.f32.mrf.mxu0
        %v1082 = vadd.f32 %v501, %v1081
        %v1083 = vpop.f32.mrf.mxu0
        %1084 = vmatprep.mubr.bf16.mxu0 0
        %1085 = vmatmul.mubr.bf16.gmra.mxu0 %v846
        %v1086 = vpop.f32.mrf.mxu0
        %v1087 = vadd.f32 %v501, %v1086
        %v1088 = vpop.f32.mrf.mxu0
        %v1089 = vpop.f32.mrf.mxu0
        %v1090 = vadd.f32 %v501, %v1089
        %v1091 = vpop.f32.mrf.mxu0
        %1092 = vmatprep.mubr.bf16.mxu0 0
        %1093 = vmatmul.mubr.bf16.gmra.mxu0 %v849
        %v1094 = vpop.f32.mrf.mxu0
        %v1095 = vadd.f32 %v501, %v1094
        %v1096 = vpop.f32.mrf.mxu0
        %v1097 = vpop.f32.mrf.mxu0
        %v1098 = vadd.f32 %v501, %v1097
        %v1099 = vpop.f32.mrf.mxu0
        %1100 = vmatprep.mubr.bf16.mxu0 0
        %1101 = vmatmul.mubr.bf16.gmra.mxu0 %v852
        %v1102 = vpop.f32.mrf.mxu0
        %v1103 = vadd.f32 %v501, %v1102
        %v1104 = vpop.f32.mrf.mxu0
        %v1105 = vpop.f32.mrf.mxu0
        %v1106 = vadd.f32 %v501, %v1105
        %v1107 = vpop.f32.mrf.mxu0
        %1108 = vmatprep.mubr.bf16.mxu0 0
        %1109 = vmatmul.mubr.bf16.gmra.mxu0 %v855
        %v1110 = vpop.f32.mrf.mxu0
        %v1111 = vadd.f32 %v501, %v1110
        %v1112 = vpop.f32.mrf.mxu0
        %v1113 = vpop.f32.mrf.mxu0
        %v1114 = vadd.f32 %v501, %v1113
        %v1115 = vpop.f32.mrf.mxu0
        %1116 = vmatprep.mubr.bf16.mxu0 0
        %1117 = vmatmul.mubr.bf16.gmra.mxu0 %v858
        %v1118 = vpop.f32.mrf.mxu0
        %v1119 = vadd.f32 %v501, %v1118
        %v1120 = vpop.f32.mrf.mxu0
        %v1121 = vpop.f32.mrf.mxu0
        %v1122 = vadd.f32 %v501, %v1121
        %v1123 = vpop.f32.mrf.mxu0
        %1124 = vmatprep.mubr.bf16.mxu0 0
        %1125 = vmatmul.mubr.bf16.gmra.mxu0 %v861
        %v1126 = vpop.f32.mrf.mxu0
        %v1127 = vadd.f32 %v501, %v1126
        %v1128 = vpop.f32.mrf.mxu0
        %v1129 = vpop.f32.mrf.mxu0
        %v1130 = vadd.f32 %v501, %v1129
        %v1131 = vpop.f32.mrf.mxu0
        %1132 = vmatprep.mubr.bf16.mxu0 0
        %1133 = vmatmul.mubr.bf16.gmra.mxu0 %v864
        %v1134 = vpop.f32.mrf.mxu0
        %v1135 = vadd.f32 %v501, %v1134
        %v1136 = vpop.f32.mrf.mxu0
        %v1137 = vpop.f32.mrf.mxu0
        %v1138 = vadd.f32 %v501, %v1137
        %v1139 = vpop.f32.mrf.mxu0
        %1140 = vmatprep.mubr.bf16.mxu0 0
        %1141 = vmatmul.mubr.bf16.gmra.mxu0 %v867
        %v1142 = vpop.f32.mrf.mxu0
        %v1143 = vadd.f32 %v501, %v1142
        %v1144 = vpop.f32.mrf.mxu0
        %v1145 = vpop.f32.mrf.mxu0
        %v1146 = vadd.f32 %v501, %v1145
        %v1147 = vpop.f32.mrf.mxu0
        %1148 = vmatprep.mubr.bf16.mxu0 0
        %1149 = vmatmul.mubr.bf16.gmra.mxu0 %v870
        %v1150 = vpop.f32.mrf.mxu0
        %v1151 = vadd.f32 %v501, %v1150
        %v1152 = vpop.f32.mrf.mxu0
        %v1153 = vpop.f32.mrf.mxu0
        %v1154 = vadd.f32 %v501, %v1153
        %v1155 = vpop.f32.mrf.mxu0
        %1156 = vmatprep.mubr.bf16.mxu0 0
        %1157 = vmatmul.mubr.bf16.gmra.mxu0 %v873
        %v1158 = vpop.f32.mrf.mxu0
        %v1159 = vadd.f32 %v501, %v1158
        %v1160 = vpop.f32.mrf.mxu0
        %v1161 = vpop.f32.mrf.mxu0
        %v1162 = vadd.f32 %v501, %v1161
        %v1163 = vpop.f32.mrf.mxu0
        %1164 = vmatprep.mubr.bf16.mxu0 0
        %1165 = vmatmul.mubr.bf16.gmra.mxu0 %v876
        %v1166 = vpop.f32.mrf.mxu0
        %v1167 = vadd.f32 %v501, %v1166
        %v1168 = vpop.f32.mrf.mxu0
        %v1169 = vpop.f32.mrf.mxu0
        %v1170 = vadd.f32 %v501, %v1169
        %v1171 = vpop.f32.mrf.mxu0
        %1172 = vmatprep.mubr.bf16.mxu0 0
        %1173 = vmatmul.mubr.bf16.gmra.mxu0 %v879
        %v1174 = vpop.f32.mrf.mxu0
        %v1175 = vadd.f32 %v501, %v1174
        %v1176 = vpop.f32.mrf.mxu0
        %v1177 = vpop.f32.mrf.mxu0
        %v1178 = vadd.f32 %v501, %v1177
        %v1179 = vpop.f32.mrf.mxu0
        %1180 = vmatprep.mubr.bf16.mxu0 0
        %1181 = vmatmul.mubr.bf16.gmra.mxu0 %v882
        %v1182 = vpop.f32.mrf.mxu0
        %v1183 = vadd.f32 %v501, %v1182
        %v1184 = vpop.f32.mrf.mxu0
        %v1185 = vpop.f32.mrf.mxu0
        %v1186 = vadd.f32 %v501, %v1185
        %v1187 = vpop.f32.mrf.mxu0
        %1188 = vmatprep.mubr.bf16.mxu0 0
        %1189 = vmatmul.mubr.bf16.gmra.mxu0 %v885
        %v1190 = vpop.f32.mrf.mxu0
        %v1191 = vadd.f32 %v501, %v1190
        %v1192 = vpop.f32.mrf.mxu0
        %v1193 = vpop.f32.mrf.mxu0
        %v1194 = vadd.f32 %v501, %v1193
        %v1195 = vpop.f32.mrf.mxu0
        %1196 = vmatprep.mubr.bf16.mxu0 0
        %1197 = vmatmul.mubr.bf16.gmra.mxu0 %v888
        %v1198 = vpop.f32.mrf.mxu0
        %v1199 = vadd.f32 %v501, %v1198
        %v1200 = vpop.f32.mrf.mxu0
        %v1201 = vpop.f32.mrf.mxu0
        %v1202 = vadd.f32 %v501, %v1201
        %v1203 = vpop.f32.mrf.mxu0
        %1204 = vmatprep.mubr.bf16.mxu0 0
        %1205 = vmatmul.mubr.bf16.gmra.mxu0 %v891
        %v1206 = vpop.f32.mrf.mxu0
        %v1207 = vadd.f32 %v501, %v1206
        %v1208 = vpop.f32.mrf.mxu0
        %v1209 = vpop.f32.mrf.mxu0
        %v1210 = vadd.f32 %v501, %v1209
        %v1211 = vpop.f32.mrf.mxu0
        %1212 = vmatprep.mubr.bf16.mxu0 0
        %1213 = vmatmul.mubr.bf16.gmra.mxu0 %v894
        %v1214 = vpop.f32.mrf.mxu0
        %v1215 = vadd.f32 %v501, %v1214
        %v1216 = vpop.f32.mrf.mxu0
        %v1217 = vpop.f32.mrf.mxu0
        %v1218 = vadd.f32 %v501, %v1217
        %v1219 = vpop.f32.mrf.mxu0
        %1220 = vmatprep.mubr.bf16.mxu0 0
        %1221 = vmatmul.mubr.bf16.gmra.mxu0 %v897
        %v1222 = vpop.f32.mrf.mxu0
        %v1223 = vadd.f32 %v501, %v1222
        %v1224 = vpop.f32.mrf.mxu0
        %v1225 = vpop.f32.mrf.mxu0
        %v1226 = vadd.f32 %v501, %v1225
        %v1227 = vpop.f32.mrf.mxu0
        %1228 = vmatprep.mubr.bf16.mxu0 0
        %1229 = vmatmul.mubr.bf16.gmra.mxu0 %v900
        %v1230 = vpop.f32.mrf.mxu0
        %v1231 = vadd.f32 %v501, %v1230
        %v1232 = vpop.f32.mrf.mxu0
        %v1233 = vpop.f32.mrf.mxu0
        %v1234 = vadd.f32 %v501, %v1233
        %v1235 = vpop.f32.mrf.mxu0
        %1236 = vmatprep.mubr.bf16.mxu0 0
        %1237 = vmatmul.mubr.bf16.gmra.mxu0 %v903
        %v1238 = vpop.f32.mrf.mxu0
        %v1239 = vadd.f32 %v501, %v1238
        %v1240 = vpop.f32.mrf.mxu0
        %v1241 = vpop.f32.mrf.mxu0
        %v1242 = vadd.f32 %v501, %v1241
        %v1243 = vpop.f32.mrf.mxu0
        %1244 = vmatprep.mubr.bf16.mxu0 0
        %1245 = vmatmul.mubr.bf16.gmra.mxu0 %v906
        %v1246 = vpop.f32.mrf.mxu0
        %v1247 = vadd.f32 %v501, %v1246
        %v1248 = vpop.f32.mrf.mxu0
        %v1249 = vpop.f32.mrf.mxu0
        %v1250 = vadd.f32 %v501, %v1249
        %v1251 = vpop.f32.mrf.mxu0
        %1252 = vmatprep.mubr.bf16.mxu0 0
        %1253 = vmatmul.mubr.bf16.gmra.mxu0 %v909
        %v1254 = vpop.f32.mrf.mxu0
        %v1255 = vadd.f32 %v501, %v1254
        %v1256 = vpop.f32.mrf.mxu0
        %v1257 = vpop.f32.mrf.mxu0
        %v1258 = vadd.f32 %v501, %v1257
        %v1259 = vpop.f32.mrf.mxu0
        %1260 = vmatprep.mubr.bf16.mxu0 0
        %1261 = vmatmul.mubr.bf16.gmra.mxu0 %v912
        %v1262 = vpop.f32.mrf.mxu0
        %v1263 = vadd.f32 %v501, %v1262
        %v1264 = vpop.f32.mrf.mxu0
        %v1265 = vpop.f32.mrf.mxu0
        %v1266 = vadd.f32 %v501, %v1265
        %v1267 = vpop.f32.mrf.mxu0
        %1268 = vmatprep.mubr.bf16.mxu0 0
        %1269 = vmatmul.mubr.bf16.gmra.mxu0 %v915
        %v1270 = vpop.f32.mrf.mxu0
        %v1271 = vadd.f32 %v501, %v1270
        %v1272 = vpop.f32.mrf.mxu0
        %v1273 = vpop.f32.mrf.mxu0
        %v1274 = vadd.f32 %v501, %v1273
        %v1275 = vpop.f32.mrf.mxu0
        %1276 = vmatprep.mubr.bf16.mxu0 0
        %1277 = vmatmul.mubr.bf16.gmra.mxu0 %v918
        %v1278 = vpop.f32.mrf.mxu0
        %v1279 = vadd.f32 %v501, %v1278
        %v1280 = vpop.f32.mrf.mxu0
        %v1281 = vpop.f32.mrf.mxu0
        %v1282 = vadd.f32 %v501, %v1281
        %v1283 = vpop.f32.mrf.mxu0
        %1284 = vmatprep.mubr.bf16.mxu0 0
        %1285 = vmatmul.mubr.bf16.gmra.mxu0 %v921
        %v1286 = vpop.f32.mrf.mxu0
        %v1287 = vadd.f32 %v501, %v1286
        %v1288 = vpop.f32.mrf.mxu0
        %v1289 = vpop.f32.mrf.mxu0
        %v1290 = vadd.f32 %v501, %v1289
        %v1291 = vpop.f32.mrf.mxu0
        %1292 = vmatprep.mubr.bf16.mxu0 0
        %1293 = vmatmul.mubr.bf16.gmra.mxu0 %v924
        %v1294 = vpop.f32.mrf.mxu0
        %v1295 = vadd.f32 %v501, %v1294
        %v1296 = vpop.f32.mrf.mxu0
        %v1297 = vpop.f32.mrf.mxu0
        %v1298 = vadd.f32 %v501, %v1297
        %v1299 = vpop.f32.mrf.mxu0
        %1300 = vmatprep.mubr.bf16.mxu0 0
        %1301 = vmatmul.mubr.bf16.gmra.mxu0 %v927
        %v1302 = vpop.f32.mrf.mxu0
        %v1303 = vadd.f32 %v501, %v1302
        %v1304 = vpop.f32.mrf.mxu0
        %v1305 = vpop.f32.mrf.mxu0
        %v1306 = vadd.f32 %v501, %v1305
        %v1307 = vpop.f32.mrf.mxu0
        %1308 = vmatprep.mubr.bf16.mxu0 0
        %1309 = vmatmul.mubr.bf16.gmra.mxu0 %v930
        %v1310 = vpop.f32.mrf.mxu0
        %v1311 = vadd.f32 %v501, %v1310
        %v1312 = vpop.f32.mrf.mxu0
        %v1313 = vpop.f32.mrf.mxu0
        %v1314 = vadd.f32 %v501, %v1313
        %v1315 = vpop.f32.mrf.mxu0
        %1316 = vmatprep.mubr.bf16.mxu0 0
        %1317 = vmatmul.mubr.bf16.gmra.mxu0 %v933
        %v1318 = vpop.f32.mrf.mxu0
        %v1319 = vadd.f32 %v501, %v1318
        %v1320 = vpop.f32.mrf.mxu0
        %v1321 = vpop.f32.mrf.mxu0
        %v1322 = vadd.f32 %v501, %v1321
        %v1323 = vpop.f32.mrf.mxu0
        %1324 = vmatprep.mubr.bf16.mxu0 0
        %1325 = vmatmul.mubr.bf16.gmra.mxu0 %v936
        %v1326 = vpop.f32.mrf.mxu0
        %v1327 = vadd.f32 %v501, %v1326
        %v1328 = vpop.f32.mrf.mxu0
        %v1329 = vpop.f32.mrf.mxu0
        %v1330 = vadd.f32 %v501, %v1329
        %v1331 = vpop.f32.mrf.mxu0
        %1332 = vmatprep.mubr.bf16.mxu0 0
        %1333 = vmatmul.mubr.bf16.gmra.mxu0 %v939
        %v1334 = vpop.f32.mrf.mxu0
        %v1335 = vadd.f32 %v501, %v1334
        %v1336 = vpop.f32.mrf.mxu0
        %v1337 = vpop.f32.mrf.mxu0
        %v1338 = vadd.f32 %v501, %v1337
        %v1339 = vpop.f32.mrf.mxu0
        %1340 = vmatprep.mubr.bf16.mxu0 0
        %1341 = vmatmul.mubr.bf16.gmra.mxu0 %v942
        %v1342 = vpop.f32.mrf.mxu0
        %v1343 = vadd.f32 %v501, %v1342
        %v1344 = vpop.f32.mrf.mxu0
        %v1345 = vpop.f32.mrf.mxu0
        %v1346 = vadd.f32 %v501, %v1345
        %v1347 = vpop.f32.mrf.mxu0
        %1348 = vmatprep.mubr.bf16.mxu0 0
        %1349 = vmatmul.mubr.bf16.gmra.mxu0 %v945
        %v1350 = vpop.f32.mrf.mxu0
        %v1351 = vadd.f32 %v501, %v1350
        %v1352 = vpop.f32.mrf.mxu0
        %v1353 = vpop.f32.mrf.mxu0
        %v1354 = vadd.f32 %v501, %v1353
        %v1355 = vpop.f32.mrf.mxu0
        %1356 = vmatprep.mubr.bf16.mxu0 0
        %1357 = vmatmul.mubr.bf16.gmra.mxu0 %v948
        %v1358 = vpop.f32.mrf.mxu0
        %v1359 = vadd.f32 %v501, %v1358
        %v1360 = vpop.f32.mrf.mxu0
        %v1361 = vpop.f32.mrf.mxu0
        %v1362 = vadd.f32 %v501, %v1361
        %v1363 = vpop.f32.mrf.mxu0
        %1364 = vmatprep.mubr.bf16.mxu0 0
        %1365 = vmatmul.mubr.bf16.gmra.mxu0 %v951
        %v1366 = vpop.f32.mrf.mxu0
        %v1367 = vadd.f32 %v501, %v1366
        %v1368 = vpop.f32.mrf.mxu0
        %v1369 = vpop.f32.mrf.mxu0
        %v1370 = vadd.f32 %v501, %v1369
        %v1371 = vpop.f32.mrf.mxu0
        %1372 = vmatprep.mubr.bf16.mxu0 0
        %1373 = vmatmul.mubr.bf16.gmra.mxu0 %v954
        %v1374 = vpop.f32.mrf.mxu0
        %v1375 = vadd.f32 %v501, %v1374
        %v1376 = vpop.f32.mrf.mxu0
        %v1377 = vpop.f32.mrf.mxu0
        %v1378 = vadd.f32 %v501, %v1377
        %v1379 = vpop.f32.mrf.mxu0
        %1380 = vmatprep.mubr.bf16.mxu0 0
        %1381 = vmatmul.mubr.bf16.gmra.mxu0 %v957
        %v1382 = vpop.f32.mrf.mxu0
        %v1383 = vadd.f32 %v501, %v1382
        %v1384 = vpop.f32.mrf.mxu0
        %v1385 = vpop.f32.mrf.mxu0
        %v1386 = vadd.f32 %v501, %v1385
        %v1387 = vpop.f32.mrf.mxu0
        %1388 = vmatprep.mubr.bf16.mxu0 0
        %1389 = vmatmul.mubr.bf16.gmra.mxu0 %v960
        %v1390 = vpop.f32.mrf.mxu0
        %v1391 = vadd.f32 %v501, %v1390
        %v1392 = vpop.f32.mrf.mxu0
        %v1393 = vpop.f32.mrf.mxu0
        %v1394 = vadd.f32 %v501, %v1393
        %v1395 = vpop.f32.mrf.mxu0
        %1396 = vmatprep.mubr.bf16.mxu0 0
        %1397 = vmatmul.mubr.bf16.gmra.mxu0 %v963
        %v1398 = vpop.f32.mrf.mxu0
        %v1399 = vadd.f32 %v501, %v1398
        %v1400 = vpop.f32.mrf.mxu0
        %v1401 = vpop.f32.mrf.mxu0
        %v1402 = vadd.f32 %v501, %v1401
        %v1403 = vpop.f32.mrf.mxu0
        %1404 = vmatprep.mubr.bf16.mxu0 0
        %1405 = vmatmul.mubr.bf16.gmra.mxu0 %v966
        %v1406 = vpop.f32.mrf.mxu0
        %v1407 = vadd.f32 %v501, %v1406
        %v1408 = vpop.f32.mrf.mxu0
        %v1409 = vpop.f32.mrf.mxu0
        %v1410 = vadd.f32 %v501, %v1409
        %v1411 = vpop.f32.mrf.mxu0
        %1412 = vmatprep.mubr.bf16.mxu0 0
        %1413 = vmatmul.mubr.bf16.gmra.mxu0 %v969
        %v1414 = vpop.f32.mrf.mxu0
        %v1415 = vadd.f32 %v501, %v1414
        %v1416 = vpop.f32.mrf.mxu0
        %v1417 = vpop.f32.mrf.mxu0
        %v1418 = vadd.f32 %v501, %v1417
        %v1419 = vpop.f32.mrf.mxu0
        %1420 = vmatprep.mubr.bf16.mxu0 0
        %1421 = vmatmul.mubr.bf16.gmra.mxu0 %v972
        %v1422 = vpop.f32.mrf.mxu0
        %v1423 = vadd.f32 %v501, %v1422
        %v1424 = vpop.f32.mrf.mxu0
        %v1425 = vpop.f32.mrf.mxu0
        %v1426 = vadd.f32 %v501, %v1425
        %v1427 = vpop.f32.mrf.mxu0
        %1428 = vmatprep.mubr.bf16.mxu0 0
        %1429 = vmatmul.mubr.bf16.gmra.mxu0 %v975
        %v1430 = vpop.f32.mrf.mxu0
        %v1431 = vadd.f32 %v501, %v1430
        %v1432 = vpop.f32.mrf.mxu0
        %v1433 = vpop.f32.mrf.mxu0
        %v1434 = vadd.f32 %v501, %v1433
        %v1435 = vpop.f32.mrf.mxu0
        %1436 = vmatprep.mubr.bf16.mxu0 0
        %1437 = vmatmul.mubr.bf16.gmra.mxu0 %v978
        %v1438 = vpop.f32.mrf.mxu0
        %v1439 = vadd.f32 %v501, %v1438
        %v1440 = vpop.f32.mrf.mxu0
        %v1441 = vpop.f32.mrf.mxu0
        %v1442 = vadd.f32 %v501, %v1441
        %v1443 = vpop.f32.mrf.mxu0
        %1444 = vmatprep.mubr.bf16.mxu0 0
        %1445 = vmatmul.mubr.bf16.gmra.mxu0 %v981
        %v1446 = vpop.f32.mrf.mxu0
        %v1447 = vadd.f32 %v501, %v1446
        %v1448 = vpop.f32.mrf.mxu0
        %v1449 = vpop.f32.mrf.mxu0
        %v1450 = vadd.f32 %v501, %v1449
        %v1451 = vpop.f32.mrf.mxu0
        %1452 = vmatprep.mubr.bf16.mxu0 0
        %1453 = vmatmul.mubr.bf16.gmra.mxu0 %v984
        %v1454 = vpop.f32.mrf.mxu0
        %v1455 = vadd.f32 %v501, %v1454
        %v1456 = vpop.f32.mrf.mxu0
        %v1457 = vpop.f32.mrf.mxu0
        %v1458 = vadd.f32 %v501, %v1457
        %v1459 = vpop.f32.mrf.mxu0
        %1460 = vmatprep.mubr.bf16.mxu0 0
        %1461 = vmatmul.mubr.bf16.gmra.mxu0 %v987
        %v1462 = vpop.f32.mrf.mxu0
        %v1463 = vadd.f32 %v501, %v1462
        %v1464 = vpop.f32.mrf.mxu0
        %v1465 = vpop.f32.mrf.mxu0
        %v1466 = vadd.f32 %v501, %v1465
        %v1467 = vpop.f32.mrf.mxu0
        %1468 = vmatprep.mubr.bf16.mxu0 0
        %1469 = vmatmul.mubr.bf16.gmra.mxu0 %v990
        %v1470 = vpop.f32.mrf.mxu0
        %v1471 = vadd.f32 %v501, %v1470
        %v1472 = vpop.f32.mrf.mxu0
        %v1473 = vpop.f32.mrf.mxu0
        %v1474 = vadd.f32 %v501, %v1473
        %v1475 = vpop.f32.mrf.mxu0
        %1476 = vmatprep.mubr.bf16.mxu0 0
        %1477 = vmatmul.mubr.bf16.gmra.mxu0 %v993
        %v1478 = vpop.f32.mrf.mxu0
        %v1479 = vadd.f32 %v501, %v1478
        %v1480 = vpop.f32.mrf.mxu0
        %v1481 = vpop.f32.mrf.mxu0
        %v1482 = vadd.f32 %v501, %v1481
        %v1483 = vpop.f32.mrf.mxu0
        %1484 = vmatprep.mubr.bf16.mxu0 0
        %1485 = vmatmul.mubr.bf16.gmra.mxu0 %v996
        %v1486 = vpop.f32.mrf.mxu0
        %v1487 = vadd.f32 %v501, %v1486
        %v1488 = vpop.f32.mrf.mxu0
        %v1489 = vpop.f32.mrf.mxu0
        %v1490 = vadd.f32 %v501, %v1489
        %v1491 = vpop.f32.mrf.mxu0
        %1492 = vmatprep.mubr.bf16.mxu0 0
        %1493 = vmatmul.mubr.bf16.gmra.mxu0 %v999
        %v1494 = vpop.f32.mrf.mxu0
        %v1495 = vadd.f32 %v501, %v1494
        %v1496 = vpop.f32.mrf.mxu0
        %v1497 = vpop.f32.mrf.mxu0
        %v1498 = vadd.f32 %v501, %v1497
        %v1499 = vpop.f32.mrf.mxu0
        %1500 = vmatprep.mubr.bf16.mxu0 0
        %1501 = vmatmul.mubr.bf16.gmra.mxu0 %v1002
        %v1502 = vpop.f32.mrf.mxu0
        %v1503 = vadd.f32 %v501, %v1502
        %v1504 = vpop.f32.mrf.mxu0
        %v1505 = vpop.f32.mrf.mxu0
        %v1506 = vadd.f32 %v501, %v1505
        %v1507 = vpop.f32.mrf.mxu0
        %1508 = vmatprep.mubr.bf16.mxu0 0
        %1509 = vmatmul.mubr.bf16.gmra.mxu0 %v1005
        %v1510 = vpop.f32.mrf.mxu0
        %v1511 = vadd.f32 %v501, %v1510
        %v1512 = vpop.f32.mrf.mxu0
        %v1513 = vpop.f32.mrf.mxu0
        %v1514 = vadd.f32 %v501, %v1513
        %v1515 = vpop.f32.mrf.mxu0
        %1516 = vmatprep.mubr.bf16.mxu0 0
        %1517 = vmatmul.mubr.bf16.gmra.mxu0 %v1008
        %v1518 = vpop.f32.mrf.mxu0
        %v1519 = vadd.f32 %v501, %v1518
        %v1520 = vpop.f32.mrf.mxu0
        %v1521 = vpop.f32.mrf.mxu0
        %v1522 = vadd.f32 %v501, %v1521
        %v1523 = vpop.f32.mrf.mxu0
        %1524 = vmatprep.mubr.bf16.mxu0 0
        %1525 = vmatmul.mubr.bf16.gmra.mxu0 %v1011
        %v1526 = vpop.f32.mrf.mxu0
        %v1527 = vadd.f32 %v501, %v1526
        %v1528 = vpop.f32.mrf.mxu0
        %v1529 = vpop.f32.mrf.mxu0
        %v1530 = vadd.f32 %v501, %v1529
        %v1531 = vpop.f32.mrf.mxu0
        %1532 = vmatprep.mubr.bf16.mxu0 0
        %1533 = vmatmul.mubr.bf16.gmra.mxu0 %v1014
        %v1534 = vpop.f32.mrf.mxu0
        %v1535 = vadd.f32 %v501, %v1534
        %v1536 = vpop.f32.mrf.mxu0
        %v1537 = vpop.f32.mrf.mxu0
        %v1538 = vadd.f32 %v501, %v1537
        %v1539 = vpop.f32.mrf.mxu0
        %1540 = vmatprep.mubr.bf16.mxu0 0
        %1541 = vmatmul.mubr.bf16.gmra.mxu0 %v1017
        %v1542 = vpop.f32.mrf.mxu0
        %v1543 = vadd.f32 %v501, %v1542
        %v1544 = vpop.f32.mrf.mxu0
        %v1545 = vpop.f32.mrf.mxu0
        %v1546 = vadd.f32 %v501, %v1545
        %v1547 = vpop.f32.mrf.mxu0
        %1548 = vmatprep.mubr.bf16.mxu0 0
        %1549 = vmatmul.mubr.bf16.gmra.mxu0 %v1020
        %v1550 = vpop.f32.mrf.mxu0
        %v1551 = vadd.f32 %v501, %v1550
        %v1552 = vpop.f32.mrf.mxu0
        %v1553 = vpop.f32.mrf.mxu0
        %v1554 = vadd.f32 %v501, %v1553
        %v1555 = vpop.f32.mrf.mxu0
        %1556 = vmatprep.mubr.bf16.mxu0 0
        %1557 = vmatmul.mubr.bf16.gmra.mxu0 %v1023
        %v1558 = vpop.f32.mrf.mxu0
        %v1559 = vadd.f32 %v501, %v1558
        %v1560 = vpop.f32.mrf.mxu0
        %v1561 = vpop.f32.mrf.mxu0
        %v1562 = vadd.f32 %v501, %v1561
        %v1563 = vpop.f32.mrf.mxu0
        %1564 = vmatprep.mubr.bf16.mxu0 0
        %1565 = vmatmul.mubr.bf16.gmra.mxu0 %v1026
        %v1566 = vpop.f32.mrf.mxu0
        %v1567 = vadd.f32 %v501, %v1566
        %v1568 = vpop.f32.mrf.mxu0
        %v1569 = vpop.f32.mrf.mxu0
        %v1570 = vadd.f32 %v501, %v1569
        %v1571 = vpop.f32.mrf.mxu0
        %1572 = vdwg.mxu0
        %v1573 = vmax.f32 %v1063, 0.0
        %v1574 = vmax.f32 %v1066, 0.0
        %v1575 = vmax.f32 %v1071, 0.0
        %v1576 = vmax.f32 %v1074, 0.0
        %v1577 = vmax.f32 %v1079, 0.0
        %v1578 = vmax.f32 %v1082, 0.0
        %v1579 = vmax.f32 %v1087, 0.0
        %v1580 = vmax.f32 %v1090, 0.0
        %v1581 = vmax.f32 %v1095, 0.0
        %v1582 = vmax.f32 %v1098, 0.0
        %v1583 = vmax.f32 %v1103, 0.0
        %v1584 = vmax.f32 %v1106, 0.0
        %v1585 = vmax.f32 %v1111, 0.0
        %v1586 = vmax.f32 %v1114, 0.0
        %v1587 = vmax.f32 %v1119, 0.0
        %v1588 = vmax.f32 %v1122, 0.0
        %v1589 = vmax.f32 %v1127, 0.0
        %v1590 = vmax.f32 %v1130, 0.0
        %v1591 = vmax.f32 %v1135, 0.0
        %v1592 = vmax.f32 %v1138, 0.0
        %v1593 = vmax.f32 %v1143, 0.0
        %v1594 = vmax.f32 %v1146, 0.0
        %v1595 = vmax.f32 %v1151, 0.0
        %v1596 = vmax.f32 %v1154, 0.0
        %v1597 = vmax.f32 %v1159, 0.0
        %v1598 = vmax.f32 %v1162, 0.0
        %v1599 = vmax.f32 %v1167, 0.0
        %v1600 = vmax.f32 %v1170, 0.0
        %v1601 = vmax.f32 %v1175, 0.0
        %v1602 = vmax.f32 %v1178, 0.0
        %v1603 = vmax.f32 %v1183, 0.0
        %v1604 = vmax.f32 %v1186, 0.0
        %v1605 = vmax.f32 %v1191, 0.0
        %v1606 = vmax.f32 %v1194, 0.0
        %v1607 = vmax.f32 %v1199, 0.0
        %v1608 = vmax.f32 %v1202, 0.0
        %v1609 = vmax.f32 %v1207, 0.0
        %v1610 = vmax.f32 %v1210, 0.0
        %v1611 = vmax.f32 %v1215, 0.0
        %v1612 = vmax.f32 %v1218, 0.0
        %v1613 = vmax.f32 %v1223, 0.0
        %v1614 = vmax.f32 %v1226, 0.0
        %v1615 = vmax.f32 %v1231, 0.0
        %v1616 = vmax.f32 %v1234, 0.0
        %v1617 = vmax.f32 %v1239, 0.0
        %v1618 = vmax.f32 %v1242, 0.0
        %v1619 = vmax.f32 %v1247, 0.0
        %v1620 = vmax.f32 %v1250, 0.0
        %v1621 = vmax.f32 %v1255, 0.0
        %v1622 = vmax.f32 %v1258, 0.0
        %v1623 = vmax.f32 %v1263, 0.0
        %v1624 = vmax.f32 %v1266, 0.0
        %v1625 = vmax.f32 %v1271, 0.0
        %v1626 = vmax.f32 %v1274, 0.0
        %v1627 = vmax.f32 %v1279, 0.0
        %v1628 = vmax.f32 %v1282, 0.0
        %v1629 = vmax.f32 %v1287, 0.0
        %v1630 = vmax.f32 %v1290, 0.0
        %v1631 = vmax.f32 %v1295, 0.0
        %v1632 = vmax.f32 %v1298, 0.0
        %v1633 = vmax.f32 %v1303, 0.0
        %v1634 = vmax.f32 %v1306, 0.0
        %v1635 = vmax.f32 %v1311, 0.0
        %v1636 = vmax.f32 %v1314, 0.0
        %v1637 = vmax.f32 %v1319, 0.0
        %v1638 = vmax.f32 %v1322, 0.0
        %v1639 = vmax.f32 %v1327, 0.0
        %v1640 = vmax.f32 %v1330, 0.0
        %v1641 = vmax.f32 %v1335, 0.0
        %v1642 = vmax.f32 %v1338, 0.0
        %v1643 = vmax.f32 %v1343, 0.0
        %v1644 = vmax.f32 %v1346, 0.0
        %v1645 = vmax.f32 %v1351, 0.0
        %v1646 = vmax.f32 %v1354, 0.0
        %v1647 = vmax.f32 %v1359, 0.0
        %v1648 = vmax.f32 %v1362, 0.0
        %v1649 = vmax.f32 %v1367, 0.0
        %v1650 = vmax.f32 %v1370, 0.0
        %v1651 = vmax.f32 %v1375, 0.0
        %v1652 = vmax.f32 %v1378, 0.0
        %v1653 = vmax.f32 %v1383, 0.0
        %v1654 = vmax.f32 %v1386, 0.0
        %v1655 = vmax.f32 %v1391, 0.0
        %v1656 = vmax.f32 %v1394, 0.0
        %v1657 = vmax.f32 %v1399, 0.0
        %v1658 = vmax.f32 %v1402, 0.0
        %v1659 = vmax.f32 %v1407, 0.0
        %v1660 = vmax.f32 %v1410, 0.0
        %v1661 = vmax.f32 %v1415, 0.0
        %v1662 = vmax.f32 %v1418, 0.0
        %v1663 = vmax.f32 %v1423, 0.0
        %v1664 = vmax.f32 %v1426, 0.0
        %v1665 = vmax.f32 %v1431, 0.0
        %v1666 = vmax.f32 %v1434, 0.0
        %v1667 = vmax.f32 %v1439, 0.0
        %v1668 = vmax.f32 %v1442, 0.0
        %v1669 = vmax.f32 %v1447, 0.0
        %v1670 = vmax.f32 %v1450, 0.0
        %v1671 = vmax.f32 %v1455, 0.0
        %v1672 = vmax.f32 %v1458, 0.0
        %v1673 = vmax.f32 %v1463, 0.0
        %v1674 = vmax.f32 %v1466, 0.0
        %v1675 = vmax.f32 %v1471, 0.0
        %v1676 = vmax.f32 %v1474, 0.0
        %v1677 = vmax.f32 %v1479, 0.0
        %v1678 = vmax.f32 %v1482, 0.0
        %v1679 = vmax.f32 %v1487, 0.0
        %v1680 = vmax.f32 %v1490, 0.0
        %v1681 = vmax.f32 %v1495, 0.0
        %v1682 = vmax.f32 %v1498, 0.0
        %v1683 = vmax.f32 %v1503, 0.0
        %v1684 = vmax.f32 %v1506, 0.0
        %v1685 = vmax.f32 %v1511, 0.0
        %v1686 = vmax.f32 %v1514, 0.0
        %v1687 = vmax.f32 %v1519, 0.0
        %v1688 = vmax.f32 %v1522, 0.0
        %v1689 = vmax.f32 %v1527, 0.0
        %v1690 = vmax.f32 %v1530, 0.0
        %v1691 = vmax.f32 %v1535, 0.0
        %v1692 = vmax.f32 %v1538, 0.0
        %v1693 = vmax.f32 %v1543, 0.0
        %v1694 = vmax.f32 %v1546, 0.0
        %v1695 = vmax.f32 %v1551, 0.0
        %v1696 = vmax.f32 %v1554, 0.0
        %v1697 = vmax.f32 %v1559, 0.0
        %v1698 = vmax.f32 %v1562, 0.0
        %v1699 = vmax.f32 %v1567, 0.0
        %v1700 = vmax.f32 %v1570, 0.0
        %vm1824 = vcmask 1046528
        %v1825 = vrot.slane %v1573, 1
        %v1826 = vrot.slane %v1574, 1
        %v1827 = vsel %vm1824, %v1825, %v1826
        %v1828 = vrot.slane %v1575, 1
        %v1829 = vsel %vm1824, %v1826, %v1828
        %v1830 = vrot.slane %v1576, 1
        %v1831 = vsel %vm1824, %v1828, %v1830
        %v1832 = vrot.slane %v1577, 1
        %v1833 = vsel %vm1824, %v1830, %v1832
        %v1834 = vrot.slane %v1578, 1
        %v1835 = vsel %vm1824, %v1832, %v1834
        %v1836 = vrot.slane %v1579, 1
        %v1837 = vsel %vm1824, %v1834, %v1836
        %v1838 = vrot.slane %v1580, 1
        %v1839 = vsel %vm1824, %v1836, %v1838
        %v1840 = vrot.slane %v1581, 1
        %v1841 = vsel %vm1824, %v1838, %v1840
        %v1842 = vrot.slane %v1582, 1
        %v1843 = vsel %vm1824, %v1840, %v1842
        %v1844 = vrot.slane %v1583, 1
        %v1845 = vsel %vm1824, %v1842, %v1844
        %v1846 = vrot.slane %v1584, 1
        %v1847 = vsel %vm1824, %v1844, %v1846
        %v1848 = vrot.slane %v1585, 1
        %v1849 = vsel %vm1824, %v1846, %v1848
        %v1850 = vrot.slane %v1586, 1
        %v1851 = vsel %vm1824, %v1848, %v1850
        %v1852 = vrot.slane %v1587, 1
        %v1853 = vsel %vm1824, %v1850, %v1852
        %v1854 = vrot.slane %v1588, 1
        %v1855 = vsel %vm1824, %v1852, %v1854
        %v1856 = vrot.slane %v1589, 1
        %v1857 = vsel %vm1824, %v1854, %v1856
        %v1858 = vrot.slane %v1590, 1
        %v1859 = vsel %vm1824, %v1856, %v1858
        %v1860 = vrot.slane %v1591, 1
        %v1861 = vsel %vm1824, %v1858, %v1860
        %v1862 = vrot.slane %v1592, 1
        %v1863 = vsel %vm1824, %v1860, %v1862
        %v1864 = vrot.slane %v1593, 1
        %v1865 = vsel %vm1824, %v1862, %v1864
        %v1866 = vrot.slane %v1594, 1
        %v1867 = vsel %vm1824, %v1864, %v1866
        %v1868 = vrot.slane %v1595, 1
        %v1869 = vsel %vm1824, %v1866, %v1868
        %v1870 = vrot.slane %v1596, 1
        %v1871 = vsel %vm1824, %v1868, %v1870
        %v1872 = vrot.slane %v1597, 1
        %v1873 = vsel %vm1824, %v1870, %v1872
        %v1874 = vrot.slane %v1598, 1
        %v1875 = vsel %vm1824, %v1872, %v1874
        %v1876 = vrot.slane %v1599, 1
        %v1877 = vsel %vm1824, %v1874, %v1876
        %v1878 = vrot.slane %v1600, 1
        %v1879 = vsel %vm1824, %v1876, %v1878
        %v1880 = vrot.slane %v1601, 1
        %v1881 = vsel %vm1824, %v1878, %v1880
        %v1882 = vrot.slane %v1602, 1
        %v1883 = vsel %vm1824, %v1880, %v1882
        %v1884 = vrot.slane %v1603, 1
        %v1885 = vsel %vm1824, %v1882, %v1884
        %v1886 = vrot.slane %v1605, 1
        %v1887 = vrot.slane %v1606, 1
        %v1888 = vsel %vm1824, %v1886, %v1887
        %v1889 = vrot.slane %v1607, 1
        %v1890 = vsel %vm1824, %v1887, %v1889
        %v1891 = vrot.slane %v1608, 1
        %v1892 = vsel %vm1824, %v1889, %v1891
        %v1893 = vrot.slane %v1609, 1
        %v1894 = vsel %vm1824, %v1891, %v1893
        %v1895 = vrot.slane %v1610, 1
        %v1896 = vsel %vm1824, %v1893, %v1895
        %v1897 = vrot.slane %v1611, 1
        %v1898 = vsel %vm1824, %v1895, %v1897
        %v1899 = vrot.slane %v1612, 1
        %v1900 = vsel %vm1824, %v1897, %v1899
        %v1901 = vrot.slane %v1613, 1
        %v1902 = vsel %vm1824, %v1899, %v1901
        %v1903 = vrot.slane %v1614, 1
        %v1904 = vsel %vm1824, %v1901, %v1903
        %v1905 = vrot.slane %v1615, 1
        %v1906 = vsel %vm1824, %v1903, %v1905
        %v1907 = vrot.slane %v1616, 1
        %v1908 = vsel %vm1824, %v1905, %v1907
        %v1909 = vrot.slane %v1617, 1
        %v1910 = vsel %vm1824, %v1907, %v1909
        %v1911 = vrot.slane %v1618, 1
        %v1912 = vsel %vm1824, %v1909, %v1911
        %v1913 = vrot.slane %v1619, 1
        %v1914 = vsel %vm1824, %v1911, %v1913
        %v1915 = vrot.slane %v1620, 1
        %v1916 = vsel %vm1824, %v1913, %v1915
        %v1917 = vrot.slane %v1621, 1
        %v1918 = vsel %vm1824, %v1915, %v1917
        %v1919 = vrot.slane %v1622, 1
        %v1920 = vsel %vm1824, %v1917, %v1919
        %v1921 = vrot.slane %v1623, 1
        %v1922 = vsel %vm1824, %v1919, %v1921
        %v1923 = vrot.slane %v1624, 1
        %v1924 = vsel %vm1824, %v1921, %v1923
        %v1925 = vrot.slane %v1625, 1
        %v1926 = vsel %vm1824, %v1923, %v1925
        %v1927 = vrot.slane %v1626, 1
        %v1928 = vsel %vm1824, %v1925, %v1927
        %v1929 = vrot.slane %v1627, 1
        %v1930 = vsel %vm1824, %v1927, %v1929
        %v1931 = vrot.slane %v1628, 1
        %v1932 = vsel %vm1824, %v1929, %v1931
        %v1933 = vrot.slane %v1629, 1
        %v1934 = vsel %vm1824, %v1931, %v1933
        %v1935 = vrot.slane %v1630, 1
        %v1936 = vsel %vm1824, %v1933, %v1935
        %v1937 = vrot.slane %v1631, 1
        %v1938 = vsel %vm1824, %v1935, %v1937
        %v1939 = vrot.slane %v1632, 1
        %v1940 = vsel %vm1824, %v1937, %v1939
        %v1941 = vrot.slane %v1633, 1
        %v1942 = vsel %vm1824, %v1939, %v1941
        %v1943 = vrot.slane %v1634, 1
        %v1944 = vsel %vm1824, %v1941, %v1943
        %v1945 = vrot.slane %v1635, 1
        %v1946 = vsel %vm1824, %v1943, %v1945
        %v1947 = vrot.slane %v1637, 1
        %v1948 = vrot.slane %v1638, 1
        %v1949 = vsel %vm1824, %v1947, %v1948
        %v1950 = vrot.slane %v1639, 1
        %v1951 = vsel %vm1824, %v1948, %v1950
        %v1952 = vrot.slane %v1640, 1
        %v1953 = vsel %vm1824, %v1950, %v1952
        %v1954 = vrot.slane %v1641, 1
        %v1955 = vsel %vm1824, %v1952, %v1954
        %v1956 = vrot.slane %v1642, 1
        %v1957 = vsel %vm1824, %v1954, %v1956
        %v1958 = vrot.slane %v1643, 1
        %v1959 = vsel %vm1824, %v1956, %v1958
        %v1960 = vrot.slane %v1644, 1
        %v1961 = vsel %vm1824, %v1958, %v1960
        %v1962 = vrot.slane %v1645, 1
        %v1963 = vsel %vm1824, %v1960, %v1962
        %v1964 = vrot.slane %v1646, 1
        %v1965 = vsel %vm1824, %v1962, %v1964
        %v1966 = vrot.slane %v1647, 1
        %v1967 = vsel %vm1824, %v1964, %v1966
        %v1968 = vrot.slane %v1648, 1
        %v1969 = vsel %vm1824, %v1966, %v1968
        %v1970 = vrot.slane %v1649, 1
        %v1971 = vsel %vm1824, %v1968, %v1970
        %v1972 = vrot.slane %v1650, 1
        %v1973 = vsel %vm1824, %v1970, %v1972
        %v1974 = vrot.slane %v1651, 1
        %v1975 = vsel %vm1824, %v1972, %v1974
        %v1976 = vrot.slane %v1652, 1
        %v1977 = vsel %vm1824, %v1974, %v1976
        %v1978 = vrot.slane %v1653, 1
        %v1979 = vsel %vm1824, %v1976, %v1978
        %v1980 = vrot.slane %v1654, 1
        %v1981 = vsel %vm1824, %v1978, %v1980
        %v1982 = vrot.slane %v1655, 1
        %v1983 = vsel %vm1824, %v1980, %v1982
        %v1984 = vrot.slane %v1656, 1
        %v1985 = vsel %vm1824, %v1982, %v1984
        %v1986 = vrot.slane %v1657, 1
        %v1987 = vsel %vm1824, %v1984, %v1986
        %v1988 = vrot.slane %v1658, 1
        %v1989 = vsel %vm1824, %v1986, %v1988
        %v1990 = vrot.slane %v1659, 1
        %v1991 = vsel %vm1824, %v1988, %v1990
        %v1992 = vrot.slane %v1660, 1
        %v1993 = vsel %vm1824, %v1990, %v1992
        %v1994 = vrot.slane %v1661, 1
        %v1995 = vsel %vm1824, %v1992, %v1994
        %v1996 = vrot.slane %v1662, 1
        %v1997 = vsel %vm1824, %v1994, %v1996
        %v1998 = vrot.slane %v1663, 1
        %v1999 = vsel %vm1824, %v1996, %v1998
        %v2000 = vrot.slane %v1664, 1
        %v2001 = vsel %vm1824, %v1998, %v2000
        %v2002 = vrot.slane %v1665, 1
        %v2003 = vsel %vm1824, %v2000, %v2002
        %v2004 = vrot.slane %v1666, 1
        %v2005 = vsel %vm1824, %v2002, %v2004
        %v2006 = vrot.slane %v1667, 1
        %v2007 = vsel %vm1824, %v2004, %v2006
        %v2008 = vrot.slane %v1669, 1
        %v2009 = vrot.slane %v1670, 1
        %v2010 = vsel %vm1824, %v2008, %v2009
        %v2011 = vrot.slane %v1671, 1
        %v2012 = vsel %vm1824, %v2009, %v2011
        %v2013 = vrot.slane %v1672, 1
        %v2014 = vsel %vm1824, %v2011, %v2013
        %v2015 = vrot.slane %v1673, 1
        %v2016 = vsel %vm1824, %v2013, %v2015
        %v2017 = vrot.slane %v1674, 1
        %v2018 = vsel %vm1824, %v2015, %v2017
        %v2019 = vrot.slane %v1675, 1
        %v2020 = vsel %vm1824, %v2017, %v2019
        %v2021 = vrot.slane %v1676, 1
        %v2022 = vsel %vm1824, %v2019, %v2021
        %v2023 = vrot.slane %v1677, 1
        %v2024 = vsel %vm1824, %v2021, %v2023
        %v2025 = vrot.slane %v1678, 1
        %v2026 = vsel %vm1824, %v2023, %v2025
        %v2027 = vrot.slane %v1679, 1
        %v2028 = vsel %vm1824, %v2025, %v2027
        %v2029 = vrot.slane %v1680, 1
        %v2030 = vsel %vm1824, %v2027, %v2029
        %v2031 = vrot.slane %v1681, 1
        %v2032 = vsel %vm1824, %v2029, %v2031
        %v2033 = vrot.slane %v1682, 1
        %v2034 = vsel %vm1824, %v2031, %v2033
        %v2035 = vrot.slane %v1683, 1
        %v2036 = vsel %vm1824, %v2033, %v2035
        %v2037 = vrot.slane %v1684, 1
        %v2038 = vsel %vm1824, %v2035, %v2037
        %v2039 = vrot.slane %v1685, 1
        %v2040 = vsel %vm1824, %v2037, %v2039
        %v2041 = vrot.slane %v1686, 1
        %v2042 = vsel %vm1824, %v2039, %v2041
        %v2043 = vrot.slane %v1687, 1
        %v2044 = vsel %vm1824, %v2041, %v2043
        %v2045 = vrot.slane %v1688, 1
        %v2046 = vsel %vm1824, %v2043, %v2045
        %v2047 = vrot.slane %v1689, 1
        %v2048 = vsel %vm1824, %v2045, %v2047
        %v2049 = vrot.slane %v1690, 1
        %v2050 = vsel %vm1824, %v2047, %v2049
        %v2051 = vrot.slane %v1691, 1
        %v2052 = vsel %vm1824, %v2049, %v2051
        %v2053 = vrot.slane %v1692, 1
        %v2054 = vsel %vm1824, %v2051, %v2053
        %v2055 = vrot.slane %v1693, 1
        %v2056 = vsel %vm1824, %v2053, %v2055
        %v2057 = vrot.slane %v1694, 1
        %v2058 = vsel %vm1824, %v2055, %v2057
        %v2059 = vrot.slane %v1695, 1
        %v2060 = vsel %vm1824, %v2057, %v2059
        %v2061 = vrot.slane %v1696, 1
        %v2062 = vsel %vm1824, %v2059, %v2061
        %v2063 = vrot.slane %v1697, 1
        %v2064 = vsel %vm1824, %v2061, %v2063
        %v2065 = vrot.slane %v1698, 1
        %v2066 = vsel %vm1824, %v2063, %v2065
        %v2187 = vmax.f32 %v1573, %v1827
        %v2188 = vmax.f32 %v1574, %v1829
        %v2189 = vmax.f32 %v1575, %v1831
        %v2190 = vmax.f32 %v1576, %v1833
        %v2191 = vmax.f32 %v1577, %v1835
        %v2192 = vmax.f32 %v1578, %v1837
        %v2193 = vmax.f32 %v1579, %v1839
        %v2194 = vmax.f32 %v1580, %v1841
        %v2195 = vmax.f32 %v1581, %v1843
        %v2196 = vmax.f32 %v1582, %v1845
        %v2197 = vmax.f32 %v1583, %v1847
        %v2198 = vmax.f32 %v1584, %v1849
        %v2199 = vmax.f32 %v1585, %v1851
        %v2200 = vmax.f32 %v1586, %v1853
        %v2201 = vmax.f32 %v1587, %v1855
        %v2202 = vmax.f32 %v1588, %v1857
        %v2203 = vmax.f32 %v1589, %v1859
        %v2204 = vmax.f32 %v1590, %v1861
        %v2205 = vmax.f32 %v1591, %v1863
        %v2206 = vmax.f32 %v1592, %v1865
        %v2207 = vmax.f32 %v1593, %v1867
        %v2208 = vmax.f32 %v1594, %v1869
        %v2209 = vmax.f32 %v1595, %v1871
        %v2210 = vmax.f32 %v1596, %v1873
        %v2211 = vmax.f32 %v1597, %v1875
        %v2212 = vmax.f32 %v1598, %v1877
        %v2213 = vmax.f32 %v1599, %v1879
        %v2214 = vmax.f32 %v1600, %v1881
        %v2215 = vmax.f32 %v1601, %v1883
        %v2216 = vmax.f32 %v1602, %v1885
        %v2217 = vmax.f32 %v1605, %v1888
        %v2218 = vmax.f32 %v1606, %v1890
        %v2219 = vmax.f32 %v1607, %v1892
        %v2220 = vmax.f32 %v1608, %v1894
        %v2221 = vmax.f32 %v1609, %v1896
        %v2222 = vmax.f32 %v1610, %v1898
        %v2223 = vmax.f32 %v1611, %v1900
        %v2224 = vmax.f32 %v1612, %v1902
        %v2225 = vmax.f32 %v1613, %v1904
        %v2226 = vmax.f32 %v1614, %v1906
        %v2227 = vmax.f32 %v1615, %v1908
        %v2228 = vmax.f32 %v1616, %v1910
        %v2229 = vmax.f32 %v1617, %v1912
        %v2230 = vmax.f32 %v1618, %v1914
        %v2231 = vmax.f32 %v1619, %v1916
        %v2232 = vmax.f32 %v1620, %v1918
        %v2233 = vmax.f32 %v1621, %v1920
        %v2234 = vmax.f32 %v1622, %v1922
        %v2235 = vmax.f32 %v1623, %v1924
        %v2236 = vmax.f32 %v1624, %v1926
        %v2237 = vmax.f32 %v1625, %v1928
        %v2238 = vmax.f32 %v1626, %v1930
        %v2239 = vmax.f32 %v1627, %v1932
        %v2240 = vmax.f32 %v1628, %v1934
        %v2241 = vmax.f32 %v1629, %v1936
        %v2242 = vmax.f32 %v1630, %v1938
        %v2243 = vmax.f32 %v1631, %v1940
        %v2244 = vmax.f32 %v1632, %v1942
        %v2245 = vmax.f32 %v1633, %v1944
        %v2246 = vmax.f32 %v1634, %v1946
        %v2247 = vmax.f32 %v1637, %v1949
        %v2248 = vmax.f32 %v1638, %v1951
        %v2249 = vmax.f32 %v1639, %v1953
        %v2250 = vmax.f32 %v1640, %v1955
        %v2251 = vmax.f32 %v1641, %v1957
        %v2252 = vmax.f32 %v1642, %v1959
        %v2253 = vmax.f32 %v1643, %v1961
        %v2254 = vmax.f32 %v1644, %v1963
        %v2255 = vmax.f32 %v1645, %v1965
        %v2256 = vmax.f32 %v1646, %v1967
        %v2257 = vmax.f32 %v1647, %v1969
        %v2258 = vmax.f32 %v1648, %v1971
        %v2259 = vmax.f32 %v1649, %v1973
        %v2260 = vmax.f32 %v1650, %v1975
        %v2261 = vmax.f32 %v1651, %v1977
        %v2262 = vmax.f32 %v1652, %v1979
        %v2263 = vmax.f32 %v1653, %v1981
        %v2264 = vmax.f32 %v1654, %v1983
        %v2265 = vmax.f32 %v1655, %v1985
        %v2266 = vmax.f32 %v1656, %v1987
        %v2267 = vmax.f32 %v1657, %v1989
        %v2268 = vmax.f32 %v1658, %v1991
        %v2269 = vmax.f32 %v1659, %v1993
        %v2270 = vmax.f32 %v1660, %v1995
        %v2271 = vmax.f32 %v1661, %v1997
        %v2272 = vmax.f32 %v1662, %v1999
        %v2273 = vmax.f32 %v1663, %v2001
        %v2274 = vmax.f32 %v1664, %v2003
        %v2275 = vmax.f32 %v1665, %v2005
        %v2276 = vmax.f32 %v1666, %v2007
        %v2277 = vmax.f32 %v1669, %v2010
        %v2278 = vmax.f32 %v1670, %v2012
        %v2279 = vmax.f32 %v1671, %v2014
        %v2280 = vmax.f32 %v1672, %v2016
        %v2281 = vmax.f32 %v1673, %v2018
        %v2282 = vmax.f32 %v1674, %v2020
        %v2283 = vmax.f32 %v1675, %v2022
        %v2284 = vmax.f32 %v1676, %v2024
        %v2285 = vmax.f32 %v1677, %v2026
        %v2286 = vmax.f32 %v1678, %v2028
        %v2287 = vmax.f32 %v1679, %v2030
        %v2288 = vmax.f32 %v1680, %v2032
        %v2289 = vmax.f32 %v1681, %v2034
        %v2290 = vmax.f32 %v1682, %v2036
        %v2291 = vmax.f32 %v1683, %v2038
        %v2292 = vmax.f32 %v1684, %v2040
        %v2293 = vmax.f32 %v1685, %v2042
        %v2294 = vmax.f32 %v1686, %v2044
        %v2295 = vmax.f32 %v1687, %v2046
        %v2296 = vmax.f32 %v1688, %v2048
        %v2297 = vmax.f32 %v1689, %v2050
        %v2298 = vmax.f32 %v1690, %v2052
        %v2299 = vmax.f32 %v1691, %v2054
        %v2300 = vmax.f32 %v1692, %v2056
        %v2301 = vmax.f32 %v1693, %v2058
        %v2302 = vmax.f32 %v1694, %v2060
        %v2303 = vmax.f32 %v1695, %v2062
        %v2304 = vmax.f32 %v1696, %v2064
        %v2305 = vmax.f32 %v1697, %v2066
        %v2306 = vmax.f32 %v1698, %v2065
        %v2312 = vrot.slane %v1604, 1
        %v2313 = vsel %vm1824, %v1884, %v2312
        %v2314 = vsel %vm1824, %v2312, %v1886
        %v2315 = vrot.slane %v1636, 1
        %v2316 = vsel %vm1824, %v1945, %v2315
        %v2317 = vsel %vm1824, %v2315, %v1947
        %v2318 = vrot.slane %v1668, 1
        %v2319 = vsel %vm1824, %v2006, %v2318
        %v2320 = vsel %vm1824, %v2318, %v2008
        %v2321 = vrot.slane %v1699, 1
        %v2322 = vsel %vm1824, %v2065, %v2321
        %v2323 = vrot.slane %v1700, 1
        %v2324 = vsel %vm1824, %v2321, %v2323
        %v2334 = vmax.f32 %v1603, %v2313
        %v2335 = vmax.f32 %v1604, %v2314
        %v2336 = vmax.f32 %v1635, %v2316
        %v2337 = vmax.f32 %v1636, %v2317
        %v2338 = vmax.f32 %v1667, %v2319
        %v2339 = vmax.f32 %v1668, %v2320
        %v2340 = vmax.f32 %v1698, %v2322
        %v2341 = vmax.f32 %v1699, %v2324
        %v2342 = vmax.f32 %v1700, %v2323
        %v2343 = vmax.f32 %v2187, %v2189
        %v2344 = vmax.f32 %v2188, %v2190
        %v2345 = vmax.f32 %v2189, %v2191
        %v2346 = vmax.f32 %v2190, %v2192
        %v2347 = vmax.f32 %v2191, %v2193
        %v2348 = vmax.f32 %v2192, %v2194
        %v2349 = vmax.f32 %v2193, %v2195
        %v2350 = vmax.f32 %v2194, %v2196
        %v2351 = vmax.f32 %v2195, %v2197
        %v2352 = vmax.f32 %v2196, %v2198
        %v2353 = vmax.f32 %v2197, %v2199
        %v2354 = vmax.f32 %v2198, %v2200
        %v2355 = vmax.f32 %v2199, %v2201
        %v2356 = vmax.f32 %v2200, %v2202
        %v2357 = vmax.f32 %v2201, %v2203
        %v2358 = vmax.f32 %v2202, %v2204
        %v2359 = vmax.f32 %v2203, %v2205
        %v2360 = vmax.f32 %v2204, %v2206
        %v2361 = vmax.f32 %v2205, %v2207
        %v2362 = vmax.f32 %v2206, %v2208
        %v2363 = vmax.f32 %v2207, %v2209
        %v2364 = vmax.f32 %v2208, %v2210
        %v2365 = vmax.f32 %v2209, %v2211
        %v2366 = vmax.f32 %v2210, %v2212
        %v2367 = vmax.f32 %v2211, %v2213
        %v2368 = vmax.f32 %v2212, %v2214
        %v2369 = vmax.f32 %v2213, %v2215
        %v2370 = vmax.f32 %v2214, %v2216
        %v2371 = vmax.f32 %v2215, %v2334
        %v2372 = vmax.f32 %v2216, %v2335
        %v2373 = vmax.f32 %v2217, %v2219
        %v2374 = vmax.f32 %v2218, %v2220
        %v2375 = vmax.f32 %v2219, %v2221
        %v2376 = vmax.f32 %v2220, %v2222
        %v2377 = vmax.f32 %v2221, %v2223
        %v2378 = vmax.f32 %v2222, %v2224
        %v2379 = vmax.f32 %v2223, %v2225
        %v2380 = vmax.f32 %v2224, %v2226
        %v2381 = vmax.f32 %v2225, %v2227
        %v2382 = vmax.f32 %v2226, %v2228
        %v2383 = vmax.f32 %v2227, %v2229
        %v2384 = vmax.f32 %v2228, %v2230
        %v2385 = vmax.f32 %v2229, %v2231
        %v2386 = vmax.f32 %v2230, %v2232
        %v2387 = vmax.f32 %v2231, %v2233
        %v2388 = vmax.f32 %v2232, %v2234
        %v2389 = vmax.f32 %v2233, %v2235
        %v2390 = vmax.f32 %v2234, %v2236
        %v2391 = vmax.f32 %v2235, %v2237
        %v2392 = vmax.f32 %v2236, %v2238
        %v2393 = vmax.f32 %v2237, %v2239
        %v2394 = vmax.f32 %v2238, %v2240
        %v2395 = vmax.f32 %v2239, %v2241
        %v2396 = vmax.f32 %v2240, %v2242
        %v2397 = vmax.f32 %v2241, %v2243
        %v2398 = vmax.f32 %v2242, %v2244
        %v2399 = vmax.f32 %v2243, %v2245
        %v2400 = vmax.f32 %v2244, %v2246
        %v2401 = vmax.f32 %v2245, %v2336
        %v2402 = vmax.f32 %v2246, %v2337
        %v2403 = vmax.f32 %v2247, %v2249
        %v2404 = vmax.f32 %v2248, %v2250
        %v2405 = vmax.f32 %v2249, %v2251
        %v2406 = vmax.f32 %v2250, %v2252
        %v2407 = vmax.f32 %v2251, %v2253
        %v2408 = vmax.f32 %v2252, %v2254
        %v2409 = vmax.f32 %v2253, %v2255
        %v2410 = vmax.f32 %v2254, %v2256
        %v2411 = vmax.f32 %v2255, %v2257
        %v2412 = vmax.f32 %v2256, %v2258
        %v2413 = vmax.f32 %v2257, %v2259
        %v2414 = vmax.f32 %v2258, %v2260
        %v2415 = vmax.f32 %v2259, %v2261
        %v2416 = vmax.f32 %v2260, %v2262
        %v2417 = vmax.f32 %v2261, %v2263
        %v2418 = vmax.f32 %v2262, %v2264
        %v2419 = vmax.f32 %v2263, %v2265
        %v2420 = vmax.f32 %v2264, %v2266
        %v2421 = vmax.f32 %v2265, %v2267
        %v2422 = vmax.f32 %v2266, %v2268
        %v2423 = vmax.f32 %v2267, %v2269
        %v2424 = vmax.f32 %v2268, %v2270
        %v2425 = vmax.f32 %v2269, %v2271
        %v2426 = vmax.f32 %v2270, %v2272
        %v2427 = vmax.f32 %v2271, %v2273
        %v2428 = vmax.f32 %v2272, %v2274
        %v2429 = vmax.f32 %v2273, %v2275
        %v2430 = vmax.f32 %v2274, %v2276
        %v2431 = vmax.f32 %v2275, %v2338
        %v2432 = vmax.f32 %v2276, %v2339
        %v2433 = vmax.f32 %v2277, %v2279
        %v2434 = vmax.f32 %v2278, %v2280
        %v2435 = vmax.f32 %v2279, %v2281
        %v2436 = vmax.f32 %v2280, %v2282
        %v2437 = vmax.f32 %v2281, %v2283
        %v2438 = vmax.f32 %v2282, %v2284
        %v2439 = vmax.f32 %v2283, %v2285
        %v2440 = vmax.f32 %v2284, %v2286
        %v2441 = vmax.f32 %v2285, %v2287
        %v2442 = vmax.f32 %v2286, %v2288
        %v2443 = vmax.f32 %v2287, %v2289
        %v2444 = vmax.f32 %v2288, %v2290
        %v2445 = vmax.f32 %v2289, %v2291
        %v2446 = vmax.f32 %v2290, %v2292
        %v2447 = vmax.f32 %v2291, %v2293
        %v2448 = vmax.f32 %v2292, %v2294
        %v2449 = vmax.f32 %v2293, %v2295
        %v2450 = vmax.f32 %v2294, %v2296
        %v2451 = vmax.f32 %v2295, %v2297
        %v2452 = vmax.f32 %v2296, %v2298
        %v2453 = vmax.f32 %v2297, %v2299
        %v2454 = vmax.f32 %v2298, %v2300
        %v2455 = vmax.f32 %v2299, %v2301
        %v2456 = vmax.f32 %v2300, %v2302
        %v2457 = vmax.f32 %v2301, %v2303
        %v2458 = vmax.f32 %v2302, %v2304
        %v2459 = vmax.f32 %v2303, %v2305
        %v2460 = vmax.f32 %v2304, %v2340
        %v2461 = vmax.f32 %v2305, %v2341
        %v2462 = vmax.f32 %v2306, %v2342
        %v2463 = vpack.c.bf16 %v2344, %v2343
        %v2464 = vpack.c.bf16 %v2346, %v2345
        %v2465 = vpack.c.bf16 %v2348, %v2347
        %v2466 = vpack.c.bf16 %v2350, %v2349
        %v2467 = vpack.c.bf16 %v2352, %v2351
        %v2468 = vpack.c.bf16 %v2354, %v2353
        %v2469 = vpack.c.bf16 %v2356, %v2355
        %v2470 = vpack.c.bf16 %v2358, %v2357
        %v2471 = vpack.c.bf16 %v2360, %v2359
        %v2472 = vpack.c.bf16 %v2362, %v2361
        %v2473 = vpack.c.bf16 %v2364, %v2363
        %v2474 = vpack.c.bf16 %v2366, %v2365
        %v2475 = vpack.c.bf16 %v2368, %v2367
        %v2476 = vpack.c.bf16 %v2370, %v2369
        %v2477 = vpack.c.bf16 %v2372, %v2371
        %v2478 = vpack.c.bf16 %v2374, %v2373
        %v2479 = vpack.c.bf16 %v2376, %v2375
        %v2480 = vpack.c.bf16 %v2378, %v2377
        %v2481 = vpack.c.bf16 %v2380, %v2379
        %v2482 = vpack.c.bf16 %v2382, %v2381
        %v2483 = vpack.c.bf16 %v2384, %v2383
        %v2484 = vpack.c.bf16 %v2386, %v2385
        %v2485 = vpack.c.bf16 %v2388, %v2387
        %v2486 = vpack.c.bf16 %v2390, %v2389
        %v2487 = vpack.c.bf16 %v2392, %v2391
        %v2488 = vpack.c.bf16 %v2394, %v2393
        %v2489 = vpack.c.bf16 %v2396, %v2395
        %v2490 = vpack.c.bf16 %v2398, %v2397
        %v2491 = vpack.c.bf16 %v2400, %v2399
        %v2492 = vpack.c.bf16 %v2402, %v2401
        %v2493 = vpack.c.bf16 %v2404, %v2403
        %v2494 = vpack.c.bf16 %v2406, %v2405
        %v2495 = vpack.c.bf16 %v2408, %v2407
        %v2496 = vpack.c.bf16 %v2410, %v2409
        %v2497 = vpack.c.bf16 %v2412, %v2411
        %v2498 = vpack.c.bf16 %v2414, %v2413
        %v2499 = vpack.c.bf16 %v2416, %v2415
        %v2500 = vpack.c.bf16 %v2418, %v2417
        %v2501 = vpack.c.bf16 %v2420, %v2419
        %v2502 = vpack.c.bf16 %v2422, %v2421
        %v2503 = vpack.c.bf16 %v2424, %v2423
        %v2504 = vpack.c.bf16 %v2426, %v2425
        %v2505 = vpack.c.bf16 %v2428, %v2427
        %v2506 = vpack.c.bf16 %v2430, %v2429
        %v2507 = vpack.c.bf16 %v2432, %v2431
        %v2508 = vpack.c.bf16 %v2434, %v2433
        %v2509 = vpack.c.bf16 %v2436, %v2435
        %v2510 = vpack.c.bf16 %v2438, %v2437
        %v2511 = vpack.c.bf16 %v2440, %v2439
        %v2512 = vpack.c.bf16 %v2442, %v2441
        %v2513 = vpack.c.bf16 %v2444, %v2443
        %v2514 = vpack.c.bf16 %v2446, %v2445
        %v2515 = vpack.c.bf16 %v2448, %v2447
        %v2516 = vpack.c.bf16 %v2450, %v2449
        %v2517 = vpack.c.bf16 %v2452, %v2451
        %v2518 = vpack.c.bf16 %v2454, %v2453
        %v2519 = vpack.c.bf16 %v2456, %v2455
        %v2520 = vpack.c.bf16 %v2458, %v2457
        %v2521 = vpack.c.bf16 %v2460, %v2459
        %v2522 = vpack.c.bf16 %v2462, %v2461
        %v2523 = vld [vmem:[%s7] sm:$0xff]
        %v2524 = vld [vmem:[%s7 + $0x8] sm:$0xff]
        %v2525 = vld [vmem:[%s7 + $0x10] sm:$0xff]
        %v2526 = vld [vmem:[%s7 + $0x18] sm:$0xff]
        %v2527 = vld [vmem:[%s7 + $0x20] sm:$0xff]
        %v2528 = vld [vmem:[%s7 + $0x28] sm:$0xff]
        %v2529 = vld [vmem:[%s7 + $0x30] sm:$0xff]
        %v2530 = vld [vmem:[%s7 + $0x38] sm:$0xff]
        %v2531 = vld [vmem:[%s7 + $0x40] sm:$0xff]
        %v2532 = vld [vmem:[%s7 + $0x48] sm:$0xff]
        %v2533 = vld [vmem:[%s7 + $0x50] sm:$0xff]
        %v2534 = vld [vmem:[%s7 + $0x58] sm:$0xff]
        %v2535 = vld [vmem:[%s7 + $0x60] sm:$0xff]
        %v2549 = vunpack.c.l.b16 %v2523
        %v2550 = vunpack.c.h.b16 %v2523
        %v2551 = vunpack.c.l.b16 %v2524
        %v2552 = vunpack.c.h.b16 %v2524
        %v2553 = vunpack.c.l.b16 %v2525
        %v2554 = vunpack.c.h.b16 %v2525
        %v2555 = vunpack.c.l.b16 %v2526
        %v2556 = vunpack.c.h.b16 %v2526
        %v2557 = vunpack.c.l.b16 %v2527
        %v2558 = vunpack.c.h.b16 %v2527
        %v2559 = vunpack.c.l.b16 %v2528
        %v2560 = vunpack.c.h.b16 %v2528
        %v2561 = vunpack.c.l.b16 %v2529
        %v2562 = vunpack.c.h.b16 %v2529
        %v2563 = vunpack.c.l.b16 %v2530
        %v2564 = vunpack.c.h.b16 %v2530
        %v2565 = vunpack.c.l.b16 %v2531
        %v2566 = vunpack.c.h.b16 %v2531
        %v2567 = vunpack.c.l.b16 %v2532
        %v2568 = vunpack.c.h.b16 %v2532
        %v2569 = vunpack.c.l.b16 %v2533
        %v2570 = vunpack.c.h.b16 %v2533
        %v2571 = vunpack.c.l.b16 %v2534
        %v2572 = vunpack.c.h.b16 %v2534
        %v2573 = vunpack.c.l.b16 %v2535
        %v2574 = vunpack.c.h.b16 %v2535
        %v2575 = vpack.c.b16 %v2551, %v2549
        %v2576 = vpack.c.b16 %v2552, %v2550
        %v2577 = vpack.c.b16 %v2555, %v2553
        %v2578 = vpack.c.b16 %v2556, %v2554
        %v2579 = vpack.c.b16 %v2559, %v2557
        %v2580 = vpack.c.b16 %v2560, %v2558
        %v2581 = vpack.c.b16 %v2563, %v2561
        %v2582 = vpack.c.b16 %v2564, %v2562
        %v2583 = vpack.c.b16 %v2567, %v2565
        %v2584 = vpack.c.b16 %v2568, %v2566
        %v2585 = vpack.c.b16 %v2571, %v2569
        %v2586 = vpack.c.b16 %v2572, %v2570
        %v2587 = vpack.c.b16 %v2573, %v2573
        %v2588 = vpack.c.b16 %v2574, %v2574
        %vm2596 = vcmask 908288
        %v2598 = vsel %vm2596, %v2576, 0
        %v2601 = vsel %vm2596, %v2578, 0
        %v2604 = vsel %vm2596, %v2580, 0
        %v2607 = vsel %vm2596, %v2582, 0
        %v2610 = vsel %vm2596, %v2584, 0
        %v2613 = vsel %vm2596, %v2586, 0
        %v2616 = vsel %vm2596, %v2588, 0
        %vm2618 = vcmask 1047552
        %v2619 = vsel %vm1824, 4294967295, 65535
        %v2620 = vsel %vm2618, %v2619, 0
        %v2622 = vand.u32 %v2477, %v2620
        %2624 = vmatprep.subr.bf16.mxu0 0
        %2625 = vmatpush1.bf16.msra.mxu0 %v2470
        %2626 = vmatprep.subr.bf16.mxu0 0
        %2627 = vmatpush1.bf16.msra.mxu0 %v2469
        %2628 = vmatprep.subr.bf16.mxu0 0
        %2629 = vmatpush1.bf16.msra.mxu0 %v2468
        %2630 = vmatprep.subr.bf16.mxu0 0
        %2631 = vmatpush1.bf16.msra.mxu0 %v2467
        %2632 = vmatprep.subr.bf16.mxu0 0
        %2633 = vmatpush1.bf16.msra.mxu0 %v2466
        %2634 = vmatprep.subr.bf16.mxu0 0
        %2635 = vmatpush1.bf16.msra.mxu0 %v2465
        %2636 = vmatprep.subr.bf16.mxu0 0
        %2637 = vmatpush1.bf16.msra.mxu0 %v2464
        %2638 = vmatprep.subr.bf16.mxu0 0
        %2639 = vmatpush1.bf16.msra.mxu0 %v2463
        %2640 = vmatprep.subr.bf16.mxu0 0
        %2641 = vmatpush2.bf16.msra.mxu0 0
        %2642 = vmatprep.subr.bf16.mxu0 0
        %2643 = vmatpush2.bf16.msra.mxu0 %v2622
        %2644 = vmatprep.subr.bf16.mxu0 0
        %2645 = vmatpush2.bf16.msra.mxu0 %v2476
        %2646 = vmatprep.subr.bf16.mxu0 0
        %2647 = vmatpush2.bf16.msra.mxu0 %v2475
        %2648 = vmatprep.subr.bf16.mxu0 0
        %2649 = vmatpush2.bf16.msra.mxu0 %v2474
        %2650 = vmatprep.subr.bf16.mxu0 0
        %2651 = vmatpush2.bf16.msra.mxu0 %v2473
        %2652 = vmatprep.subr.bf16.mxu0 0
        %2653 = vmatpush2.bf16.msra.mxu0 %v2472
        %2654 = vmatprep.subr.bf16.mxu0 0
        %2655 = vmatpush2.bf16.msra.mxu0 %v2471
        %2656 = vmatprep.mubr.bf16.mxu0 %v2598
        %2657 = vmatmul.mubr.bf16.gmra.mxu0 %v2575
        %v2658 = vpop.f32.mrf.mxu0
        %v2659 = vadd.f32 0.0, %v2658
        %v2660 = vpop.f32.mrf.mxu0
        %v2661 = vpop.f32.mrf.mxu0
        %v2662 = vadd.f32 0.0, %v2661
        %v2663 = vpop.f32.mrf.mxu0
        %2664 = vmatprep.mubr.bf16.mxu0 %v2601
        %2665 = vmatmul.mubr.bf16.gmra.mxu0 %v2577
        %v2666 = vpop.f32.mrf.mxu0
        %v2667 = vadd.f32 0.0, %v2666
        %v2668 = vpop.f32.mrf.mxu0
        %v2669 = vpop.f32.mrf.mxu0
        %v2670 = vadd.f32 0.0, %v2669
        %v2671 = vpop.f32.mrf.mxu0
        %2672 = vmatprep.mubr.bf16.mxu0 %v2604
        %2673 = vmatmul.mubr.bf16.gmra.mxu0 %v2579
        %v2674 = vpop.f32.mrf.mxu0
        %v2675 = vadd.f32 0.0, %v2674
        %v2676 = vpop.f32.mrf.mxu0
        %v2677 = vpop.f32.mrf.mxu0
        %v2678 = vadd.f32 0.0, %v2677
        %v2679 = vpop.f32.mrf.mxu0
        %2680 = vmatprep.mubr.bf16.mxu0 %v2607
        %2681 = vmatmul.mubr.bf16.gmra.mxu0 %v2581
        %v2682 = vpop.f32.mrf.mxu0
        %v2683 = vadd.f32 0.0, %v2682
        %v2684 = vpop.f32.mrf.mxu0
        %v2685 = vpop.f32.mrf.mxu0
        %v2686 = vadd.f32 0.0, %v2685
        %v2687 = vpop.f32.mrf.mxu0
        %2688 = vmatprep.mubr.bf16.mxu0 %v2610
        %2689 = vmatmul.mubr.bf16.gmra.mxu0 %v2583
        %v2690 = vpop.f32.mrf.mxu0
        %v2691 = vadd.f32 0.0, %v2690
        %v2692 = vpop.f32.mrf.mxu0
        %v2693 = vpop.f32.mrf.mxu0
        %v2694 = vadd.f32 0.0, %v2693
        %v2695 = vpop.f32.mrf.mxu0
        %2696 = vmatprep.mubr.bf16.mxu0 %v2613
        %2697 = vmatmul.mubr.bf16.gmra.mxu0 %v2585
        %v2698 = vpop.f32.mrf.mxu0
        %v2699 = vadd.f32 0.0, %v2698
        %v2700 = vpop.f32.mrf.mxu0
        %v2701 = vpop.f32.mrf.mxu0
        %v2702 = vadd.f32 0.0, %v2701
        %v2703 = vpop.f32.mrf.mxu0
        %2704 = vmatprep.mubr.bf16.mxu0 %v2616
        %2705 = vmatmul.mubr.bf16.gmra.mxu0 %v2587
        %v2706 = vpop.f32.mrf.mxu0
        %v2707 = vadd.f32 0.0, %v2706
        %v2708 = vpop.f32.mrf.mxu0
        %v2709 = vpop.f32.mrf.mxu0
        %v2710 = vpop.f32.mrf.mxu0
        %2711 = vdwg.mxu0
        %vm2712 = vcmask 523264
        %2713 = vst.msk [vmem:[#allocation2] sm:$0xff] %vm2712, %v2659
        %2714 = vst.msk [vmem:[#allocation2 + $0x8] sm:$0xff] %vm2712, %v2662
        %2715 = vst.msk [vmem:[#allocation2 + $0x10] sm:$0xff] %vm2712, %v2667
        %2716 = vst.msk [vmem:[#allocation2 + $0x18] sm:$0xff] %vm2712, %v2670
        %2717 = vst.msk [vmem:[#allocation2 + $0x20] sm:$0xff] %vm2712, %v2675
        %2718 = vst.msk [vmem:[#allocation2 + $0x28] sm:$0xff] %vm2712, %v2678
        %2719 = vst.msk [vmem:[#allocation2 + $0x30] sm:$0xff] %vm2712, %v2683
        %2720 = vst.msk [vmem:[#allocation2 + $0x38] sm:$0xff] %vm2712, %v2686
        %2721 = vst.msk [vmem:[#allocation2 + $0x40] sm:$0xff] %vm2712, %v2691
        %2722 = vst.msk [vmem:[#allocation2 + $0x48] sm:$0xff] %vm2712, %v2694
        %2723 = vst.msk [vmem:[#allocation2 + $0x50] sm:$0xff] %vm2712, %v2699
        %2724 = vst.msk [vmem:[#allocation2 + $0x58] sm:$0xff] %vm2712, %v2702
        %2725 = vst.msk [vmem:[#allocation2 + $0x60] sm:$0xff] %vm2712, %v2707
        %v2727 = vand.u32 %v2492, %v2620
        %2729 = vmatprep.subr.bf16.mxu0 0
        %2730 = vmatpush1.bf16.msra.mxu0 %v2485
        %2731 = vmatprep.subr.bf16.mxu0 0
        %2732 = vmatpush1.bf16.msra.mxu0 %v2484
        %2733 = vmatprep.subr.bf16.mxu0 0
        %2734 = vmatpush1.bf16.msra.mxu0 %v2483
        %2735 = vmatprep.subr.bf16.mxu0 0
        %2736 = vmatpush1.bf16.msra.mxu0 %v2482
        %2737 = vmatprep.subr.bf16.mxu0 0
        %2738 = vmatpush1.bf16.msra.mxu0 %v2481
        %2739 = vmatprep.subr.bf16.mxu0 0
        %2740 = vmatpush1.bf16.msra.mxu0 %v2480
        %2741 = vmatprep.subr.bf16.mxu0 0
        %2742 = vmatpush1.bf16.msra.mxu0 %v2479
        %2743 = vmatprep.subr.bf16.mxu0 0
        %2744 = vmatpush1.bf16.msra.mxu0 %v2478
        %2745 = vmatprep.subr.bf16.mxu0 0
        %2746 = vmatpush2.bf16.msra.mxu0 0
        %2747 = vmatprep.subr.bf16.mxu0 0
        %2748 = vmatpush2.bf16.msra.mxu0 %v2727
        %2749 = vmatprep.subr.bf16.mxu0 0
        %2750 = vmatpush2.bf16.msra.mxu0 %v2491
        %2751 = vmatprep.subr.bf16.mxu0 0
        %2752 = vmatpush2.bf16.msra.mxu0 %v2490
        %2753 = vmatprep.subr.bf16.mxu0 0
        %2754 = vmatpush2.bf16.msra.mxu0 %v2489
        %2755 = vmatprep.subr.bf16.mxu0 0
        %2756 = vmatpush2.bf16.msra.mxu0 %v2488
        %2757 = vmatprep.subr.bf16.mxu0 0
        %2758 = vmatpush2.bf16.msra.mxu0 %v2487
        %2759 = vmatprep.subr.bf16.mxu0 0
        %2760 = vmatpush2.bf16.msra.mxu0 %v2486
        %2761 = vmatprep.mubr.bf16.mxu0 %v2598
        %2762 = vmatmul.mubr.bf16.gmra.mxu0 %v2575
        %v2763 = vpop.f32.mrf.mxu0
        %v2764 = vadd.f32 0.0, %v2763
        %v2765 = vpop.f32.mrf.mxu0
        %v2766 = vpop.f32.mrf.mxu0
        %v2767 = vadd.f32 0.0, %v2766
        %v2768 = vpop.f32.mrf.mxu0
        %2769 = vmatprep.mubr.bf16.mxu0 %v2601
        %2770 = vmatmul.mubr.bf16.gmra.mxu0 %v2577
        %v2771 = vpop.f32.mrf.mxu0
        %v2772 = vadd.f32 0.0, %v2771
        %v2773 = vpop.f32.mrf.mxu0
        %v2774 = vpop.f32.mrf.mxu0
        %v2775 = vadd.f32 0.0, %v2774
        %v2776 = vpop.f32.mrf.mxu0
        %2777 = vmatprep.mubr.bf16.mxu0 %v2604
        %2778 = vmatmul.mubr.bf16.gmra.mxu0 %v2579
        %v2779 = vpop.f32.mrf.mxu0
        %v2780 = vadd.f32 0.0, %v2779
        %v2781 = vpop.f32.mrf.mxu0
        %v2782 = vpop.f32.mrf.mxu0
        %v2783 = vadd.f32 0.0, %v2782
        %v2784 = vpop.f32.mrf.mxu0
        %2785 = vmatprep.mubr.bf16.mxu0 %v2607
        %2786 = vmatmul.mubr.bf16.gmra.mxu0 %v2581
        %v2787 = vpop.f32.mrf.mxu0
        %v2788 = vadd.f32 0.0, %v2787
        %v2789 = vpop.f32.mrf.mxu0
        %v2790 = vpop.f32.mrf.mxu0
        %v2791 = vadd.f32 0.0, %v2790
        %v2792 = vpop.f32.mrf.mxu0
        %2793 = vmatprep.mubr.bf16.mxu0 %v2610
        %2794 = vmatmul.mubr.bf16.gmra.mxu0 %v2583
        %v2795 = vpop.f32.mrf.mxu0
        %v2796 = vadd.f32 0.0, %v2795
        %v2797 = vpop.f32.mrf.mxu0
        %v2798 = vpop.f32.mrf.mxu0
        %v2799 = vadd.f32 0.0, %v2798
        %v2800 = vpop.f32.mrf.mxu0
        %2801 = vmatprep.mubr.bf16.mxu0 %v2613
        %2802 = vmatmul.mubr.bf16.gmra.mxu0 %v2585
        %v2803 = vpop.f32.mrf.mxu0
        %v2804 = vadd.f32 0.0, %v2803
        %v2805 = vpop.f32.mrf.mxu0
        %v2806 = vpop.f32.mrf.mxu0
        %v2807 = vadd.f32 0.0, %v2806
        %v2808 = vpop.f32.mrf.mxu0
        %2809 = vmatprep.mubr.bf16.mxu0 %v2616
        %2810 = vmatmul.mubr.bf16.gmra.mxu0 %v2587
        %v2811 = vpop.f32.mrf.mxu0
        %v2812 = vadd.f32 0.0, %v2811
        %v2813 = vpop.f32.mrf.mxu0
        %v2814 = vpop.f32.mrf.mxu0
        %v2815 = vpop.f32.mrf.mxu0
        %2816 = vdwg.mxu0
        %2817 = vst.msk [vmem:[#allocation2 + $0x68] sm:$0xff] %vm2712, %v2764
        %2818 = vst.msk [vmem:[#allocation2 + $0x70] sm:$0xff] %vm2712, %v2767
        %2819 = vst.msk [vmem:[#allocation2 + $0x78] sm:$0xff] %vm2712, %v2772
        %2820 = vst.msk [vmem:[#allocation2 + $0x80] sm:$0xff] %vm2712, %v2775
        %2821 = vst.msk [vmem:[#allocation2 + $0x88] sm:$0xff] %vm2712, %v2780
        %2822 = vst.msk [vmem:[#allocation2 + $0x90] sm:$0xff] %vm2712, %v2783
        %2823 = vst.msk [vmem:[#allocation2 + $0x98] sm:$0xff] %vm2712, %v2788
        %2824 = vst.msk [vmem:[#allocation2 + $0xa0] sm:$0xff] %vm2712, %v2791
        %2825 = vst.msk [vmem:[#allocation2 + $0xa8] sm:$0xff] %vm2712, %v2796
        %2826 = vst.msk [vmem:[#allocation2 + $0xb0] sm:$0xff] %vm2712, %v2799
        %2827 = vst.msk [vmem:[#allocation2 + $0xb8] sm:$0xff] %vm2712, %v2804
        %2828 = vst.msk [vmem:[#allocation2 + $0xc0] sm:$0xff] %vm2712, %v2807
        %2829 = vst.msk [vmem:[#allocation2 + $0xc8] sm:$0xff] %vm2712, %v2812
        %v2831 = vand.u32 %v2507, %v2620
        %2833 = vmatprep.subr.bf16.mxu0 0
        %2834 = vmatpush1.bf16.msra.mxu0 %v2500
        %2835 = vmatprep.subr.bf16.mxu0 0
        %2836 = vmatpush1.bf16.msra.mxu0 %v2499
        %2837 = vmatprep.subr.bf16.mxu0 0
        %2838 = vmatpush1.bf16.msra.mxu0 %v2498
        %2839 = vmatprep.subr.bf16.mxu0 0
        %2840 = vmatpush1.bf16.msra.mxu0 %v2497
        %2841 = vmatprep.subr.bf16.mxu0 0
        %2842 = vmatpush1.bf16.msra.mxu0 %v2496
        %2843 = vmatprep.subr.bf16.mxu0 0
        %2844 = vmatpush1.bf16.msra.mxu0 %v2495
        %2845 = vmatprep.subr.bf16.mxu0 0
        %2846 = vmatpush1.bf16.msra.mxu0 %v2494
        %2847 = vmatprep.subr.bf16.mxu0 0
        %2848 = vmatpush1.bf16.msra.mxu0 %v2493
        %2849 = vmatprep.subr.bf16.mxu0 0
        %2850 = vmatpush2.bf16.msra.mxu0 0
        %2851 = vmatprep.subr.bf16.mxu0 0
        %2852 = vmatpush2.bf16.msra.mxu0 %v2831
        %2853 = vmatprep.subr.bf16.mxu0 0
        %2854 = vmatpush2.bf16.msra.mxu0 %v2506
        %2855 = vmatprep.subr.bf16.mxu0 0
        %2856 = vmatpush2.bf16.msra.mxu0 %v2505
        %2857 = vmatprep.subr.bf16.mxu0 0
        %2858 = vmatpush2.bf16.msra.mxu0 %v2504
        %2859 = vmatprep.subr.bf16.mxu0 0
        %2860 = vmatpush2.bf16.msra.mxu0 %v2503
        %2861 = vmatprep.subr.bf16.mxu0 0
        %2862 = vmatpush2.bf16.msra.mxu0 %v2502
        %2863 = vmatprep.subr.bf16.mxu0 0
        %2864 = vmatpush2.bf16.msra.mxu0 %v2501
        %2865 = vmatprep.mubr.bf16.mxu0 %v2598
        %2866 = vmatmul.mubr.bf16.gmra.mxu0 %v2575
        %v2867 = vpop.f32.mrf.mxu0
        %v2868 = vadd.f32 0.0, %v2867
        %v2869 = vpop.f32.mrf.mxu0
        %v2870 = vpop.f32.mrf.mxu0
        %v2871 = vadd.f32 0.0, %v2870
        %v2872 = vpop.f32.mrf.mxu0
        %2873 = vmatprep.mubr.bf16.mxu0 %v2601
        %2874 = vmatmul.mubr.bf16.gmra.mxu0 %v2577
        %v2875 = vpop.f32.mrf.mxu0
        %v2876 = vadd.f32 0.0, %v2875
        %v2877 = vpop.f32.mrf.mxu0
        %v2878 = vpop.f32.mrf.mxu0
        %v2879 = vadd.f32 0.0, %v2878
        %v2880 = vpop.f32.mrf.mxu0
        %2881 = vmatprep.mubr.bf16.mxu0 %v2604
        %2882 = vmatmul.mubr.bf16.gmra.mxu0 %v2579
        %v2883 = vpop.f32.mrf.mxu0
        %v2884 = vadd.f32 0.0, %v2883
        %v2885 = vpop.f32.mrf.mxu0
        %v2886 = vpop.f32.mrf.mxu0
        %v2887 = vadd.f32 0.0, %v2886
        %v2888 = vpop.f32.mrf.mxu0
        %2889 = vmatprep.mubr.bf16.mxu0 %v2607
        %2890 = vmatmul.mubr.bf16.gmra.mxu0 %v2581
        %v2891 = vpop.f32.mrf.mxu0
        %v2892 = vadd.f32 0.0, %v2891
        %v2893 = vpop.f32.mrf.mxu0
        %v2894 = vpop.f32.mrf.mxu0
        %v2895 = vadd.f32 0.0, %v2894
        %v2896 = vpop.f32.mrf.mxu0
        %2897 = vmatprep.mubr.bf16.mxu0 %v2610
        %2898 = vmatmul.mubr.bf16.gmra.mxu0 %v2583
        %v2899 = vpop.f32.mrf.mxu0
        %v2900 = vadd.f32 0.0, %v2899
        %v2901 = vpop.f32.mrf.mxu0
        %v2902 = vpop.f32.mrf.mxu0
        %v2903 = vadd.f32 0.0, %v2902
        %v2904 = vpop.f32.mrf.mxu0
        %2905 = vmatprep.mubr.bf16.mxu0 %v2613
        %2906 = vmatmul.mubr.bf16.gmra.mxu0 %v2585
        %v2907 = vpop.f32.mrf.mxu0
        %v2908 = vadd.f32 0.0, %v2907
        %v2909 = vpop.f32.mrf.mxu0
        %v2910 = vpop.f32.mrf.mxu0
        %v2911 = vadd.f32 0.0, %v2910
        %v2912 = vpop.f32.mrf.mxu0
        %2913 = vmatprep.mubr.bf16.mxu0 %v2616
        %2914 = vmatmul.mubr.bf16.gmra.mxu0 %v2587
        %v2915 = vpop.f32.mrf.mxu0
        %v2916 = vadd.f32 0.0, %v2915
        %v2917 = vpop.f32.mrf.mxu0
        %v2918 = vpop.f32.mrf.mxu0
        %v2919 = vpop.f32.mrf.mxu0
        %2920 = vdwg.mxu0
        %2921 = vst.msk [vmem:[#allocation2 + $0xd0] sm:$0xff] %vm2712, %v2868
        %2922 = vst.msk [vmem:[#allocation2 + $0xd8] sm:$0xff] %vm2712, %v2871
        %2923 = vst.msk [vmem:[#allocation2 + $0xe0] sm:$0xff] %vm2712, %v2876
        %2924 = vst.msk [vmem:[#allocation2 + $0xe8] sm:$0xff] %vm2712, %v2879
        %2925 = vst.msk [vmem:[#allocation2 + $0xf0] sm:$0xff] %vm2712, %v2884
        %2926 = vst.msk [vmem:[#allocation2 + $0xf8] sm:$0xff] %vm2712, %v2887
        %2927 = vst.msk [vmem:[#allocation2 + $0x100] sm:$0xff] %vm2712, %v2892
        %2928 = vst.msk [vmem:[#allocation2 + $0x108] sm:$0xff] %vm2712, %v2895
        %2929 = vst.msk [vmem:[#allocation2 + $0x110] sm:$0xff] %vm2712, %v2900
        %2930 = vst.msk [vmem:[#allocation2 + $0x118] sm:$0xff] %vm2712, %v2903
        %2931 = vst.msk [vmem:[#allocation2 + $0x120] sm:$0xff] %vm2712, %v2908
        %2932 = vst.msk [vmem:[#allocation2 + $0x128] sm:$0xff] %vm2712, %v2911
        %2933 = vst.msk [vmem:[#allocation2 + $0x130] sm:$0xff] %vm2712, %v2916
        %v2935 = vand.u32 %v2522, %v2620
        %2937 = vmatprep.subr.bf16.mxu0 0
        %2938 = vmatpush1.bf16.msra.mxu0 %v2515
        %2939 = vmatprep.subr.bf16.mxu0 0
        %2940 = vmatpush1.bf16.msra.mxu0 %v2514
        %2941 = vmatprep.subr.bf16.mxu0 0
        %2942 = vmatpush1.bf16.msra.mxu0 %v2513
        %2943 = vmatprep.subr.bf16.mxu0 0
        %2944 = vmatpush1.bf16.msra.mxu0 %v2512
        %2945 = vmatprep.subr.bf16.mxu0 0
        %2946 = vmatpush1.bf16.msra.mxu0 %v2511
        %2947 = vmatprep.subr.bf16.mxu0 0
        %2948 = vmatpush1.bf16.msra.mxu0 %v2510
        %2949 = vmatprep.subr.bf16.mxu0 0
        %2950 = vmatpush1.bf16.msra.mxu0 %v2509
        %2951 = vmatprep.subr.bf16.mxu0 0
        %2952 = vmatpush1.bf16.msra.mxu0 %v2508
        %2953 = vmatprep.subr.bf16.mxu0 0
        %2954 = vmatpush2.bf16.msra.mxu0 0
        %2955 = vmatprep.subr.bf16.mxu0 0
        %2956 = vmatpush2.bf16.msra.mxu0 %v2935
        %2957 = vmatprep.subr.bf16.mxu0 0
        %2958 = vmatpush2.bf16.msra.mxu0 %v2521
        %2959 = vmatprep.subr.bf16.mxu0 0
        %2960 = vmatpush2.bf16.msra.mxu0 %v2520
        %2961 = vmatprep.subr.bf16.mxu0 0
        %2962 = vmatpush2.bf16.msra.mxu0 %v2519
        %2963 = vmatprep.subr.bf16.mxu0 0
        %2964 = vmatpush2.bf16.msra.mxu0 %v2518
        %2965 = vmatprep.subr.bf16.mxu0 0
        %2966 = vmatpush2.bf16.msra.mxu0 %v2517
        %2967 = vmatprep.subr.bf16.mxu0 0
        %2968 = vmatpush2.bf16.msra.mxu0 %v2516
        %2969 = vmatprep.mubr.bf16.mxu0 %v2598
        %2970 = vmatmul.mubr.bf16.gmra.mxu0 %v2575
        %v2971 = vpop.f32.mrf.mxu0
        %v2972 = vadd.f32 0.0, %v2971
        %v2973 = vpop.f32.mrf.mxu0
        %v2974 = vpop.f32.mrf.mxu0
        %v2975 = vadd.f32 0.0, %v2974
        %v2976 = vpop.f32.mrf.mxu0
        %2977 = vmatprep.mubr.bf16.mxu0 %v2601
        %2978 = vmatmul.mubr.bf16.gmra.mxu0 %v2577
        %v2979 = vpop.f32.mrf.mxu0
        %v2980 = vadd.f32 0.0, %v2979
        %v2981 = vpop.f32.mrf.mxu0
        %v2982 = vpop.f32.mrf.mxu0
        %v2983 = vadd.f32 0.0, %v2982
        %v2984 = vpop.f32.mrf.mxu0
        %2985 = vmatprep.mubr.bf16.mxu0 %v2604
        %2986 = vmatmul.mubr.bf16.gmra.mxu0 %v2579
        %v2987 = vpop.f32.mrf.mxu0
        %v2988 = vadd.f32 0.0, %v2987
        %v2989 = vpop.f32.mrf.mxu0
        %v2990 = vpop.f32.mrf.mxu0
        %v2991 = vadd.f32 0.0, %v2990
        %v2992 = vpop.f32.mrf.mxu0
        %2993 = vmatprep.mubr.bf16.mxu0 %v2607
        %2994 = vmatmul.mubr.bf16.gmra.mxu0 %v2581
        %v2995 = vpop.f32.mrf.mxu0
        %v2996 = vadd.f32 0.0, %v2995
        %v2997 = vpop.f32.mrf.mxu0
        %v2998 = vpop.f32.mrf.mxu0
        %v2999 = vadd.f32 0.0, %v2998
        %v3000 = vpop.f32.mrf.mxu0
        %3001 = vmatprep.mubr.bf16.mxu0 %v2610
        %3002 = vmatmul.mubr.bf16.gmra.mxu0 %v2583
        %v3003 = vpop.f32.mrf.mxu0
        %v3004 = vadd.f32 0.0, %v3003
        %v3005 = vpop.f32.mrf.mxu0
        %v3006 = vpop.f32.mrf.mxu0
        %v3007 = vadd.f32 0.0, %v3006
        %v3008 = vpop.f32.mrf.mxu0
        %3009 = vmatprep.mubr.bf16.mxu0 %v2613
        %3010 = vmatmul.mubr.bf16.gmra.mxu0 %v2585
        %v3011 = vpop.f32.mrf.mxu0
        %v3012 = vadd.f32 0.0, %v3011
        %v3013 = vpop.f32.mrf.mxu0
        %v3014 = vpop.f32.mrf.mxu0
        %v3015 = vadd.f32 0.0, %v3014
        %v3016 = vpop.f32.mrf.mxu0
        %3017 = vmatprep.mubr.bf16.mxu0 %v2616
        %3018 = vmatmul.mubr.bf16.gmra.mxu0 %v2587
        %v3019 = vpop.f32.mrf.mxu0
        %v3020 = vadd.f32 0.0, %v3019
        %v3021 = vpop.f32.mrf.mxu0
        %v3022 = vpop.f32.mrf.mxu0
        %v3023 = vpop.f32.mrf.mxu0
        %3024 = vdwg.mxu0
        %3025 = vst.msk [vmem:[#allocation2 + $0x138] sm:$0xff] %vm2712, %v2972
        %3026 = vst.msk [vmem:[#allocation2 + $0x140] sm:$0xff] %vm2712, %v2975
        %3027 = vst.msk [vmem:[#allocation2 + $0x148] sm:$0xff] %vm2712, %v2980
        %3028 = vst.msk [vmem:[#allocation2 + $0x150] sm:$0xff] %vm2712, %v2983
        %3029 = vst.msk [vmem:[#allocation2 + $0x158] sm:$0xff] %vm2712, %v2988
        %3030 = vst.msk [vmem:[#allocation2 + $0x160] sm:$0xff] %vm2712, %v2991
        %3031 = vst.msk [vmem:[#allocation2 + $0x168] sm:$0xff] %vm2712, %v2996
        %3032 = vst.msk [vmem:[#allocation2 + $0x170] sm:$0xff] %vm2712, %v2999
        %3033 = vst.msk [vmem:[#allocation2 + $0x178] sm:$0xff] %vm2712, %v3004
        %3034 = vst.msk [vmem:[#allocation2 + $0x180] sm:$0xff] %vm2712, %v3007
        %3035 = vst.msk [vmem:[#allocation2 + $0x188] sm:$0xff] %vm2712, %v3012
        %3036 = vst.msk [vmem:[#allocation2 + $0x190] sm:$0xff] %vm2712, %v3015
        %3037 = vst.msk [vmem:[#allocation2 + $0x198] sm:$0xff] %vm2712, %v3020
        %v3038 = vld [vmem:[%s4] sm:$0x1]
        %v3039 = vld [vmem:[#allocation2] sm:$0xff]
        %v3040 = vld [vmem:[#allocation2 + $0x8] sm:$0xff]
        %v3041 = vld [vmem:[#allocation2 + $0x10] sm:$0xff]
        %v3042 = vld [vmem:[#allocation2 + $0x18] sm:$0xff]
        %v3043 = vld [vmem:[#allocation2 + $0x20] sm:$0xff]
        %v3044 = vld [vmem:[#allocation2 + $0x28] sm:$0xff]
        %v3045 = vld [vmem:[#allocation2 + $0x30] sm:$0xff]
        %v3046 = vld [vmem:[#allocation2 + $0x38] sm:$0xff]
        %v3047 = vld [vmem:[#allocation2 + $0x40] sm:$0xff]
        %v3048 = vld [vmem:[#allocation2 + $0x48] sm:$0xff]
        %v3049 = vld [vmem:[#allocation2 + $0x50] sm:$0xff]
        %v3050 = vld [vmem:[#allocation2 + $0x58] sm:$0xff]
        %v3051 = vld [vmem:[#allocation2 + $0x60] sm:$0xff]
        %v3052 = vld [vmem:[#allocation2 + $0x68] sm:$0xff]
        %v3053 = vld [vmem:[#allocation2 + $0x70] sm:$0xff]
        %v3054 = vld [vmem:[#allocation2 + $0x78] sm:$0xff]
        %v3055 = vld [vmem:[#allocation2 + $0x80] sm:$0xff]
        %v3056 = vld [vmem:[#allocation2 + $0x88] sm:$0xff]
        %v3057 = vld [vmem:[#allocation2 + $0x90] sm:$0xff]
        %v3058 = vld [vmem:[#allocation2 + $0x98] sm:$0xff]
        %v3059 = vld [vmem:[#allocation2 + $0xa0] sm:$0xff]
        %v3060 = vld [vmem:[#allocation2 + $0xa8] sm:$0xff]
        %v3061 = vld [vmem:[#allocation2 + $0xb0] sm:$0xff]
        %v3062 = vld [vmem:[#allocation2 + $0xb8] sm:$0xff]
        %v3063 = vld [vmem:[#allocation2 + $0xc0] sm:$0xff]
        %v3064 = vld [vmem:[#allocation2 + $0xc8] sm:$0xff]
        %v3065 = vld [vmem:[#allocation2 + $0xd0] sm:$0xff]
        %v3066 = vld [vmem:[#allocation2 + $0xd8] sm:$0xff]
        %v3067 = vld [vmem:[#allocation2 + $0xe0] sm:$0xff]
        %v3068 = vld [vmem:[#allocation2 + $0xe8] sm:$0xff]
        %v3069 = vld [vmem:[#allocation2 + $0xf0] sm:$0xff]
        %v3070 = vld [vmem:[#allocation2 + $0xf8] sm:$0xff]
        %v3071 = vld [vmem:[#allocation2 + $0x100] sm:$0xff]
        %v3072 = vld [vmem:[#allocation2 + $0x108] sm:$0xff]
        %v3073 = vld [vmem:[#allocation2 + $0x110] sm:$0xff]
        %v3074 = vld [vmem:[#allocation2 + $0x118] sm:$0xff]
        %v3075 = vld [vmem:[#allocation2 + $0x120] sm:$0xff]
        %v3076 = vld [vmem:[#allocation2 + $0x128] sm:$0xff]
        %v3077 = vld [vmem:[#allocation2 + $0x130] sm:$0xff]
        %v3078 = vld [vmem:[#allocation2 + $0x138] sm:$0xff]
        %v3079 = vld [vmem:[#allocation2 + $0x140] sm:$0xff]
        %v3080 = vld [vmem:[#allocation2 + $0x148] sm:$0xff]
        %v3081 = vld [vmem:[#allocation2 + $0x150] sm:$0xff]
        %v3082 = vld [vmem:[#allocation2 + $0x158] sm:$0xff]
        %v3083 = vld [vmem:[#allocation2 + $0x160] sm:$0xff]
        %v3084 = vld [vmem:[#allocation2 + $0x168] sm:$0xff]
        %v3085 = vld [vmem:[#allocation2 + $0x170] sm:$0xff]
        %v3086 = vld [vmem:[#allocation2 + $0x178] sm:$0xff]
        %v3087 = vld [vmem:[#allocation2 + $0x180] sm:$0x3f]
        %v3088 = vpack.c.bf16 %v3040, %v3039
        %v3089 = vpack.c.bf16 %v3042, %v3041
        %v3090 = vpack.c.bf16 %v3044, %v3043
        %v3091 = vpack.c.bf16 %v3046, %v3045
        %v3092 = vpack.c.bf16 %v3048, %v3047
        %v3093 = vpack.c.bf16 %v3050, %v3049
        %v3094 = vpack.c.bf16 %v3052, %v3051
        %v3095 = vpack.c.bf16 %v3054, %v3053
        %v3096 = vpack.c.bf16 %v3056, %v3055
        %v3097 = vpack.c.bf16 %v3058, %v3057
        %v3098 = vpack.c.bf16 %v3060, %v3059
        %v3099 = vpack.c.bf16 %v3062, %v3061
        %v3100 = vpack.c.bf16 %v3064, %v3063
        %v3101 = vpack.c.bf16 %v3066, %v3065
        %v3102 = vpack.c.bf16 %v3068, %v3067
        %v3103 = vpack.c.bf16 %v3070, %v3069
        %v3104 = vpack.c.bf16 %v3072, %v3071
        %v3105 = vpack.c.bf16 %v3074, %v3073
        %v3106 = vpack.c.bf16 %v3076, %v3075
        %v3107 = vpack.c.bf16 %v3078, %v3077
        %v3108 = vpack.c.bf16 %v3080, %v3079
        %v3109 = vpack.c.bf16 %v3082, %v3081
        %v3110 = vpack.c.bf16 %v3084, %v3083
        %v3111 = vpack.c.bf16 %v3086, %v3085
        %v3112 = vpack.c.bf16 %v3087, %v3087
        %v3113 = vld [vmem:[%s2] sm:$0xf]
        %v3114 = vld [vmem:[%s2 + $0x4] sm:$0xf]
        %v3115 = vld [vmem:[%s2 + $0x8] sm:$0xf]
        %v3116 = vld [vmem:[%s2 + $0xc] sm:$0xf]
        %v3117 = vld [vmem:[%s2 + $0x10] sm:$0xf]
        %v3118 = vld [vmem:[%s2 + $0x14] sm:$0xf]
        %v3119 = vld [vmem:[%s2 + $0x18] sm:$0xf]
        %v3120 = vld [vmem:[%s2 + $0x1c] sm:$0xf]
        %v3121 = vld [vmem:[#allocation2 + $0x1] sm:$0xff]
        %v3122 = vld [vmem:[#allocation2 + $0x9] sm:$0xff]
        %v3123 = vld [vmem:[#allocation2 + $0x11] sm:$0xff]
        %v3124 = vld [vmem:[#allocation2 + $0x19] sm:$0xff]
        %v3125 = vld [vmem:[#allocation2 + $0x21] sm:$0xff]
        %v3126 = vld [vmem:[#allocation2 + $0x29] sm:$0xff]
        %v3127 = vld [vmem:[#allocation2 + $0x31] sm:$0xff]
        %v3128 = vld [vmem:[#allocation2 + $0x39] sm:$0xff]
        %v3129 = vld [vmem:[#allocation2 + $0x41] sm:$0xff]
        %v3130 = vld [vmem:[#allocation2 + $0x49] sm:$0xff]
        %v3131 = vld [vmem:[#allocation2 + $0x51] sm:$0xff]
        %v3132 = vld [vmem:[#allocation2 + $0x59] sm:$0xff]
        %v3133 = vld [vmem:[#allocation2 + $0x61] sm:$0xff]
        %v3134 = vld [vmem:[#allocation2 + $0x69] sm:$0xff]
        %v3135 = vld [vmem:[#allocation2 + $0x71] sm:$0xff]
        %v3136 = vld [vmem:[#allocation2 + $0x79] sm:$0xff]
        %v3137 = vld [vmem:[#allocation2 + $0x81] sm:$0xff]
        %v3138 = vld [vmem:[#allocation2 + $0x89] sm:$0xff]
        %v3139 = vld [vmem:[#allocation2 + $0x91] sm:$0xff]
        %v3140 = vld [vmem:[#allocation2 + $0x99] sm:$0xff]
        %v3141 = vld [vmem:[#allocation2 + $0xa1] sm:$0xff]
        %v3142 = vld [vmem:[#allocation2 + $0xa9] sm:$0xff]
        %v3143 = vld [vmem:[#allocation2 + $0xb1] sm:$0xff]
        %v3144 = vld [vmem:[#allocation2 + $0xb9] sm:$0xff]
        %v3145 = vld [vmem:[#allocation2 + $0xc1] sm:$0xff]
        %v3146 = vld [vmem:[#allocation2 + $0xc9] sm:$0xff]
        %v3147 = vld [vmem:[#allocation2 + $0xd1] sm:$0xff]
        %v3148 = vld [vmem:[#allocation2 + $0xd9] sm:$0xff]
        %v3149 = vld [vmem:[#allocation2 + $0xe1] sm:$0xff]
        %v3150 = vld [vmem:[#allocation2 + $0xe9] sm:$0xff]
        %v3151 = vld [vmem:[#allocation2 + $0xf1] sm:$0xff]
        %v3152 = vld [vmem:[#allocation2 + $0xf9] sm:$0xff]
        %v3153 = vld [vmem:[#allocation2 + $0x101] sm:$0xff]
        %v3154 = vld [vmem:[#allocation2 + $0x109] sm:$0xff]
        %v3155 = vld [vmem:[#allocation2 + $0x111] sm:$0xff]
        %v3156 = vld [vmem:[#allocation2 + $0x119] sm:$0xff]
        %v3157 = vld [vmem:[#allocation2 + $0x121] sm:$0xff]
        %v3158 = vld [vmem:[#allocation2 + $0x129] sm:$0xff]
        %v3159 = vld [vmem:[#allocation2 + $0x131] sm:$0xff]
        %v3160 = vld [vmem:[#allocation2 + $0x139] sm:$0xff]
        %v3161 = vld [vmem:[#allocation2 + $0x141] sm:$0xff]
        %v3162 = vld [vmem:[#allocation2 + $0x149] sm:$0xff]
        %v3163 = vld [vmem:[#allocation2 + $0x151] sm:$0xff]
        %v3164 = vld [vmem:[#allocation2 + $0x159] sm:$0xff]
        %v3165 = vld [vmem:[#allocation2 + $0x161] sm:$0xff]
        %v3166 = vld [vmem:[#allocation2 + $0x169] sm:$0xff]
        %v3167 = vld [vmem:[#allocation2 + $0x171] sm:$0xff]
        %v3168 = vld [vmem:[#allocation2 + $0x179] sm:$0xff]
        %v3169 = vld [vmem:[#allocation2 + $0x181] sm:$0x3f]
        %v3170 = vpack.c.bf16 %v3122, %v3121
        %v3171 = vpack.c.bf16 %v3124, %v3123
        %v3172 = vpack.c.bf16 %v3126, %v3125
        %v3173 = vpack.c.bf16 %v3128, %v3127
        %v3174 = vpack.c.bf16 %v3130, %v3129
        %v3175 = vpack.c.bf16 %v3132, %v3131
        %v3176 = vpack.c.bf16 %v3134, %v3133
        %v3177 = vpack.c.bf16 %v3136, %v3135
        %v3178 = vpack.c.bf16 %v3138, %v3137
        %v3179 = vpack.c.bf16 %v3140, %v3139
        %v3180 = vpack.c.bf16 %v3142, %v3141
        %v3181 = vpack.c.bf16 %v3144, %v3143
        %v3182 = vpack.c.bf16 %v3146, %v3145
        %v3183 = vpack.c.bf16 %v3148, %v3147
        %v3184 = vpack.c.bf16 %v3150, %v3149
        %v3185 = vpack.c.bf16 %v3152, %v3151
        %v3186 = vpack.c.bf16 %v3154, %v3153
        %v3187 = vpack.c.bf16 %v3156, %v3155
        %v3188 = vpack.c.bf16 %v3158, %v3157
        %v3189 = vpack.c.bf16 %v3160, %v3159
        %v3190 = vpack.c.bf16 %v3162, %v3161
        %v3191 = vpack.c.bf16 %v3164, %v3163
        %v3192 = vpack.c.bf16 %v3166, %v3165
        %v3193 = vpack.c.bf16 %v3168, %v3167
        %v3194 = vpack.c.bf16 %v3169, %v3169
        %s3195 = scalar_lea.vmem %s2, 32
        %v3196 = vld [vmem:[%s3195] sm:$0xf]
        %v3197 = vld [vmem:[%s3195 + $0x4] sm:$0xf]
        %v3198 = vld [vmem:[%s3195 + $0x8] sm:$0xf]
        %v3199 = vld [vmem:[%s3195 + $0xc] sm:$0xf]
        %v3200 = vld [vmem:[%s3195 + $0x10] sm:$0xf]
        %v3201 = vld [vmem:[%s3195 + $0x14] sm:$0xf]
        %v3202 = vld [vmem:[%s3195 + $0x18] sm:$0xf]
        %v3203 = vld [vmem:[%s3195 + $0x1c] sm:$0xf]
        %v3212 = vunpack.c.l.b16 %v3196
        %v3213 = vunpack.c.l.b16 %v3197
        %v3214 = vunpack.c.l.b16 %v3198
        %v3215 = vunpack.c.l.b16 %v3199
        %v3216 = vunpack.c.l.b16 %v3200
        %v3217 = vunpack.c.l.b16 %v3201
        %v3218 = vunpack.c.l.b16 %v3202
        %v3219 = vunpack.c.l.b16 %v3203
        %v3220 = vpack.c.b16 %v3213, %v3212
        %v3221 = vpack.c.b16 %v3215, %v3214
        %v3222 = vpack.c.b16 %v3217, %v3216
        %v3223 = vpack.c.b16 %v3219, %v3218
        %v3229 = vsel %vm2712, %v3170, 0
        %v3232 = vsel %vm2712, %v3171, 0
        %v3235 = vsel %vm2712, %v3172, 0
        %v3238 = vsel %vm2712, %v3173, 0
        %v3241 = vsel %vm2712, %v3174, 0
        %v3244 = vsel %vm2712, %v3175, 0
        %v3247 = vsel %vm2712, %v3176, 0
        %v3250 = vsel %vm2712, %v3177, 0
        %v3253 = vsel %vm2712, %v3178, 0
        %v3256 = vsel %vm2712, %v3179, 0
        %v3259 = vsel %vm2712, %v3180, 0
        %v3262 = vsel %vm2712, %v3181, 0
        %v3265 = vsel %vm2712, %v3182, 0
        %v3268 = vsel %vm2712, %v3183, 0
        %v3271 = vsel %vm2712, %v3184, 0
        %v3274 = vsel %vm2712, %v3185, 0
        %v3277 = vsel %vm2712, %v3186, 0
        %v3280 = vsel %vm2712, %v3187, 0
        %v3283 = vsel %vm2712, %v3188, 0
        %v3286 = vsel %vm2712, %v3189, 0
        %v3289 = vsel %vm2712, %v3190, 0
        %v3292 = vsel %vm2712, %v3191, 0
        %v3295 = vsel %vm2712, %v3192, 0
        %v3298 = vsel %vm2712, %v3193, 0
        %v3301 = vsel %vm2712, %v3194, 0
        %3303 = vmatprep.subr.bf16.mxu0 0
        %3304 = vmatpush1.bf16.msra.mxu0 0
        %3305 = vmatprep.subr.bf16.mxu0 0
        %3306 = vmatpush1.bf16.msra.mxu0 0
        %3307 = vmatprep.subr.bf16.mxu0 0
        %3308 = vmatpush1.bf16.msra.mxu0 0
        %3309 = vmatprep.subr.bf16.mxu0 0
        %3310 = vmatpush1.bf16.msra.mxu0 0
        %3311 = vmatprep.subr.bf16.mxu0 0
        %3312 = vmatpush1.bf16.msra.mxu0 %v3223
        %3313 = vmatprep.subr.bf16.mxu0 0
        %3314 = vmatpush1.bf16.msra.mxu0 %v3222
        %3315 = vmatprep.subr.bf16.mxu0 0
        %3316 = vmatpush1.bf16.msra.mxu0 %v3221
        %3317 = vmatprep.subr.bf16.mxu0 0
        %3318 = vmatpush1.bf16.msra.mxu0 %v3220
        %3319 = vmatprep.subr.bf16.mxu0 0
        %3320 = vmatpush2.bf16.msra.mxu0 0
        %3321 = vmatprep.subr.bf16.mxu0 0
        %3322 = vmatpush2.bf16.msra.mxu0 0
        %3323 = vmatprep.subr.bf16.mxu0 0
        %3324 = vmatpush2.bf16.msra.mxu0 0
        %3325 = vmatprep.subr.bf16.mxu0 0
        %3326 = vmatpush2.bf16.msra.mxu0 0
        %3327 = vmatprep.subr.bf16.mxu0 0
        %3328 = vmatpush2.bf16.msra.mxu0 0
        %3329 = vmatprep.subr.bf16.mxu0 0
        %3330 = vmatpush2.bf16.msra.mxu0 0
        %3331 = vmatprep.subr.bf16.mxu0 0
        %3332 = vmatpush2.bf16.msra.mxu0 0
        %3333 = vmatprep.subr.bf16.mxu0 0
        %3334 = vmatpush2.bf16.msra.mxu0 0
        %3335 = vmatprep.mubr.bf16.mxu0 0
        %3336 = vmatmul.mubr.bf16.gmra.mxu0 %v3229
        %v3337 = vpop.f32.mrf.mxu0
        %v3338 = vadd.f32 0.0, %v3337
        %v3339 = vpop.f32.mrf.mxu0
        %v3340 = vpop.f32.mrf.mxu0
        %v3341 = vadd.f32 0.0, %v3340
        %v3342 = vpop.f32.mrf.mxu0
        %3343 = vmatprep.mubr.bf16.mxu0 0
        %3344 = vmatmul.mubr.bf16.gmra.mxu0 %v3232
        %v3345 = vpop.f32.mrf.mxu0
        %v3346 = vadd.f32 0.0, %v3345
        %v3347 = vpop.f32.mrf.mxu0
        %v3348 = vpop.f32.mrf.mxu0
        %v3349 = vadd.f32 0.0, %v3348
        %v3350 = vpop.f32.mrf.mxu0
        %3351 = vmatprep.mubr.bf16.mxu0 0
        %3352 = vmatmul.mubr.bf16.gmra.mxu0 %v3235
        %v3353 = vpop.f32.mrf.mxu0
        %v3354 = vadd.f32 0.0, %v3353
        %v3355 = vpop.f32.mrf.mxu0
        %v3356 = vpop.f32.mrf.mxu0
        %v3357 = vadd.f32 0.0, %v3356
        %v3358 = vpop.f32.mrf.mxu0
        %3359 = vmatprep.mubr.bf16.mxu0 0
        %3360 = vmatmul.mubr.bf16.gmra.mxu0 %v3238
        %v3361 = vpop.f32.mrf.mxu0
        %v3362 = vadd.f32 0.0, %v3361
        %v3363 = vpop.f32.mrf.mxu0
        %v3364 = vpop.f32.mrf.mxu0
        %v3365 = vadd.f32 0.0, %v3364
        %v3366 = vpop.f32.mrf.mxu0
        %3367 = vmatprep.mubr.bf16.mxu0 0
        %3368 = vmatmul.mubr.bf16.gmra.mxu0 %v3241
        %v3369 = vpop.f32.mrf.mxu0
        %v3370 = vadd.f32 0.0, %v3369
        %v3371 = vpop.f32.mrf.mxu0
        %v3372 = vpop.f32.mrf.mxu0
        %v3373 = vadd.f32 0.0, %v3372
        %v3374 = vpop.f32.mrf.mxu0
        %3375 = vmatprep.mubr.bf16.mxu0 0
        %3376 = vmatmul.mubr.bf16.gmra.mxu0 %v3244
        %v3377 = vpop.f32.mrf.mxu0
        %v3378 = vadd.f32 0.0, %v3377
        %v3379 = vpop.f32.mrf.mxu0
        %v3380 = vpop.f32.mrf.mxu0
        %v3381 = vadd.f32 0.0, %v3380
        %v3382 = vpop.f32.mrf.mxu0
        %3383 = vmatprep.mubr.bf16.mxu0 0
        %3384 = vmatmul.mubr.bf16.gmra.mxu0 %v3247
        %v3385 = vpop.f32.mrf.mxu0
        %v3386 = vadd.f32 0.0, %v3385
        %v3387 = vpop.f32.mrf.mxu0
        %v3388 = vpop.f32.mrf.mxu0
        %v3389 = vadd.f32 0.0, %v3388
        %v3390 = vpop.f32.mrf.mxu0
        %3391 = vmatprep.mubr.bf16.mxu0 0
        %3392 = vmatmul.mubr.bf16.gmra.mxu0 %v3250
        %v3393 = vpop.f32.mrf.mxu0
        %v3394 = vadd.f32 0.0, %v3393
        %v3395 = vpop.f32.mrf.mxu0
        %v3396 = vpop.f32.mrf.mxu0
        %v3397 = vadd.f32 0.0, %v3396
        %v3398 = vpop.f32.mrf.mxu0
        %3399 = vmatprep.mubr.bf16.mxu0 0
        %3400 = vmatmul.mubr.bf16.gmra.mxu0 %v3253
        %v3401 = vpop.f32.mrf.mxu0
        %v3402 = vadd.f32 0.0, %v3401
        %v3403 = vpop.f32.mrf.mxu0
        %v3404 = vpop.f32.mrf.mxu0
        %v3405 = vadd.f32 0.0, %v3404
        %v3406 = vpop.f32.mrf.mxu0
        %3407 = vmatprep.mubr.bf16.mxu0 0
        %3408 = vmatmul.mubr.bf16.gmra.mxu0 %v3256
        %v3409 = vpop.f32.mrf.mxu0
        %v3410 = vadd.f32 0.0, %v3409
        %v3411 = vpop.f32.mrf.mxu0
        %v3412 = vpop.f32.mrf.mxu0
        %v3413 = vadd.f32 0.0, %v3412
        %v3414 = vpop.f32.mrf.mxu0
        %3415 = vmatprep.mubr.bf16.mxu0 0
        %3416 = vmatmul.mubr.bf16.gmra.mxu0 %v3259
        %v3417 = vpop.f32.mrf.mxu0
        %v3418 = vadd.f32 0.0, %v3417
        %v3419 = vpop.f32.mrf.mxu0
        %v3420 = vpop.f32.mrf.mxu0
        %v3421 = vadd.f32 0.0, %v3420
        %v3422 = vpop.f32.mrf.mxu0
        %3423 = vmatprep.mubr.bf16.mxu0 0
        %3424 = vmatmul.mubr.bf16.gmra.mxu0 %v3262
        %v3425 = vpop.f32.mrf.mxu0
        %v3426 = vadd.f32 0.0, %v3425
        %v3427 = vpop.f32.mrf.mxu0
        %v3428 = vpop.f32.mrf.mxu0
        %v3429 = vadd.f32 0.0, %v3428
        %v3430 = vpop.f32.mrf.mxu0
        %3431 = vmatprep.mubr.bf16.mxu0 0
        %3432 = vmatmul.mubr.bf16.gmra.mxu0 %v3265
        %v3433 = vpop.f32.mrf.mxu0
        %v3434 = vadd.f32 0.0, %v3433
        %v3435 = vpop.f32.mrf.mxu0
        %v3436 = vpop.f32.mrf.mxu0
        %v3437 = vpop.f32.mrf.mxu0
        %3438 = vmatprep.mubr.bf16.mxu0 0
        %3439 = vmatmul.mubr.bf16.gmra.mxu0 %v3268
        %v3440 = vpop.f32.mrf.mxu0
        %v3441 = vadd.f32 0.0, %v3440
        %v3442 = vpop.f32.mrf.mxu0
        %v3443 = vpop.f32.mrf.mxu0
        %v3444 = vadd.f32 0.0, %v3443
        %v3445 = vpop.f32.mrf.mxu0
        %3446 = vmatprep.mubr.bf16.mxu0 0
        %3447 = vmatmul.mubr.bf16.gmra.mxu0 %v3271
        %v3448 = vpop.f32.mrf.mxu0
        %v3449 = vadd.f32 0.0, %v3448
        %v3450 = vpop.f32.mrf.mxu0
        %v3451 = vpop.f32.mrf.mxu0
        %v3452 = vadd.f32 0.0, %v3451
        %v3453 = vpop.f32.mrf.mxu0
        %3454 = vmatprep.mubr.bf16.mxu0 0
        %3455 = vmatmul.mubr.bf16.gmra.mxu0 %v3274
        %v3456 = vpop.f32.mrf.mxu0
        %v3457 = vadd.f32 0.0, %v3456
        %v3458 = vpop.f32.mrf.mxu0
        %v3459 = vpop.f32.mrf.mxu0
        %v3460 = vadd.f32 0.0, %v3459
        %v3461 = vpop.f32.mrf.mxu0
        %3462 = vmatprep.mubr.bf16.mxu0 0
        %3463 = vmatmul.mubr.bf16.gmra.mxu0 %v3277
        %v3464 = vpop.f32.mrf.mxu0
        %v3465 = vadd.f32 0.0, %v3464
        %v3466 = vpop.f32.mrf.mxu0
        %v3467 = vpop.f32.mrf.mxu0
        %v3468 = vadd.f32 0.0, %v3467
        %v3469 = vpop.f32.mrf.mxu0
        %3470 = vmatprep.mubr.bf16.mxu0 0
        %3471 = vmatmul.mubr.bf16.gmra.mxu0 %v3280
        %v3472 = vpop.f32.mrf.mxu0
        %v3473 = vadd.f32 0.0, %v3472
        %v3474 = vpop.f32.mrf.mxu0
        %v3475 = vpop.f32.mrf.mxu0
        %v3476 = vadd.f32 0.0, %v3475
        %v3477 = vpop.f32.mrf.mxu0
        %3478 = vmatprep.mubr.bf16.mxu0 0
        %3479 = vmatmul.mubr.bf16.gmra.mxu0 %v3283
        %v3480 = vpop.f32.mrf.mxu0
        %v3481 = vadd.f32 0.0, %v3480
        %v3482 = vpop.f32.mrf.mxu0
        %v3483 = vpop.f32.mrf.mxu0
        %v3484 = vadd.f32 0.0, %v3483
        %v3485 = vpop.f32.mrf.mxu0
        %3486 = vmatprep.mubr.bf16.mxu0 0
        %3487 = vmatmul.mubr.bf16.gmra.mxu0 %v3286
        %v3488 = vpop.f32.mrf.mxu0
        %v3489 = vadd.f32 0.0, %v3488
        %v3490 = vpop.f32.mrf.mxu0
        %v3491 = vpop.f32.mrf.mxu0
        %v3492 = vadd.f32 0.0, %v3491
        %v3493 = vpop.f32.mrf.mxu0
        %3494 = vmatprep.mubr.bf16.mxu0 0
        %3495 = vmatmul.mubr.bf16.gmra.mxu0 %v3289
        %v3496 = vpop.f32.mrf.mxu0
        %v3497 = vadd.f32 0.0, %v3496
        %v3498 = vpop.f32.mrf.mxu0
        %v3499 = vpop.f32.mrf.mxu0
        %v3500 = vadd.f32 0.0, %v3499
        %v3501 = vpop.f32.mrf.mxu0
        %3502 = vmatprep.mubr.bf16.mxu0 0
        %3503 = vmatmul.mubr.bf16.gmra.mxu0 %v3292
        %v3504 = vpop.f32.mrf.mxu0
        %v3505 = vadd.f32 0.0, %v3504
        %v3506 = vpop.f32.mrf.mxu0
        %v3507 = vpop.f32.mrf.mxu0
        %v3508 = vadd.f32 0.0, %v3507
        %v3509 = vpop.f32.mrf.mxu0
        %3510 = vmatprep.mubr.bf16.mxu0 0
        %3511 = vmatmul.mubr.bf16.gmra.mxu0 %v3295
        %v3512 = vpop.f32.mrf.mxu0
        %v3513 = vadd.f32 0.0, %v3512
        %v3514 = vpop.f32.mrf.mxu0
        %v3515 = vpop.f32.mrf.mxu0
        %v3516 = vadd.f32 0.0, %v3515
        %v3517 = vpop.f32.mrf.mxu0
        %3518 = vmatprep.mubr.bf16.mxu0 0
        %3519 = vmatmul.mubr.bf16.gmra.mxu0 %v3298
        %v3520 = vpop.f32.mrf.mxu0
        %v3521 = vadd.f32 0.0, %v3520
        %v3522 = vpop.f32.mrf.mxu0
        %v3523 = vpop.f32.mrf.mxu0
        %v3524 = vadd.f32 0.0, %v3523
        %v3525 = vpop.f32.mrf.mxu0
        %3526 = vmatprep.mubr.bf16.mxu0 0
        %3527 = vmatmul.mubr.bf16.gmra.mxu0 %v3301
        %v3528 = vpop.f32.mrf.mxu0
        %v3529 = vadd.f32 0.0, %v3528
        %v3530 = vpop.f32.mrf.mxu0
        %v3531 = vpop.f32.mrf.mxu0
        %v3532 = vpop.f32.mrf.mxu0
        %3533 = vdwg.mxu0
        %v3542 = vunpack.c.l.b16 %v3113
        %v3543 = vunpack.c.l.b16 %v3114
        %v3544 = vunpack.c.l.b16 %v3115
        %v3545 = vunpack.c.l.b16 %v3116
        %v3546 = vunpack.c.l.b16 %v3117
        %v3547 = vunpack.c.l.b16 %v3118
        %v3548 = vunpack.c.l.b16 %v3119
        %v3549 = vunpack.c.l.b16 %v3120
        %v3550 = vpack.c.b16 %v3543, %v3542
        %v3551 = vpack.c.b16 %v3545, %v3544
        %v3552 = vpack.c.b16 %v3547, %v3546
        %v3553 = vpack.c.b16 %v3549, %v3548
        %v3559 = vsel %vm2712, %v3088, 0
        %v3562 = vsel %vm2712, %v3089, 0
        %v3565 = vsel %vm2712, %v3090, 0
        %v3568 = vsel %vm2712, %v3091, 0
        %v3571 = vsel %vm2712, %v3092, 0
        %v3574 = vsel %vm2712, %v3093, 0
        %v3577 = vsel %vm2712, %v3094, 0
        %v3580 = vsel %vm2712, %v3095, 0
        %v3583 = vsel %vm2712, %v3096, 0
        %v3586 = vsel %vm2712, %v3097, 0
        %v3589 = vsel %vm2712, %v3098, 0
        %v3592 = vsel %vm2712, %v3099, 0
        %v3595 = vsel %vm2712, %v3100, 0
        %v3598 = vsel %vm2712, %v3101, 0
        %v3601 = vsel %vm2712, %v3102, 0
        %v3604 = vsel %vm2712, %v3103, 0
        %v3607 = vsel %vm2712, %v3104, 0
        %v3610 = vsel %vm2712, %v3105, 0
        %v3613 = vsel %vm2712, %v3106, 0
        %v3616 = vsel %vm2712, %v3107, 0
        %v3619 = vsel %vm2712, %v3108, 0
        %v3622 = vsel %vm2712, %v3109, 0
        %v3625 = vsel %vm2712, %v3110, 0
        %v3628 = vsel %vm2712, %v3111, 0
        %v3631 = vsel %vm2712, %v3112, 0
        %3633 = vmatprep.subr.bf16.mxu0 0
        %3634 = vmatpush1.bf16.msra.mxu0 0
        %3635 = vmatprep.subr.bf16.mxu0 0
        %3636 = vmatpush1.bf16.msra.mxu0 0
        %3637 = vmatprep.subr.bf16.mxu0 0
        %3638 = vmatpush1.bf16.msra.mxu0 0
        %3639 = vmatprep.subr.bf16.mxu0 0
        %3640 = vmatpush1.bf16.msra.mxu0 0
        %3641 = vmatprep.subr.bf16.mxu0 0
        %3642 = vmatpush1.bf16.msra.mxu0 %v3553
        %3643 = vmatprep.subr.bf16.mxu0 0
        %3644 = vmatpush1.bf16.msra.mxu0 %v3552
        %3645 = vmatprep.subr.bf16.mxu0 0
        %3646 = vmatpush1.bf16.msra.mxu0 %v3551
        %3647 = vmatprep.subr.bf16.mxu0 0
        %3648 = vmatpush1.bf16.msra.mxu0 %v3550
        %3649 = vmatprep.subr.bf16.mxu0 0
        %3650 = vmatpush2.bf16.msra.mxu0 0
        %3651 = vmatprep.subr.bf16.mxu0 0
        %3652 = vmatpush2.bf16.msra.mxu0 0
        %3653 = vmatprep.subr.bf16.mxu0 0
        %3654 = vmatpush2.bf16.msra.mxu0 0
        %3655 = vmatprep.subr.bf16.mxu0 0
        %3656 = vmatpush2.bf16.msra.mxu0 0
        %3657 = vmatprep.subr.bf16.mxu0 0
        %3658 = vmatpush2.bf16.msra.mxu0 0
        %3659 = vmatprep.subr.bf16.mxu0 0
        %3660 = vmatpush2.bf16.msra.mxu0 0
        %3661 = vmatprep.subr.bf16.mxu0 0
        %3662 = vmatpush2.bf16.msra.mxu0 0
        %3663 = vmatprep.subr.bf16.mxu0 0
        %3664 = vmatpush2.bf16.msra.mxu0 0
        %3665 = vmatprep.mubr.bf16.mxu0 0
        %3666 = vmatmul.mubr.bf16.gmra.mxu0 %v3559
        %v3667 = vpop.f32.mrf.mxu0
        %v3668 = vadd.f32 %v3338, %v3667
        %v3669 = vpop.f32.mrf.mxu0
        %v3670 = vpop.f32.mrf.mxu0
        %v3671 = vadd.f32 %v3341, %v3670
        %v3672 = vpop.f32.mrf.mxu0
        %3673 = vmatprep.mubr.bf16.mxu0 0
        %3674 = vmatmul.mubr.bf16.gmra.mxu0 %v3562
        %v3675 = vpop.f32.mrf.mxu0
        %v3676 = vadd.f32 %v3346, %v3675
        %v3677 = vpop.f32.mrf.mxu0
        %v3678 = vpop.f32.mrf.mxu0
        %v3679 = vadd.f32 %v3349, %v3678
        %v3680 = vpop.f32.mrf.mxu0
        %3681 = vmatprep.mubr.bf16.mxu0 0
        %3682 = vmatmul.mubr.bf16.gmra.mxu0 %v3565
        %v3683 = vpop.f32.mrf.mxu0
        %v3684 = vadd.f32 %v3354, %v3683
        %v3685 = vpop.f32.mrf.mxu0
        %v3686 = vpop.f32.mrf.mxu0
        %v3687 = vadd.f32 %v3357, %v3686
        %v3688 = vpop.f32.mrf.mxu0
        %3689 = vmatprep.mubr.bf16.mxu0 0
        %3690 = vmatmul.mubr.bf16.gmra.mxu0 %v3568
        %v3691 = vpop.f32.mrf.mxu0
        %v3692 = vadd.f32 %v3362, %v3691
        %v3693 = vpop.f32.mrf.mxu0
        %v3694 = vpop.f32.mrf.mxu0
        %v3695 = vadd.f32 %v3365, %v3694
        %v3696 = vpop.f32.mrf.mxu0
        %3697 = vmatprep.mubr.bf16.mxu0 0
        %3698 = vmatmul.mubr.bf16.gmra.mxu0 %v3571
        %v3699 = vpop.f32.mrf.mxu0
        %v3700 = vadd.f32 %v3370, %v3699
        %v3701 = vpop.f32.mrf.mxu0
        %v3702 = vpop.f32.mrf.mxu0
        %v3703 = vadd.f32 %v3373, %v3702
        %v3704 = vpop.f32.mrf.mxu0
        %3705 = vmatprep.mubr.bf16.mxu0 0
        %3706 = vmatmul.mubr.bf16.gmra.mxu0 %v3574
        %v3707 = vpop.f32.mrf.mxu0
        %v3708 = vadd.f32 %v3378, %v3707
        %v3709 = vpop.f32.mrf.mxu0
        %v3710 = vpop.f32.mrf.mxu0
        %v3711 = vadd.f32 %v3381, %v3710
        %v3712 = vpop.f32.mrf.mxu0
        %3713 = vmatprep.mubr.bf16.mxu0 0
        %3714 = vmatmul.mubr.bf16.gmra.mxu0 %v3577
        %v3715 = vpop.f32.mrf.mxu0
        %v3716 = vadd.f32 %v3386, %v3715
        %v3717 = vpop.f32.mrf.mxu0
        %v3718 = vpop.f32.mrf.mxu0
        %v3719 = vadd.f32 %v3389, %v3718
        %v3720 = vpop.f32.mrf.mxu0
        %3721 = vmatprep.mubr.bf16.mxu0 0
        %3722 = vmatmul.mubr.bf16.gmra.mxu0 %v3580
        %v3723 = vpop.f32.mrf.mxu0
        %v3724 = vadd.f32 %v3394, %v3723
        %v3725 = vpop.f32.mrf.mxu0
        %v3726 = vpop.f32.mrf.mxu0
        %v3727 = vadd.f32 %v3397, %v3726
        %v3728 = vpop.f32.mrf.mxu0
        %3729 = vmatprep.mubr.bf16.mxu0 0
        %3730 = vmatmul.mubr.bf16.gmra.mxu0 %v3583
        %v3731 = vpop.f32.mrf.mxu0
        %v3732 = vadd.f32 %v3402, %v3731
        %v3733 = vpop.f32.mrf.mxu0
        %v3734 = vpop.f32.mrf.mxu0
        %v3735 = vadd.f32 %v3405, %v3734
        %v3736 = vpop.f32.mrf.mxu0
        %3737 = vmatprep.mubr.bf16.mxu0 0
        %3738 = vmatmul.mubr.bf16.gmra.mxu0 %v3586
        %v3739 = vpop.f32.mrf.mxu0
        %v3740 = vadd.f32 %v3410, %v3739
        %v3741 = vpop.f32.mrf.mxu0
        %v3742 = vpop.f32.mrf.mxu0
        %v3743 = vadd.f32 %v3413, %v3742
        %v3744 = vpop.f32.mrf.mxu0
        %3745 = vmatprep.mubr.bf16.mxu0 0
        %3746 = vmatmul.mubr.bf16.gmra.mxu0 %v3589
        %v3747 = vpop.f32.mrf.mxu0
        %v3748 = vadd.f32 %v3418, %v3747
        %v3749 = vpop.f32.mrf.mxu0
        %v3750 = vpop.f32.mrf.mxu0
        %v3751 = vadd.f32 %v3421, %v3750
        %v3752 = vpop.f32.mrf.mxu0
        %3753 = vmatprep.mubr.bf16.mxu0 0
        %3754 = vmatmul.mubr.bf16.gmra.mxu0 %v3592
        %v3755 = vpop.f32.mrf.mxu0
        %v3756 = vadd.f32 %v3426, %v3755
        %v3757 = vpop.f32.mrf.mxu0
        %v3758 = vpop.f32.mrf.mxu0
        %v3759 = vadd.f32 %v3429, %v3758
        %v3760 = vpop.f32.mrf.mxu0
        %3761 = vmatprep.mubr.bf16.mxu0 0
        %3762 = vmatmul.mubr.bf16.gmra.mxu0 %v3595
        %v3763 = vpop.f32.mrf.mxu0
        %v3764 = vadd.f32 %v3434, %v3763
        %v3765 = vpop.f32.mrf.mxu0
        %v3766 = vpop.f32.mrf.mxu0
        %v3767 = vpop.f32.mrf.mxu0
        %3768 = vmatprep.mubr.bf16.mxu0 0
        %3769 = vmatmul.mubr.bf16.gmra.mxu0 %v3598
        %v3770 = vpop.f32.mrf.mxu0
        %v3771 = vadd.f32 %v3441, %v3770
        %v3772 = vpop.f32.mrf.mxu0
        %v3773 = vpop.f32.mrf.mxu0
        %v3774 = vadd.f32 %v3444, %v3773
        %v3775 = vpop.f32.mrf.mxu0
        %3776 = vmatprep.mubr.bf16.mxu0 0
        %3777 = vmatmul.mubr.bf16.gmra.mxu0 %v3601
        %v3778 = vpop.f32.mrf.mxu0
        %v3779 = vadd.f32 %v3449, %v3778
        %v3780 = vpop.f32.mrf.mxu0
        %v3781 = vpop.f32.mrf.mxu0
        %v3782 = vadd.f32 %v3452, %v3781
        %v3783 = vpop.f32.mrf.mxu0
        %3784 = vmatprep.mubr.bf16.mxu0 0
        %3785 = vmatmul.mubr.bf16.gmra.mxu0 %v3604
        %v3786 = vpop.f32.mrf.mxu0
        %v3787 = vadd.f32 %v3457, %v3786
        %v3788 = vpop.f32.mrf.mxu0
        %v3789 = vpop.f32.mrf.mxu0
        %v3790 = vadd.f32 %v3460, %v3789
        %v3791 = vpop.f32.mrf.mxu0
        %3792 = vmatprep.mubr.bf16.mxu0 0
        %3793 = vmatmul.mubr.bf16.gmra.mxu0 %v3607
        %v3794 = vpop.f32.mrf.mxu0
        %v3795 = vadd.f32 %v3465, %v3794
        %v3796 = vpop.f32.mrf.mxu0
        %v3797 = vpop.f32.mrf.mxu0
        %v3798 = vadd.f32 %v3468, %v3797
        %v3799 = vpop.f32.mrf.mxu0
        %3800 = vmatprep.mubr.bf16.mxu0 0
        %3801 = vmatmul.mubr.bf16.gmra.mxu0 %v3610
        %v3802 = vpop.f32.mrf.mxu0
        %v3803 = vadd.f32 %v3473, %v3802
        %v3804 = vpop.f32.mrf.mxu0
        %v3805 = vpop.f32.mrf.mxu0
        %v3806 = vadd.f32 %v3476, %v3805
        %v3807 = vpop.f32.mrf.mxu0
        %3808 = vmatprep.mubr.bf16.mxu0 0
        %3809 = vmatmul.mubr.bf16.gmra.mxu0 %v3613
        %v3810 = vpop.f32.mrf.mxu0
        %v3811 = vadd.f32 %v3481, %v3810
        %v3812 = vpop.f32.mrf.mxu0
        %v3813 = vpop.f32.mrf.mxu0
        %v3814 = vadd.f32 %v3484, %v3813
        %v3815 = vpop.f32.mrf.mxu0
        %3816 = vmatprep.mubr.bf16.mxu0 0
        %3817 = vmatmul.mubr.bf16.gmra.mxu0 %v3616
        %v3818 = vpop.f32.mrf.mxu0
        %v3819 = vadd.f32 %v3489, %v3818
        %v3820 = vpop.f32.mrf.mxu0
        %v3821 = vpop.f32.mrf.mxu0
        %v3822 = vadd.f32 %v3492, %v3821
        %v3823 = vpop.f32.mrf.mxu0
        %3824 = vmatprep.mubr.bf16.mxu0 0
        %3825 = vmatmul.mubr.bf16.gmra.mxu0 %v3619
        %v3826 = vpop.f32.mrf.mxu0
        %v3827 = vadd.f32 %v3497, %v3826
        %v3828 = vpop.f32.mrf.mxu0
        %v3829 = vpop.f32.mrf.mxu0
        %v3830 = vadd.f32 %v3500, %v3829
        %v3831 = vpop.f32.mrf.mxu0
        %3832 = vmatprep.mubr.bf16.mxu0 0
        %3833 = vmatmul.mubr.bf16.gmra.mxu0 %v3622
        %v3834 = vpop.f32.mrf.mxu0
        %v3835 = vadd.f32 %v3505, %v3834
        %v3836 = vpop.f32.mrf.mxu0
        %v3837 = vpop.f32.mrf.mxu0
        %v3838 = vadd.f32 %v3508, %v3837
        %v3839 = vpop.f32.mrf.mxu0
        %3840 = vmatprep.mubr.bf16.mxu0 0
        %3841 = vmatmul.mubr.bf16.gmra.mxu0 %v3625
        %v3842 = vpop.f32.mrf.mxu0
        %v3843 = vadd.f32 %v3513, %v3842
        %v3844 = vpop.f32.mrf.mxu0
        %v3845 = vpop.f32.mrf.mxu0
        %v3846 = vadd.f32 %v3516, %v3845
        %v3847 = vpop.f32.mrf.mxu0
        %3848 = vmatprep.mubr.bf16.mxu0 0
        %3849 = vmatmul.mubr.bf16.gmra.mxu0 %v3628
        %v3850 = vpop.f32.mrf.mxu0
        %v3851 = vadd.f32 %v3521, %v3850
        %v3852 = vpop.f32.mrf.mxu0
        %v3853 = vpop.f32.mrf.mxu0
        %v3854 = vadd.f32 %v3524, %v3853
        %v3855 = vpop.f32.mrf.mxu0
        %3856 = vmatprep.mubr.bf16.mxu0 0
        %3857 = vmatmul.mubr.bf16.gmra.mxu0 %v3631
        %v3858 = vpop.f32.mrf.mxu0
        %v3859 = vadd.f32 %v3529, %v3858
        %v3860 = vpop.f32.mrf.mxu0
        %v3861 = vpop.f32.mrf.mxu0
        %v3862 = vpop.f32.mrf.mxu0
        %3863 = vdwg.mxu0
        %v3864 = vld [vmem:[#allocation2 + $0x2] sm:$0xff]
        %v3865 = vld [vmem:[#allocation2 + $0xa] sm:$0xff]
        %v3866 = vld [vmem:[#allocation2 + $0x12] sm:$0xff]
        %v3867 = vld [vmem:[#allocation2 + $0x1a] sm:$0xff]
        %v3868 = vld [vmem:[#allocation2 + $0x22] sm:$0xff]
        %v3869 = vld [vmem:[#allocation2 + $0x2a] sm:$0xff]
        %v3870 = vld [vmem:[#allocation2 + $0x32] sm:$0xff]
        %v3871 = vld [vmem:[#allocation2 + $0x3a] sm:$0xff]
        %v3872 = vld [vmem:[#allocation2 + $0x42] sm:$0xff]
        %v3873 = vld [vmem:[#allocation2 + $0x4a] sm:$0xff]
        %v3874 = vld [vmem:[#allocation2 + $0x52] sm:$0xff]
        %v3875 = vld [vmem:[#allocation2 + $0x5a] sm:$0xff]
        %v3876 = vld [vmem:[#allocation2 + $0x62] sm:$0xff]
        %v3877 = vld [vmem:[#allocation2 + $0x6a] sm:$0xff]
        %v3878 = vld [vmem:[#allocation2 + $0x72] sm:$0xff]
        %v3879 = vld [vmem:[#allocation2 + $0x7a] sm:$0xff]
        %v3880 = vld [vmem:[#allocation2 + $0x82] sm:$0xff]
        %v3881 = vld [vmem:[#allocation2 + $0x8a] sm:$0xff]
        %v3882 = vld [vmem:[#allocation2 + $0x92] sm:$0xff]
        %v3883 = vld [vmem:[#allocation2 + $0x9a] sm:$0xff]
        %v3884 = vld [vmem:[#allocation2 + $0xa2] sm:$0xff]
        %v3885 = vld [vmem:[#allocation2 + $0xaa] sm:$0xff]
        %v3886 = vld [vmem:[#allocation2 + $0xb2] sm:$0xff]
        %v3887 = vld [vmem:[#allocation2 + $0xba] sm:$0xff]
        %v3888 = vld [vmem:[#allocation2 + $0xc2] sm:$0xff]
        %v3889 = vld [vmem:[#allocation2 + $0xca] sm:$0xff]
        %v3890 = vld [vmem:[#allocation2 + $0xd2] sm:$0xff]
        %v3891 = vld [vmem:[#allocation2 + $0xda] sm:$0xff]
        %v3892 = vld [vmem:[#allocation2 + $0xe2] sm:$0xff]
        %v3893 = vld [vmem:[#allocation2 + $0xea] sm:$0xff]
        %v3894 = vld [vmem:[#allocation2 + $0xf2] sm:$0xff]
        %v3895 = vld [vmem:[#allocation2 + $0xfa] sm:$0xff]
        %v3896 = vld [vmem:[#allocation2 + $0x102] sm:$0xff]
        %v3897 = vld [vmem:[#allocation2 + $0x10a] sm:$0xff]
        %v3898 = vld [vmem:[#allocation2 + $0x112] sm:$0xff]
        %v3899 = vld [vmem:[#allocation2 + $0x11a] sm:$0xff]
        %v3900 = vld [vmem:[#allocation2 + $0x122] sm:$0xff]
        %v3901 = vld [vmem:[#allocation2 + $0x12a] sm:$0xff]
        %v3902 = vld [vmem:[#allocation2 + $0x132] sm:$0xff]
        %v3903 = vld [vmem:[#allocation2 + $0x13a] sm:$0xff]
        %v3904 = vld [vmem:[#allocation2 + $0x142] sm:$0xff]
        %v3905 = vld [vmem:[#allocation2 + $0x14a] sm:$0xff]
        %v3906 = vld [vmem:[#allocation2 + $0x152] sm:$0xff]
        %v3907 = vld [vmem:[#allocation2 + $0x15a] sm:$0xff]
        %v3908 = vld [vmem:[#allocation2 + $0x162] sm:$0xff]
        %v3909 = vld [vmem:[#allocation2 + $0x16a] sm:$0xff]
        %v3910 = vld [vmem:[#allocation2 + $0x172] sm:$0xff]
        %v3911 = vld [vmem:[#allocation2 + $0x17a] sm:$0xff]
        %v3912 = vld [vmem:[#allocation2 + $0x182] sm:$0x3f]
        %v3913 = vpack.c.bf16 %v3865, %v3864
        %v3914 = vpack.c.bf16 %v3867, %v3866
        %v3915 = vpack.c.bf16 %v3869, %v3868
        %v3916 = vpack.c.bf16 %v3871, %v3870
        %v3917 = vpack.c.bf16 %v3873, %v3872
        %v3918 = vpack.c.bf16 %v3875, %v3874
        %v3919 = vpack.c.bf16 %v3877, %v3876
        %v3920 = vpack.c.bf16 %v3879, %v3878
        %v3921 = vpack.c.bf16 %v3881, %v3880
        %v3922 = vpack.c.bf16 %v3883, %v3882
        %v3923 = vpack.c.bf16 %v3885, %v3884
        %v3924 = vpack.c.bf16 %v3887, %v3886
        %v3925 = vpack.c.bf16 %v3889, %v3888
        %v3926 = vpack.c.bf16 %v3891, %v3890
        %v3927 = vpack.c.bf16 %v3893, %v3892
        %v3928 = vpack.c.bf16 %v3895, %v3894
        %v3929 = vpack.c.bf16 %v3897, %v3896
        %v3930 = vpack.c.bf16 %v3899, %v3898
        %v3931 = vpack.c.bf16 %v3901, %v3900
        %v3932 = vpack.c.bf16 %v3903, %v3902
        %v3933 = vpack.c.bf16 %v3905, %v3904
        %v3934 = vpack.c.bf16 %v3907, %v3906
        %v3935 = vpack.c.bf16 %v3909, %v3908
        %v3936 = vpack.c.bf16 %v3911, %v3910
        %v3937 = vpack.c.bf16 %v3912, %v3912
        %s3938 = scalar_lea.vmem %s2, 64
        %v3939 = vld [vmem:[%s3938] sm:$0xf]
        %v3940 = vld [vmem:[%s3938 + $0x4] sm:$0xf]
        %v3941 = vld [vmem:[%s3938 + $0x8] sm:$0xf]
        %v3942 = vld [vmem:[%s3938 + $0xc] sm:$0xf]
        %v3943 = vld [vmem:[%s3938 + $0x10] sm:$0xf]
        %v3944 = vld [vmem:[%s3938 + $0x14] sm:$0xf]
        %v3945 = vld [vmem:[%s3938 + $0x18] sm:$0xf]
        %v3946 = vld [vmem:[%s3938 + $0x1c] sm:$0xf]
        %v3955 = vunpack.c.l.b16 %v3939
        %v3956 = vunpack.c.l.b16 %v3940
        %v3957 = vunpack.c.l.b16 %v3941
        %v3958 = vunpack.c.l.b16 %v3942
        %v3959 = vunpack.c.l.b16 %v3943
        %v3960 = vunpack.c.l.b16 %v3944
        %v3961 = vunpack.c.l.b16 %v3945
        %v3962 = vunpack.c.l.b16 %v3946
        %v3963 = vpack.c.b16 %v3956, %v3955
        %v3964 = vpack.c.b16 %v3958, %v3957
        %v3965 = vpack.c.b16 %v3960, %v3959
        %v3966 = vpack.c.b16 %v3962, %v3961
        %v3972 = vsel %vm2712, %v3913, 0
        %v3975 = vsel %vm2712, %v3914, 0
        %v3978 = vsel %vm2712, %v3915, 0
        %v3981 = vsel %vm2712, %v3916, 0
        %v3984 = vsel %vm2712, %v3917, 0
        %v3987 = vsel %vm2712, %v3918, 0
        %v3990 = vsel %vm2712, %v3919, 0
        %v3993 = vsel %vm2712, %v3920, 0
        %v3996 = vsel %vm2712, %v3921, 0
        %v3999 = vsel %vm2712, %v3922, 0
        %v4002 = vsel %vm2712, %v3923, 0
        %v4005 = vsel %vm2712, %v3924, 0
        %v4008 = vsel %vm2712, %v3925, 0
        %v4011 = vsel %vm2712, %v3926, 0
        %v4014 = vsel %vm2712, %v3927, 0
        %v4017 = vsel %vm2712, %v3928, 0
        %v4020 = vsel %vm2712, %v3929, 0
        %v4023 = vsel %vm2712, %v3930, 0
        %v4026 = vsel %vm2712, %v3931, 0
        %v4029 = vsel %vm2712, %v3932, 0
        %v4032 = vsel %vm2712, %v3933, 0
        %v4035 = vsel %vm2712, %v3934, 0
        %v4038 = vsel %vm2712, %v3935, 0
        %v4041 = vsel %vm2712, %v3936, 0
        %v4044 = vsel %vm2712, %v3937, 0
        %4046 = vmatprep.subr.bf16.mxu0 0
        %4047 = vmatpush1.bf16.msra.mxu0 0
        %4048 = vmatprep.subr.bf16.mxu0 0
        %4049 = vmatpush1.bf16.msra.mxu0 0
        %4050 = vmatprep.subr.bf16.mxu0 0
        %4051 = vmatpush1.bf16.msra.mxu0 0
        %4052 = vmatprep.subr.bf16.mxu0 0
        %4053 = vmatpush1.bf16.msra.mxu0 0
        %4054 = vmatprep.subr.bf16.mxu0 0
        %4055 = vmatpush1.bf16.msra.mxu0 %v3966
        %4056 = vmatprep.subr.bf16.mxu0 0
        %4057 = vmatpush1.bf16.msra.mxu0 %v3965
        %4058 = vmatprep.subr.bf16.mxu0 0
        %4059 = vmatpush1.bf16.msra.mxu0 %v3964
        %4060 = vmatprep.subr.bf16.mxu0 0
        %4061 = vmatpush1.bf16.msra.mxu0 %v3963
        %4062 = vmatprep.subr.bf16.mxu0 0
        %4063 = vmatpush2.bf16.msra.mxu0 0
        %4064 = vmatprep.subr.bf16.mxu0 0
        %4065 = vmatpush2.bf16.msra.mxu0 0
        %4066 = vmatprep.subr.bf16.mxu0 0
        %4067 = vmatpush2.bf16.msra.mxu0 0
        %4068 = vmatprep.subr.bf16.mxu0 0
        %4069 = vmatpush2.bf16.msra.mxu0 0
        %4070 = vmatprep.subr.bf16.mxu0 0
        %4071 = vmatpush2.bf16.msra.mxu0 0
        %4072 = vmatprep.subr.bf16.mxu0 0
        %4073 = vmatpush2.bf16.msra.mxu0 0
        %4074 = vmatprep.subr.bf16.mxu0 0
        %4075 = vmatpush2.bf16.msra.mxu0 0
        %4076 = vmatprep.subr.bf16.mxu0 0
        %4077 = vmatpush2.bf16.msra.mxu0 0
        %4078 = vmatprep.mubr.bf16.mxu0 0
        %4079 = vmatmul.mubr.bf16.gmra.mxu0 %v3972
        %v4080 = vpop.f32.mrf.mxu0
        %v4081 = vadd.f32 0.0, %v4080
        %v4082 = vpop.f32.mrf.mxu0
        %v4083 = vpop.f32.mrf.mxu0
        %v4084 = vadd.f32 0.0, %v4083
        %v4085 = vpop.f32.mrf.mxu0
        %4086 = vmatprep.mubr.bf16.mxu0 0
        %4087 = vmatmul.mubr.bf16.gmra.mxu0 %v3975
        %v4088 = vpop.f32.mrf.mxu0
        %v4089 = vadd.f32 0.0, %v4088
        %v4090 = vpop.f32.mrf.mxu0
        %v4091 = vpop.f32.mrf.mxu0
        %v4092 = vadd.f32 0.0, %v4091
        %v4093 = vpop.f32.mrf.mxu0
        %4094 = vmatprep.mubr.bf16.mxu0 0
        %4095 = vmatmul.mubr.bf16.gmra.mxu0 %v3978
        %v4096 = vpop.f32.mrf.mxu0
        %v4097 = vadd.f32 0.0, %v4096
        %v4098 = vpop.f32.mrf.mxu0
        %v4099 = vpop.f32.mrf.mxu0
        %v4100 = vadd.f32 0.0, %v4099
        %v4101 = vpop.f32.mrf.mxu0
        %4102 = vmatprep.mubr.bf16.mxu0 0
        %4103 = vmatmul.mubr.bf16.gmra.mxu0 %v3981
        %v4104 = vpop.f32.mrf.mxu0
        %v4105 = vadd.f32 0.0, %v4104
        %v4106 = vpop.f32.mrf.mxu0
        %v4107 = vpop.f32.mrf.mxu0
        %v4108 = vadd.f32 0.0, %v4107
        %v4109 = vpop.f32.mrf.mxu0
        %4110 = vmatprep.mubr.bf16.mxu0 0
        %4111 = vmatmul.mubr.bf16.gmra.mxu0 %v3984
        %v4112 = vpop.f32.mrf.mxu0
        %v4113 = vadd.f32 0.0, %v4112
        %v4114 = vpop.f32.mrf.mxu0
        %v4115 = vpop.f32.mrf.mxu0
        %v4116 = vadd.f32 0.0, %v4115
        %v4117 = vpop.f32.mrf.mxu0
        %4118 = vmatprep.mubr.bf16.mxu0 0
        %4119 = vmatmul.mubr.bf16.gmra.mxu0 %v3987
        %v4120 = vpop.f32.mrf.mxu0
        %v4121 = vadd.f32 0.0, %v4120
        %v4122 = vpop.f32.mrf.mxu0
        %v4123 = vpop.f32.mrf.mxu0
        %v4124 = vadd.f32 0.0, %v4123
        %v4125 = vpop.f32.mrf.mxu0
        %4126 = vmatprep.mubr.bf16.mxu0 0
        %4127 = vmatmul.mubr.bf16.gmra.mxu0 %v3990
        %v4128 = vpop.f32.mrf.mxu0
        %v4129 = vadd.f32 0.0, %v4128
        %v4130 = vpop.f32.mrf.mxu0
        %v4131 = vpop.f32.mrf.mxu0
        %v4132 = vadd.f32 0.0, %v4131
        %v4133 = vpop.f32.mrf.mxu0
        %4134 = vmatprep.mubr.bf16.mxu0 0
        %4135 = vmatmul.mubr.bf16.gmra.mxu0 %v3993
        %v4136 = vpop.f32.mrf.mxu0
        %v4137 = vadd.f32 0.0, %v4136
        %v4138 = vpop.f32.mrf.mxu0
        %v4139 = vpop.f32.mrf.mxu0
        %v4140 = vadd.f32 0.0, %v4139
        %v4141 = vpop.f32.mrf.mxu0
        %4142 = vmatprep.mubr.bf16.mxu0 0
        %4143 = vmatmul.mubr.bf16.gmra.mxu0 %v3996
        %v4144 = vpop.f32.mrf.mxu0
        %v4145 = vadd.f32 0.0, %v4144
        %v4146 = vpop.f32.mrf.mxu0
        %v4147 = vpop.f32.mrf.mxu0
        %v4148 = vadd.f32 0.0, %v4147
        %v4149 = vpop.f32.mrf.mxu0
        %4150 = vmatprep.mubr.bf16.mxu0 0
        %4151 = vmatmul.mubr.bf16.gmra.mxu0 %v3999
        %v4152 = vpop.f32.mrf.mxu0
        %v4153 = vadd.f32 0.0, %v4152
        %v4154 = vpop.f32.mrf.mxu0
        %v4155 = vpop.f32.mrf.mxu0
        %v4156 = vadd.f32 0.0, %v4155
        %v4157 = vpop.f32.mrf.mxu0
        %4158 = vmatprep.mubr.bf16.mxu0 0
        %4159 = vmatmul.mubr.bf16.gmra.mxu0 %v4002
        %v4160 = vpop.f32.mrf.mxu0
        %v4161 = vadd.f32 0.0, %v4160
        %v4162 = vpop.f32.mrf.mxu0
        %v4163 = vpop.f32.mrf.mxu0
        %v4164 = vadd.f32 0.0, %v4163
        %v4165 = vpop.f32.mrf.mxu0
        %4166 = vmatprep.mubr.bf16.mxu0 0
        %4167 = vmatmul.mubr.bf16.gmra.mxu0 %v4005
        %v4168 = vpop.f32.mrf.mxu0
        %v4169 = vadd.f32 0.0, %v4168
        %v4170 = vpop.f32.mrf.mxu0
        %v4171 = vpop.f32.mrf.mxu0
        %v4172 = vadd.f32 0.0, %v4171
        %v4173 = vpop.f32.mrf.mxu0
        %4174 = vmatprep.mubr.bf16.mxu0 0
        %4175 = vmatmul.mubr.bf16.gmra.mxu0 %v4008
        %v4176 = vpop.f32.mrf.mxu0
        %v4177 = vadd.f32 0.0, %v4176
        %v4178 = vpop.f32.mrf.mxu0
        %v4179 = vpop.f32.mrf.mxu0
        %v4180 = vpop.f32.mrf.mxu0
        %4181 = vmatprep.mubr.bf16.mxu0 0
        %4182 = vmatmul.mubr.bf16.gmra.mxu0 %v4011
        %v4183 = vpop.f32.mrf.mxu0
        %v4184 = vadd.f32 0.0, %v4183
        %v4185 = vpop.f32.mrf.mxu0
        %v4186 = vpop.f32.mrf.mxu0
        %v4187 = vadd.f32 0.0, %v4186
        %v4188 = vpop.f32.mrf.mxu0
        %4189 = vmatprep.mubr.bf16.mxu0 0
        %4190 = vmatmul.mubr.bf16.gmra.mxu0 %v4014
        %v4191 = vpop.f32.mrf.mxu0
        %v4192 = vadd.f32 0.0, %v4191
        %v4193 = vpop.f32.mrf.mxu0
        %v4194 = vpop.f32.mrf.mxu0
        %v4195 = vadd.f32 0.0, %v4194
        %v4196 = vpop.f32.mrf.mxu0
        %4197 = vmatprep.mubr.bf16.mxu0 0
        %4198 = vmatmul.mubr.bf16.gmra.mxu0 %v4017
        %v4199 = vpop.f32.mrf.mxu0
        %v4200 = vadd.f32 0.0, %v4199
        %v4201 = vpop.f32.mrf.mxu0
        %v4202 = vpop.f32.mrf.mxu0
        %v4203 = vadd.f32 0.0, %v4202
        %v4204 = vpop.f32.mrf.mxu0
        %4205 = vmatprep.mubr.bf16.mxu0 0
        %4206 = vmatmul.mubr.bf16.gmra.mxu0 %v4020
        %v4207 = vpop.f32.mrf.mxu0
        %v4208 = vadd.f32 0.0, %v4207
        %v4209 = vpop.f32.mrf.mxu0
        %v4210 = vpop.f32.mrf.mxu0
        %v4211 = vadd.f32 0.0, %v4210
        %v4212 = vpop.f32.mrf.mxu0
        %4213 = vmatprep.mubr.bf16.mxu0 0
        %4214 = vmatmul.mubr.bf16.gmra.mxu0 %v4023
        %v4215 = vpop.f32.mrf.mxu0
        %v4216 = vadd.f32 0.0, %v4215
        %v4217 = vpop.f32.mrf.mxu0
        %v4218 = vpop.f32.mrf.mxu0
        %v4219 = vadd.f32 0.0, %v4218
        %v4220 = vpop.f32.mrf.mxu0
        %4221 = vmatprep.mubr.bf16.mxu0 0
        %4222 = vmatmul.mubr.bf16.gmra.mxu0 %v4026
        %v4223 = vpop.f32.mrf.mxu0
        %v4224 = vadd.f32 0.0, %v4223
        %v4225 = vpop.f32.mrf.mxu0
        %v4226 = vpop.f32.mrf.mxu0
        %v4227 = vadd.f32 0.0, %v4226
        %v4228 = vpop.f32.mrf.mxu0
        %4229 = vmatprep.mubr.bf16.mxu0 0
        %4230 = vmatmul.mubr.bf16.gmra.mxu0 %v4029
        %v4231 = vpop.f32.mrf.mxu0
        %v4232 = vadd.f32 0.0, %v4231
        %v4233 = vpop.f32.mrf.mxu0
        %v4234 = vpop.f32.mrf.mxu0
        %v4235 = vadd.f32 0.0, %v4234
        %v4236 = vpop.f32.mrf.mxu0
        %4237 = vmatprep.mubr.bf16.mxu0 0
        %4238 = vmatmul.mubr.bf16.gmra.mxu0 %v4032
        %v4239 = vpop.f32.mrf.mxu0
        %v4240 = vadd.f32 0.0, %v4239
        %v4241 = vpop.f32.mrf.mxu0
        %v4242 = vpop.f32.mrf.mxu0
        %v4243 = vadd.f32 0.0, %v4242
        %v4244 = vpop.f32.mrf.mxu0
        %4245 = vmatprep.mubr.bf16.mxu0 0
        %4246 = vmatmul.mubr.bf16.gmra.mxu0 %v4035
        %v4247 = vpop.f32.mrf.mxu0
        %v4248 = vadd.f32 0.0, %v4247
        %v4249 = vpop.f32.mrf.mxu0
        %v4250 = vpop.f32.mrf.mxu0
        %v4251 = vadd.f32 0.0, %v4250
        %v4252 = vpop.f32.mrf.mxu0
        %4253 = vmatprep.mubr.bf16.mxu0 0
        %4254 = vmatmul.mubr.bf16.gmra.mxu0 %v4038
        %v4255 = vpop.f32.mrf.mxu0
        %v4256 = vadd.f32 0.0, %v4255
        %v4257 = vpop.f32.mrf.mxu0
        %v4258 = vpop.f32.mrf.mxu0
        %v4259 = vadd.f32 0.0, %v4258
        %v4260 = vpop.f32.mrf.mxu0
        %4261 = vmatprep.mubr.bf16.mxu0 0
        %4262 = vmatmul.mubr.bf16.gmra.mxu0 %v4041
        %v4263 = vpop.f32.mrf.mxu0
        %v4264 = vadd.f32 0.0, %v4263
        %v4265 = vpop.f32.mrf.mxu0
        %v4266 = vpop.f32.mrf.mxu0
        %v4267 = vadd.f32 0.0, %v4266
        %v4268 = vpop.f32.mrf.mxu0
        %4269 = vmatprep.mubr.bf16.mxu0 0
        %4270 = vmatmul.mubr.bf16.gmra.mxu0 %v4044
        %v4271 = vpop.f32.mrf.mxu0
        %v4272 = vadd.f32 0.0, %v4271
        %v4273 = vpop.f32.mrf.mxu0
        %v4274 = vpop.f32.mrf.mxu0
        %v4275 = vpop.f32.mrf.mxu0
        %4276 = vdwg.mxu0
        %v4277 = vadd.f32 %v3668, %v4081
        %v4278 = vadd.f32 %v3671, %v4084
        %v4279 = vadd.f32 %v3676, %v4089
        %v4280 = vadd.f32 %v3679, %v4092
        %v4281 = vadd.f32 %v3684, %v4097
        %v4282 = vadd.f32 %v3687, %v4100
        %v4283 = vadd.f32 %v3692, %v4105
        %v4284 = vadd.f32 %v3695, %v4108
        %v4285 = vadd.f32 %v3700, %v4113
        %v4286 = vadd.f32 %v3703, %v4116
        %v4287 = vadd.f32 %v3708, %v4121
        %v4288 = vadd.f32 %v3711, %v4124
        %v4289 = vadd.f32 %v3716, %v4129
        %v4290 = vadd.f32 %v3719, %v4132
        %v4291 = vadd.f32 %v3724, %v4137
        %v4292 = vadd.f32 %v3727, %v4140
        %v4293 = vadd.f32 %v3732, %v4145
        %v4294 = vadd.f32 %v3735, %v4148
        %v4295 = vadd.f32 %v3740, %v4153
        %v4296 = vadd.f32 %v3743, %v4156
        %v4297 = vadd.f32 %v3748, %v4161
        %v4298 = vadd.f32 %v3751, %v4164
        %v4299 = vadd.f32 %v3756, %v4169
        %v4300 = vadd.f32 %v3759, %v4172
        %v4301 = vadd.f32 %v3764, %v4177
        %v4302 = vadd.f32 %v3771, %v4184
        %v4303 = vadd.f32 %v3774, %v4187
        %v4304 = vadd.f32 %v3779, %v4192
        %v4305 = vadd.f32 %v3782, %v4195
        %v4306 = vadd.f32 %v3787, %v4200
        %v4307 = vadd.f32 %v3790, %v4203
        %v4308 = vadd.f32 %v3795, %v4208
        %v4309 = vadd.f32 %v3798, %v4211
        %v4310 = vadd.f32 %v3803, %v4216
        %v4311 = vadd.f32 %v3806, %v4219
        %v4312 = vadd.f32 %v3811, %v4224
        %v4313 = vadd.f32 %v3814, %v4227
        %v4314 = vadd.f32 %v3819, %v4232
        %v4315 = vadd.f32 %v3822, %v4235
        %v4316 = vadd.f32 %v3827, %v4240
        %v4317 = vadd.f32 %v3830, %v4243
        %v4318 = vadd.f32 %v3835, %v4248
        %v4319 = vadd.f32 %v3838, %v4251
        %v4320 = vadd.f32 %v3843, %v4256
        %v4321 = vadd.f32 %v3846, %v4259
        %v4322 = vadd.f32 %v3851, %v4264
        %v4323 = vadd.f32 %v3854, %v4267
        %v4324 = vadd.f32 %v3859, %v4272
        %v4325 = vld [vmem:[#allocation2 + $0xa] sm:$0xff]
        %v4326 = vld [vmem:[#allocation2 + $0x12] sm:$0xff]
        %v4327 = vld [vmem:[#allocation2 + $0x1a] sm:$0xff]
        %v4328 = vld [vmem:[#allocation2 + $0x22] sm:$0xff]
        %v4329 = vld [vmem:[#allocation2 + $0x2a] sm:$0xff]
        %v4330 = vld [vmem:[#allocation2 + $0x32] sm:$0xff]
        %v4331 = vld [vmem:[#allocation2 + $0x3a] sm:$0xff]
        %v4332 = vld [vmem:[#allocation2 + $0x42] sm:$0xff]
        %v4333 = vld [vmem:[#allocation2 + $0x4a] sm:$0xff]
        %v4334 = vld [vmem:[#allocation2 + $0x52] sm:$0xff]
        %v4335 = vld [vmem:[#allocation2 + $0x5a] sm:$0xff]
        %v4336 = vld [vmem:[#allocation2 + $0x62] sm:$0xff]
        %v4337 = vld [vmem:[#allocation2 + $0x6a] sm:$0xff]
        %v4338 = vld [vmem:[#allocation2 + $0x72] sm:$0xff]
        %v4339 = vld [vmem:[#allocation2 + $0x7a] sm:$0xff]
        %v4340 = vld [vmem:[#allocation2 + $0x82] sm:$0xff]
        %v4341 = vld [vmem:[#allocation2 + $0x8a] sm:$0xff]
        %v4342 = vld [vmem:[#allocation2 + $0x92] sm:$0xff]
        %v4343 = vld [vmem:[#allocation2 + $0x9a] sm:$0xff]
        %v4344 = vld [vmem:[#allocation2 + $0xa2] sm:$0xff]
        %v4345 = vld [vmem:[#allocation2 + $0xaa] sm:$0xff]
        %v4346 = vld [vmem:[#allocation2 + $0xb2] sm:$0xff]
        %v4347 = vld [vmem:[#allocation2 + $0xba] sm:$0xff]
        %v4348 = vld [vmem:[#allocation2 + $0xc2] sm:$0xff]
        %v4349 = vld [vmem:[#allocation2 + $0xca] sm:$0xff]
        %v4350 = vld [vmem:[#allocation2 + $0xd2] sm:$0xff]
        %v4351 = vld [vmem:[#allocation2 + $0xda] sm:$0xff]
        %v4352 = vld [vmem:[#allocation2 + $0xe2] sm:$0xff]
        %v4353 = vld [vmem:[#allocation2 + $0xea] sm:$0xff]
        %v4354 = vld [vmem:[#allocation2 + $0xf2] sm:$0xff]
        %v4355 = vld [vmem:[#allocation2 + $0xfa] sm:$0xff]
        %v4356 = vld [vmem:[#allocation2 + $0x102] sm:$0xff]
        %v4357 = vld [vmem:[#allocation2 + $0x10a] sm:$0xff]
        %v4358 = vld [vmem:[#allocation2 + $0x112] sm:$0xff]
        %v4359 = vld [vmem:[#allocation2 + $0x11a] sm:$0xff]
        %v4360 = vld [vmem:[#allocation2 + $0x122] sm:$0xff]
        %v4361 = vld [vmem:[#allocation2 + $0x12a] sm:$0xff]
        %v4362 = vld [vmem:[#allocation2 + $0x132] sm:$0xff]
        %v4363 = vld [vmem:[#allocation2 + $0x13a] sm:$0xff]
        %v4364 = vld [vmem:[#allocation2 + $0x142] sm:$0xff]
        %v4365 = vld [vmem:[#allocation2 + $0x14a] sm:$0xff]
        %v4366 = vld [vmem:[#allocation2 + $0x152] sm:$0xff]
        %v4367 = vld [vmem:[#allocation2 + $0x15a] sm:$0xff]
        %v4368 = vld [vmem:[#allocation2 + $0x162] sm:$0xff]
        %v4369 = vld [vmem:[#allocation2 + $0x16a] sm:$0xff]
        %v4370 = vld [vmem:[#allocation2 + $0x172] sm:$0xff]
        %v4371 = vld [vmem:[#allocation2 + $0x17a] sm:$0xff]
        %v4372 = vld [vmem:[#allocation2 + $0x182] sm:$0xff]
        %v4373 = vld [vmem:[#allocation2 + $0x18a] sm:$0x3f]
        %v4374 = vpack.c.bf16 %v4326, %v4325
        %v4375 = vpack.c.bf16 %v4328, %v4327
        %v4376 = vpack.c.bf16 %v4330, %v4329
        %v4377 = vpack.c.bf16 %v4332, %v4331
        %v4378 = vpack.c.bf16 %v4334, %v4333
        %v4379 = vpack.c.bf16 %v4336, %v4335
        %v4380 = vpack.c.bf16 %v4338, %v4337
        %v4381 = vpack.c.bf16 %v4340, %v4339
        %v4382 = vpack.c.bf16 %v4342, %v4341
        %v4383 = vpack.c.bf16 %v4344, %v4343
        %v4384 = vpack.c.bf16 %v4346, %v4345
        %v4385 = vpack.c.bf16 %v4348, %v4347
        %v4386 = vpack.c.bf16 %v4350, %v4349
        %v4387 = vpack.c.bf16 %v4352, %v4351
        %v4388 = vpack.c.bf16 %v4354, %v4353
        %v4389 = vpack.c.bf16 %v4356, %v4355
        %v4390 = vpack.c.bf16 %v4358, %v4357
        %v4391 = vpack.c.bf16 %v4360, %v4359
        %v4392 = vpack.c.bf16 %v4362, %v4361
        %v4393 = vpack.c.bf16 %v4364, %v4363
        %v4394 = vpack.c.bf16 %v4366, %v4365
        %v4395 = vpack.c.bf16 %v4368, %v4367
        %v4396 = vpack.c.bf16 %v4370, %v4369
        %v4397 = vpack.c.bf16 %v4372, %v4371
        %v4398 = vpack.c.bf16 %v4373, %v4373
        %s4399 = scalar_lea.vmem %s2, 96
        %v4400 = vld [vmem:[%s4399] sm:$0xf]
        %v4401 = vld [vmem:[%s4399 + $0x4] sm:$0xf]
        %v4402 = vld [vmem:[%s4399 + $0x8] sm:$0xf]
        %v4403 = vld [vmem:[%s4399 + $0xc] sm:$0xf]
        %v4404 = vld [vmem:[%s4399 + $0x10] sm:$0xf]
        %v4405 = vld [vmem:[%s4399 + $0x14] sm:$0xf]
        %v4406 = vld [vmem:[%s4399 + $0x18] sm:$0xf]
        %v4407 = vld [vmem:[%s4399 + $0x1c] sm:$0xf]
        %v4416 = vunpack.c.l.b16 %v4400
        %v4417 = vunpack.c.l.b16 %v4401
        %v4418 = vunpack.c.l.b16 %v4402
        %v4419 = vunpack.c.l.b16 %v4403
        %v4420 = vunpack.c.l.b16 %v4404
        %v4421 = vunpack.c.l.b16 %v4405
        %v4422 = vunpack.c.l.b16 %v4406
        %v4423 = vunpack.c.l.b16 %v4407
        %v4424 = vpack.c.b16 %v4417, %v4416
        %v4425 = vpack.c.b16 %v4419, %v4418
        %v4426 = vpack.c.b16 %v4421, %v4420
        %v4427 = vpack.c.b16 %v4423, %v4422
        %v4433 = vsel %vm2712, %v4374, 0
        %v4436 = vsel %vm2712, %v4375, 0
        %v4439 = vsel %vm2712, %v4376, 0
        %v4442 = vsel %vm2712, %v4377, 0
        %v4445 = vsel %vm2712, %v4378, 0
        %v4448 = vsel %vm2712, %v4379, 0
        %v4451 = vsel %vm2712, %v4380, 0
        %v4454 = vsel %vm2712, %v4381, 0
        %v4457 = vsel %vm2712, %v4382, 0
        %v4460 = vsel %vm2712, %v4383, 0
        %v4463 = vsel %vm2712, %v4384, 0
        %v4466 = vsel %vm2712, %v4385, 0
        %v4469 = vsel %vm2712, %v4386, 0
        %v4472 = vsel %vm2712, %v4387, 0
        %v4475 = vsel %vm2712, %v4388, 0
        %v4478 = vsel %vm2712, %v4389, 0
        %v4481 = vsel %vm2712, %v4390, 0
        %v4484 = vsel %vm2712, %v4391, 0
        %v4487 = vsel %vm2712, %v4392, 0
        %v4490 = vsel %vm2712, %v4393, 0
        %v4493 = vsel %vm2712, %v4394, 0
        %v4496 = vsel %vm2712, %v4395, 0
        %v4499 = vsel %vm2712, %v4396, 0
        %v4502 = vsel %vm2712, %v4397, 0
        %v4505 = vsel %vm2712, %v4398, 0
        %4507 = vmatprep.subr.bf16.mxu0 0
        %4508 = vmatpush1.bf16.msra.mxu0 0
        %4509 = vmatprep.subr.bf16.mxu0 0
        %4510 = vmatpush1.bf16.msra.mxu0 0
        %4511 = vmatprep.subr.bf16.mxu0 0
        %4512 = vmatpush1.bf16.msra.mxu0 0
        %4513 = vmatprep.subr.bf16.mxu0 0
        %4514 = vmatpush1.bf16.msra.mxu0 0
        %4515 = vmatprep.subr.bf16.mxu0 0
        %4516 = vmatpush1.bf16.msra.mxu0 %v4427
        %4517 = vmatprep.subr.bf16.mxu0 0
        %4518 = vmatpush1.bf16.msra.mxu0 %v4426
        %4519 = vmatprep.subr.bf16.mxu0 0
        %4520 = vmatpush1.bf16.msra.mxu0 %v4425
        %4521 = vmatprep.subr.bf16.mxu0 0
        %4522 = vmatpush1.bf16.msra.mxu0 %v4424
        %4523 = vmatprep.subr.bf16.mxu0 0
        %4524 = vmatpush2.bf16.msra.mxu0 0
        %4525 = vmatprep.subr.bf16.mxu0 0
        %4526 = vmatpush2.bf16.msra.mxu0 0
        %4527 = vmatprep.subr.bf16.mxu0 0
        %4528 = vmatpush2.bf16.msra.mxu0 0
        %4529 = vmatprep.subr.bf16.mxu0 0
        %4530 = vmatpush2.bf16.msra.mxu0 0
        %4531 = vmatprep.subr.bf16.mxu0 0
        %4532 = vmatpush2.bf16.msra.mxu0 0
        %4533 = vmatprep.subr.bf16.mxu0 0
        %4534 = vmatpush2.bf16.msra.mxu0 0
        %4535 = vmatprep.subr.bf16.mxu0 0
        %4536 = vmatpush2.bf16.msra.mxu0 0
        %4537 = vmatprep.subr.bf16.mxu0 0
        %4538 = vmatpush2.bf16.msra.mxu0 0
        %4539 = vmatprep.mubr.bf16.mxu0 0
        %4540 = vmatmul.mubr.bf16.gmra.mxu0 %v4433
        %v4541 = vpop.f32.mrf.mxu0
        %v4542 = vadd.f32 0.0, %v4541
        %v4543 = vpop.f32.mrf.mxu0
        %v4544 = vpop.f32.mrf.mxu0
        %v4545 = vadd.f32 0.0, %v4544
        %v4546 = vpop.f32.mrf.mxu0
        %4547 = vmatprep.mubr.bf16.mxu0 0
        %4548 = vmatmul.mubr.bf16.gmra.mxu0 %v4436
        %v4549 = vpop.f32.mrf.mxu0
        %v4550 = vadd.f32 0.0, %v4549
        %v4551 = vpop.f32.mrf.mxu0
        %v4552 = vpop.f32.mrf.mxu0
        %v4553 = vadd.f32 0.0, %v4552
        %v4554 = vpop.f32.mrf.mxu0
        %4555 = vmatprep.mubr.bf16.mxu0 0
        %4556 = vmatmul.mubr.bf16.gmra.mxu0 %v4439
        %v4557 = vpop.f32.mrf.mxu0
        %v4558 = vadd.f32 0.0, %v4557
        %v4559 = vpop.f32.mrf.mxu0
        %v4560 = vpop.f32.mrf.mxu0
        %v4561 = vadd.f32 0.0, %v4560
        %v4562 = vpop.f32.mrf.mxu0
        %4563 = vmatprep.mubr.bf16.mxu0 0
        %4564 = vmatmul.mubr.bf16.gmra.mxu0 %v4442
        %v4565 = vpop.f32.mrf.mxu0
        %v4566 = vadd.f32 0.0, %v4565
        %v4567 = vpop.f32.mrf.mxu0
        %v4568 = vpop.f32.mrf.mxu0
        %v4569 = vadd.f32 0.0, %v4568
        %v4570 = vpop.f32.mrf.mxu0
        %4571 = vmatprep.mubr.bf16.mxu0 0
        %4572 = vmatmul.mubr.bf16.gmra.mxu0 %v4445
        %v4573 = vpop.f32.mrf.mxu0
        %v4574 = vadd.f32 0.0, %v4573
        %v4575 = vpop.f32.mrf.mxu0
        %v4576 = vpop.f32.mrf.mxu0
        %v4577 = vadd.f32 0.0, %v4576
        %v4578 = vpop.f32.mrf.mxu0
        %4579 = vmatprep.mubr.bf16.mxu0 0
        %4580 = vmatmul.mubr.bf16.gmra.mxu0 %v4448
        %v4581 = vpop.f32.mrf.mxu0
        %v4582 = vadd.f32 0.0, %v4581
        %v4583 = vpop.f32.mrf.mxu0
        %v4584 = vpop.f32.mrf.mxu0
        %v4585 = vadd.f32 0.0, %v4584
        %v4586 = vpop.f32.mrf.mxu0
        %4587 = vmatprep.mubr.bf16.mxu0 0
        %4588 = vmatmul.mubr.bf16.gmra.mxu0 %v4451
        %v4589 = vpop.f32.mrf.mxu0
        %v4590 = vadd.f32 0.0, %v4589
        %v4591 = vpop.f32.mrf.mxu0
        %v4592 = vpop.f32.mrf.mxu0
        %v4593 = vadd.f32 0.0, %v4592
        %v4594 = vpop.f32.mrf.mxu0
        %4595 = vmatprep.mubr.bf16.mxu0 0
        %4596 = vmatmul.mubr.bf16.gmra.mxu0 %v4454
        %v4597 = vpop.f32.mrf.mxu0
        %v4598 = vadd.f32 0.0, %v4597
        %v4599 = vpop.f32.mrf.mxu0
        %v4600 = vpop.f32.mrf.mxu0
        %v4601 = vadd.f32 0.0, %v4600
        %v4602 = vpop.f32.mrf.mxu0
        %4603 = vmatprep.mubr.bf16.mxu0 0
        %4604 = vmatmul.mubr.bf16.gmra.mxu0 %v4457
        %v4605 = vpop.f32.mrf.mxu0
        %v4606 = vadd.f32 0.0, %v4605
        %v4607 = vpop.f32.mrf.mxu0
        %v4608 = vpop.f32.mrf.mxu0
        %v4609 = vadd.f32 0.0, %v4608
        %v4610 = vpop.f32.mrf.mxu0
        %4611 = vmatprep.mubr.bf16.mxu0 0
        %4612 = vmatmul.mubr.bf16.gmra.mxu0 %v4460
        %v4613 = vpop.f32.mrf.mxu0
        %v4614 = vadd.f32 0.0, %v4613
        %v4615 = vpop.f32.mrf.mxu0
        %v4616 = vpop.f32.mrf.mxu0
        %v4617 = vadd.f32 0.0, %v4616
        %v4618 = vpop.f32.mrf.mxu0
        %4619 = vmatprep.mubr.bf16.mxu0 0
        %4620 = vmatmul.mubr.bf16.gmra.mxu0 %v4463
        %v4621 = vpop.f32.mrf.mxu0
        %v4622 = vadd.f32 0.0, %v4621
        %v4623 = vpop.f32.mrf.mxu0
        %v4624 = vpop.f32.mrf.mxu0
        %v4625 = vadd.f32 0.0, %v4624
        %v4626 = vpop.f32.mrf.mxu0
        %4627 = vmatprep.mubr.bf16.mxu0 0
        %4628 = vmatmul.mubr.bf16.gmra.mxu0 %v4466
        %v4629 = vpop.f32.mrf.mxu0
        %v4630 = vadd.f32 0.0, %v4629
        %v4631 = vpop.f32.mrf.mxu0
        %v4632 = vpop.f32.mrf.mxu0
        %v4633 = vadd.f32 0.0, %v4632
        %v4634 = vpop.f32.mrf.mxu0
        %4635 = vmatprep.mubr.bf16.mxu0 0
        %4636 = vmatmul.mubr.bf16.gmra.mxu0 %v4469
        %v4637 = vpop.f32.mrf.mxu0
        %v4638 = vadd.f32 0.0, %v4637
        %v4639 = vpop.f32.mrf.mxu0
        %v4640 = vpop.f32.mrf.mxu0
        %v4641 = vpop.f32.mrf.mxu0
        %4642 = vmatprep.mubr.bf16.mxu0 0
        %4643 = vmatmul.mubr.bf16.gmra.mxu0 %v4472
        %v4644 = vpop.f32.mrf.mxu0
        %v4645 = vadd.f32 0.0, %v4644
        %v4646 = vpop.f32.mrf.mxu0
        %v4647 = vpop.f32.mrf.mxu0
        %v4648 = vadd.f32 0.0, %v4647
        %v4649 = vpop.f32.mrf.mxu0
        %4650 = vmatprep.mubr.bf16.mxu0 0
        %4651 = vmatmul.mubr.bf16.gmra.mxu0 %v4475
        %v4652 = vpop.f32.mrf.mxu0
        %v4653 = vadd.f32 0.0, %v4652
        %v4654 = vpop.f32.mrf.mxu0
        %v4655 = vpop.f32.mrf.mxu0
        %v4656 = vadd.f32 0.0, %v4655
        %v4657 = vpop.f32.mrf.mxu0
        %4658 = vmatprep.mubr.bf16.mxu0 0
        %4659 = vmatmul.mubr.bf16.gmra.mxu0 %v4478
        %v4660 = vpop.f32.mrf.mxu0
        %v4661 = vadd.f32 0.0, %v4660
        %v4662 = vpop.f32.mrf.mxu0
        %v4663 = vpop.f32.mrf.mxu0
        %v4664 = vadd.f32 0.0, %v4663
        %v4665 = vpop.f32.mrf.mxu0
        %4666 = vmatprep.mubr.bf16.mxu0 0
        %4667 = vmatmul.mubr.bf16.gmra.mxu0 %v4481
        %v4668 = vpop.f32.mrf.mxu0
        %v4669 = vadd.f32 0.0, %v4668
        %v4670 = vpop.f32.mrf.mxu0
        %v4671 = vpop.f32.mrf.mxu0
        %v4672 = vadd.f32 0.0, %v4671
        %v4673 = vpop.f32.mrf.mxu0
        %4674 = vmatprep.mubr.bf16.mxu0 0
        %4675 = vmatmul.mubr.bf16.gmra.mxu0 %v4484
        %v4676 = vpop.f32.mrf.mxu0
        %v4677 = vadd.f32 0.0, %v4676
        %v4678 = vpop.f32.mrf.mxu0
        %v4679 = vpop.f32.mrf.mxu0
        %v4680 = vadd.f32 0.0, %v4679
        %v4681 = vpop.f32.mrf.mxu0
        %4682 = vmatprep.mubr.bf16.mxu0 0
        %4683 = vmatmul.mubr.bf16.gmra.mxu0 %v4487
        %v4684 = vpop.f32.mrf.mxu0
        %v4685 = vadd.f32 0.0, %v4684
        %v4686 = vpop.f32.mrf.mxu0
        %v4687 = vpop.f32.mrf.mxu0
        %v4688 = vadd.f32 0.0, %v4687
        %v4689 = vpop.f32.mrf.mxu0
        %4690 = vmatprep.mubr.bf16.mxu0 0
        %4691 = vmatmul.mubr.bf16.gmra.mxu0 %v4490
        %v4692 = vpop.f32.mrf.mxu0
        %v4693 = vadd.f32 0.0, %v4692
        %v4694 = vpop.f32.mrf.mxu0
        %v4695 = vpop.f32.mrf.mxu0
        %v4696 = vadd.f32 0.0, %v4695
        %v4697 = vpop.f32.mrf.mxu0
        %4698 = vmatprep.mubr.bf16.mxu0 0
        %4699 = vmatmul.mubr.bf16.gmra.mxu0 %v4493
        %v4700 = vpop.f32.mrf.mxu0
        %v4701 = vadd.f32 0.0, %v4700
        %v4702 = vpop.f32.mrf.mxu0
        %v4703 = vpop.f32.mrf.mxu0
        %v4704 = vadd.f32 0.0, %v4703
        %v4705 = vpop.f32.mrf.mxu0
        %4706 = vmatprep.mubr.bf16.mxu0 0
        %4707 = vmatmul.mubr.bf16.gmra.mxu0 %v4496
        %v4708 = vpop.f32.mrf.mxu0
        %v4709 = vadd.f32 0.0, %v4708
        %v4710 = vpop.f32.mrf.mxu0
        %v4711 = vpop.f32.mrf.mxu0
        %v4712 = vadd.f32 0.0, %v4711
        %v4713 = vpop.f32.mrf.mxu0
        %4714 = vmatprep.mubr.bf16.mxu0 0
        %4715 = vmatmul.mubr.bf16.gmra.mxu0 %v4499
        %v4716 = vpop.f32.mrf.mxu0
        %v4717 = vadd.f32 0.0, %v4716
        %v4718 = vpop.f32.mrf.mxu0
        %v4719 = vpop.f32.mrf.mxu0
        %v4720 = vadd.f32 0.0, %v4719
        %v4721 = vpop.f32.mrf.mxu0
        %4722 = vmatprep.mubr.bf16.mxu0 0
        %4723 = vmatmul.mubr.bf16.gmra.mxu0 %v4502
        %v4724 = vpop.f32.mrf.mxu0
        %v4725 = vadd.f32 0.0, %v4724
        %v4726 = vpop.f32.mrf.mxu0
        %v4727 = vpop.f32.mrf.mxu0
        %v4728 = vadd.f32 0.0, %v4727
        %v4729 = vpop.f32.mrf.mxu0
        %4730 = vmatprep.mubr.bf16.mxu0 0
        %4731 = vmatmul.mubr.bf16.gmra.mxu0 %v4505
        %v4732 = vpop.f32.mrf.mxu0
        %v4733 = vadd.f32 0.0, %v4732
        %v4734 = vpop.f32.mrf.mxu0
        %v4735 = vpop.f32.mrf.mxu0
        %v4736 = vpop.f32.mrf.mxu0
        %4737 = vdwg.mxu0
        %v4738 = vadd.f32 %v4277, %v4542
        %v4739 = vadd.f32 %v4278, %v4545
        %v4740 = vadd.f32 %v4279, %v4550
        %v4741 = vadd.f32 %v4280, %v4553
        %v4742 = vadd.f32 %v4281, %v4558
        %v4743 = vadd.f32 %v4282, %v4561
        %v4744 = vadd.f32 %v4283, %v4566
        %v4745 = vadd.f32 %v4284, %v4569
        %v4746 = vadd.f32 %v4285, %v4574
        %v4747 = vadd.f32 %v4286, %v4577
        %v4748 = vadd.f32 %v4287, %v4582
        %v4749 = vadd.f32 %v4288, %v4585
        %v4750 = vadd.f32 %v4289, %v4590
        %v4751 = vadd.f32 %v4290, %v4593
        %v4752 = vadd.f32 %v4291, %v4598
        %v4753 = vadd.f32 %v4292, %v4601
        %v4754 = vadd.f32 %v4293, %v4606
        %v4755 = vadd.f32 %v4294, %v4609
        %v4756 = vadd.f32 %v4295, %v4614
        %v4757 = vadd.f32 %v4296, %v4617
        %v4758 = vadd.f32 %v4297, %v4622
        %v4759 = vadd.f32 %v4298, %v4625
        %v4760 = vadd.f32 %v4299, %v4630
        %v4761 = vadd.f32 %v4300, %v4633
        %v4762 = vadd.f32 %v4301, %v4638
        %v4763 = vadd.f32 %v4302, %v4645
        %v4764 = vadd.f32 %v4303, %v4648
        %v4765 = vadd.f32 %v4304, %v4653
        %v4766 = vadd.f32 %v4305, %v4656
        %v4767 = vadd.f32 %v4306, %v4661
        %v4768 = vadd.f32 %v4307, %v4664
        %v4769 = vadd.f32 %v4308, %v4669
        %v4770 = vadd.f32 %v4309, %v4672
        %v4771 = vadd.f32 %v4310, %v4677
        %v4772 = vadd.f32 %v4311, %v4680
        %v4773 = vadd.f32 %v4312, %v4685
        %v4774 = vadd.f32 %v4313, %v4688
        %v4775 = vadd.f32 %v4314, %v4693
        %v4776 = vadd.f32 %v4315, %v4696
        %v4777 = vadd.f32 %v4316, %v4701
        %v4778 = vadd.f32 %v4317, %v4704
        %v4779 = vadd.f32 %v4318, %v4709
        %v4780 = vadd.f32 %v4319, %v4712
        %v4781 = vadd.f32 %v4320, %v4717
        %v4782 = vadd.f32 %v4321, %v4720
        %v4783 = vadd.f32 %v4322, %v4725
        %v4784 = vadd.f32 %v4323, %v4728
        %v4785 = vadd.f32 %v4324, %v4733
        %v4786 = vld [vmem:[#allocation2 + $0xb] sm:$0xff]
        %v4787 = vld [vmem:[#allocation2 + $0x13] sm:$0xff]
        %v4788 = vld [vmem:[#allocation2 + $0x1b] sm:$0xff]
        %v4789 = vld [vmem:[#allocation2 + $0x23] sm:$0xff]
        %v4790 = vld [vmem:[#allocation2 + $0x2b] sm:$0xff]
        %v4791 = vld [vmem:[#allocation2 + $0x33] sm:$0xff]
        %v4792 = vld [vmem:[#allocation2 + $0x3b] sm:$0xff]
        %v4793 = vld [vmem:[#allocation2 + $0x43] sm:$0xff]
        %v4794 = vld [vmem:[#allocation2 + $0x4b] sm:$0xff]
        %v4795 = vld [vmem:[#allocation2 + $0x53] sm:$0xff]
        %v4796 = vld [vmem:[#allocation2 + $0x5b] sm:$0xff]
        %v4797 = vld [vmem:[#allocation2 + $0x63] sm:$0xff]
        %v4798 = vld [vmem:[#allocation2 + $0x6b] sm:$0xff]
        %v4799 = vld [vmem:[#allocation2 + $0x73] sm:$0xff]
        %v4800 = vld [vmem:[#allocation2 + $0x7b] sm:$0xff]
        %v4801 = vld [vmem:[#allocation2 + $0x83] sm:$0xff]
        %v4802 = vld [vmem:[#allocation2 + $0x8b] sm:$0xff]
        %v4803 = vld [vmem:[#allocation2 + $0x93] sm:$0xff]
        %v4804 = vld [vmem:[#allocation2 + $0x9b] sm:$0xff]
        %v4805 = vld [vmem:[#allocation2 + $0xa3] sm:$0xff]
        %v4806 = vld [vmem:[#allocation2 + $0xab] sm:$0xff]
        %v4807 = vld [vmem:[#allocation2 + $0xb3] sm:$0xff]
        %v4808 = vld [vmem:[#allocation2 + $0xbb] sm:$0xff]
        %v4809 = vld [vmem:[#allocation2 + $0xc3] sm:$0xff]
        %v4810 = vld [vmem:[#allocation2 + $0xcb] sm:$0xff]
        %v4811 = vld [vmem:[#allocation2 + $0xd3] sm:$0xff]
        %v4812 = vld [vmem:[#allocation2 + $0xdb] sm:$0xff]
        %v4813 = vld [vmem:[#allocation2 + $0xe3] sm:$0xff]
        %v4814 = vld [vmem:[#allocation2 + $0xeb] sm:$0xff]
        %v4815 = vld [vmem:[#allocation2 + $0xf3] sm:$0xff]
        %v4816 = vld [vmem:[#allocation2 + $0xfb] sm:$0xff]
        %v4817 = vld [vmem:[#allocation2 + $0x103] sm:$0xff]
        %v4818 = vld [vmem:[#allocation2 + $0x10b] sm:$0xff]
        %v4819 = vld [vmem:[#allocation2 + $0x113] sm:$0xff]
        %v4820 = vld [vmem:[#allocation2 + $0x11b] sm:$0xff]
        %v4821 = vld [vmem:[#allocation2 + $0x123] sm:$0xff]
        %v4822 = vld [vmem:[#allocation2 + $0x12b] sm:$0xff]
        %v4823 = vld [vmem:[#allocation2 + $0x133] sm:$0xff]
        %v4824 = vld [vmem:[#allocation2 + $0x13b] sm:$0xff]
        %v4825 = vld [vmem:[#allocation2 + $0x143] sm:$0xff]
        %v4826 = vld [vmem:[#allocation2 + $0x14b] sm:$0xff]
        %v4827 = vld [vmem:[#allocation2 + $0x153] sm:$0xff]
        %v4828 = vld [vmem:[#allocation2 + $0x15b] sm:$0xff]
        %v4829 = vld [vmem:[#allocation2 + $0x163] sm:$0xff]
        %v4830 = vld [vmem:[#allocation2 + $0x16b] sm:$0xff]
        %v4831 = vld [vmem:[#allocation2 + $0x173] sm:$0xff]
        %v4832 = vld [vmem:[#allocation2 + $0x17b] sm:$0xff]
        %v4833 = vld [vmem:[#allocation2 + $0x183] sm:$0xff]
        %v4834 = vld [vmem:[#allocation2 + $0x18b] sm:$0x3f]
        %v4835 = vpack.c.bf16 %v4787, %v4786
        %v4836 = vpack.c.bf16 %v4789, %v4788
        %v4837 = vpack.c.bf16 %v4791, %v4790
        %v4838 = vpack.c.bf16 %v4793, %v4792
        %v4839 = vpack.c.bf16 %v4795, %v4794
        %v4840 = vpack.c.bf16 %v4797, %v4796
        %v4841 = vpack.c.bf16 %v4799, %v4798
        %v4842 = vpack.c.bf16 %v4801, %v4800
        %v4843 = vpack.c.bf16 %v4803, %v4802
        %v4844 = vpack.c.bf16 %v4805, %v4804
        %v4845 = vpack.c.bf16 %v4807, %v4806
        %v4846 = vpack.c.bf16 %v4809, %v4808
        %v4847 = vpack.c.bf16 %v4811, %v4810
        %v4848 = vpack.c.bf16 %v4813, %v4812
        %v4849 = vpack.c.bf16 %v4815, %v4814
        %v4850 = vpack.c.bf16 %v4817, %v4816
        %v4851 = vpack.c.bf16 %v4819, %v4818
        %v4852 = vpack.c.bf16 %v4821, %v4820
        %v4853 = vpack.c.bf16 %v4823, %v4822
        %v4854 = vpack.c.bf16 %v4825, %v4824
        %v4855 = vpack.c.bf16 %v4827, %v4826
        %v4856 = vpack.c.bf16 %v4829, %v4828
        %v4857 = vpack.c.bf16 %v4831, %v4830
        %v4858 = vpack.c.bf16 %v4833, %v4832
        %v4859 = vpack.c.bf16 %v4834, %v4834
        %s4860 = scalar_lea.vmem %s2, 128
        %v4861 = vld [vmem:[%s4860] sm:$0xf]
        %v4862 = vld [vmem:[%s4860 + $0x4] sm:$0xf]
        %v4863 = vld [vmem:[%s4860 + $0x8] sm:$0xf]
        %v4864 = vld [vmem:[%s4860 + $0xc] sm:$0xf]
        %v4865 = vld [vmem:[%s4860 + $0x10] sm:$0xf]
        %v4866 = vld [vmem:[%s4860 + $0x14] sm:$0xf]
        %v4867 = vld [vmem:[%s4860 + $0x18] sm:$0xf]
        %v4868 = vld [vmem:[%s4860 + $0x1c] sm:$0xf]
        %v4877 = vunpack.c.l.b16 %v4861
        %v4878 = vunpack.c.l.b16 %v4862
        %v4879 = vunpack.c.l.b16 %v4863
        %v4880 = vunpack.c.l.b16 %v4864
        %v4881 = vunpack.c.l.b16 %v4865
        %v4882 = vunpack.c.l.b16 %v4866
        %v4883 = vunpack.c.l.b16 %v4867
        %v4884 = vunpack.c.l.b16 %v4868
        %v4885 = vpack.c.b16 %v4878, %v4877
        %v4886 = vpack.c.b16 %v4880, %v4879
        %v4887 = vpack.c.b16 %v4882, %v4881
        %v4888 = vpack.c.b16 %v4884, %v4883
        %v4894 = vsel %vm2712, %v4835, 0
        %v4897 = vsel %vm2712, %v4836, 0
        %v4900 = vsel %vm2712, %v4837, 0
        %v4903 = vsel %vm2712, %v4838, 0
        %v4906 = vsel %vm2712, %v4839, 0
        %v4909 = vsel %vm2712, %v4840, 0
        %v4912 = vsel %vm2712, %v4841, 0
        %v4915 = vsel %vm2712, %v4842, 0
        %v4918 = vsel %vm2712, %v4843, 0
        %v4921 = vsel %vm2712, %v4844, 0
        %v4924 = vsel %vm2712, %v4845, 0
        %v4927 = vsel %vm2712, %v4846, 0
        %v4930 = vsel %vm2712, %v4847, 0
        %v4933 = vsel %vm2712, %v4848, 0
        %v4936 = vsel %vm2712, %v4849, 0
        %v4939 = vsel %vm2712, %v4850, 0
        %v4942 = vsel %vm2712, %v4851, 0
        %v4945 = vsel %vm2712, %v4852, 0
        %v4948 = vsel %vm2712, %v4853, 0
        %v4951 = vsel %vm2712, %v4854, 0
        %v4954 = vsel %vm2712, %v4855, 0
        %v4957 = vsel %vm2712, %v4856, 0
        %v4960 = vsel %vm2712, %v4857, 0
        %v4963 = vsel %vm2712, %v4858, 0
        %v4966 = vsel %vm2712, %v4859, 0
        %4968 = vmatprep.subr.bf16.mxu0 0
        %4969 = vmatpush1.bf16.msra.mxu0 0
        %4970 = vmatprep.subr.bf16.mxu0 0
        %4971 = vmatpush1.bf16.msra.mxu0 0
        %4972 = vmatprep.subr.bf16.mxu0 0
        %4973 = vmatpush1.bf16.msra.mxu0 0
        %4974 = vmatprep.subr.bf16.mxu0 0
        %4975 = vmatpush1.bf16.msra.mxu0 0
        %4976 = vmatprep.subr.bf16.mxu0 0
        %4977 = vmatpush1.bf16.msra.mxu0 %v4888
        %4978 = vmatprep.subr.bf16.mxu0 0
        %4979 = vmatpush1.bf16.msra.mxu0 %v4887
        %4980 = vmatprep.subr.bf16.mxu0 0
        %4981 = vmatpush1.bf16.msra.mxu0 %v4886
        %4982 = vmatprep.subr.bf16.mxu0 0
        %4983 = vmatpush1.bf16.msra.mxu0 %v4885
        %4984 = vmatprep.subr.bf16.mxu0 0
        %4985 = vmatpush2.bf16.msra.mxu0 0
        %4986 = vmatprep.subr.bf16.mxu0 0
        %4987 = vmatpush2.bf16.msra.mxu0 0
        %4988 = vmatprep.subr.bf16.mxu0 0
        %4989 = vmatpush2.bf16.msra.mxu0 0
        %4990 = vmatprep.subr.bf16.mxu0 0
        %4991 = vmatpush2.bf16.msra.mxu0 0
        %4992 = vmatprep.subr.bf16.mxu0 0
        %4993 = vmatpush2.bf16.msra.mxu0 0
        %4994 = vmatprep.subr.bf16.mxu0 0
        %4995 = vmatpush2.bf16.msra.mxu0 0
        %4996 = vmatprep.subr.bf16.mxu0 0
        %4997 = vmatpush2.bf16.msra.mxu0 0
        %4998 = vmatprep.subr.bf16.mxu0 0
        %4999 = vmatpush2.bf16.msra.mxu0 0
        %5000 = vmatprep.mubr.bf16.mxu0 0
        %5001 = vmatmul.mubr.bf16.gmra.mxu0 %v4894
        %v5002 = vpop.f32.mrf.mxu0
        %v5003 = vadd.f32 0.0, %v5002
        %v5004 = vpop.f32.mrf.mxu0
        %v5005 = vpop.f32.mrf.mxu0
        %v5006 = vadd.f32 0.0, %v5005
        %v5007 = vpop.f32.mrf.mxu0
        %5008 = vmatprep.mubr.bf16.mxu0 0
        %5009 = vmatmul.mubr.bf16.gmra.mxu0 %v4897
        %v5010 = vpop.f32.mrf.mxu0
        %v5011 = vadd.f32 0.0, %v5010
        %v5012 = vpop.f32.mrf.mxu0
        %v5013 = vpop.f32.mrf.mxu0
        %v5014 = vadd.f32 0.0, %v5013
        %v5015 = vpop.f32.mrf.mxu0
        %5016 = vmatprep.mubr.bf16.mxu0 0
        %5017 = vmatmul.mubr.bf16.gmra.mxu0 %v4900
        %v5018 = vpop.f32.mrf.mxu0
        %v5019 = vadd.f32 0.0, %v5018
        %v5020 = vpop.f32.mrf.mxu0
        %v5021 = vpop.f32.mrf.mxu0
        %v5022 = vadd.f32 0.0, %v5021
        %v5023 = vpop.f32.mrf.mxu0
        %5024 = vmatprep.mubr.bf16.mxu0 0
        %5025 = vmatmul.mubr.bf16.gmra.mxu0 %v4903
        %v5026 = vpop.f32.mrf.mxu0
        %v5027 = vadd.f32 0.0, %v5026
        %v5028 = vpop.f32.mrf.mxu0
        %v5029 = vpop.f32.mrf.mxu0
        %v5030 = vadd.f32 0.0, %v5029
        %v5031 = vpop.f32.mrf.mxu0
        %5032 = vmatprep.mubr.bf16.mxu0 0
        %5033 = vmatmul.mubr.bf16.gmra.mxu0 %v4906
        %v5034 = vpop.f32.mrf.mxu0
        %v5035 = vadd.f32 0.0, %v5034
        %v5036 = vpop.f32.mrf.mxu0
        %v5037 = vpop.f32.mrf.mxu0
        %v5038 = vadd.f32 0.0, %v5037
        %v5039 = vpop.f32.mrf.mxu0
        %5040 = vmatprep.mubr.bf16.mxu0 0
        %5041 = vmatmul.mubr.bf16.gmra.mxu0 %v4909
        %v5042 = vpop.f32.mrf.mxu0
        %v5043 = vadd.f32 0.0, %v5042
        %v5044 = vpop.f32.mrf.mxu0
        %v5045 = vpop.f32.mrf.mxu0
        %v5046 = vadd.f32 0.0, %v5045
        %v5047 = vpop.f32.mrf.mxu0
        %5048 = vmatprep.mubr.bf16.mxu0 0
        %5049 = vmatmul.mubr.bf16.gmra.mxu0 %v4912
        %v5050 = vpop.f32.mrf.mxu0
        %v5051 = vadd.f32 0.0, %v5050
        %v5052 = vpop.f32.mrf.mxu0
        %v5053 = vpop.f32.mrf.mxu0
        %v5054 = vadd.f32 0.0, %v5053
        %v5055 = vpop.f32.mrf.mxu0
        %5056 = vmatprep.mubr.bf16.mxu0 0
        %5057 = vmatmul.mubr.bf16.gmra.mxu0 %v4915
        %v5058 = vpop.f32.mrf.mxu0
        %v5059 = vadd.f32 0.0, %v5058
        %v5060 = vpop.f32.mrf.mxu0
        %v5061 = vpop.f32.mrf.mxu0
        %v5062 = vadd.f32 0.0, %v5061
        %v5063 = vpop.f32.mrf.mxu0
        %5064 = vmatprep.mubr.bf16.mxu0 0
        %5065 = vmatmul.mubr.bf16.gmra.mxu0 %v4918
        %v5066 = vpop.f32.mrf.mxu0
        %v5067 = vadd.f32 0.0, %v5066
        %v5068 = vpop.f32.mrf.mxu0
        %v5069 = vpop.f32.mrf.mxu0
        %v5070 = vadd.f32 0.0, %v5069
        %v5071 = vpop.f32.mrf.mxu0
        %5072 = vmatprep.mubr.bf16.mxu0 0
        %5073 = vmatmul.mubr.bf16.gmra.mxu0 %v4921
        %v5074 = vpop.f32.mrf.mxu0
        %v5075 = vadd.f32 0.0, %v5074
        %v5076 = vpop.f32.mrf.mxu0
        %v5077 = vpop.f32.mrf.mxu0
        %v5078 = vadd.f32 0.0, %v5077
        %v5079 = vpop.f32.mrf.mxu0
        %5080 = vmatprep.mubr.bf16.mxu0 0
        %5081 = vmatmul.mubr.bf16.gmra.mxu0 %v4924
        %v5082 = vpop.f32.mrf.mxu0
        %v5083 = vadd.f32 0.0, %v5082
        %v5084 = vpop.f32.mrf.mxu0
        %v5085 = vpop.f32.mrf.mxu0
        %v5086 = vadd.f32 0.0, %v5085
        %v5087 = vpop.f32.mrf.mxu0
        %5088 = vmatprep.mubr.bf16.mxu0 0
        %5089 = vmatmul.mubr.bf16.gmra.mxu0 %v4927
        %v5090 = vpop.f32.mrf.mxu0
        %v5091 = vadd.f32 0.0, %v5090
        %v5092 = vpop.f32.mrf.mxu0
        %v5093 = vpop.f32.mrf.mxu0
        %v5094 = vadd.f32 0.0, %v5093
        %v5095 = vpop.f32.mrf.mxu0
        %5096 = vmatprep.mubr.bf16.mxu0 0
        %5097 = vmatmul.mubr.bf16.gmra.mxu0 %v4930
        %v5098 = vpop.f32.mrf.mxu0
        %v5099 = vadd.f32 0.0, %v5098
        %v5100 = vpop.f32.mrf.mxu0
        %v5101 = vpop.f32.mrf.mxu0
        %v5102 = vpop.f32.mrf.mxu0
        %5103 = vmatprep.mubr.bf16.mxu0 0
        %5104 = vmatmul.mubr.bf16.gmra.mxu0 %v4933
        %v5105 = vpop.f32.mrf.mxu0
        %v5106 = vadd.f32 0.0, %v5105
        %v5107 = vpop.f32.mrf.mxu0
        %v5108 = vpop.f32.mrf.mxu0
        %v5109 = vadd.f32 0.0, %v5108
        %v5110 = vpop.f32.mrf.mxu0
        %5111 = vmatprep.mubr.bf16.mxu0 0
        %5112 = vmatmul.mubr.bf16.gmra.mxu0 %v4936
        %v5113 = vpop.f32.mrf.mxu0
        %v5114 = vadd.f32 0.0, %v5113
        %v5115 = vpop.f32.mrf.mxu0
        %v5116 = vpop.f32.mrf.mxu0
        %v5117 = vadd.f32 0.0, %v5116
        %v5118 = vpop.f32.mrf.mxu0
        %5119 = vmatprep.mubr.bf16.mxu0 0
        %5120 = vmatmul.mubr.bf16.gmra.mxu0 %v4939
        %v5121 = vpop.f32.mrf.mxu0
        %v5122 = vadd.f32 0.0, %v5121
        %v5123 = vpop.f32.mrf.mxu0
        %v5124 = vpop.f32.mrf.mxu0
        %v5125 = vadd.f32 0.0, %v5124
        %v5126 = vpop.f32.mrf.mxu0
        %5127 = vmatprep.mubr.bf16.mxu0 0
        %5128 = vmatmul.mubr.bf16.gmra.mxu0 %v4942
        %v5129 = vpop.f32.mrf.mxu0
        %v5130 = vadd.f32 0.0, %v5129
        %v5131 = vpop.f32.mrf.mxu0
        %v5132 = vpop.f32.mrf.mxu0
        %v5133 = vadd.f32 0.0, %v5132
        %v5134 = vpop.f32.mrf.mxu0
        %5135 = vmatprep.mubr.bf16.mxu0 0
        %5136 = vmatmul.mubr.bf16.gmra.mxu0 %v4945
        %v5137 = vpop.f32.mrf.mxu0
        %v5138 = vadd.f32 0.0, %v5137
        %v5139 = vpop.f32.mrf.mxu0
        %v5140 = vpop.f32.mrf.mxu0
        %v5141 = vadd.f32 0.0, %v5140
        %v5142 = vpop.f32.mrf.mxu0
        %5143 = vmatprep.mubr.bf16.mxu0 0
        %5144 = vmatmul.mubr.bf16.gmra.mxu0 %v4948
        %v5145 = vpop.f32.mrf.mxu0
        %v5146 = vadd.f32 0.0, %v5145
        %v5147 = vpop.f32.mrf.mxu0
        %v5148 = vpop.f32.mrf.mxu0
        %v5149 = vadd.f32 0.0, %v5148
        %v5150 = vpop.f32.mrf.mxu0
        %5151 = vmatprep.mubr.bf16.mxu0 0
        %5152 = vmatmul.mubr.bf16.gmra.mxu0 %v4951
        %v5153 = vpop.f32.mrf.mxu0
        %v5154 = vadd.f32 0.0, %v5153
        %v5155 = vpop.f32.mrf.mxu0
        %v5156 = vpop.f32.mrf.mxu0
        %v5157 = vadd.f32 0.0, %v5156
        %v5158 = vpop.f32.mrf.mxu0
        %5159 = vmatprep.mubr.bf16.mxu0 0
        %5160 = vmatmul.mubr.bf16.gmra.mxu0 %v4954
        %v5161 = vpop.f32.mrf.mxu0
        %v5162 = vadd.f32 0.0, %v5161
        %v5163 = vpop.f32.mrf.mxu0
        %v5164 = vpop.f32.mrf.mxu0
        %v5165 = vadd.f32 0.0, %v5164
        %v5166 = vpop.f32.mrf.mxu0
        %5167 = vmatprep.mubr.bf16.mxu0 0
        %5168 = vmatmul.mubr.bf16.gmra.mxu0 %v4957
        %v5169 = vpop.f32.mrf.mxu0
        %v5170 = vadd.f32 0.0, %v5169
        %v5171 = vpop.f32.mrf.mxu0
        %v5172 = vpop.f32.mrf.mxu0
        %v5173 = vadd.f32 0.0, %v5172
        %v5174 = vpop.f32.mrf.mxu0
        %5175 = vmatprep.mubr.bf16.mxu0 0
        %5176 = vmatmul.mubr.bf16.gmra.mxu0 %v4960
        %v5177 = vpop.f32.mrf.mxu0
        %v5178 = vadd.f32 0.0, %v5177
        %v5179 = vpop.f32.mrf.mxu0
        %v5180 = vpop.f32.mrf.mxu0
        %v5181 = vadd.f32 0.0, %v5180
        %v5182 = vpop.f32.mrf.mxu0
        %5183 = vmatprep.mubr.bf16.mxu0 0
        %5184 = vmatmul.mubr.bf16.gmra.mxu0 %v4963
        %v5185 = vpop.f32.mrf.mxu0
        %v5186 = vadd.f32 0.0, %v5185
        %v5187 = vpop.f32.mrf.mxu0
        %v5188 = vpop.f32.mrf.mxu0
        %v5189 = vadd.f32 0.0, %v5188
        %v5190 = vpop.f32.mrf.mxu0
        %5191 = vmatprep.mubr.bf16.mxu0 0
        %5192 = vmatmul.mubr.bf16.gmra.mxu0 %v4966
        %v5193 = vpop.f32.mrf.mxu0
        %v5194 = vadd.f32 0.0, %v5193
        %v5195 = vpop.f32.mrf.mxu0
        %v5196 = vpop.f32.mrf.mxu0
        %v5197 = vpop.f32.mrf.mxu0
        %5198 = vdwg.mxu0
        %v5199 = vadd.f32 %v4738, %v5003
        %v5200 = vadd.f32 %v4739, %v5006
        %v5201 = vadd.f32 %v4740, %v5011
        %v5202 = vadd.f32 %v4741, %v5014
        %v5203 = vadd.f32 %v4742, %v5019
        %v5204 = vadd.f32 %v4743, %v5022
        %v5205 = vadd.f32 %v4744, %v5027
        %v5206 = vadd.f32 %v4745, %v5030
        %v5207 = vadd.f32 %v4746, %v5035
        %v5208 = vadd.f32 %v4747, %v5038
        %v5209 = vadd.f32 %v4748, %v5043
        %v5210 = vadd.f32 %v4749, %v5046
        %v5211 = vadd.f32 %v4750, %v5051
        %v5212 = vadd.f32 %v4751, %v5054
        %v5213 = vadd.f32 %v4752, %v5059
        %v5214 = vadd.f32 %v4753, %v5062
        %v5215 = vadd.f32 %v4754, %v5067
        %v5216 = vadd.f32 %v4755, %v5070
        %v5217 = vadd.f32 %v4756, %v5075
        %v5218 = vadd.f32 %v4757, %v5078
        %v5219 = vadd.f32 %v4758, %v5083
        %v5220 = vadd.f32 %v4759, %v5086
        %v5221 = vadd.f32 %v4760, %v5091
        %v5222 = vadd.f32 %v4761, %v5094
        %v5223 = vadd.f32 %v4762, %v5099
        %v5224 = vadd.f32 %v4763, %v5106
        %v5225 = vadd.f32 %v4764, %v5109
        %v5226 = vadd.f32 %v4765, %v5114
        %v5227 = vadd.f32 %v4766, %v5117
        %v5228 = vadd.f32 %v4767, %v5122
        %v5229 = vadd.f32 %v4768, %v5125
        %v5230 = vadd.f32 %v4769, %v5130
        %v5231 = vadd.f32 %v4770, %v5133
        %v5232 = vadd.f32 %v4771, %v5138
        %v5233 = vadd.f32 %v4772, %v5141
        %v5234 = vadd.f32 %v4773, %v5146
        %v5235 = vadd.f32 %v4774, %v5149
        %v5236 = vadd.f32 %v4775, %v5154
        %v5237 = vadd.f32 %v4776, %v5157
        %v5238 = vadd.f32 %v4777, %v5162
        %v5239 = vadd.f32 %v4778, %v5165
        %v5240 = vadd.f32 %v4779, %v5170
        %v5241 = vadd.f32 %v4780, %v5173
        %v5242 = vadd.f32 %v4781, %v5178
        %v5243 = vadd.f32 %v4782, %v5181
        %v5244 = vadd.f32 %v4783, %v5186
        %v5245 = vadd.f32 %v4784, %v5189
        %v5246 = vadd.f32 %v4785, %v5194
        %v5247 = vld [vmem:[#allocation2 + $0xc] sm:$0xff]
        %v5248 = vld [vmem:[#allocation2 + $0x14] sm:$0xff]
        %v5249 = vld [vmem:[#allocation2 + $0x1c] sm:$0xff]
        %v5250 = vld [vmem:[#allocation2 + $0x24] sm:$0xff]
        %v5251 = vld [vmem:[#allocation2 + $0x2c] sm:$0xff]
        %v5252 = vld [vmem:[#allocation2 + $0x34] sm:$0xff]
        %v5253 = vld [vmem:[#allocation2 + $0x3c] sm:$0xff]
        %v5254 = vld [vmem:[#allocation2 + $0x44] sm:$0xff]
        %v5255 = vld [vmem:[#allocation2 + $0x4c] sm:$0xff]
        %v5256 = vld [vmem:[#allocation2 + $0x54] sm:$0xff]
        %v5257 = vld [vmem:[#allocation2 + $0x5c] sm:$0xff]
        %v5258 = vld [vmem:[#allocation2 + $0x64] sm:$0xff]
        %v5259 = vld [vmem:[#allocation2 + $0x6c] sm:$0xff]
        %v5260 = vld [vmem:[#allocation2 + $0x74] sm:$0xff]
        %v5261 = vld [vmem:[#allocation2 + $0x7c] sm:$0xff]
        %v5262 = vld [vmem:[#allocation2 + $0x84] sm:$0xff]
        %v5263 = vld [vmem:[#allocation2 + $0x8c] sm:$0xff]
        %v5264 = vld [vmem:[#allocation2 + $0x94] sm:$0xff]
        %v5265 = vld [vmem:[#allocation2 + $0x9c] sm:$0xff]
        %v5266 = vld [vmem:[#allocation2 + $0xa4] sm:$0xff]
        %v5267 = vld [vmem:[#allocation2 + $0xac] sm:$0xff]
        %v5268 = vld [vmem:[#allocation2 + $0xb4] sm:$0xff]
        %v5269 = vld [vmem:[#allocation2 + $0xbc] sm:$0xff]
        %v5270 = vld [vmem:[#allocation2 + $0xc4] sm:$0xff]
        %v5271 = vld [vmem:[#allocation2 + $0xcc] sm:$0xff]
        %v5272 = vld [vmem:[#allocation2 + $0xd4] sm:$0xff]
        %v5273 = vld [vmem:[#allocation2 + $0xdc] sm:$0xff]
        %v5274 = vld [vmem:[#allocation2 + $0xe4] sm:$0xff]
        %v5275 = vld [vmem:[#allocation2 + $0xec] sm:$0xff]
        %v5276 = vld [vmem:[#allocation2 + $0xf4] sm:$0xff]
        %v5277 = vld [vmem:[#allocation2 + $0xfc] sm:$0xff]
        %v5278 = vld [vmem:[#allocation2 + $0x104] sm:$0xff]
        %v5279 = vld [vmem:[#allocation2 + $0x10c] sm:$0xff]
        %v5280 = vld [vmem:[#allocation2 + $0x114] sm:$0xff]
        %v5281 = vld [vmem:[#allocation2 + $0x11c] sm:$0xff]
        %v5282 = vld [vmem:[#allocation2 + $0x124] sm:$0xff]
        %v5283 = vld [vmem:[#allocation2 + $0x12c] sm:$0xff]
        %v5284 = vld [vmem:[#allocation2 + $0x134] sm:$0xff]
        %v5285 = vld [vmem:[#allocation2 + $0x13c] sm:$0xff]
        %v5286 = vld [vmem:[#allocation2 + $0x144] sm:$0xff]
        %v5287 = vld [vmem:[#allocation2 + $0x14c] sm:$0xff]
        %v5288 = vld [vmem:[#allocation2 + $0x154] sm:$0xff]
        %v5289 = vld [vmem:[#allocation2 + $0x15c] sm:$0xff]
        %v5290 = vld [vmem:[#allocation2 + $0x164] sm:$0xff]
        %v5291 = vld [vmem:[#allocation2 + $0x16c] sm:$0xff]
        %v5292 = vld [vmem:[#allocation2 + $0x174] sm:$0xff]
        %v5293 = vld [vmem:[#allocation2 + $0x17c] sm:$0xff]
        %v5294 = vld [vmem:[#allocation2 + $0x184] sm:$0xff]
        %v5295 = vld [vmem:[#allocation2 + $0x18c] sm:$0x3f]
        %v5296 = vpack.c.bf16 %v5248, %v5247
        %v5297 = vpack.c.bf16 %v5250, %v5249
        %v5298 = vpack.c.bf16 %v5252, %v5251
        %v5299 = vpack.c.bf16 %v5254, %v5253
        %v5300 = vpack.c.bf16 %v5256, %v5255
        %v5301 = vpack.c.bf16 %v5258, %v5257
        %v5302 = vpack.c.bf16 %v5260, %v5259
        %v5303 = vpack.c.bf16 %v5262, %v5261
        %v5304 = vpack.c.bf16 %v5264, %v5263
        %v5305 = vpack.c.bf16 %v5266, %v5265
        %v5306 = vpack.c.bf16 %v5268, %v5267
        %v5307 = vpack.c.bf16 %v5270, %v5269
        %v5308 = vpack.c.bf16 %v5272, %v5271
        %v5309 = vpack.c.bf16 %v5274, %v5273
        %v5310 = vpack.c.bf16 %v5276, %v5275
        %v5311 = vpack.c.bf16 %v5278, %v5277
        %v5312 = vpack.c.bf16 %v5280, %v5279
        %v5313 = vpack.c.bf16 %v5282, %v5281
        %v5314 = vpack.c.bf16 %v5284, %v5283
        %v5315 = vpack.c.bf16 %v5286, %v5285
        %v5316 = vpack.c.bf16 %v5288, %v5287
        %v5317 = vpack.c.bf16 %v5290, %v5289
        %v5318 = vpack.c.bf16 %v5292, %v5291
        %v5319 = vpack.c.bf16 %v5294, %v5293
        %v5320 = vpack.c.bf16 %v5295, %v5295
        %s5321 = scalar_lea.vmem %s2, 160
        %v5322 = vld [vmem:[%s5321] sm:$0xf]
        %v5323 = vld [vmem:[%s5321 + $0x4] sm:$0xf]
        %v5324 = vld [vmem:[%s5321 + $0x8] sm:$0xf]
        %v5325 = vld [vmem:[%s5321 + $0xc] sm:$0xf]
        %v5326 = vld [vmem:[%s5321 + $0x10] sm:$0xf]
        %v5327 = vld [vmem:[%s5321 + $0x14] sm:$0xf]
        %v5328 = vld [vmem:[%s5321 + $0x18] sm:$0xf]
        %v5329 = vld [vmem:[%s5321 + $0x1c] sm:$0xf]
        %v5338 = vunpack.c.l.b16 %v5322
        %v5339 = vunpack.c.l.b16 %v5323
        %v5340 = vunpack.c.l.b16 %v5324
        %v5341 = vunpack.c.l.b16 %v5325
        %v5342 = vunpack.c.l.b16 %v5326
        %v5343 = vunpack.c.l.b16 %v5327
        %v5344 = vunpack.c.l.b16 %v5328
        %v5345 = vunpack.c.l.b16 %v5329
        %v5346 = vpack.c.b16 %v5339, %v5338
        %v5347 = vpack.c.b16 %v5341, %v5340
        %v5348 = vpack.c.b16 %v5343, %v5342
        %v5349 = vpack.c.b16 %v5345, %v5344
        %v5355 = vsel %vm2712, %v5296, 0
        %v5358 = vsel %vm2712, %v5297, 0
        %v5361 = vsel %vm2712, %v5298, 0
        %v5364 = vsel %vm2712, %v5299, 0
        %v5367 = vsel %vm2712, %v5300, 0
        %v5370 = vsel %vm2712, %v5301, 0
        %v5373 = vsel %vm2712, %v5302, 0
        %v5376 = vsel %vm2712, %v5303, 0
        %v5379 = vsel %vm2712, %v5304, 0
        %v5382 = vsel %vm2712, %v5305, 0
        %v5385 = vsel %vm2712, %v5306, 0
        %v5388 = vsel %vm2712, %v5307, 0
        %v5391 = vsel %vm2712, %v5308, 0
        %v5394 = vsel %vm2712, %v5309, 0
        %v5397 = vsel %vm2712, %v5310, 0
        %v5400 = vsel %vm2712, %v5311, 0
        %v5403 = vsel %vm2712, %v5312, 0
        %v5406 = vsel %vm2712, %v5313, 0
        %v5409 = vsel %vm2712, %v5314, 0
        %v5412 = vsel %vm2712, %v5315, 0
        %v5415 = vsel %vm2712, %v5316, 0
        %v5418 = vsel %vm2712, %v5317, 0
        %v5421 = vsel %vm2712, %v5318, 0
        %v5424 = vsel %vm2712, %v5319, 0
        %v5427 = vsel %vm2712, %v5320, 0
        %5429 = vmatprep.subr.bf16.mxu0 0
        %5430 = vmatpush1.bf16.msra.mxu0 0
        %5431 = vmatprep.subr.bf16.mxu0 0
        %5432 = vmatpush1.bf16.msra.mxu0 0
        %5433 = vmatprep.subr.bf16.mxu0 0
        %5434 = vmatpush1.bf16.msra.mxu0 0
        %5435 = vmatprep.subr.bf16.mxu0 0
        %5436 = vmatpush1.bf16.msra.mxu0 0
        %5437 = vmatprep.subr.bf16.mxu0 0
        %5438 = vmatpush1.bf16.msra.mxu0 %v5349
        %5439 = vmatprep.subr.bf16.mxu0 0
        %5440 = vmatpush1.bf16.msra.mxu0 %v5348
        %5441 = vmatprep.subr.bf16.mxu0 0
        %5442 = vmatpush1.bf16.msra.mxu0 %v5347
        %5443 = vmatprep.subr.bf16.mxu0 0
        %5444 = vmatpush1.bf16.msra.mxu0 %v5346
        %5445 = vmatprep.subr.bf16.mxu0 0
        %5446 = vmatpush2.bf16.msra.mxu0 0
        %5447 = vmatprep.subr.bf16.mxu0 0
        %5448 = vmatpush2.bf16.msra.mxu0 0
        %5449 = vmatprep.subr.bf16.mxu0 0
        %5450 = vmatpush2.bf16.msra.mxu0 0
        %5451 = vmatprep.subr.bf16.mxu0 0
        %5452 = vmatpush2.bf16.msra.mxu0 0
        %5453 = vmatprep.subr.bf16.mxu0 0
        %5454 = vmatpush2.bf16.msra.mxu0 0
        %5455 = vmatprep.subr.bf16.mxu0 0
        %5456 = vmatpush2.bf16.msra.mxu0 0
        %5457 = vmatprep.subr.bf16.mxu0 0
        %5458 = vmatpush2.bf16.msra.mxu0 0
        %5459 = vmatprep.subr.bf16.mxu0 0
        %5460 = vmatpush2.bf16.msra.mxu0 0
        %5461 = vmatprep.mubr.bf16.mxu0 0
        %5462 = vmatmul.mubr.bf16.gmra.mxu0 %v5355
        %v5463 = vpop.f32.mrf.mxu0
        %v5464 = vadd.f32 0.0, %v5463
        %v5465 = vpop.f32.mrf.mxu0
        %v5466 = vpop.f32.mrf.mxu0
        %v5467 = vadd.f32 0.0, %v5466
        %v5468 = vpop.f32.mrf.mxu0
        %5469 = vmatprep.mubr.bf16.mxu0 0
        %5470 = vmatmul.mubr.bf16.gmra.mxu0 %v5358
        %v5471 = vpop.f32.mrf.mxu0
        %v5472 = vadd.f32 0.0, %v5471
        %v5473 = vpop.f32.mrf.mxu0
        %v5474 = vpop.f32.mrf.mxu0
        %v5475 = vadd.f32 0.0, %v5474
        %v5476 = vpop.f32.mrf.mxu0
        %5477 = vmatprep.mubr.bf16.mxu0 0
        %5478 = vmatmul.mubr.bf16.gmra.mxu0 %v5361
        %v5479 = vpop.f32.mrf.mxu0
        %v5480 = vadd.f32 0.0, %v5479
        %v5481 = vpop.f32.mrf.mxu0
        %v5482 = vpop.f32.mrf.mxu0
        %v5483 = vadd.f32 0.0, %v5482
        %v5484 = vpop.f32.mrf.mxu0
        %5485 = vmatprep.mubr.bf16.mxu0 0
        %5486 = vmatmul.mubr.bf16.gmra.mxu0 %v5364
        %v5487 = vpop.f32.mrf.mxu0
        %v5488 = vadd.f32 0.0, %v5487
        %v5489 = vpop.f32.mrf.mxu0
        %v5490 = vpop.f32.mrf.mxu0
        %v5491 = vadd.f32 0.0, %v5490
        %v5492 = vpop.f32.mrf.mxu0
        %5493 = vmatprep.mubr.bf16.mxu0 0
        %5494 = vmatmul.mubr.bf16.gmra.mxu0 %v5367
        %v5495 = vpop.f32.mrf.mxu0
        %v5496 = vadd.f32 0.0, %v5495
        %v5497 = vpop.f32.mrf.mxu0
        %v5498 = vpop.f32.mrf.mxu0
        %v5499 = vadd.f32 0.0, %v5498
        %v5500 = vpop.f32.mrf.mxu0
        %5501 = vmatprep.mubr.bf16.mxu0 0
        %5502 = vmatmul.mubr.bf16.gmra.mxu0 %v5370
        %v5503 = vpop.f32.mrf.mxu0
        %v5504 = vadd.f32 0.0, %v5503
        %v5505 = vpop.f32.mrf.mxu0
        %v5506 = vpop.f32.mrf.mxu0
        %v5507 = vadd.f32 0.0, %v5506
        %v5508 = vpop.f32.mrf.mxu0
        %5509 = vmatprep.mubr.bf16.mxu0 0
        %5510 = vmatmul.mubr.bf16.gmra.mxu0 %v5373
        %v5511 = vpop.f32.mrf.mxu0
        %v5512 = vadd.f32 0.0, %v5511
        %v5513 = vpop.f32.mrf.mxu0
        %v5514 = vpop.f32.mrf.mxu0
        %v5515 = vadd.f32 0.0, %v5514
        %v5516 = vpop.f32.mrf.mxu0
        %5517 = vmatprep.mubr.bf16.mxu0 0
        %5518 = vmatmul.mubr.bf16.gmra.mxu0 %v5376
        %v5519 = vpop.f32.mrf.mxu0
        %v5520 = vadd.f32 0.0, %v5519
        %v5521 = vpop.f32.mrf.mxu0
        %v5522 = vpop.f32.mrf.mxu0
        %v5523 = vadd.f32 0.0, %v5522
        %v5524 = vpop.f32.mrf.mxu0
        %5525 = vmatprep.mubr.bf16.mxu0 0
        %5526 = vmatmul.mubr.bf16.gmra.mxu0 %v5379
        %v5527 = vpop.f32.mrf.mxu0
        %v5528 = vadd.f32 0.0, %v5527
        %v5529 = vpop.f32.mrf.mxu0
        %v5530 = vpop.f32.mrf.mxu0
        %v5531 = vadd.f32 0.0, %v5530
        %v5532 = vpop.f32.mrf.mxu0
        %5533 = vmatprep.mubr.bf16.mxu0 0
        %5534 = vmatmul.mubr.bf16.gmra.mxu0 %v5382
        %v5535 = vpop.f32.mrf.mxu0
        %v5536 = vadd.f32 0.0, %v5535
        %v5537 = vpop.f32.mrf.mxu0
        %v5538 = vpop.f32.mrf.mxu0
        %v5539 = vadd.f32 0.0, %v5538
        %v5540 = vpop.f32.mrf.mxu0
        %5541 = vmatprep.mubr.bf16.mxu0 0
        %5542 = vmatmul.mubr.bf16.gmra.mxu0 %v5385
        %v5543 = vpop.f32.mrf.mxu0
        %v5544 = vadd.f32 0.0, %v5543
        %v5545 = vpop.f32.mrf.mxu0
        %v5546 = vpop.f32.mrf.mxu0
        %v5547 = vadd.f32 0.0, %v5546
        %v5548 = vpop.f32.mrf.mxu0
        %5549 = vmatprep.mubr.bf16.mxu0 0
        %5550 = vmatmul.mubr.bf16.gmra.mxu0 %v5388
        %v5551 = vpop.f32.mrf.mxu0
        %v5552 = vadd.f32 0.0, %v5551
        %v5553 = vpop.f32.mrf.mxu0
        %v5554 = vpop.f32.mrf.mxu0
        %v5555 = vadd.f32 0.0, %v5554
        %v5556 = vpop.f32.mrf.mxu0
        %5557 = vmatprep.mubr.bf16.mxu0 0
        %5558 = vmatmul.mubr.bf16.gmra.mxu0 %v5391
        %v5559 = vpop.f32.mrf.mxu0
        %v5560 = vadd.f32 0.0, %v5559
        %v5561 = vpop.f32.mrf.mxu0
        %v5562 = vpop.f32.mrf.mxu0
        %v5563 = vpop.f32.mrf.mxu0
        %5564 = vmatprep.mubr.bf16.mxu0 0
        %5565 = vmatmul.mubr.bf16.gmra.mxu0 %v5394
        %v5566 = vpop.f32.mrf.mxu0
        %v5567 = vadd.f32 0.0, %v5566
        %v5568 = vpop.f32.mrf.mxu0
        %v5569 = vpop.f32.mrf.mxu0
        %v5570 = vadd.f32 0.0, %v5569
        %v5571 = vpop.f32.mrf.mxu0
        %5572 = vmatprep.mubr.bf16.mxu0 0
        %5573 = vmatmul.mubr.bf16.gmra.mxu0 %v5397
        %v5574 = vpop.f32.mrf.mxu0
        %v5575 = vadd.f32 0.0, %v5574
        %v5576 = vpop.f32.mrf.mxu0
        %v5577 = vpop.f32.mrf.mxu0
        %v5578 = vadd.f32 0.0, %v5577
        %v5579 = vpop.f32.mrf.mxu0
        %5580 = vmatprep.mubr.bf16.mxu0 0
        %5581 = vmatmul.mubr.bf16.gmra.mxu0 %v5400
        %v5582 = vpop.f32.mrf.mxu0
        %v5583 = vadd.f32 0.0, %v5582
        %v5584 = vpop.f32.mrf.mxu0
        %v5585 = vpop.f32.mrf.mxu0
        %v5586 = vadd.f32 0.0, %v5585
        %v5587 = vpop.f32.mrf.mxu0
        %5588 = vmatprep.mubr.bf16.mxu0 0
        %5589 = vmatmul.mubr.bf16.gmra.mxu0 %v5403
        %v5590 = vpop.f32.mrf.mxu0
        %v5591 = vadd.f32 0.0, %v5590
        %v5592 = vpop.f32.mrf.mxu0
        %v5593 = vpop.f32.mrf.mxu0
        %v5594 = vadd.f32 0.0, %v5593
        %v5595 = vpop.f32.mrf.mxu0
        %5596 = vmatprep.mubr.bf16.mxu0 0
        %5597 = vmatmul.mubr.bf16.gmra.mxu0 %v5406
        %v5598 = vpop.f32.mrf.mxu0
        %v5599 = vadd.f32 0.0, %v5598
        %v5600 = vpop.f32.mrf.mxu0
        %v5601 = vpop.f32.mrf.mxu0
        %v5602 = vadd.f32 0.0, %v5601
        %v5603 = vpop.f32.mrf.mxu0
        %5604 = vmatprep.mubr.bf16.mxu0 0
        %5605 = vmatmul.mubr.bf16.gmra.mxu0 %v5409
        %v5606 = vpop.f32.mrf.mxu0
        %v5607 = vadd.f32 0.0, %v5606
        %v5608 = vpop.f32.mrf.mxu0
        %v5609 = vpop.f32.mrf.mxu0
        %v5610 = vadd.f32 0.0, %v5609
        %v5611 = vpop.f32.mrf.mxu0
        %5612 = vmatprep.mubr.bf16.mxu0 0
        %5613 = vmatmul.mubr.bf16.gmra.mxu0 %v5412
        %v5614 = vpop.f32.mrf.mxu0
        %v5615 = vadd.f32 0.0, %v5614
        %v5616 = vpop.f32.mrf.mxu0
        %v5617 = vpop.f32.mrf.mxu0
        %v5618 = vadd.f32 0.0, %v5617
        %v5619 = vpop.f32.mrf.mxu0
        %5620 = vmatprep.mubr.bf16.mxu0 0
        %5621 = vmatmul.mubr.bf16.gmra.mxu0 %v5415
        %v5622 = vpop.f32.mrf.mxu0
        %v5623 = vadd.f32 0.0, %v5622
        %v5624 = vpop.f32.mrf.mxu0
        %v5625 = vpop.f32.mrf.mxu0
        %v5626 = vadd.f32 0.0, %v5625
        %v5627 = vpop.f32.mrf.mxu0
        %5628 = vmatprep.mubr.bf16.mxu0 0
        %5629 = vmatmul.mubr.bf16.gmra.mxu0 %v5418
        %v5630 = vpop.f32.mrf.mxu0
        %v5631 = vadd.f32 0.0, %v5630
        %v5632 = vpop.f32.mrf.mxu0
        %v5633 = vpop.f32.mrf.mxu0
        %v5634 = vadd.f32 0.0, %v5633
        %v5635 = vpop.f32.mrf.mxu0
        %5636 = vmatprep.mubr.bf16.mxu0 0
        %5637 = vmatmul.mubr.bf16.gmra.mxu0 %v5421
        %v5638 = vpop.f32.mrf.mxu0
        %v5639 = vadd.f32 0.0, %v5638
        %v5640 = vpop.f32.mrf.mxu0
        %v5641 = vpop.f32.mrf.mxu0
        %v5642 = vadd.f32 0.0, %v5641
        %v5643 = vpop.f32.mrf.mxu0
        %5644 = vmatprep.mubr.bf16.mxu0 0
        %5645 = vmatmul.mubr.bf16.gmra.mxu0 %v5424
        %v5646 = vpop.f32.mrf.mxu0
        %v5647 = vadd.f32 0.0, %v5646
        %v5648 = vpop.f32.mrf.mxu0
        %v5649 = vpop.f32.mrf.mxu0
        %v5650 = vadd.f32 0.0, %v5649
        %v5651 = vpop.f32.mrf.mxu0
        %5652 = vmatprep.mubr.bf16.mxu0 0
        %5653 = vmatmul.mubr.bf16.gmra.mxu0 %v5427
        %v5654 = vpop.f32.mrf.mxu0
        %v5655 = vadd.f32 0.0, %v5654
        %v5656 = vpop.f32.mrf.mxu0
        %v5657 = vpop.f32.mrf.mxu0
        %v5658 = vpop.f32.mrf.mxu0
        %5659 = vdwg.mxu0
        %v5660 = vadd.f32 %v5199, %v5464
        %v5661 = vadd.f32 %v5200, %v5467
        %v5662 = vadd.f32 %v5201, %v5472
        %v5663 = vadd.f32 %v5202, %v5475
        %v5664 = vadd.f32 %v5203, %v5480
        %v5665 = vadd.f32 %v5204, %v5483
        %v5666 = vadd.f32 %v5205, %v5488
        %v5667 = vadd.f32 %v5206, %v5491
        %v5668 = vadd.f32 %v5207, %v5496
        %v5669 = vadd.f32 %v5208, %v5499
        %v5670 = vadd.f32 %v5209, %v5504
        %v5671 = vadd.f32 %v5210, %v5507
        %v5672 = vadd.f32 %v5211, %v5512
        %v5673 = vadd.f32 %v5212, %v5515
        %v5674 = vadd.f32 %v5213, %v5520
        %v5675 = vadd.f32 %v5214, %v5523
        %v5676 = vadd.f32 %v5215, %v5528
        %v5677 = vadd.f32 %v5216, %v5531
        %v5678 = vadd.f32 %v5217, %v5536
        %v5679 = vadd.f32 %v5218, %v5539
        %v5680 = vadd.f32 %v5219, %v5544
        %v5681 = vadd.f32 %v5220, %v5547
        %v5682 = vadd.f32 %v5221, %v5552
        %v5683 = vadd.f32 %v5222, %v5555
        %v5684 = vadd.f32 %v5223, %v5560
        %v5685 = vadd.f32 %v5224, %v5567
        %v5686 = vadd.f32 %v5225, %v5570
        %v5687 = vadd.f32 %v5226, %v5575
        %v5688 = vadd.f32 %v5227, %v5578
        %v5689 = vadd.f32 %v5228, %v5583
        %v5690 = vadd.f32 %v5229, %v5586
        %v5691 = vadd.f32 %v5230, %v5591
        %v5692 = vadd.f32 %v5231, %v5594
        %v5693 = vadd.f32 %v5232, %v5599
        %v5694 = vadd.f32 %v5233, %v5602
        %v5695 = vadd.f32 %v5234, %v5607
        %v5696 = vadd.f32 %v5235, %v5610
        %v5697 = vadd.f32 %v5236, %v5615
        %v5698 = vadd.f32 %v5237, %v5618
        %v5699 = vadd.f32 %v5238, %v5623
        %v5700 = vadd.f32 %v5239, %v5626
        %v5701 = vadd.f32 %v5240, %v5631
        %v5702 = vadd.f32 %v5241, %v5634
        %v5703 = vadd.f32 %v5242, %v5639
        %v5704 = vadd.f32 %v5243, %v5642
        %v5705 = vadd.f32 %v5244, %v5647
        %v5706 = vadd.f32 %v5245, %v5650
        %v5707 = vadd.f32 %v5246, %v5655
        %v5708 = vld [vmem:[#allocation2 + $0x14] sm:$0xff]
        %v5709 = vld [vmem:[#allocation2 + $0x1c] sm:$0xff]
        %v5710 = vld [vmem:[#allocation2 + $0x24] sm:$0xff]
        %v5711 = vld [vmem:[#allocation2 + $0x2c] sm:$0xff]
        %v5712 = vld [vmem:[#allocation2 + $0x34] sm:$0xff]
        %v5713 = vld [vmem:[#allocation2 + $0x3c] sm:$0xff]
        %v5714 = vld [vmem:[#allocation2 + $0x44] sm:$0xff]
        %v5715 = vld [vmem:[#allocation2 + $0x4c] sm:$0xff]
        %v5716 = vld [vmem:[#allocation2 + $0x54] sm:$0xff]
        %v5717 = vld [vmem:[#allocation2 + $0x5c] sm:$0xff]
        %v5718 = vld [vmem:[#allocation2 + $0x64] sm:$0xff]
        %v5719 = vld [vmem:[#allocation2 + $0x6c] sm:$0xff]
        %v5720 = vld [vmem:[#allocation2 + $0x74] sm:$0xff]
        %v5721 = vld [vmem:[#allocation2 + $0x7c] sm:$0xff]
        %v5722 = vld [vmem:[#allocation2 + $0x84] sm:$0xff]
        %v5723 = vld [vmem:[#allocation2 + $0x8c] sm:$0xff]
        %v5724 = vld [vmem:[#allocation2 + $0x94] sm:$0xff]
        %v5725 = vld [vmem:[#allocation2 + $0x9c] sm:$0xff]
        %v5726 = vld [vmem:[#allocation2 + $0xa4] sm:$0xff]
        %v5727 = vld [vmem:[#allocation2 + $0xac] sm:$0xff]
        %v5728 = vld [vmem:[#allocation2 + $0xb4] sm:$0xff]
        %v5729 = vld [vmem:[#allocation2 + $0xbc] sm:$0xff]
        %v5730 = vld [vmem:[#allocation2 + $0xc4] sm:$0xff]
        %v5731 = vld [vmem:[#allocation2 + $0xcc] sm:$0xff]
        %v5732 = vld [vmem:[#allocation2 + $0xd4] sm:$0xff]
        %v5733 = vld [vmem:[#allocation2 + $0xdc] sm:$0xff]
        %v5734 = vld [vmem:[#allocation2 + $0xe4] sm:$0xff]
        %v5735 = vld [vmem:[#allocation2 + $0xec] sm:$0xff]
        %v5736 = vld [vmem:[#allocation2 + $0xf4] sm:$0xff]
        %v5737 = vld [vmem:[#allocation2 + $0xfc] sm:$0xff]
        %v5738 = vld [vmem:[#allocation2 + $0x104] sm:$0xff]
        %v5739 = vld [vmem:[#allocation2 + $0x10c] sm:$0xff]
        %v5740 = vld [vmem:[#allocation2 + $0x114] sm:$0xff]
        %v5741 = vld [vmem:[#allocation2 + $0x11c] sm:$0xff]
        %v5742 = vld [vmem:[#allocation2 + $0x124] sm:$0xff]
        %v5743 = vld [vmem:[#allocation2 + $0x12c] sm:$0xff]
        %v5744 = vld [vmem:[#allocation2 + $0x134] sm:$0xff]
        %v5745 = vld [vmem:[#allocation2 + $0x13c] sm:$0xff]
        %v5746 = vld [vmem:[#allocation2 + $0x144] sm:$0xff]
        %v5747 = vld [vmem:[#allocation2 + $0x14c] sm:$0xff]
        %v5748 = vld [vmem:[#allocation2 + $0x154] sm:$0xff]
        %v5749 = vld [vmem:[#allocation2 + $0x15c] sm:$0xff]
        %v5750 = vld [vmem:[#allocation2 + $0x164] sm:$0xff]
        %v5751 = vld [vmem:[#allocation2 + $0x16c] sm:$0xff]
        %v5752 = vld [vmem:[#allocation2 + $0x174] sm:$0xff]
        %v5753 = vld [vmem:[#allocation2 + $0x17c] sm:$0xff]
        %v5754 = vld [vmem:[#allocation2 + $0x184] sm:$0xff]
        %v5755 = vld [vmem:[#allocation2 + $0x18c] sm:$0xff]
        %v5756 = vld [vmem:[#allocation2 + $0x194] sm:$0x3f]
        %v5757 = vpack.c.bf16 %v5709, %v5708
        %v5758 = vpack.c.bf16 %v5711, %v5710
        %v5759 = vpack.c.bf16 %v5713, %v5712
        %v5760 = vpack.c.bf16 %v5715, %v5714
        %v5761 = vpack.c.bf16 %v5717, %v5716
        %v5762 = vpack.c.bf16 %v5719, %v5718
        %v5763 = vpack.c.bf16 %v5721, %v5720
        %v5764 = vpack.c.bf16 %v5723, %v5722
        %v5765 = vpack.c.bf16 %v5725, %v5724
        %v5766 = vpack.c.bf16 %v5727, %v5726
        %v5767 = vpack.c.bf16 %v5729, %v5728
        %v5768 = vpack.c.bf16 %v5731, %v5730
        %v5769 = vpack.c.bf16 %v5733, %v5732
        %v5770 = vpack.c.bf16 %v5735, %v5734
        %v5771 = vpack.c.bf16 %v5737, %v5736
        %v5772 = vpack.c.bf16 %v5739, %v5738
        %v5773 = vpack.c.bf16 %v5741, %v5740
        %v5774 = vpack.c.bf16 %v5743, %v5742
        %v5775 = vpack.c.bf16 %v5745, %v5744
        %v5776 = vpack.c.bf16 %v5747, %v5746
        %v5777 = vpack.c.bf16 %v5749, %v5748
        %v5778 = vpack.c.bf16 %v5751, %v5750
        %v5779 = vpack.c.bf16 %v5753, %v5752
        %v5780 = vpack.c.bf16 %v5755, %v5754
        %v5781 = vpack.c.bf16 %v5756, %v5756
        %s5782 = scalar_lea.vmem %s2, 192
        %v5783 = vld [vmem:[%s5782] sm:$0xf]
        %v5784 = vld [vmem:[%s5782 + $0x4] sm:$0xf]
        %v5785 = vld [vmem:[%s5782 + $0x8] sm:$0xf]
        %v5786 = vld [vmem:[%s5782 + $0xc] sm:$0xf]
        %v5787 = vld [vmem:[%s5782 + $0x10] sm:$0xf]
        %v5788 = vld [vmem:[%s5782 + $0x14] sm:$0xf]
        %v5789 = vld [vmem:[%s5782 + $0x18] sm:$0xf]
        %v5790 = vld [vmem:[%s5782 + $0x1c] sm:$0xf]
        %v5799 = vunpack.c.l.b16 %v5783
        %v5800 = vunpack.c.l.b16 %v5784
        %v5801 = vunpack.c.l.b16 %v5785
        %v5802 = vunpack.c.l.b16 %v5786
        %v5803 = vunpack.c.l.b16 %v5787
        %v5804 = vunpack.c.l.b16 %v5788
        %v5805 = vunpack.c.l.b16 %v5789
        %v5806 = vunpack.c.l.b16 %v5790
        %v5807 = vpack.c.b16 %v5800, %v5799
        %v5808 = vpack.c.b16 %v5802, %v5801
        %v5809 = vpack.c.b16 %v5804, %v5803
        %v5810 = vpack.c.b16 %v5806, %v5805
        %v5816 = vsel %vm2712, %v5757, 0
        %v5819 = vsel %vm2712, %v5758, 0
        %v5822 = vsel %vm2712, %v5759, 0
        %v5825 = vsel %vm2712, %v5760, 0
        %v5828 = vsel %vm2712, %v5761, 0
        %v5831 = vsel %vm2712, %v5762, 0
        %v5834 = vsel %vm2712, %v5763, 0
        %v5837 = vsel %vm2712, %v5764, 0
        %v5840 = vsel %vm2712, %v5765, 0
        %v5843 = vsel %vm2712, %v5766, 0
        %v5846 = vsel %vm2712, %v5767, 0
        %v5849 = vsel %vm2712, %v5768, 0
        %v5852 = vsel %vm2712, %v5769, 0
        %v5855 = vsel %vm2712, %v5770, 0
        %v5858 = vsel %vm2712, %v5771, 0
        %v5861 = vsel %vm2712, %v5772, 0
        %v5864 = vsel %vm2712, %v5773, 0
        %v5867 = vsel %vm2712, %v5774, 0
        %v5870 = vsel %vm2712, %v5775, 0
        %v5873 = vsel %vm2712, %v5776, 0
        %v5876 = vsel %vm2712, %v5777, 0
        %v5879 = vsel %vm2712, %v5778, 0
        %v5882 = vsel %vm2712, %v5779, 0
        %v5885 = vsel %vm2712, %v5780, 0
        %v5888 = vsel %vm2712, %v5781, 0
        %5890 = vmatprep.subr.bf16.mxu0 0
        %5891 = vmatpush1.bf16.msra.mxu0 0
        %5892 = vmatprep.subr.bf16.mxu0 0
        %5893 = vmatpush1.bf16.msra.mxu0 0
        %5894 = vmatprep.subr.bf16.mxu0 0
        %5895 = vmatpush1.bf16.msra.mxu0 0
        %5896 = vmatprep.subr.bf16.mxu0 0
        %5897 = vmatpush1.bf16.msra.mxu0 0
        %5898 = vmatprep.subr.bf16.mxu0 0
        %5899 = vmatpush1.bf16.msra.mxu0 %v5810
        %5900 = vmatprep.subr.bf16.mxu0 0
        %5901 = vmatpush1.bf16.msra.mxu0 %v5809
        %5902 = vmatprep.subr.bf16.mxu0 0
        %5903 = vmatpush1.bf16.msra.mxu0 %v5808
        %5904 = vmatprep.subr.bf16.mxu0 0
        %5905 = vmatpush1.bf16.msra.mxu0 %v5807
        %5906 = vmatprep.subr.bf16.mxu0 0
        %5907 = vmatpush2.bf16.msra.mxu0 0
        %5908 = vmatprep.subr.bf16.mxu0 0
        %5909 = vmatpush2.bf16.msra.mxu0 0
        %5910 = vmatprep.subr.bf16.mxu0 0
        %5911 = vmatpush2.bf16.msra.mxu0 0
        %5912 = vmatprep.subr.bf16.mxu0 0
        %5913 = vmatpush2.bf16.msra.mxu0 0
        %5914 = vmatprep.subr.bf16.mxu0 0
        %5915 = vmatpush2.bf16.msra.mxu0 0
        %5916 = vmatprep.subr.bf16.mxu0 0
        %5917 = vmatpush2.bf16.msra.mxu0 0
        %5918 = vmatprep.subr.bf16.mxu0 0
        %5919 = vmatpush2.bf16.msra.mxu0 0
        %5920 = vmatprep.subr.bf16.mxu0 0
        %5921 = vmatpush2.bf16.msra.mxu0 0
        %5922 = vmatprep.mubr.bf16.mxu0 0
        %5923 = vmatmul.mubr.bf16.gmra.mxu0 %v5816
        %v5924 = vpop.f32.mrf.mxu0
        %v5925 = vadd.f32 0.0, %v5924
        %v5926 = vpop.f32.mrf.mxu0
        %v5927 = vpop.f32.mrf.mxu0
        %v5928 = vadd.f32 0.0, %v5927
        %v5929 = vpop.f32.mrf.mxu0
        %5930 = vmatprep.mubr.bf16.mxu0 0
        %5931 = vmatmul.mubr.bf16.gmra.mxu0 %v5819
        %v5932 = vpop.f32.mrf.mxu0
        %v5933 = vadd.f32 0.0, %v5932
        %v5934 = vpop.f32.mrf.mxu0
        %v5935 = vpop.f32.mrf.mxu0
        %v5936 = vadd.f32 0.0, %v5935
        %v5937 = vpop.f32.mrf.mxu0
        %5938 = vmatprep.mubr.bf16.mxu0 0
        %5939 = vmatmul.mubr.bf16.gmra.mxu0 %v5822
        %v5940 = vpop.f32.mrf.mxu0
        %v5941 = vadd.f32 0.0, %v5940
        %v5942 = vpop.f32.mrf.mxu0
        %v5943 = vpop.f32.mrf.mxu0
        %v5944 = vadd.f32 0.0, %v5943
        %v5945 = vpop.f32.mrf.mxu0
        %5946 = vmatprep.mubr.bf16.mxu0 0
        %5947 = vmatmul.mubr.bf16.gmra.mxu0 %v5825
        %v5948 = vpop.f32.mrf.mxu0
        %v5949 = vadd.f32 0.0, %v5948
        %v5950 = vpop.f32.mrf.mxu0
        %v5951 = vpop.f32.mrf.mxu0
        %v5952 = vadd.f32 0.0, %v5951
        %v5953 = vpop.f32.mrf.mxu0
        %5954 = vmatprep.mubr.bf16.mxu0 0
        %5955 = vmatmul.mubr.bf16.gmra.mxu0 %v5828
        %v5956 = vpop.f32.mrf.mxu0
        %v5957 = vadd.f32 0.0, %v5956
        %v5958 = vpop.f32.mrf.mxu0
        %v5959 = vpop.f32.mrf.mxu0
        %v5960 = vadd.f32 0.0, %v5959
        %v5961 = vpop.f32.mrf.mxu0
        %5962 = vmatprep.mubr.bf16.mxu0 0
        %5963 = vmatmul.mubr.bf16.gmra.mxu0 %v5831
        %v5964 = vpop.f32.mrf.mxu0
        %v5965 = vadd.f32 0.0, %v5964
        %v5966 = vpop.f32.mrf.mxu0
        %v5967 = vpop.f32.mrf.mxu0
        %v5968 = vadd.f32 0.0, %v5967
        %v5969 = vpop.f32.mrf.mxu0
        %5970 = vmatprep.mubr.bf16.mxu0 0
        %5971 = vmatmul.mubr.bf16.gmra.mxu0 %v5834
        %v5972 = vpop.f32.mrf.mxu0
        %v5973 = vadd.f32 0.0, %v5972
        %v5974 = vpop.f32.mrf.mxu0
        %v5975 = vpop.f32.mrf.mxu0
        %v5976 = vadd.f32 0.0, %v5975
        %v5977 = vpop.f32.mrf.mxu0
        %5978 = vmatprep.mubr.bf16.mxu0 0
        %5979 = vmatmul.mubr.bf16.gmra.mxu0 %v5837
        %v5980 = vpop.f32.mrf.mxu0
        %v5981 = vadd.f32 0.0, %v5980
        %v5982 = vpop.f32.mrf.mxu0
        %v5983 = vpop.f32.mrf.mxu0
        %v5984 = vadd.f32 0.0, %v5983
        %v5985 = vpop.f32.mrf.mxu0
        %5986 = vmatprep.mubr.bf16.mxu0 0
        %5987 = vmatmul.mubr.bf16.gmra.mxu0 %v5840
        %v5988 = vpop.f32.mrf.mxu0
        %v5989 = vadd.f32 0.0, %v5988
        %v5990 = vpop.f32.mrf.mxu0
        %v5991 = vpop.f32.mrf.mxu0
        %v5992 = vadd.f32 0.0, %v5991
        %v5993 = vpop.f32.mrf.mxu0
        %5994 = vmatprep.mubr.bf16.mxu0 0
        %5995 = vmatmul.mubr.bf16.gmra.mxu0 %v5843
        %v5996 = vpop.f32.mrf.mxu0
        %v5997 = vadd.f32 0.0, %v5996
        %v5998 = vpop.f32.mrf.mxu0
        %v5999 = vpop.f32.mrf.mxu0
        %v6000 = vadd.f32 0.0, %v5999
        %v6001 = vpop.f32.mrf.mxu0
        %6002 = vmatprep.mubr.bf16.mxu0 0
        %6003 = vmatmul.mubr.bf16.gmra.mxu0 %v5846
        %v6004 = vpop.f32.mrf.mxu0
        %v6005 = vadd.f32 0.0, %v6004
        %v6006 = vpop.f32.mrf.mxu0
        %v6007 = vpop.f32.mrf.mxu0
        %v6008 = vadd.f32 0.0, %v6007
        %v6009 = vpop.f32.mrf.mxu0
        %6010 = vmatprep.mubr.bf16.mxu0 0
        %6011 = vmatmul.mubr.bf16.gmra.mxu0 %v5849
        %v6012 = vpop.f32.mrf.mxu0
        %v6013 = vadd.f32 0.0, %v6012
        %v6014 = vpop.f32.mrf.mxu0
        %v6015 = vpop.f32.mrf.mxu0
        %v6016 = vadd.f32 0.0, %v6015
        %v6017 = vpop.f32.mrf.mxu0
        %6018 = vmatprep.mubr.bf16.mxu0 0
        %6019 = vmatmul.mubr.bf16.gmra.mxu0 %v5852
        %v6020 = vpop.f32.mrf.mxu0
        %v6021 = vadd.f32 0.0, %v6020
        %v6022 = vpop.f32.mrf.mxu0
        %v6023 = vpop.f32.mrf.mxu0
        %v6024 = vpop.f32.mrf.mxu0
        %6025 = vmatprep.mubr.bf16.mxu0 0
        %6026 = vmatmul.mubr.bf16.gmra.mxu0 %v5855
        %v6027 = vpop.f32.mrf.mxu0
        %v6028 = vadd.f32 0.0, %v6027
        %v6029 = vpop.f32.mrf.mxu0
        %v6030 = vpop.f32.mrf.mxu0
        %v6031 = vadd.f32 0.0, %v6030
        %v6032 = vpop.f32.mrf.mxu0
        %6033 = vmatprep.mubr.bf16.mxu0 0
        %6034 = vmatmul.mubr.bf16.gmra.mxu0 %v5858
        %v6035 = vpop.f32.mrf.mxu0
        %v6036 = vadd.f32 0.0, %v6035
        %v6037 = vpop.f32.mrf.mxu0
        %v6038 = vpop.f32.mrf.mxu0
        %v6039 = vadd.f32 0.0, %v6038
        %v6040 = vpop.f32.mrf.mxu0
        %6041 = vmatprep.mubr.bf16.mxu0 0
        %6042 = vmatmul.mubr.bf16.gmra.mxu0 %v5861
        %v6043 = vpop.f32.mrf.mxu0
        %v6044 = vadd.f32 0.0, %v6043
        %v6045 = vpop.f32.mrf.mxu0
        %v6046 = vpop.f32.mrf.mxu0
        %v6047 = vadd.f32 0.0, %v6046
        %v6048 = vpop.f32.mrf.mxu0
        %6049 = vmatprep.mubr.bf16.mxu0 0
        %6050 = vmatmul.mubr.bf16.gmra.mxu0 %v5864
        %v6051 = vpop.f32.mrf.mxu0
        %v6052 = vadd.f32 0.0, %v6051
        %v6053 = vpop.f32.mrf.mxu0
        %v6054 = vpop.f32.mrf.mxu0
        %v6055 = vadd.f32 0.0, %v6054
        %v6056 = vpop.f32.mrf.mxu0
        %6057 = vmatprep.mubr.bf16.mxu0 0
        %6058 = vmatmul.mubr.bf16.gmra.mxu0 %v5867
        %v6059 = vpop.f32.mrf.mxu0
        %v6060 = vadd.f32 0.0, %v6059
        %v6061 = vpop.f32.mrf.mxu0
        %v6062 = vpop.f32.mrf.mxu0
        %v6063 = vadd.f32 0.0, %v6062
        %v6064 = vpop.f32.mrf.mxu0
        %6065 = vmatprep.mubr.bf16.mxu0 0
        %6066 = vmatmul.mubr.bf16.gmra.mxu0 %v5870
        %v6067 = vpop.f32.mrf.mxu0
        %v6068 = vadd.f32 0.0, %v6067
        %v6069 = vpop.f32.mrf.mxu0
        %v6070 = vpop.f32.mrf.mxu0
        %v6071 = vadd.f32 0.0, %v6070
        %v6072 = vpop.f32.mrf.mxu0
        %6073 = vmatprep.mubr.bf16.mxu0 0
        %6074 = vmatmul.mubr.bf16.gmra.mxu0 %v5873
        %v6075 = vpop.f32.mrf.mxu0
        %v6076 = vadd.f32 0.0, %v6075
        %v6077 = vpop.f32.mrf.mxu0
        %v6078 = vpop.f32.mrf.mxu0
        %v6079 = vadd.f32 0.0, %v6078
        %v6080 = vpop.f32.mrf.mxu0
        %6081 = vmatprep.mubr.bf16.mxu0 0
        %6082 = vmatmul.mubr.bf16.gmra.mxu0 %v5876
        %v6083 = vpop.f32.mrf.mxu0
        %v6084 = vadd.f32 0.0, %v6083
        %v6085 = vpop.f32.mrf.mxu0
        %v6086 = vpop.f32.mrf.mxu0
        %v6087 = vadd.f32 0.0, %v6086
        %v6088 = vpop.f32.mrf.mxu0
        %6089 = vmatprep.mubr.bf16.mxu0 0
        %6090 = vmatmul.mubr.bf16.gmra.mxu0 %v5879
        %v6091 = vpop.f32.mrf.mxu0
        %v6092 = vadd.f32 0.0, %v6091
        %v6093 = vpop.f32.mrf.mxu0
        %v6094 = vpop.f32.mrf.mxu0
        %v6095 = vadd.f32 0.0, %v6094
        %v6096 = vpop.f32.mrf.mxu0
        %6097 = vmatprep.mubr.bf16.mxu0 0
        %6098 = vmatmul.mubr.bf16.gmra.mxu0 %v5882
        %v6099 = vpop.f32.mrf.mxu0
        %v6100 = vadd.f32 0.0, %v6099
        %v6101 = vpop.f32.mrf.mxu0
        %v6102 = vpop.f32.mrf.mxu0
        %v6103 = vadd.f32 0.0, %v6102
        %v6104 = vpop.f32.mrf.mxu0
        %6105 = vmatprep.mubr.bf16.mxu0 0
        %6106 = vmatmul.mubr.bf16.gmra.mxu0 %v5885
        %v6107 = vpop.f32.mrf.mxu0
        %v6108 = vadd.f32 0.0, %v6107
        %v6109 = vpop.f32.mrf.mxu0
        %v6110 = vpop.f32.mrf.mxu0
        %v6111 = vadd.f32 0.0, %v6110
        %v6112 = vpop.f32.mrf.mxu0
        %6113 = vmatprep.mubr.bf16.mxu0 0
        %6114 = vmatmul.mubr.bf16.gmra.mxu0 %v5888
        %v6115 = vpop.f32.mrf.mxu0
        %v6116 = vadd.f32 0.0, %v6115
        %v6117 = vpop.f32.mrf.mxu0
        %v6118 = vpop.f32.mrf.mxu0
        %v6119 = vpop.f32.mrf.mxu0
        %6120 = vdwg.mxu0
        %v6121 = vadd.f32 %v5660, %v5925
        %v6122 = vadd.f32 %v5661, %v5928
        %v6123 = vadd.f32 %v5662, %v5933
        %v6124 = vadd.f32 %v5663, %v5936
        %v6125 = vadd.f32 %v5664, %v5941
        %v6126 = vadd.f32 %v5665, %v5944
        %v6127 = vadd.f32 %v5666, %v5949
        %v6128 = vadd.f32 %v5667, %v5952
        %v6129 = vadd.f32 %v5668, %v5957
        %v6130 = vadd.f32 %v5669, %v5960
        %v6131 = vadd.f32 %v5670, %v5965
        %v6132 = vadd.f32 %v5671, %v5968
        %v6133 = vadd.f32 %v5672, %v5973
        %v6134 = vadd.f32 %v5673, %v5976
        %v6135 = vadd.f32 %v5674, %v5981
        %v6136 = vadd.f32 %v5675, %v5984
        %v6137 = vadd.f32 %v5676, %v5989
        %v6138 = vadd.f32 %v5677, %v5992
        %v6139 = vadd.f32 %v5678, %v5997
        %v6140 = vadd.f32 %v5679, %v6000
        %v6141 = vadd.f32 %v5680, %v6005
        %v6142 = vadd.f32 %v5681, %v6008
        %v6143 = vadd.f32 %v5682, %v6013
        %v6144 = vadd.f32 %v5683, %v6016
        %v6145 = vadd.f32 %v5684, %v6021
        %v6146 = vadd.f32 %v5685, %v6028
        %v6147 = vadd.f32 %v5686, %v6031
        %v6148 = vadd.f32 %v5687, %v6036
        %v6149 = vadd.f32 %v5688, %v6039
        %v6150 = vadd.f32 %v5689, %v6044
        %v6151 = vadd.f32 %v5690, %v6047
        %v6152 = vadd.f32 %v5691, %v6052
        %v6153 = vadd.f32 %v5692, %v6055
        %v6154 = vadd.f32 %v5693, %v6060
        %v6155 = vadd.f32 %v5694, %v6063
        %v6156 = vadd.f32 %v5695, %v6068
        %v6157 = vadd.f32 %v5696, %v6071
        %v6158 = vadd.f32 %v5697, %v6076
        %v6159 = vadd.f32 %v5698, %v6079
        %v6160 = vadd.f32 %v5699, %v6084
        %v6161 = vadd.f32 %v5700, %v6087
        %v6162 = vadd.f32 %v5701, %v6092
        %v6163 = vadd.f32 %v5702, %v6095
        %v6164 = vadd.f32 %v5703, %v6100
        %v6165 = vadd.f32 %v5704, %v6103
        %v6166 = vadd.f32 %v5705, %v6108
        %v6167 = vadd.f32 %v5706, %v6111
        %v6168 = vadd.f32 %v5707, %v6116
        %v6169 = vld [vmem:[#allocation2 + $0x15] sm:$0xff]
        %v6170 = vld [vmem:[#allocation2 + $0x1d] sm:$0xff]
        %v6171 = vld [vmem:[#allocation2 + $0x25] sm:$0xff]
        %v6172 = vld [vmem:[#allocation2 + $0x2d] sm:$0xff]
        %v6173 = vld [vmem:[#allocation2 + $0x35] sm:$0xff]
        %v6174 = vld [vmem:[#allocation2 + $0x3d] sm:$0xff]
        %v6175 = vld [vmem:[#allocation2 + $0x45] sm:$0xff]
        %v6176 = vld [vmem:[#allocation2 + $0x4d] sm:$0xff]
        %v6177 = vld [vmem:[#allocation2 + $0x55] sm:$0xff]
        %v6178 = vld [vmem:[#allocation2 + $0x5d] sm:$0xff]
        %v6179 = vld [vmem:[#allocation2 + $0x65] sm:$0xff]
        %v6180 = vld [vmem:[#allocation2 + $0x6d] sm:$0xff]
        %v6181 = vld [vmem:[#allocation2 + $0x75] sm:$0xff]
        %v6182 = vld [vmem:[#allocation2 + $0x7d] sm:$0xff]
        %v6183 = vld [vmem:[#allocation2 + $0x85] sm:$0xff]
        %v6184 = vld [vmem:[#allocation2 + $0x8d] sm:$0xff]
        %v6185 = vld [vmem:[#allocation2 + $0x95] sm:$0xff]
        %v6186 = vld [vmem:[#allocation2 + $0x9d] sm:$0xff]
        %v6187 = vld [vmem:[#allocation2 + $0xa5] sm:$0xff]
        %v6188 = vld [vmem:[#allocation2 + $0xad] sm:$0xff]
        %v6189 = vld [vmem:[#allocation2 + $0xb5] sm:$0xff]
        %v6190 = vld [vmem:[#allocation2 + $0xbd] sm:$0xff]
        %v6191 = vld [vmem:[#allocation2 + $0xc5] sm:$0xff]
        %v6192 = vld [vmem:[#allocation2 + $0xcd] sm:$0xff]
        %v6193 = vld [vmem:[#allocation2 + $0xd5] sm:$0xff]
        %v6194 = vld [vmem:[#allocation2 + $0xdd] sm:$0xff]
        %v6195 = vld [vmem:[#allocation2 + $0xe5] sm:$0xff]
        %v6196 = vld [vmem:[#allocation2 + $0xed] sm:$0xff]
        %v6197 = vld [vmem:[#allocation2 + $0xf5] sm:$0xff]
        %v6198 = vld [vmem:[#allocation2 + $0xfd] sm:$0xff]
        %v6199 = vld [vmem:[#allocation2 + $0x105] sm:$0xff]
        %v6200 = vld [vmem:[#allocation2 + $0x10d] sm:$0xff]
        %v6201 = vld [vmem:[#allocation2 + $0x115] sm:$0xff]
        %v6202 = vld [vmem:[#allocation2 + $0x11d] sm:$0xff]
        %v6203 = vld [vmem:[#allocation2 + $0x125] sm:$0xff]
        %v6204 = vld [vmem:[#allocation2 + $0x12d] sm:$0xff]
        %v6205 = vld [vmem:[#allocation2 + $0x135] sm:$0xff]
        %v6206 = vld [vmem:[#allocation2 + $0x13d] sm:$0xff]
        %v6207 = vld [vmem:[#allocation2 + $0x145] sm:$0xff]
        %v6208 = vld [vmem:[#allocation2 + $0x14d] sm:$0xff]
        %v6209 = vld [vmem:[#allocation2 + $0x155] sm:$0xff]
        %v6210 = vld [vmem:[#allocation2 + $0x15d] sm:$0xff]
        %v6211 = vld [vmem:[#allocation2 + $0x165] sm:$0xff]
        %v6212 = vld [vmem:[#allocation2 + $0x16d] sm:$0xff]
        %v6213 = vld [vmem:[#allocation2 + $0x175] sm:$0xff]
        %v6214 = vld [vmem:[#allocation2 + $0x17d] sm:$0xff]
        %v6215 = vld [vmem:[#allocation2 + $0x185] sm:$0xff]
        %v6216 = vld [vmem:[#allocation2 + $0x18d] sm:$0xff]
        %v6217 = vld [vmem:[#allocation2 + $0x195] sm:$0x3f]
        %v6218 = vpack.c.bf16 %v6170, %v6169
        %v6219 = vpack.c.bf16 %v6172, %v6171
        %v6220 = vpack.c.bf16 %v6174, %v6173
        %v6221 = vpack.c.bf16 %v6176, %v6175
        %v6222 = vpack.c.bf16 %v6178, %v6177
        %v6223 = vpack.c.bf16 %v6180, %v6179
        %v6224 = vpack.c.bf16 %v6182, %v6181
        %v6225 = vpack.c.bf16 %v6184, %v6183
        %v6226 = vpack.c.bf16 %v6186, %v6185
        %v6227 = vpack.c.bf16 %v6188, %v6187
        %v6228 = vpack.c.bf16 %v6190, %v6189
        %v6229 = vpack.c.bf16 %v6192, %v6191
        %v6230 = vpack.c.bf16 %v6194, %v6193
        %v6231 = vpack.c.bf16 %v6196, %v6195
        %v6232 = vpack.c.bf16 %v6198, %v6197
        %v6233 = vpack.c.bf16 %v6200, %v6199
        %v6234 = vpack.c.bf16 %v6202, %v6201
        %v6235 = vpack.c.bf16 %v6204, %v6203
        %v6236 = vpack.c.bf16 %v6206, %v6205
        %v6237 = vpack.c.bf16 %v6208, %v6207
        %v6238 = vpack.c.bf16 %v6210, %v6209
        %v6239 = vpack.c.bf16 %v6212, %v6211
        %v6240 = vpack.c.bf16 %v6214, %v6213
        %v6241 = vpack.c.bf16 %v6216, %v6215
        %v6242 = vpack.c.bf16 %v6217, %v6217
        %s6243 = scalar_lea.vmem %s2, 224
        %v6244 = vld [vmem:[%s6243] sm:$0xf]
        %v6245 = vld [vmem:[%s6243 + $0x4] sm:$0xf]
        %v6246 = vld [vmem:[%s6243 + $0x8] sm:$0xf]
        %v6247 = vld [vmem:[%s6243 + $0xc] sm:$0xf]
        %v6248 = vld [vmem:[%s6243 + $0x10] sm:$0xf]
        %v6249 = vld [vmem:[%s6243 + $0x14] sm:$0xf]
        %v6250 = vld [vmem:[%s6243 + $0x18] sm:$0xf]
        %v6251 = vld [vmem:[%s6243 + $0x1c] sm:$0xf]
        %v6260 = vunpack.c.l.b16 %v6244
        %v6261 = vunpack.c.l.b16 %v6245
        %v6262 = vunpack.c.l.b16 %v6246
        %v6263 = vunpack.c.l.b16 %v6247
        %v6264 = vunpack.c.l.b16 %v6248
        %v6265 = vunpack.c.l.b16 %v6249
        %v6266 = vunpack.c.l.b16 %v6250
        %v6267 = vunpack.c.l.b16 %v6251
        %v6268 = vpack.c.b16 %v6261, %v6260
        %v6269 = vpack.c.b16 %v6263, %v6262
        %v6270 = vpack.c.b16 %v6265, %v6264
        %v6271 = vpack.c.b16 %v6267, %v6266
        %v6277 = vsel %vm2712, %v6218, 0
        %v6280 = vsel %vm2712, %v6219, 0
        %v6283 = vsel %vm2712, %v6220, 0
        %v6286 = vsel %vm2712, %v6221, 0
        %v6289 = vsel %vm2712, %v6222, 0
        %v6292 = vsel %vm2712, %v6223, 0
        %v6295 = vsel %vm2712, %v6224, 0
        %v6298 = vsel %vm2712, %v6225, 0
        %v6301 = vsel %vm2712, %v6226, 0
        %v6304 = vsel %vm2712, %v6227, 0
        %v6307 = vsel %vm2712, %v6228, 0
        %v6310 = vsel %vm2712, %v6229, 0
        %v6313 = vsel %vm2712, %v6230, 0
        %v6316 = vsel %vm2712, %v6231, 0
        %v6319 = vsel %vm2712, %v6232, 0
        %v6322 = vsel %vm2712, %v6233, 0
        %v6325 = vsel %vm2712, %v6234, 0
        %v6328 = vsel %vm2712, %v6235, 0
        %v6331 = vsel %vm2712, %v6236, 0
        %v6334 = vsel %vm2712, %v6237, 0
        %v6337 = vsel %vm2712, %v6238, 0
        %v6340 = vsel %vm2712, %v6239, 0
        %v6343 = vsel %vm2712, %v6240, 0
        %v6346 = vsel %vm2712, %v6241, 0
        %v6349 = vsel %vm2712, %v6242, 0
        %6351 = vmatprep.subr.bf16.mxu0 0
        %6352 = vmatpush1.bf16.msra.mxu0 0
        %6353 = vmatprep.subr.bf16.mxu0 0
        %6354 = vmatpush1.bf16.msra.mxu0 0
        %6355 = vmatprep.subr.bf16.mxu0 0
        %6356 = vmatpush1.bf16.msra.mxu0 0
        %6357 = vmatprep.subr.bf16.mxu0 0
        %6358 = vmatpush1.bf16.msra.mxu0 0
        %6359 = vmatprep.subr.bf16.mxu0 0
        %6360 = vmatpush1.bf16.msra.mxu0 %v6271
        %6361 = vmatprep.subr.bf16.mxu0 0
        %6362 = vmatpush1.bf16.msra.mxu0 %v6270
        %6363 = vmatprep.subr.bf16.mxu0 0
        %6364 = vmatpush1.bf16.msra.mxu0 %v6269
        %6365 = vmatprep.subr.bf16.mxu0 0
        %6366 = vmatpush1.bf16.msra.mxu0 %v6268
        %6367 = vmatprep.subr.bf16.mxu0 0
        %6368 = vmatpush2.bf16.msra.mxu0 0
        %6369 = vmatprep.subr.bf16.mxu0 0
        %6370 = vmatpush2.bf16.msra.mxu0 0
        %6371 = vmatprep.subr.bf16.mxu0 0
        %6372 = vmatpush2.bf16.msra.mxu0 0
        %6373 = vmatprep.subr.bf16.mxu0 0
        %6374 = vmatpush2.bf16.msra.mxu0 0
        %6375 = vmatprep.subr.bf16.mxu0 0
        %6376 = vmatpush2.bf16.msra.mxu0 0
        %6377 = vmatprep.subr.bf16.mxu0 0
        %6378 = vmatpush2.bf16.msra.mxu0 0
        %6379 = vmatprep.subr.bf16.mxu0 0
        %6380 = vmatpush2.bf16.msra.mxu0 0
        %6381 = vmatprep.subr.bf16.mxu0 0
        %6382 = vmatpush2.bf16.msra.mxu0 0
        %6383 = vmatprep.mubr.bf16.mxu0 0
        %6384 = vmatmul.mubr.bf16.gmra.mxu0 %v6277
        %v6385 = vpop.f32.mrf.mxu0
        %v6386 = vadd.f32 0.0, %v6385
        %v6387 = vpop.f32.mrf.mxu0
        %v6388 = vpop.f32.mrf.mxu0
        %v6389 = vadd.f32 0.0, %v6388
        %v6390 = vpop.f32.mrf.mxu0
        %6391 = vmatprep.mubr.bf16.mxu0 0
        %6392 = vmatmul.mubr.bf16.gmra.mxu0 %v6280
        %v6393 = vpop.f32.mrf.mxu0
        %v6394 = vadd.f32 0.0, %v6393
        %v6395 = vpop.f32.mrf.mxu0
        %v6396 = vpop.f32.mrf.mxu0
        %v6397 = vadd.f32 0.0, %v6396
        %v6398 = vpop.f32.mrf.mxu0
        %6399 = vmatprep.mubr.bf16.mxu0 0
        %6400 = vmatmul.mubr.bf16.gmra.mxu0 %v6283
        %v6401 = vpop.f32.mrf.mxu0
        %v6402 = vadd.f32 0.0, %v6401
        %v6403 = vpop.f32.mrf.mxu0
        %v6404 = vpop.f32.mrf.mxu0
        %v6405 = vadd.f32 0.0, %v6404
        %v6406 = vpop.f32.mrf.mxu0
        %6407 = vmatprep.mubr.bf16.mxu0 0
        %6408 = vmatmul.mubr.bf16.gmra.mxu0 %v6286
        %v6409 = vpop.f32.mrf.mxu0
        %v6410 = vadd.f32 0.0, %v6409
        %v6411 = vpop.f32.mrf.mxu0
        %v6412 = vpop.f32.mrf.mxu0
        %v6413 = vadd.f32 0.0, %v6412
        %v6414 = vpop.f32.mrf.mxu0
        %6415 = vmatprep.mubr.bf16.mxu0 0
        %6416 = vmatmul.mubr.bf16.gmra.mxu0 %v6289
        %v6417 = vpop.f32.mrf.mxu0
        %v6418 = vadd.f32 0.0, %v6417
        %v6419 = vpop.f32.mrf.mxu0
        %v6420 = vpop.f32.mrf.mxu0
        %v6421 = vadd.f32 0.0, %v6420
        %v6422 = vpop.f32.mrf.mxu0
        %6423 = vmatprep.mubr.bf16.mxu0 0
        %6424 = vmatmul.mubr.bf16.gmra.mxu0 %v6292
        %v6425 = vpop.f32.mrf.mxu0
        %v6426 = vadd.f32 0.0, %v6425
        %v6427 = vpop.f32.mrf.mxu0
        %v6428 = vpop.f32.mrf.mxu0
        %v6429 = vadd.f32 0.0, %v6428
        %v6430 = vpop.f32.mrf.mxu0
        %6431 = vmatprep.mubr.bf16.mxu0 0
        %6432 = vmatmul.mubr.bf16.gmra.mxu0 %v6295
        %v6433 = vpop.f32.mrf.mxu0
        %v6434 = vadd.f32 0.0, %v6433
        %v6435 = vpop.f32.mrf.mxu0
        %v6436 = vpop.f32.mrf.mxu0
        %v6437 = vadd.f32 0.0, %v6436
        %v6438 = vpop.f32.mrf.mxu0
        %6439 = vmatprep.mubr.bf16.mxu0 0
        %6440 = vmatmul.mubr.bf16.gmra.mxu0 %v6298
        %v6441 = vpop.f32.mrf.mxu0
        %v6442 = vadd.f32 0.0, %v6441
        %v6443 = vpop.f32.mrf.mxu0
        %v6444 = vpop.f32.mrf.mxu0
        %v6445 = vadd.f32 0.0, %v6444
        %v6446 = vpop.f32.mrf.mxu0
        %6447 = vmatprep.mubr.bf16.mxu0 0
        %6448 = vmatmul.mubr.bf16.gmra.mxu0 %v6301
        %v6449 = vpop.f32.mrf.mxu0
        %v6450 = vadd.f32 0.0, %v6449
        %v6451 = vpop.f32.mrf.mxu0
        %v6452 = vpop.f32.mrf.mxu0
        %v6453 = vadd.f32 0.0, %v6452
        %v6454 = vpop.f32.mrf.mxu0
        %6455 = vmatprep.mubr.bf16.mxu0 0
        %6456 = vmatmul.mubr.bf16.gmra.mxu0 %v6304
        %v6457 = vpop.f32.mrf.mxu0
        %v6458 = vadd.f32 0.0, %v6457
        %v6459 = vpop.f32.mrf.mxu0
        %v6460 = vpop.f32.mrf.mxu0
        %v6461 = vadd.f32 0.0, %v6460
        %v6462 = vpop.f32.mrf.mxu0
        %6463 = vmatprep.mubr.bf16.mxu0 0
        %6464 = vmatmul.mubr.bf16.gmra.mxu0 %v6307
        %v6465 = vpop.f32.mrf.mxu0
        %v6466 = vadd.f32 0.0, %v6465
        %v6467 = vpop.f32.mrf.mxu0
        %v6468 = vpop.f32.mrf.mxu0
        %v6469 = vadd.f32 0.0, %v6468
        %v6470 = vpop.f32.mrf.mxu0
        %6471 = vmatprep.mubr.bf16.mxu0 0
        %6472 = vmatmul.mubr.bf16.gmra.mxu0 %v6310
        %v6473 = vpop.f32.mrf.mxu0
        %v6474 = vadd.f32 0.0, %v6473
        %v6475 = vpop.f32.mrf.mxu0
        %v6476 = vpop.f32.mrf.mxu0
        %v6477 = vadd.f32 0.0, %v6476
        %v6478 = vpop.f32.mrf.mxu0
        %6479 = vmatprep.mubr.bf16.mxu0 0
        %6480 = vmatmul.mubr.bf16.gmra.mxu0 %v6313
        %v6481 = vpop.f32.mrf.mxu0
        %v6482 = vadd.f32 0.0, %v6481
        %v6483 = vpop.f32.mrf.mxu0
        %v6484 = vpop.f32.mrf.mxu0
        %v6485 = vpop.f32.mrf.mxu0
        %6486 = vmatprep.mubr.bf16.mxu0 0
        %6487 = vmatmul.mubr.bf16.gmra.mxu0 %v6316
        %v6488 = vpop.f32.mrf.mxu0
        %v6489 = vadd.f32 0.0, %v6488
        %v6490 = vpop.f32.mrf.mxu0
        %v6491 = vpop.f32.mrf.mxu0
        %v6492 = vadd.f32 0.0, %v6491
        %v6493 = vpop.f32.mrf.mxu0
        %6494 = vmatprep.mubr.bf16.mxu0 0
        %6495 = vmatmul.mubr.bf16.gmra.mxu0 %v6319
        %v6496 = vpop.f32.mrf.mxu0
        %v6497 = vadd.f32 0.0, %v6496
        %v6498 = vpop.f32.mrf.mxu0
        %v6499 = vpop.f32.mrf.mxu0
        %v6500 = vadd.f32 0.0, %v6499
        %v6501 = vpop.f32.mrf.mxu0
        %6502 = vmatprep.mubr.bf16.mxu0 0
        %6503 = vmatmul.mubr.bf16.gmra.mxu0 %v6322
        %v6504 = vpop.f32.mrf.mxu0
        %v6505 = vadd.f32 0.0, %v6504
        %v6506 = vpop.f32.mrf.mxu0
        %v6507 = vpop.f32.mrf.mxu0
        %v6508 = vadd.f32 0.0, %v6507
        %v6509 = vpop.f32.mrf.mxu0
        %6510 = vmatprep.mubr.bf16.mxu0 0
        %6511 = vmatmul.mubr.bf16.gmra.mxu0 %v6325
        %v6512 = vpop.f32.mrf.mxu0
        %v6513 = vadd.f32 0.0, %v6512
        %v6514 = vpop.f32.mrf.mxu0
        %v6515 = vpop.f32.mrf.mxu0
        %v6516 = vadd.f32 0.0, %v6515
        %v6517 = vpop.f32.mrf.mxu0
        %6518 = vmatprep.mubr.bf16.mxu0 0
        %6519 = vmatmul.mubr.bf16.gmra.mxu0 %v6328
        %v6520 = vpop.f32.mrf.mxu0
        %v6521 = vadd.f32 0.0, %v6520
        %v6522 = vpop.f32.mrf.mxu0
        %v6523 = vpop.f32.mrf.mxu0
        %v6524 = vadd.f32 0.0, %v6523
        %v6525 = vpop.f32.mrf.mxu0
        %6526 = vmatprep.mubr.bf16.mxu0 0
        %6527 = vmatmul.mubr.bf16.gmra.mxu0 %v6331
        %v6528 = vpop.f32.mrf.mxu0
        %v6529 = vadd.f32 0.0, %v6528
        %v6530 = vpop.f32.mrf.mxu0
        %v6531 = vpop.f32.mrf.mxu0
        %v6532 = vadd.f32 0.0, %v6531
        %v6533 = vpop.f32.mrf.mxu0
        %6534 = vmatprep.mubr.bf16.mxu0 0
        %6535 = vmatmul.mubr.bf16.gmra.mxu0 %v6334
        %v6536 = vpop.f32.mrf.mxu0
        %v6537 = vadd.f32 0.0, %v6536
        %v6538 = vpop.f32.mrf.mxu0
        %v6539 = vpop.f32.mrf.mxu0
        %v6540 = vadd.f32 0.0, %v6539
        %v6541 = vpop.f32.mrf.mxu0
        %6542 = vmatprep.mubr.bf16.mxu0 0
        %6543 = vmatmul.mubr.bf16.gmra.mxu0 %v6337
        %v6544 = vpop.f32.mrf.mxu0
        %v6545 = vadd.f32 0.0, %v6544
        %v6546 = vpop.f32.mrf.mxu0
        %v6547 = vpop.f32.mrf.mxu0
        %v6548 = vadd.f32 0.0, %v6547
        %v6549 = vpop.f32.mrf.mxu0
        %6550 = vmatprep.mubr.bf16.mxu0 0
        %6551 = vmatmul.mubr.bf16.gmra.mxu0 %v6340
        %v6552 = vpop.f32.mrf.mxu0
        %v6553 = vadd.f32 0.0, %v6552
        %v6554 = vpop.f32.mrf.mxu0
        %v6555 = vpop.f32.mrf.mxu0
        %v6556 = vadd.f32 0.0, %v6555
        %v6557 = vpop.f32.mrf.mxu0
        %6558 = vmatprep.mubr.bf16.mxu0 0
        %6559 = vmatmul.mubr.bf16.gmra.mxu0 %v6343
        %v6560 = vpop.f32.mrf.mxu0
        %v6561 = vadd.f32 0.0, %v6560
        %v6562 = vpop.f32.mrf.mxu0
        %v6563 = vpop.f32.mrf.mxu0
        %v6564 = vadd.f32 0.0, %v6563
        %v6565 = vpop.f32.mrf.mxu0
        %6566 = vmatprep.mubr.bf16.mxu0 0
        %6567 = vmatmul.mubr.bf16.gmra.mxu0 %v6346
        %v6568 = vpop.f32.mrf.mxu0
        %v6569 = vadd.f32 0.0, %v6568
        %v6570 = vpop.f32.mrf.mxu0
        %v6571 = vpop.f32.mrf.mxu0
        %v6572 = vadd.f32 0.0, %v6571
        %v6573 = vpop.f32.mrf.mxu0
        %6574 = vmatprep.mubr.bf16.mxu0 0
        %6575 = vmatmul.mubr.bf16.gmra.mxu0 %v6349
        %v6576 = vpop.f32.mrf.mxu0
        %v6577 = vadd.f32 0.0, %v6576
        %v6578 = vpop.f32.mrf.mxu0
        %v6579 = vpop.f32.mrf.mxu0
        %v6580 = vpop.f32.mrf.mxu0
        %6581 = vdwg.mxu0
        %v6582 = vadd.f32 %v6121, %v6386
        %v6583 = vadd.f32 %v6122, %v6389
        %v6584 = vadd.f32 %v6123, %v6394
        %v6585 = vadd.f32 %v6124, %v6397
        %v6586 = vadd.f32 %v6125, %v6402
        %v6587 = vadd.f32 %v6126, %v6405
        %v6588 = vadd.f32 %v6127, %v6410
        %v6589 = vadd.f32 %v6128, %v6413
        %v6590 = vadd.f32 %v6129, %v6418
        %v6591 = vadd.f32 %v6130, %v6421
        %v6592 = vadd.f32 %v6131, %v6426
        %v6593 = vadd.f32 %v6132, %v6429
        %v6594 = vadd.f32 %v6133, %v6434
        %v6595 = vadd.f32 %v6134, %v6437
        %v6596 = vadd.f32 %v6135, %v6442
        %v6597 = vadd.f32 %v6136, %v6445
        %v6598 = vadd.f32 %v6137, %v6450
        %v6599 = vadd.f32 %v6138, %v6453
        %v6600 = vadd.f32 %v6139, %v6458
        %v6601 = vadd.f32 %v6140, %v6461
        %v6602 = vadd.f32 %v6141, %v6466
        %v6603 = vadd.f32 %v6142, %v6469
        %v6604 = vadd.f32 %v6143, %v6474
        %v6605 = vadd.f32 %v6144, %v6477
        %v6606 = vadd.f32 %v6145, %v6482
        %v6607 = vadd.f32 %v6146, %v6489
        %v6608 = vadd.f32 %v6147, %v6492
        %v6609 = vadd.f32 %v6148, %v6497
        %v6610 = vadd.f32 %v6149, %v6500
        %v6611 = vadd.f32 %v6150, %v6505
        %v6612 = vadd.f32 %v6151, %v6508
        %v6613 = vadd.f32 %v6152, %v6513
        %v6614 = vadd.f32 %v6153, %v6516
        %v6615 = vadd.f32 %v6154, %v6521
        %v6616 = vadd.f32 %v6155, %v6524
        %v6617 = vadd.f32 %v6156, %v6529
        %v6618 = vadd.f32 %v6157, %v6532
        %v6619 = vadd.f32 %v6158, %v6537
        %v6620 = vadd.f32 %v6159, %v6540
        %v6621 = vadd.f32 %v6160, %v6545
        %v6622 = vadd.f32 %v6161, %v6548
        %v6623 = vadd.f32 %v6162, %v6553
        %v6624 = vadd.f32 %v6163, %v6556
        %v6625 = vadd.f32 %v6164, %v6561
        %v6626 = vadd.f32 %v6165, %v6564
        %v6627 = vadd.f32 %v6166, %v6569
        %v6628 = vadd.f32 %v6167, %v6572
        %v6629 = vadd.f32 %v6168, %v6577
        %v6630 = vld [vmem:[#allocation2 + $0x16] sm:$0xff]
        %v6631 = vld [vmem:[#allocation2 + $0x1e] sm:$0xff]
        %v6632 = vld [vmem:[#allocation2 + $0x26] sm:$0xff]
        %v6633 = vld [vmem:[#allocation2 + $0x2e] sm:$0xff]
        %v6634 = vld [vmem:[#allocation2 + $0x36] sm:$0xff]
        %v6635 = vld [vmem:[#allocation2 + $0x3e] sm:$0xff]
        %v6636 = vld [vmem:[#allocation2 + $0x46] sm:$0xff]
        %v6637 = vld [vmem:[#allocation2 + $0x4e] sm:$0xff]
        %v6638 = vld [vmem:[#allocation2 + $0x56] sm:$0xff]
        %v6639 = vld [vmem:[#allocation2 + $0x5e] sm:$0xff]
        %v6640 = vld [vmem:[#allocation2 + $0x66] sm:$0xff]
        %v6641 = vld [vmem:[#allocation2 + $0x6e] sm:$0xff]
        %v6642 = vld [vmem:[#allocation2 + $0x76] sm:$0xff]
        %v6643 = vld [vmem:[#allocation2 + $0x7e] sm:$0xff]
        %v6644 = vld [vmem:[#allocation2 + $0x86] sm:$0xff]
        %v6645 = vld [vmem:[#allocation2 + $0x8e] sm:$0xff]
        %v6646 = vld [vmem:[#allocation2 + $0x96] sm:$0xff]
        %v6647 = vld [vmem:[#allocation2 + $0x9e] sm:$0xff]
        %v6648 = vld [vmem:[#allocation2 + $0xa6] sm:$0xff]
        %v6649 = vld [vmem:[#allocation2 + $0xae] sm:$0xff]
        %v6650 = vld [vmem:[#allocation2 + $0xb6] sm:$0xff]
        %v6651 = vld [vmem:[#allocation2 + $0xbe] sm:$0xff]
        %v6652 = vld [vmem:[#allocation2 + $0xc6] sm:$0xff]
        %v6653 = vld [vmem:[#allocation2 + $0xce] sm:$0xff]
        %v6654 = vld [vmem:[#allocation2 + $0xd6] sm:$0xff]
        %v6655 = vld [vmem:[#allocation2 + $0xde] sm:$0xff]
        %v6656 = vld [vmem:[#allocation2 + $0xe6] sm:$0xff]
        %v6657 = vld [vmem:[#allocation2 + $0xee] sm:$0xff]
        %v6658 = vld [vmem:[#allocation2 + $0xf6] sm:$0xff]
        %v6659 = vld [vmem:[#allocation2 + $0xfe] sm:$0xff]
        %v6660 = vld [vmem:[#allocation2 + $0x106] sm:$0xff]
        %v6661 = vld [vmem:[#allocation2 + $0x10e] sm:$0xff]
        %v6662 = vld [vmem:[#allocation2 + $0x116] sm:$0xff]
        %v6663 = vld [vmem:[#allocation2 + $0x11e] sm:$0xff]
        %v6664 = vld [vmem:[#allocation2 + $0x126] sm:$0xff]
        %v6665 = vld [vmem:[#allocation2 + $0x12e] sm:$0xff]
        %v6666 = vld [vmem:[#allocation2 + $0x136] sm:$0xff]
        %v6667 = vld [vmem:[#allocation2 + $0x13e] sm:$0xff]
        %v6668 = vld [vmem:[#allocation2 + $0x146] sm:$0xff]
        %v6669 = vld [vmem:[#allocation2 + $0x14e] sm:$0xff]
        %v6670 = vld [vmem:[#allocation2 + $0x156] sm:$0xff]
        %v6671 = vld [vmem:[#allocation2 + $0x15e] sm:$0xff]
        %v6672 = vld [vmem:[#allocation2 + $0x166] sm:$0xff]
        %v6673 = vld [vmem:[#allocation2 + $0x16e] sm:$0xff]
        %v6674 = vld [vmem:[#allocation2 + $0x176] sm:$0xff]
        %v6675 = vld [vmem:[#allocation2 + $0x17e] sm:$0xff]
        %v6676 = vld [vmem:[#allocation2 + $0x186] sm:$0xff]
        %v6677 = vld [vmem:[#allocation2 + $0x18e] sm:$0xff]
        %v6678 = vld [vmem:[#allocation2 + $0x196] sm:$0x3f]
        %v6679 = vpack.c.bf16 %v6631, %v6630
        %v6680 = vpack.c.bf16 %v6633, %v6632
        %v6681 = vpack.c.bf16 %v6635, %v6634
        %v6682 = vpack.c.bf16 %v6637, %v6636
        %v6683 = vpack.c.bf16 %v6639, %v6638
        %v6684 = vpack.c.bf16 %v6641, %v6640
        %v6685 = vpack.c.bf16 %v6643, %v6642
        %v6686 = vpack.c.bf16 %v6645, %v6644
        %v6687 = vpack.c.bf16 %v6647, %v6646
        %v6688 = vpack.c.bf16 %v6649, %v6648
        %v6689 = vpack.c.bf16 %v6651, %v6650
        %v6690 = vpack.c.bf16 %v6653, %v6652
        %v6691 = vpack.c.bf16 %v6655, %v6654
        %v6692 = vpack.c.bf16 %v6657, %v6656
        %v6693 = vpack.c.bf16 %v6659, %v6658
        %v6694 = vpack.c.bf16 %v6661, %v6660
        %v6695 = vpack.c.bf16 %v6663, %v6662
        %v6696 = vpack.c.bf16 %v6665, %v6664
        %v6697 = vpack.c.bf16 %v6667, %v6666
        %v6698 = vpack.c.bf16 %v6669, %v6668
        %v6699 = vpack.c.bf16 %v6671, %v6670
        %v6700 = vpack.c.bf16 %v6673, %v6672
        %v6701 = vpack.c.bf16 %v6675, %v6674
        %v6702 = vpack.c.bf16 %v6677, %v6676
        %v6703 = vpack.c.bf16 %v6678, %v6678
        %s6704 = scalar_lea.vmem %s2, 256
        %v6705 = vld [vmem:[%s6704] sm:$0xf]
        %v6706 = vld [vmem:[%s6704 + $0x4] sm:$0xf]
        %v6707 = vld [vmem:[%s6704 + $0x8] sm:$0xf]
        %v6708 = vld [vmem:[%s6704 + $0xc] sm:$0xf]
        %v6709 = vld [vmem:[%s6704 + $0x10] sm:$0xf]
        %v6710 = vld [vmem:[%s6704 + $0x14] sm:$0xf]
        %v6711 = vld [vmem:[%s6704 + $0x18] sm:$0xf]
        %v6712 = vld [vmem:[%s6704 + $0x1c] sm:$0xf]
        %v6721 = vunpack.c.l.b16 %v6705
        %v6722 = vunpack.c.l.b16 %v6706
        %v6723 = vunpack.c.l.b16 %v6707
        %v6724 = vunpack.c.l.b16 %v6708
        %v6725 = vunpack.c.l.b16 %v6709
        %v6726 = vunpack.c.l.b16 %v6710
        %v6727 = vunpack.c.l.b16 %v6711
        %v6728 = vunpack.c.l.b16 %v6712
        %v6729 = vpack.c.b16 %v6722, %v6721
        %v6730 = vpack.c.b16 %v6724, %v6723
        %v6731 = vpack.c.b16 %v6726, %v6725
        %v6732 = vpack.c.b16 %v6728, %v6727
        %v6738 = vsel %vm2712, %v6679, 0
        %v6741 = vsel %vm2712, %v6680, 0
        %v6744 = vsel %vm2712, %v6681, 0
        %v6747 = vsel %vm2712, %v6682, 0
        %v6750 = vsel %vm2712, %v6683, 0
        %v6753 = vsel %vm2712, %v6684, 0
        %v6756 = vsel %vm2712, %v6685, 0
        %v6759 = vsel %vm2712, %v6686, 0
        %v6762 = vsel %vm2712, %v6687, 0
        %v6765 = vsel %vm2712, %v6688, 0
        %v6768 = vsel %vm2712, %v6689, 0
        %v6771 = vsel %vm2712, %v6690, 0
        %v6774 = vsel %vm2712, %v6691, 0
        %v6777 = vsel %vm2712, %v6692, 0
        %v6780 = vsel %vm2712, %v6693, 0
        %v6783 = vsel %vm2712, %v6694, 0
        %v6786 = vsel %vm2712, %v6695, 0
        %v6789 = vsel %vm2712, %v6696, 0
        %v6792 = vsel %vm2712, %v6697, 0
        %v6795 = vsel %vm2712, %v6698, 0
        %v6798 = vsel %vm2712, %v6699, 0
        %v6801 = vsel %vm2712, %v6700, 0
        %v6804 = vsel %vm2712, %v6701, 0
        %v6807 = vsel %vm2712, %v6702, 0
        %v6810 = vsel %vm2712, %v6703, 0
        %6812 = vmatprep.subr.bf16.mxu0 0
        %6813 = vmatpush1.bf16.msra.mxu0 0
        %6814 = vmatprep.subr.bf16.mxu0 0
        %6815 = vmatpush1.bf16.msra.mxu0 0
        %6816 = vmatprep.subr.bf16.mxu0 0
        %6817 = vmatpush1.bf16.msra.mxu0 0
        %6818 = vmatprep.subr.bf16.mxu0 0
        %6819 = vmatpush1.bf16.msra.mxu0 0
        %6820 = vmatprep.subr.bf16.mxu0 0
        %6821 = vmatpush1.bf16.msra.mxu0 %v6732
        %6822 = vmatprep.subr.bf16.mxu0 0
        %6823 = vmatpush1.bf16.msra.mxu0 %v6731
        %6824 = vmatprep.subr.bf16.mxu0 0
        %6825 = vmatpush1.bf16.msra.mxu0 %v6730
        %6826 = vmatprep.subr.bf16.mxu0 0
        %6827 = vmatpush1.bf16.msra.mxu0 %v6729
        %6828 = vmatprep.subr.bf16.mxu0 0
        %6829 = vmatpush2.bf16.msra.mxu0 0
        %6830 = vmatprep.subr.bf16.mxu0 0
        %6831 = vmatpush2.bf16.msra.mxu0 0
        %6832 = vmatprep.subr.bf16.mxu0 0
        %6833 = vmatpush2.bf16.msra.mxu0 0
        %6834 = vmatprep.subr.bf16.mxu0 0
        %6835 = vmatpush2.bf16.msra.mxu0 0
        %6836 = vmatprep.subr.bf16.mxu0 0
        %6837 = vmatpush2.bf16.msra.mxu0 0
        %6838 = vmatprep.subr.bf16.mxu0 0
        %6839 = vmatpush2.bf16.msra.mxu0 0
        %6840 = vmatprep.subr.bf16.mxu0 0
        %6841 = vmatpush2.bf16.msra.mxu0 0
        %6842 = vmatprep.subr.bf16.mxu0 0
        %6843 = vmatpush2.bf16.msra.mxu0 0
        %6844 = vmatprep.mubr.bf16.mxu0 0
        %6845 = vmatmul.mubr.bf16.gmra.mxu0 %v6738
        %v6846 = vpop.f32.mrf.mxu0
        %v6847 = vadd.f32 0.0, %v6846
        %v6848 = vpop.f32.mrf.mxu0
        %v6849 = vpop.f32.mrf.mxu0
        %v6850 = vadd.f32 0.0, %v6849
        %v6851 = vpop.f32.mrf.mxu0
        %6852 = vmatprep.mubr.bf16.mxu0 0
        %6853 = vmatmul.mubr.bf16.gmra.mxu0 %v6741
        %v6854 = vpop.f32.mrf.mxu0
        %v6855 = vadd.f32 0.0, %v6854
        %v6856 = vpop.f32.mrf.mxu0
        %v6857 = vpop.f32.mrf.mxu0
        %v6858 = vadd.f32 0.0, %v6857
        %v6859 = vpop.f32.mrf.mxu0
        %6860 = vmatprep.mubr.bf16.mxu0 0
        %6861 = vmatmul.mubr.bf16.gmra.mxu0 %v6744
        %v6862 = vpop.f32.mrf.mxu0
        %v6863 = vadd.f32 0.0, %v6862
        %v6864 = vpop.f32.mrf.mxu0
        %v6865 = vpop.f32.mrf.mxu0
        %v6866 = vadd.f32 0.0, %v6865
        %v6867 = vpop.f32.mrf.mxu0
        %6868 = vmatprep.mubr.bf16.mxu0 0
        %6869 = vmatmul.mubr.bf16.gmra.mxu0 %v6747
        %v6870 = vpop.f32.mrf.mxu0
        %v6871 = vadd.f32 0.0, %v6870
        %v6872 = vpop.f32.mrf.mxu0
        %v6873 = vpop.f32.mrf.mxu0
        %v6874 = vadd.f32 0.0, %v6873
        %v6875 = vpop.f32.mrf.mxu0
        %6876 = vmatprep.mubr.bf16.mxu0 0
        %6877 = vmatmul.mubr.bf16.gmra.mxu0 %v6750
        %v6878 = vpop.f32.mrf.mxu0
        %v6879 = vadd.f32 0.0, %v6878
        %v6880 = vpop.f32.mrf.mxu0
        %v6881 = vpop.f32.mrf.mxu0
        %v6882 = vadd.f32 0.0, %v6881
        %v6883 = vpop.f32.mrf.mxu0
        %6884 = vmatprep.mubr.bf16.mxu0 0
        %6885 = vmatmul.mubr.bf16.gmra.mxu0 %v6753
        %v6886 = vpop.f32.mrf.mxu0
        %v6887 = vadd.f32 0.0, %v6886
        %v6888 = vpop.f32.mrf.mxu0
        %v6889 = vpop.f32.mrf.mxu0
        %v6890 = vadd.f32 0.0, %v6889
        %v6891 = vpop.f32.mrf.mxu0
        %6892 = vmatprep.mubr.bf16.mxu0 0
        %6893 = vmatmul.mubr.bf16.gmra.mxu0 %v6756
        %v6894 = vpop.f32.mrf.mxu0
        %v6895 = vadd.f32 0.0, %v6894
        %v6896 = vpop.f32.mrf.mxu0
        %v6897 = vpop.f32.mrf.mxu0
        %v6898 = vadd.f32 0.0, %v6897
        %v6899 = vpop.f32.mrf.mxu0
        %6900 = vmatprep.mubr.bf16.mxu0 0
        %6901 = vmatmul.mubr.bf16.gmra.mxu0 %v6759
        %v6902 = vpop.f32.mrf.mxu0
        %v6903 = vadd.f32 0.0, %v6902
        %v6904 = vpop.f32.mrf.mxu0
        %v6905 = vpop.f32.mrf.mxu0
        %v6906 = vadd.f32 0.0, %v6905
        %v6907 = vpop.f32.mrf.mxu0
        %6908 = vmatprep.mubr.bf16.mxu0 0
        %6909 = vmatmul.mubr.bf16.gmra.mxu0 %v6762
        %v6910 = vpop.f32.mrf.mxu0
        %v6911 = vadd.f32 0.0, %v6910
        %v6912 = vpop.f32.mrf.mxu0
        %v6913 = vpop.f32.mrf.mxu0
        %v6914 = vadd.f32 0.0, %v6913
        %v6915 = vpop.f32.mrf.mxu0
        %6916 = vmatprep.mubr.bf16.mxu0 0
        %6917 = vmatmul.mubr.bf16.gmra.mxu0 %v6765
        %v6918 = vpop.f32.mrf.mxu0
        %v6919 = vadd.f32 0.0, %v6918
        %v6920 = vpop.f32.mrf.mxu0
        %v6921 = vpop.f32.mrf.mxu0
        %v6922 = vadd.f32 0.0, %v6921
        %v6923 = vpop.f32.mrf.mxu0
        %6924 = vmatprep.mubr.bf16.mxu0 0
        %6925 = vmatmul.mubr.bf16.gmra.mxu0 %v6768
        %v6926 = vpop.f32.mrf.mxu0
        %v6927 = vadd.f32 0.0, %v6926
        %v6928 = vpop.f32.mrf.mxu0
        %v6929 = vpop.f32.mrf.mxu0
        %v6930 = vadd.f32 0.0, %v6929
        %v6931 = vpop.f32.mrf.mxu0
        %6932 = vmatprep.mubr.bf16.mxu0 0
        %6933 = vmatmul.mubr.bf16.gmra.mxu0 %v6771
        %v6934 = vpop.f32.mrf.mxu0
        %v6935 = vadd.f32 0.0, %v6934
        %v6936 = vpop.f32.mrf.mxu0
        %v6937 = vpop.f32.mrf.mxu0
        %v6938 = vadd.f32 0.0, %v6937
        %v6939 = vpop.f32.mrf.mxu0
        %6940 = vmatprep.mubr.bf16.mxu0 0
        %6941 = vmatmul.mubr.bf16.gmra.mxu0 %v6774
        %v6942 = vpop.f32.mrf.mxu0
        %v6943 = vadd.f32 0.0, %v6942
        %v6944 = vpop.f32.mrf.mxu0
        %v6945 = vpop.f32.mrf.mxu0
        %v6946 = vpop.f32.mrf.mxu0
        %6947 = vmatprep.mubr.bf16.mxu0 0
        %6948 = vmatmul.mubr.bf16.gmra.mxu0 %v6777
        %v6949 = vpop.f32.mrf.mxu0
        %v6950 = vadd.f32 0.0, %v6949
        %v6951 = vpop.f32.mrf.mxu0
        %v6952 = vpop.f32.mrf.mxu0
        %v6953 = vadd.f32 0.0, %v6952
        %v6954 = vpop.f32.mrf.mxu0
        %6955 = vmatprep.mubr.bf16.mxu0 0
        %6956 = vmatmul.mubr.bf16.gmra.mxu0 %v6780
        %v6957 = vpop.f32.mrf.mxu0
        %v6958 = vadd.f32 0.0, %v6957
        %v6959 = vpop.f32.mrf.mxu0
        %v6960 = vpop.f32.mrf.mxu0
        %v6961 = vadd.f32 0.0, %v6960
        %v6962 = vpop.f32.mrf.mxu0
        %6963 = vmatprep.mubr.bf16.mxu0 0
        %6964 = vmatmul.mubr.bf16.gmra.mxu0 %v6783
        %v6965 = vpop.f32.mrf.mxu0
        %v6966 = vadd.f32 0.0, %v6965
        %v6967 = vpop.f32.mrf.mxu0
        %v6968 = vpop.f32.mrf.mxu0
        %v6969 = vadd.f32 0.0, %v6968
        %v6970 = vpop.f32.mrf.mxu0
        %6971 = vmatprep.mubr.bf16.mxu0 0
        %6972 = vmatmul.mubr.bf16.gmra.mxu0 %v6786
        %v6973 = vpop.f32.mrf.mxu0
        %v6974 = vadd.f32 0.0, %v6973
        %v6975 = vpop.f32.mrf.mxu0
        %v6976 = vpop.f32.mrf.mxu0
        %v6977 = vadd.f32 0.0, %v6976
        %v6978 = vpop.f32.mrf.mxu0
        %6979 = vmatprep.mubr.bf16.mxu0 0
        %6980 = vmatmul.mubr.bf16.gmra.mxu0 %v6789
        %v6981 = vpop.f32.mrf.mxu0
        %v6982 = vadd.f32 0.0, %v6981
        %v6983 = vpop.f32.mrf.mxu0
        %v6984 = vpop.f32.mrf.mxu0
        %v6985 = vadd.f32 0.0, %v6984
        %v6986 = vpop.f32.mrf.mxu0
        %6987 = vmatprep.mubr.bf16.mxu0 0
        %6988 = vmatmul.mubr.bf16.gmra.mxu0 %v6792
        %v6989 = vpop.f32.mrf.mxu0
        %v6990 = vadd.f32 0.0, %v6989
        %v6991 = vpop.f32.mrf.mxu0
        %v6992 = vpop.f32.mrf.mxu0
        %v6993 = vadd.f32 0.0, %v6992
        %v6994 = vpop.f32.mrf.mxu0
        %6995 = vmatprep.mubr.bf16.mxu0 0
        %6996 = vmatmul.mubr.bf16.gmra.mxu0 %v6795
        %v6997 = vpop.f32.mrf.mxu0
        %v6998 = vadd.f32 0.0, %v6997
        %v6999 = vpop.f32.mrf.mxu0
        %v7000 = vpop.f32.mrf.mxu0
        %v7001 = vadd.f32 0.0, %v7000
        %v7002 = vpop.f32.mrf.mxu0
        %7003 = vmatprep.mubr.bf16.mxu0 0
        %7004 = vmatmul.mubr.bf16.gmra.mxu0 %v6798
        %v7005 = vpop.f32.mrf.mxu0
        %v7006 = vadd.f32 0.0, %v7005
        %v7007 = vpop.f32.mrf.mxu0
        %v7008 = vpop.f32.mrf.mxu0
        %v7009 = vadd.f32 0.0, %v7008
        %v7010 = vpop.f32.mrf.mxu0
        %7011 = vmatprep.mubr.bf16.mxu0 0
        %7012 = vmatmul.mubr.bf16.gmra.mxu0 %v6801
        %v7013 = vpop.f32.mrf.mxu0
        %v7014 = vadd.f32 0.0, %v7013
        %v7015 = vpop.f32.mrf.mxu0
        %v7016 = vpop.f32.mrf.mxu0
        %v7017 = vadd.f32 0.0, %v7016
        %v7018 = vpop.f32.mrf.mxu0
        %7019 = vmatprep.mubr.bf16.mxu0 0
        %7020 = vmatmul.mubr.bf16.gmra.mxu0 %v6804
        %v7021 = vpop.f32.mrf.mxu0
        %v7022 = vadd.f32 0.0, %v7021
        %v7023 = vpop.f32.mrf.mxu0
        %v7024 = vpop.f32.mrf.mxu0
        %v7025 = vadd.f32 0.0, %v7024
        %v7026 = vpop.f32.mrf.mxu0
        %7027 = vmatprep.mubr.bf16.mxu0 0
        %7028 = vmatmul.mubr.bf16.gmra.mxu0 %v6807
        %v7029 = vpop.f32.mrf.mxu0
        %v7030 = vadd.f32 0.0, %v7029
        %v7031 = vpop.f32.mrf.mxu0
        %v7032 = vpop.f32.mrf.mxu0
        %v7033 = vadd.f32 0.0, %v7032
        %v7034 = vpop.f32.mrf.mxu0
        %7035 = vmatprep.mubr.bf16.mxu0 0
        %7036 = vmatmul.mubr.bf16.gmra.mxu0 %v6810
        %v7037 = vpop.f32.mrf.mxu0
        %v7038 = vadd.f32 0.0, %v7037
        %v7039 = vpop.f32.mrf.mxu0
        %v7040 = vpop.f32.mrf.mxu0
        %v7041 = vpop.f32.mrf.mxu0
        %7042 = vdwg.mxu0
        %v7043 = vadd.f32 %v6582, %v6847
        %v7044 = vadd.f32 %v6583, %v6850
        %v7045 = vadd.f32 %v6584, %v6855
        %v7046 = vadd.f32 %v6585, %v6858
        %v7047 = vadd.f32 %v6586, %v6863
        %v7048 = vadd.f32 %v6587, %v6866
        %v7049 = vadd.f32 %v6588, %v6871
        %v7050 = vadd.f32 %v6589, %v6874
        %v7051 = vadd.f32 %v6590, %v6879
        %v7052 = vadd.f32 %v6591, %v6882
        %v7053 = vadd.f32 %v6592, %v6887
        %v7054 = vadd.f32 %v6593, %v6890
        %v7055 = vadd.f32 %v6594, %v6895
        %v7056 = vadd.f32 %v6595, %v6898
        %v7057 = vadd.f32 %v6596, %v6903
        %v7058 = vadd.f32 %v6597, %v6906
        %v7059 = vadd.f32 %v6598, %v6911
        %v7060 = vadd.f32 %v6599, %v6914
        %v7061 = vadd.f32 %v6600, %v6919
        %v7062 = vadd.f32 %v6601, %v6922
        %v7063 = vadd.f32 %v6602, %v6927
        %v7064 = vadd.f32 %v6603, %v6930
        %v7065 = vadd.f32 %v6604, %v6935
        %v7066 = vadd.f32 %v6605, %v6938
        %v7067 = vadd.f32 %v6606, %v6943
        %v7068 = vadd.f32 %v6607, %v6950
        %v7069 = vadd.f32 %v6608, %v6953
        %v7070 = vadd.f32 %v6609, %v6958
        %v7071 = vadd.f32 %v6610, %v6961
        %v7072 = vadd.f32 %v6611, %v6966
        %v7073 = vadd.f32 %v6612, %v6969
        %v7074 = vadd.f32 %v6613, %v6974
        %v7075 = vadd.f32 %v6614, %v6977
        %v7076 = vadd.f32 %v6615, %v6982
        %v7077 = vadd.f32 %v6616, %v6985
        %v7078 = vadd.f32 %v6617, %v6990
        %v7079 = vadd.f32 %v6618, %v6993
        %v7080 = vadd.f32 %v6619, %v6998
        %v7081 = vadd.f32 %v6620, %v7001
        %v7082 = vadd.f32 %v6621, %v7006
        %v7083 = vadd.f32 %v6622, %v7009
        %v7084 = vadd.f32 %v6623, %v7014
        %v7085 = vadd.f32 %v6624, %v7017
        %v7086 = vadd.f32 %v6625, %v7022
        %v7087 = vadd.f32 %v6626, %v7025
        %v7088 = vadd.f32 %v6627, %v7030
        %v7089 = vadd.f32 %v6628, %v7033
        %v7090 = vadd.f32 %v6629, %v7038
        %v7092 = vlaneseq
        %v7093 = vshrl.u32 %v7092, 7
        %v7094 = vsub.s32 0, %v7093
        %v7095 = vrot.slane %v3038, %v7094
        %v7097 = vadd.f32 %v7043, %v7095
        %v7098 = vadd.f32 %v7044, %v7095
        %v7099 = vadd.f32 %v7045, %v7095
        %v7100 = vadd.f32 %v7046, %v7095
        %v7101 = vadd.f32 %v7047, %v7095
        %v7102 = vadd.f32 %v7048, %v7095
        %v7103 = vadd.f32 %v7049, %v7095
        %v7104 = vadd.f32 %v7050, %v7095
        %v7105 = vadd.f32 %v7051, %v7095
        %v7106 = vadd.f32 %v7052, %v7095
        %v7107 = vadd.f32 %v7053, %v7095
        %v7108 = vadd.f32 %v7054, %v7095
        %v7109 = vadd.f32 %v7055, %v7095
        %v7110 = vadd.f32 %v7056, %v7095
        %v7111 = vadd.f32 %v7057, %v7095
        %v7112 = vadd.f32 %v7058, %v7095
        %v7113 = vadd.f32 %v7059, %v7095
        %v7114 = vadd.f32 %v7060, %v7095
        %v7115 = vadd.f32 %v7061, %v7095
        %v7116 = vadd.f32 %v7062, %v7095
        %v7117 = vadd.f32 %v7063, %v7095
        %v7118 = vadd.f32 %v7064, %v7095
        %v7119 = vadd.f32 %v7065, %v7095
        %v7120 = vadd.f32 %v7066, %v7095
        %v7121 = vadd.f32 %v7067, %v7095
        %v7122 = vadd.f32 %v7068, %v7095
        %v7123 = vadd.f32 %v7069, %v7095
        %v7124 = vadd.f32 %v7070, %v7095
        %v7125 = vadd.f32 %v7071, %v7095
        %v7126 = vadd.f32 %v7072, %v7095
        %v7127 = vadd.f32 %v7073, %v7095
        %v7128 = vadd.f32 %v7074, %v7095
        %v7129 = vadd.f32 %v7075, %v7095
        %v7130 = vadd.f32 %v7076, %v7095
        %v7131 = vadd.f32 %v7077, %v7095
        %v7132 = vadd.f32 %v7078, %v7095
        %v7133 = vadd.f32 %v7079, %v7095
        %v7134 = vadd.f32 %v7080, %v7095
        %v7135 = vadd.f32 %v7081, %v7095
        %v7136 = vadd.f32 %v7082, %v7095
        %v7137 = vadd.f32 %v7083, %v7095
        %v7138 = vadd.f32 %v7084, %v7095
        %v7139 = vadd.f32 %v7085, %v7095
        %v7140 = vadd.f32 %v7086, %v7095
        %v7141 = vadd.f32 %v7087, %v7095
        %v7142 = vadd.f32 %v7088, %v7095
        %v7143 = vadd.f32 %v7089, %v7095
        %v7144 = vadd.f32 %v7090, %v7095
        %v7145 = vmax.f32 %v7097, 0.0
        %v7146 = vmax.f32 %v7098, 0.0
        %v7147 = vmax.f32 %v7099, 0.0
        %v7148 = vmax.f32 %v7100, 0.0
        %v7149 = vmax.f32 %v7101, 0.0
        %v7150 = vmax.f32 %v7102, 0.0
        %v7151 = vmax.f32 %v7103, 0.0
        %v7152 = vmax.f32 %v7104, 0.0
        %v7153 = vmax.f32 %v7105, 0.0
        %v7154 = vmax.f32 %v7106, 0.0
        %v7155 = vmax.f32 %v7107, 0.0
        %v7156 = vmax.f32 %v7108, 0.0
        %v7157 = vmax.f32 %v7109, 0.0
        %v7158 = vmax.f32 %v7110, 0.0
        %v7159 = vmax.f32 %v7111, 0.0
        %v7160 = vmax.f32 %v7112, 0.0
        %v7161 = vmax.f32 %v7113, 0.0
        %v7162 = vmax.f32 %v7114, 0.0
        %v7163 = vmax.f32 %v7115, 0.0
        %v7164 = vmax.f32 %v7116, 0.0
        %v7165 = vmax.f32 %v7117, 0.0
        %v7166 = vmax.f32 %v7118, 0.0
        %v7167 = vmax.f32 %v7119, 0.0
        %v7168 = vmax.f32 %v7120, 0.0
        %v7169 = vmax.f32 %v7121, 0.0
        %v7170 = vmax.f32 %v7122, 0.0
        %v7171 = vmax.f32 %v7123, 0.0
        %v7172 = vmax.f32 %v7124, 0.0
        %v7173 = vmax.f32 %v7125, 0.0
        %v7174 = vmax.f32 %v7126, 0.0
        %v7175 = vmax.f32 %v7127, 0.0
        %v7176 = vmax.f32 %v7128, 0.0
        %v7177 = vmax.f32 %v7129, 0.0
        %v7178 = vmax.f32 %v7130, 0.0
        %v7179 = vmax.f32 %v7131, 0.0
        %v7180 = vmax.f32 %v7132, 0.0
        %v7181 = vmax.f32 %v7133, 0.0
        %v7182 = vmax.f32 %v7134, 0.0
        %v7183 = vmax.f32 %v7135, 0.0
        %v7184 = vmax.f32 %v7136, 0.0
        %v7185 = vmax.f32 %v7137, 0.0
        %v7186 = vmax.f32 %v7138, 0.0
        %v7187 = vmax.f32 %v7139, 0.0
        %v7188 = vmax.f32 %v7140, 0.0
        %v7189 = vmax.f32 %v7141, 0.0
        %v7190 = vmax.f32 %v7142, 0.0
        %v7191 = vmax.f32 %v7143, 0.0
        %v7192 = vmax.f32 %v7144, 0.0
        %v7236 = vrot.slane %v7145, 1
        %v7237 = vrot.slane %v7146, 1
        %v7238 = vsel %vm1824, %v7236, %v7237
        %v7239 = vrot.slane %v7147, 1
        %v7240 = vsel %vm1824, %v7237, %v7239
        %v7241 = vrot.slane %v7148, 1
        %v7242 = vsel %vm1824, %v7239, %v7241
        %v7243 = vrot.slane %v7149, 1
        %v7244 = vsel %vm1824, %v7241, %v7243
        %v7245 = vrot.slane %v7150, 1
        %v7246 = vsel %vm1824, %v7243, %v7245
        %v7247 = vrot.slane %v7151, 1
        %v7248 = vsel %vm1824, %v7245, %v7247
        %v7249 = vrot.slane %v7152, 1
        %v7250 = vsel %vm1824, %v7247, %v7249
        %v7251 = vrot.slane %v7153, 1
        %v7252 = vsel %vm1824, %v7249, %v7251
        %v7253 = vrot.slane %v7154, 1
        %v7254 = vsel %vm1824, %v7251, %v7253
        %v7255 = vrot.slane %v7155, 1
        %v7256 = vsel %vm1824, %v7253, %v7255
        %v7257 = vrot.slane %v7157, 1
        %v7258 = vrot.slane %v7158, 1
        %v7259 = vsel %vm1824, %v7257, %v7258
        %v7260 = vrot.slane %v7159, 1
        %v7261 = vsel %vm1824, %v7258, %v7260
        %v7262 = vrot.slane %v7160, 1
        %v7263 = vsel %vm1824, %v7260, %v7262
        %v7264 = vrot.slane %v7161, 1
        %v7265 = vsel %vm1824, %v7262, %v7264
        %v7266 = vrot.slane %v7162, 1
        %v7267 = vsel %vm1824, %v7264, %v7266
        %v7268 = vrot.slane %v7163, 1
        %v7269 = vsel %vm1824, %v7266, %v7268
        %v7270 = vrot.slane %v7164, 1
        %v7271 = vsel %vm1824, %v7268, %v7270
        %v7272 = vrot.slane %v7165, 1
        %v7273 = vsel %vm1824, %v7270, %v7272
        %v7274 = vrot.slane %v7166, 1
        %v7275 = vsel %vm1824, %v7272, %v7274
        %v7276 = vrot.slane %v7167, 1
        %v7277 = vsel %vm1824, %v7274, %v7276
        %v7278 = vrot.slane %v7170, 1
        %v7279 = vrot.slane %v7171, 1
        %v7280 = vsel %vm1824, %v7278, %v7279
        %v7281 = vrot.slane %v7172, 1
        %v7282 = vsel %vm1824, %v7279, %v7281
        %v7283 = vrot.slane %v7173, 1
        %v7284 = vsel %vm1824, %v7281, %v7283
        %v7285 = vrot.slane %v7174, 1
        %v7286 = vsel %vm1824, %v7283, %v7285
        %v7287 = vrot.slane %v7175, 1
        %v7288 = vsel %vm1824, %v7285, %v7287
        %v7289 = vrot.slane %v7176, 1
        %v7290 = vsel %vm1824, %v7287, %v7289
        %v7291 = vrot.slane %v7177, 1
        %v7292 = vsel %vm1824, %v7289, %v7291
        %v7293 = vrot.slane %v7178, 1
        %v7294 = vsel %vm1824, %v7291, %v7293
        %v7295 = vrot.slane %v7179, 1
        %v7296 = vsel %vm1824, %v7293, %v7295
        %v7297 = vrot.slane %v7180, 1
        %v7298 = vsel %vm1824, %v7295, %v7297
        %v7299 = vrot.slane %v7182, 1
        %v7300 = vrot.slane %v7183, 1
        %v7301 = vsel %vm1824, %v7299, %v7300
        %v7302 = vrot.slane %v7184, 1
        %v7303 = vsel %vm1824, %v7300, %v7302
        %v7304 = vrot.slane %v7185, 1
        %v7305 = vsel %vm1824, %v7302, %v7304
        %v7306 = vrot.slane %v7186, 1
        %v7307 = vsel %vm1824, %v7304, %v7306
        %v7308 = vrot.slane %v7187, 1
        %v7309 = vsel %vm1824, %v7306, %v7308
        %v7310 = vrot.slane %v7188, 1
        %v7311 = vsel %vm1824, %v7308, %v7310
        %v7312 = vrot.slane %v7189, 1
        %v7313 = vsel %vm1824, %v7310, %v7312
        %v7314 = vrot.slane %v7190, 1
        %v7315 = vsel %vm1824, %v7312, %v7314
        %v7316 = vrot.slane %v7191, 1
        %v7317 = vsel %vm1824, %v7314, %v7316
        %v7358 = vmax.f32 %v7145, %v7238
        %v7359 = vmax.f32 %v7146, %v7240
        %v7360 = vmax.f32 %v7147, %v7242
        %v7361 = vmax.f32 %v7148, %v7244
        %v7362 = vmax.f32 %v7149, %v7246
        %v7363 = vmax.f32 %v7150, %v7248
        %v7364 = vmax.f32 %v7151, %v7250
        %v7365 = vmax.f32 %v7152, %v7252
        %v7366 = vmax.f32 %v7153, %v7254
        %v7367 = vmax.f32 %v7154, %v7256
        %v7368 = vmax.f32 %v7157, %v7259
        %v7369 = vmax.f32 %v7158, %v7261
        %v7370 = vmax.f32 %v7159, %v7263
        %v7371 = vmax.f32 %v7160, %v7265
        %v7372 = vmax.f32 %v7161, %v7267
        %v7373 = vmax.f32 %v7162, %v7269
        %v7374 = vmax.f32 %v7163, %v7271
        %v7375 = vmax.f32 %v7164, %v7273
        %v7376 = vmax.f32 %v7165, %v7275
        %v7377 = vmax.f32 %v7166, %v7277
        %v7378 = vmax.f32 %v7170, %v7280
        %v7379 = vmax.f32 %v7171, %v7282
        %v7380 = vmax.f32 %v7172, %v7284
        %v7381 = vmax.f32 %v7173, %v7286
        %v7382 = vmax.f32 %v7174, %v7288
        %v7383 = vmax.f32 %v7175, %v7290
        %v7384 = vmax.f32 %v7176, %v7292
        %v7385 = vmax.f32 %v7177, %v7294
        %v7386 = vmax.f32 %v7178, %v7296
        %v7387 = vmax.f32 %v7179, %v7298
        %v7388 = vmax.f32 %v7182, %v7301
        %v7389 = vmax.f32 %v7183, %v7303
        %v7390 = vmax.f32 %v7184, %v7305
        %v7391 = vmax.f32 %v7185, %v7307
        %v7392 = vmax.f32 %v7186, %v7309
        %v7393 = vmax.f32 %v7187, %v7311
        %v7394 = vmax.f32 %v7188, %v7313
        %v7395 = vmax.f32 %v7189, %v7315
        %v7396 = vmax.f32 %v7190, %v7317
        %v7397 = vmax.f32 %v7191, %v7316
        %v7403 = vrot.slane %v7156, 1
        %v7404 = vsel %vm1824, %v7255, %v7403
        %v7405 = vsel %vm1824, %v7403, %v7257
        %v7406 = vrot.slane %v7168, 1
        %v7407 = vsel %vm1824, %v7276, %v7406
        %v7408 = vrot.slane %v7169, 1
        %v7409 = vsel %vm1824, %v7406, %v7408
        %v7410 = vrot.slane %v7181, 1
        %v7411 = vsel %vm1824, %v7297, %v7410
        %v7412 = vsel %vm1824, %v7410, %v7299
        %v7413 = vrot.slane %v7192, 1
        %v7414 = vsel %vm1824, %v7316, %v7413
        %v7423 = vmax.f32 %v7155, %v7404
        %v7424 = vmax.f32 %v7156, %v7405
        %v7425 = vmax.f32 %v7167, %v7407
        %v7426 = vmax.f32 %v7168, %v7409
        %v7427 = vmax.f32 %v7180, %v7411
        %v7428 = vmax.f32 %v7181, %v7412
        %v7429 = vmax.f32 %v7191, %v7414
        %v7430 = vmax.f32 %v7192, %v7413
        %vm7474 = vcmask 1045504
        %v7475 = vrot.slane %v7359, 2
        %v7476 = vrot.slane %v7360, 2
        %v7477 = vsel %vm7474, %v7475, %v7476
        %v7478 = vrot.slane %v7361, 2
        %v7479 = vsel %vm7474, %v7476, %v7478
        %v7480 = vrot.slane %v7362, 2
        %v7481 = vsel %vm7474, %v7478, %v7480
        %v7482 = vrot.slane %v7363, 2
        %v7483 = vsel %vm7474, %v7480, %v7482
        %v7484 = vrot.slane %v7364, 2
        %v7485 = vsel %vm7474, %v7482, %v7484
        %v7486 = vrot.slane %v7365, 2
        %v7487 = vsel %vm7474, %v7484, %v7486
        %v7488 = vrot.slane %v7366, 2
        %v7489 = vsel %vm7474, %v7486, %v7488
        %v7490 = vrot.slane %v7367, 2
        %v7491 = vsel %vm7474, %v7488, %v7490
        %v7492 = vrot.slane %v7423, 2
        %v7493 = vsel %vm7474, %v7490, %v7492
        %v7494 = vrot.slane %v7424, 2
        %v7495 = vsel %vm7474, %v7492, %v7494
        %v7496 = vrot.slane %v7369, 2
        %v7497 = vrot.slane %v7370, 2
        %v7498 = vsel %vm7474, %v7496, %v7497
        %v7499 = vrot.slane %v7371, 2
        %v7500 = vsel %vm7474, %v7497, %v7499
        %v7501 = vrot.slane %v7372, 2
        %v7502 = vsel %vm7474, %v7499, %v7501
        %v7503 = vrot.slane %v7373, 2
        %v7504 = vsel %vm7474, %v7501, %v7503
        %v7505 = vrot.slane %v7374, 2
        %v7506 = vsel %vm7474, %v7503, %v7505
        %v7507 = vrot.slane %v7375, 2
        %v7508 = vsel %vm7474, %v7505, %v7507
        %v7509 = vrot.slane %v7376, 2
        %v7510 = vsel %vm7474, %v7507, %v7509
        %v7511 = vrot.slane %v7377, 2
        %v7512 = vsel %vm7474, %v7509, %v7511
        %v7513 = vrot.slane %v7425, 2
        %v7514 = vsel %vm7474, %v7511, %v7513
        %v7515 = vrot.slane %v7426, 2
        %v7516 = vsel %vm7474, %v7513, %v7515
        %v7517 = vrot.slane %v7379, 2
        %v7518 = vrot.slane %v7380, 2
        %v7519 = vsel %vm7474, %v7517, %v7518
        %v7520 = vrot.slane %v7381, 2
        %v7521 = vsel %vm7474, %v7518, %v7520
        %v7522 = vrot.slane %v7382, 2
        %v7523 = vsel %vm7474, %v7520, %v7522
        %v7524 = vrot.slane %v7383, 2
        %v7525 = vsel %vm7474, %v7522, %v7524
        %v7526 = vrot.slane %v7384, 2
        %v7527 = vsel %vm7474, %v7524, %v7526
        %v7528 = vrot.slane %v7385, 2
        %v7529 = vsel %vm7474, %v7526, %v7528
        %v7530 = vrot.slane %v7386, 2
        %v7531 = vsel %vm7474, %v7528, %v7530
        %v7532 = vrot.slane %v7387, 2
        %v7533 = vsel %vm7474, %v7530, %v7532
        %v7534 = vrot.slane %v7427, 2
        %v7535 = vsel %vm7474, %v7532, %v7534
        %v7536 = vrot.slane %v7428, 2
        %v7537 = vsel %vm7474, %v7534, %v7536
        %v7538 = vrot.slane %v7389, 2
        %v7539 = vrot.slane %v7390, 2
        %v7540 = vsel %vm7474, %v7538, %v7539
        %v7541 = vrot.slane %v7391, 2
        %v7542 = vsel %vm7474, %v7539, %v7541
        %v7543 = vrot.slane %v7392, 2
        %v7544 = vsel %vm7474, %v7541, %v7543
        %v7545 = vrot.slane %v7393, 2
        %v7546 = vsel %vm7474, %v7543, %v7545
        %v7547 = vrot.slane %v7394, 2
        %v7548 = vsel %vm7474, %v7545, %v7547
        %v7549 = vrot.slane %v7395, 2
        %v7550 = vsel %vm7474, %v7547, %v7549
        %v7551 = vrot.slane %v7396, 2
        %v7552 = vsel %vm7474, %v7549, %v7551
        %v7553 = vrot.slane %v7429, 2
        %v7554 = vsel %vm7474, %v7551, %v7553
        %v7555 = vrot.slane %v7430, 2
        %v7556 = vsel %vm7474, %v7553, %v7555
        %v7597 = vmax.f32 %v7358, %v7477
        %v7598 = vmax.f32 %v7359, %v7479
        %v7599 = vmax.f32 %v7360, %v7481
        %v7600 = vmax.f32 %v7361, %v7483
        %v7601 = vmax.f32 %v7362, %v7485
        %v7602 = vmax.f32 %v7363, %v7487
        %v7603 = vmax.f32 %v7364, %v7489
        %v7604 = vmax.f32 %v7365, %v7491
        %v7605 = vmax.f32 %v7366, %v7493
        %v7606 = vmax.f32 %v7367, %v7495
        %v7607 = vmax.f32 %v7368, %v7498
        %v7608 = vmax.f32 %v7369, %v7500
        %v7609 = vmax.f32 %v7370, %v7502
        %v7610 = vmax.f32 %v7371, %v7504
        %v7611 = vmax.f32 %v7372, %v7506
        %v7612 = vmax.f32 %v7373, %v7508
        %v7613 = vmax.f32 %v7374, %v7510
        %v7614 = vmax.f32 %v7375, %v7512
        %v7615 = vmax.f32 %v7376, %v7514
        %v7616 = vmax.f32 %v7377, %v7516
        %v7617 = vmax.f32 %v7378, %v7519
        %v7618 = vmax.f32 %v7379, %v7521
        %v7619 = vmax.f32 %v7380, %v7523
        %v7620 = vmax.f32 %v7381, %v7525
        %v7621 = vmax.f32 %v7382, %v7527
        %v7622 = vmax.f32 %v7383, %v7529
        %v7623 = vmax.f32 %v7384, %v7531
        %v7624 = vmax.f32 %v7385, %v7533
        %v7625 = vmax.f32 %v7386, %v7535
        %v7626 = vmax.f32 %v7387, %v7537
        %v7627 = vmax.f32 %v7388, %v7540
        %v7628 = vmax.f32 %v7389, %v7542
        %v7629 = vmax.f32 %v7390, %v7544
        %v7630 = vmax.f32 %v7391, %v7546
        %v7631 = vmax.f32 %v7392, %v7548
        %v7632 = vmax.f32 %v7393, %v7550
        %v7633 = vmax.f32 %v7394, %v7552
        %v7634 = vmax.f32 %v7395, %v7554
        %v7635 = vmax.f32 %v7396, %v7556
        %v7636 = vmax.f32 %v7397, %v7555
        %v7637 = vpack.c.bf16 %v7598, %v7597
        %v7638 = vpack.c.bf16 %v7600, %v7599
        %v7639 = vpack.c.bf16 %v7602, %v7601
        %v7640 = vpack.c.bf16 %v7604, %v7603
        %v7641 = vpack.c.bf16 %v7606, %v7605
        %v7642 = vpack.c.bf16 %v7608, %v7607
        %v7643 = vpack.c.bf16 %v7610, %v7609
        %v7644 = vpack.c.bf16 %v7612, %v7611
        %v7645 = vpack.c.bf16 %v7614, %v7613
        %v7646 = vpack.c.bf16 %v7616, %v7615
        %v7647 = vpack.c.bf16 %v7618, %v7617
        %v7648 = vpack.c.bf16 %v7620, %v7619
        %v7649 = vpack.c.bf16 %v7622, %v7621
        %v7650 = vpack.c.bf16 %v7624, %v7623
        %v7651 = vpack.c.bf16 %v7626, %v7625
        %v7652 = vpack.c.bf16 %v7628, %v7627
        %v7653 = vpack.c.bf16 %v7630, %v7629
        %v7654 = vpack.c.bf16 %v7632, %v7631
        %v7655 = vpack.c.bf16 %v7634, %v7633
        %v7656 = vpack.c.bf16 %v7636, %v7635
        %v7657 = vld [vmem:[%s8] sm:$0xf]
        %v7658 = vld [vmem:[%s8 + $0x4] sm:$0xf]
        %v7659 = vld [vmem:[%s8 + $0x8] sm:$0xf]
        %v7660 = vld [vmem:[%s8 + $0xc] sm:$0xf]
        %v7661 = vld [vmem:[%s8 + $0x10] sm:$0xf]
        %v7667 = vunpack.c.l.b16 %v7657
        %v7668 = vunpack.c.l.b16 %v7658
        %v7669 = vunpack.c.l.b16 %v7659
        %v7670 = vunpack.c.l.b16 %v7660
        %v7671 = vunpack.c.l.b16 %v7661
        %v7672 = vpack.c.b16 %v7668, %v7667
        %v7673 = vpack.c.b16 %v7670, %v7669
        %v7674 = vpack.c.b16 %v7671, %v7671
        %vm7675 = vcmask 547840
        %v7677 = vsel %vm7675, %v7672, 0
        %v7680 = vsel %vm7675, %v7673, 0
        %v7683 = vsel %vm7675, %v7674, 0
        %vm7685 = vcmask 1040384
        %vm7686 = vcmask 1041408
        %v7687 = vsel %vm7685, 4294967295, 65535
        %v7688 = vsel %vm7686, %v7687, 0
        %v7690 = vand.u32 %v7641, %v7688
        %7692 = vmatprep.subr.bf16.mxu0 0
        %7693 = vmatpush1.bf16.msra.mxu0 0
        %7694 = vmatprep.subr.bf16.mxu0 0
        %7695 = vmatpush1.bf16.msra.mxu0 0
        %7696 = vmatprep.subr.bf16.mxu0 0
        %7697 = vmatpush1.bf16.msra.mxu0 0
        %7698 = vmatprep.subr.bf16.mxu0 0
        %7699 = vmatpush1.bf16.msra.mxu0 %v7690
        %7700 = vmatprep.subr.bf16.mxu0 0
        %7701 = vmatpush1.bf16.msra.mxu0 %v7640
        %7702 = vmatprep.subr.bf16.mxu0 0
        %7703 = vmatpush1.bf16.msra.mxu0 %v7639
        %7704 = vmatprep.subr.bf16.mxu0 0
        %7705 = vmatpush1.bf16.msra.mxu0 %v7638
        %7706 = vmatprep.subr.bf16.mxu0 0
        %7707 = vmatpush1.bf16.msra.mxu0 %v7637
        %7708 = vmatprep.subr.bf16.mxu0 0
        %7709 = vmatpush2.bf16.msra.mxu0 0
        %7710 = vmatprep.subr.bf16.mxu0 0
        %7711 = vmatpush2.bf16.msra.mxu0 0
        %7712 = vmatprep.subr.bf16.mxu0 0
        %7713 = vmatpush2.bf16.msra.mxu0 0
        %7714 = vmatprep.subr.bf16.mxu0 0
        %7715 = vmatpush2.bf16.msra.mxu0 0
        %7716 = vmatprep.subr.bf16.mxu0 0
        %7717 = vmatpush2.bf16.msra.mxu0 0
        %7718 = vmatprep.subr.bf16.mxu0 0
        %7719 = vmatpush2.bf16.msra.mxu0 0
        %7720 = vmatprep.subr.bf16.mxu0 0
        %7721 = vmatpush2.bf16.msra.mxu0 0
        %7722 = vmatprep.subr.bf16.mxu0 0
        %7723 = vmatpush2.bf16.msra.mxu0 0
        %7724 = vmatprep.mubr.bf16.mxu0 0
        %7725 = vmatmul.mubr.bf16.gmra.mxu0 %v7677
        %v7726 = vpop.f32.mrf.mxu0
        %v7727 = vadd.f32 0.0, %v7726
        %v7728 = vpop.f32.mrf.mxu0
        %v7729 = vpop.f32.mrf.mxu0
        %v7730 = vadd.f32 0.0, %v7729
        %v7731 = vpop.f32.mrf.mxu0
        %7732 = vmatprep.mubr.bf16.mxu0 0
        %7733 = vmatmul.mubr.bf16.gmra.mxu0 %v7680
        %v7734 = vpop.f32.mrf.mxu0
        %v7735 = vadd.f32 0.0, %v7734
        %v7736 = vpop.f32.mrf.mxu0
        %v7737 = vpop.f32.mrf.mxu0
        %v7738 = vadd.f32 0.0, %v7737
        %v7739 = vpop.f32.mrf.mxu0
        %7740 = vmatprep.mubr.bf16.mxu0 0
        %7741 = vmatmul.mubr.bf16.gmra.mxu0 %v7683
        %v7742 = vpop.f32.mrf.mxu0
        %v7743 = vadd.f32 0.0, %v7742
        %v7744 = vpop.f32.mrf.mxu0
        %v7745 = vpop.f32.mrf.mxu0
        %v7746 = vpop.f32.mrf.mxu0
        %7747 = vdwg.mxu0
        %7748 = vst.msk [vmem:[#allocation3] sm:$0xff] %vm2712, %v7727
        %7749 = vst.msk [vmem:[#allocation3 + $0x8] sm:$0xff] %vm2712, %v7730
        %7750 = vst.msk [vmem:[#allocation3 + $0x10] sm:$0xff] %vm2712, %v7735
        %7751 = vst.msk [vmem:[#allocation3 + $0x18] sm:$0xff] %vm2712, %v7738
        %7752 = vst.msk [vmem:[#allocation3 + $0x20] sm:$0xff] %vm2712, %v7743
        %vm7758 = vcmask 1043456
        %v7759 = vrot.slane %v7642, 4
        %v7760 = vrot.slane %v7643, 4
        %v7761 = vsel %vm7758, %v7759, %v7760
        %v7762 = vrot.slane %v7644, 4
        %v7763 = vsel %vm7758, %v7760, %v7762
        %v7764 = vrot.slane %v7645, 4
        %v7765 = vsel %vm7758, %v7762, %v7764
        %v7766 = vrot.slane %v7646, 4
        %v7767 = vsel %vm7758, %v7764, %v7766
        %v7773 = vand.u32 %v7766, %v7688
        %7775 = vmatprep.subr.bf16.mxu0 0
        %7776 = vmatpush1.bf16.msra.mxu0 0
        %7777 = vmatprep.subr.bf16.mxu0 0
        %7778 = vmatpush1.bf16.msra.mxu0 0
        %7779 = vmatprep.subr.bf16.mxu0 0
        %7780 = vmatpush1.bf16.msra.mxu0 0
        %7781 = vmatprep.subr.bf16.mxu0 0
        %7782 = vmatpush1.bf16.msra.mxu0 %v7773
        %7783 = vmatprep.subr.bf16.mxu0 0
        %7784 = vmatpush1.bf16.msra.mxu0 %v7767
        %7785 = vmatprep.subr.bf16.mxu0 0
        %7786 = vmatpush1.bf16.msra.mxu0 %v7765
        %7787 = vmatprep.subr.bf16.mxu0 0
        %7788 = vmatpush1.bf16.msra.mxu0 %v7763
        %7789 = vmatprep.subr.bf16.mxu0 0
        %7790 = vmatpush1.bf16.msra.mxu0 %v7761
        %7791 = vmatprep.subr.bf16.mxu0 0
        %7792 = vmatpush2.bf16.msra.mxu0 0
        %7793 = vmatprep.subr.bf16.mxu0 0
        %7794 = vmatpush2.bf16.msra.mxu0 0
        %7795 = vmatprep.subr.bf16.mxu0 0
        %7796 = vmatpush2.bf16.msra.mxu0 0
        %7797 = vmatprep.subr.bf16.mxu0 0
        %7798 = vmatpush2.bf16.msra.mxu0 0
        %7799 = vmatprep.subr.bf16.mxu0 0
        %7800 = vmatpush2.bf16.msra.mxu0 0
        %7801 = vmatprep.subr.bf16.mxu0 0
        %7802 = vmatpush2.bf16.msra.mxu0 0
        %7803 = vmatprep.subr.bf16.mxu0 0
        %7804 = vmatpush2.bf16.msra.mxu0 0
        %7805 = vmatprep.subr.bf16.mxu0 0
        %7806 = vmatpush2.bf16.msra.mxu0 0
        %7807 = vmatprep.mubr.bf16.mxu0 0
        %7808 = vmatmul.mubr.bf16.gmra.mxu0 %v7677
        %v7809 = vpop.f32.mrf.mxu0
        %v7810 = vadd.f32 0.0, %v7809
        %v7811 = vpop.f32.mrf.mxu0
        %v7812 = vpop.f32.mrf.mxu0
        %v7813 = vadd.f32 0.0, %v7812
        %v7814 = vpop.f32.mrf.mxu0
        %7815 = vmatprep.mubr.bf16.mxu0 0
        %7816 = vmatmul.mubr.bf16.gmra.mxu0 %v7680
        %v7817 = vpop.f32.mrf.mxu0
        %v7818 = vadd.f32 0.0, %v7817
        %v7819 = vpop.f32.mrf.mxu0
        %v7820 = vpop.f32.mrf.mxu0
        %v7821 = vadd.f32 0.0, %v7820
        %v7822 = vpop.f32.mrf.mxu0
        %7823 = vmatprep.mubr.bf16.mxu0 0
        %7824 = vmatmul.mubr.bf16.gmra.mxu0 %v7683
        %v7825 = vpop.f32.mrf.mxu0
        %v7826 = vadd.f32 0.0, %v7825
        %v7827 = vpop.f32.mrf.mxu0
        %v7828 = vpop.f32.mrf.mxu0
        %v7829 = vpop.f32.mrf.mxu0
        %7830 = vdwg.mxu0
        %7831 = vst.msk [vmem:[#allocation3 + $0x28] sm:$0xff] %vm2712, %v7810
        %7832 = vst.msk [vmem:[#allocation3 + $0x30] sm:$0xff] %vm2712, %v7813
        %7833 = vst.msk [vmem:[#allocation3 + $0x38] sm:$0xff] %vm2712, %v7818
        %7834 = vst.msk [vmem:[#allocation3 + $0x40] sm:$0xff] %vm2712, %v7821
        %7835 = vst.msk [vmem:[#allocation3 + $0x48] sm:$0xff] %vm2712, %v7826
        %v7837 = vand.u32 %v7651, %v7688
        %7839 = vmatprep.subr.bf16.mxu0 0
        %7840 = vmatpush1.bf16.msra.mxu0 0
        %7841 = vmatprep.subr.bf16.mxu0 0
        %7842 = vmatpush1.bf16.msra.mxu0 0
        %7843 = vmatprep.subr.bf16.mxu0 0
        %7844 = vmatpush1.bf16.msra.mxu0 0
        %7845 = vmatprep.subr.bf16.mxu0 0
        %7846 = vmatpush1.bf16.msra.mxu0 %v7837
        %7847 = vmatprep.subr.bf16.mxu0 0
        %7848 = vmatpush1.bf16.msra.mxu0 %v7650
        %7849 = vmatprep.subr.bf16.mxu0 0
        %7850 = vmatpush1.bf16.msra.mxu0 %v7649
        %7851 = vmatprep.subr.bf16.mxu0 0
        %7852 = vmatpush1.bf16.msra.mxu0 %v7648
        %7853 = vmatprep.subr.bf16.mxu0 0
        %7854 = vmatpush1.bf16.msra.mxu0 %v7647
        %7855 = vmatprep.subr.bf16.mxu0 0
        %7856 = vmatpush2.bf16.msra.mxu0 0
        %7857 = vmatprep.subr.bf16.mxu0 0
        %7858 = vmatpush2.bf16.msra.mxu0 0
        %7859 = vmatprep.subr.bf16.mxu0 0
        %7860 = vmatpush2.bf16.msra.mxu0 0
        %7861 = vmatprep.subr.bf16.mxu0 0
        %7862 = vmatpush2.bf16.msra.mxu0 0
        %7863 = vmatprep.subr.bf16.mxu0 0
        %7864 = vmatpush2.bf16.msra.mxu0 0
        %7865 = vmatprep.subr.bf16.mxu0 0
        %7866 = vmatpush2.bf16.msra.mxu0 0
        %7867 = vmatprep.subr.bf16.mxu0 0
        %7868 = vmatpush2.bf16.msra.mxu0 0
        %7869 = vmatprep.subr.bf16.mxu0 0
        %7870 = vmatpush2.bf16.msra.mxu0 0
        %7871 = vmatprep.mubr.bf16.mxu0 0
        %7872 = vmatmul.mubr.bf16.gmra.mxu0 %v7677
        %v7873 = vpop.f32.mrf.mxu0
        %v7874 = vadd.f32 0.0, %v7873
        %v7875 = vpop.f32.mrf.mxu0
        %v7876 = vpop.f32.mrf.mxu0
        %v7877 = vadd.f32 0.0, %v7876
        %v7878 = vpop.f32.mrf.mxu0
        %7879 = vmatprep.mubr.bf16.mxu0 0
        %7880 = vmatmul.mubr.bf16.gmra.mxu0 %v7680
        %v7881 = vpop.f32.mrf.mxu0
        %v7882 = vadd.f32 0.0, %v7881
        %v7883 = vpop.f32.mrf.mxu0
        %v7884 = vpop.f32.mrf.mxu0
        %v7885 = vadd.f32 0.0, %v7884
        %v7886 = vpop.f32.mrf.mxu0
        %7887 = vmatprep.mubr.bf16.mxu0 0
        %7888 = vmatmul.mubr.bf16.gmra.mxu0 %v7683
        %v7889 = vpop.f32.mrf.mxu0
        %v7890 = vadd.f32 0.0, %v7889
        %v7891 = vpop.f32.mrf.mxu0
        %v7892 = vpop.f32.mrf.mxu0
        %v7893 = vpop.f32.mrf.mxu0
        %7894 = vdwg.mxu0
        %7895 = vst.msk [vmem:[#allocation3 + $0x50] sm:$0xff] %vm2712, %v7874
        %7896 = vst.msk [vmem:[#allocation3 + $0x58] sm:$0xff] %vm2712, %v7877
        %7897 = vst.msk [vmem:[#allocation3 + $0x60] sm:$0xff] %vm2712, %v7882
        %7898 = vst.msk [vmem:[#allocation3 + $0x68] sm:$0xff] %vm2712, %v7885
        %7899 = vst.msk [vmem:[#allocation3 + $0x70] sm:$0xff] %vm2712, %v7890
        %v7905 = vrot.slane %v7652, 4
        %v7906 = vrot.slane %v7653, 4
        %v7907 = vsel %vm7758, %v7905, %v7906
        %v7908 = vrot.slane %v7654, 4
        %v7909 = vsel %vm7758, %v7906, %v7908
        %v7910 = vrot.slane %v7655, 4
        %v7911 = vsel %vm7758, %v7908, %v7910
        %v7912 = vrot.slane %v7656, 4
        %v7913 = vsel %vm7758, %v7910, %v7912
        %v7919 = vand.u32 %v7912, %v7688
        %7921 = vmatprep.subr.bf16.mxu0 0
        %7922 = vmatpush1.bf16.msra.mxu0 0
        %7923 = vmatprep.subr.bf16.mxu0 0
        %7924 = vmatpush1.bf16.msra.mxu0 0
        %7925 = vmatprep.subr.bf16.mxu0 0
        %7926 = vmatpush1.bf16.msra.mxu0 0
        %7927 = vmatprep.subr.bf16.mxu0 0
        %7928 = vmatpush1.bf16.msra.mxu0 %v7919
        %7929 = vmatprep.subr.bf16.mxu0 0
        %7930 = vmatpush1.bf16.msra.mxu0 %v7913
        %7931 = vmatprep.subr.bf16.mxu0 0
        %7932 = vmatpush1.bf16.msra.mxu0 %v7911
        %7933 = vmatprep.subr.bf16.mxu0 0
        %7934 = vmatpush1.bf16.msra.mxu0 %v7909
        %7935 = vmatprep.subr.bf16.mxu0 0
        %7936 = vmatpush1.bf16.msra.mxu0 %v7907
        %7937 = vmatprep.subr.bf16.mxu0 0
        %7938 = vmatpush2.bf16.msra.mxu0 0
        %7939 = vmatprep.subr.bf16.mxu0 0
        %7940 = vmatpush2.bf16.msra.mxu0 0
        %7941 = vmatprep.subr.bf16.mxu0 0
        %7942 = vmatpush2.bf16.msra.mxu0 0
        %7943 = vmatprep.subr.bf16.mxu0 0
        %7944 = vmatpush2.bf16.msra.mxu0 0
        %7945 = vmatprep.subr.bf16.mxu0 0
        %7946 = vmatpush2.bf16.msra.mxu0 0
        %7947 = vmatprep.subr.bf16.mxu0 0
        %7948 = vmatpush2.bf16.msra.mxu0 0
        %7949 = vmatprep.subr.bf16.mxu0 0
        %7950 = vmatpush2.bf16.msra.mxu0 0
        %7951 = vmatprep.subr.bf16.mxu0 0
        %7952 = vmatpush2.bf16.msra.mxu0 0
        %7953 = vmatprep.mubr.bf16.mxu0 0
        %7954 = vmatmul.mubr.bf16.gmra.mxu0 %v7677
        %v7955 = vpop.f32.mrf.mxu0
        %v7956 = vadd.f32 0.0, %v7955
        %v7957 = vpop.f32.mrf.mxu0
        %v7958 = vpop.f32.mrf.mxu0
        %v7959 = vadd.f32 0.0, %v7958
        %v7960 = vpop.f32.mrf.mxu0
        %7961 = vmatprep.mubr.bf16.mxu0 0
        %7962 = vmatmul.mubr.bf16.gmra.mxu0 %v7680
        %v7963 = vpop.f32.mrf.mxu0
        %v7964 = vadd.f32 0.0, %v7963
        %v7965 = vpop.f32.mrf.mxu0
        %v7966 = vpop.f32.mrf.mxu0
        %v7967 = vadd.f32 0.0, %v7966
        %v7968 = vpop.f32.mrf.mxu0
        %7969 = vmatprep.mubr.bf16.mxu0 0
        %7970 = vmatmul.mubr.bf16.gmra.mxu0 %v7683
        %v7971 = vpop.f32.mrf.mxu0
        %v7972 = vadd.f32 0.0, %v7971
        %v7973 = vpop.f32.mrf.mxu0
        %v7974 = vpop.f32.mrf.mxu0
        %v7975 = vpop.f32.mrf.mxu0
        %7976 = vdwg.mxu0
        %7977 = vst.msk [vmem:[#allocation3 + $0x78] sm:$0xff] %vm2712, %v7956
        %7978 = vst.msk [vmem:[#allocation3 + $0x80] sm:$0xff] %vm2712, %v7959
        %7979 = vst.msk [vmem:[#allocation3 + $0x88] sm:$0xff] %vm2712, %v7964
        %7980 = vst.msk [vmem:[#allocation3 + $0x90] sm:$0xff] %vm2712, %v7967
        %7981 = vst.msk [vmem:[#allocation3 + $0x98] sm:$0xff] %vm2712, %v7972
        %v7982 = vld [vmem:[%s5] sm:$0x1]
        %v7983 = vld [vmem:[#allocation3] sm:$0xff]
        %v7984 = vld [vmem:[#allocation3 + $0x8] sm:$0xff]
        %v7985 = vld [vmem:[#allocation3 + $0x10] sm:$0xff]
        %v7986 = vld [vmem:[#allocation3 + $0x18] sm:$0xff]
        %v7987 = vld [vmem:[#allocation3 + $0x20] sm:$0xff]
        %v7988 = vld [vmem:[#allocation3 + $0x28] sm:$0xff]
        %v7989 = vld [vmem:[#allocation3 + $0x30] sm:$0xff]
        %v7990 = vld [vmem:[#allocation3 + $0x38] sm:$0xff]
        %v7991 = vld [vmem:[#allocation3 + $0x40] sm:$0xff]
        %v7992 = vld [vmem:[#allocation3 + $0x48] sm:$0xff]
        %v7993 = vld [vmem:[#allocation3 + $0x50] sm:$0xff]
        %v7994 = vld [vmem:[#allocation3 + $0x58] sm:$0xff]
        %v7995 = vld [vmem:[#allocation3 + $0x60] sm:$0xff]
        %v7996 = vld [vmem:[#allocation3 + $0x68] sm:$0xff]
        %v7997 = vld [vmem:[#allocation3 + $0x70] sm:$0xff]
        %v7998 = vld [vmem:[#allocation3 + $0x78] sm:$0xff]
        %v7999 = vld [vmem:[#allocation3 + $0x80] sm:$0xff]
        %v8000 = vld [vmem:[#allocation3 + $0x88] sm:$0x3f]
        %v8001 = vpack.c.bf16 %v7984, %v7983
        %v8002 = vpack.c.bf16 %v7986, %v7985
        %v8003 = vpack.c.bf16 %v7988, %v7987
        %v8004 = vpack.c.bf16 %v7990, %v7989
        %v8005 = vpack.c.bf16 %v7992, %v7991
        %v8006 = vpack.c.bf16 %v7994, %v7993
        %v8007 = vpack.c.bf16 %v7996, %v7995
        %v8008 = vpack.c.bf16 %v7998, %v7997
        %v8009 = vpack.c.bf16 %v8000, %v7999
        %s8010 = scalar_lea.vmem %s2, 288
        %v8011 = vld [vmem:[%s8010] sm:$0xf]
        %v8012 = vld [vmem:[%s8010 + $0x4] sm:$0xf]
        %v8013 = vld [vmem:[%s8010 + $0x8] sm:$0xf]
        %v8014 = vld [vmem:[%s8010 + $0xc] sm:$0xf]
        %v8015 = vld [vmem:[%s8010 + $0x10] sm:$0xf]
        %v8016 = vld [vmem:[%s8010 + $0x14] sm:$0xf]
        %v8017 = vld [vmem:[%s8010 + $0x18] sm:$0xf]
        %v8018 = vld [vmem:[%s8010 + $0x1c] sm:$0xf]
        %v8019 = vld [vmem:[#allocation3 + $0x1] sm:$0xff]
        %v8020 = vld [vmem:[#allocation3 + $0x9] sm:$0xff]
        %v8021 = vld [vmem:[#allocation3 + $0x11] sm:$0xff]
        %v8022 = vld [vmem:[#allocation3 + $0x19] sm:$0xff]
        %v8023 = vld [vmem:[#allocation3 + $0x21] sm:$0xff]
        %v8024 = vld [vmem:[#allocation3 + $0x29] sm:$0xff]
        %v8025 = vld [vmem:[#allocation3 + $0x31] sm:$0xff]
        %v8026 = vld [vmem:[#allocation3 + $0x39] sm:$0xff]
        %v8027 = vld [vmem:[#allocation3 + $0x41] sm:$0xff]
        %v8028 = vld [vmem:[#allocation3 + $0x49] sm:$0xff]
        %v8029 = vld [vmem:[#allocation3 + $0x51] sm:$0xff]
        %v8030 = vld [vmem:[#allocation3 + $0x59] sm:$0xff]
        %v8031 = vld [vmem:[#allocation3 + $0x61] sm:$0xff]
        %v8032 = vld [vmem:[#allocation3 + $0x69] sm:$0xff]
        %v8033 = vld [vmem:[#allocation3 + $0x71] sm:$0xff]
        %v8034 = vld [vmem:[#allocation3 + $0x79] sm:$0xff]
        %v8035 = vld [vmem:[#allocation3 + $0x81] sm:$0xff]
        %v8036 = vld [vmem:[#allocation3 + $0x89] sm:$0x3f]
        %v8037 = vpack.c.bf16 %v8020, %v8019
        %v8038 = vpack.c.bf16 %v8022, %v8021
        %v8039 = vpack.c.bf16 %v8024, %v8023
        %v8040 = vpack.c.bf16 %v8026, %v8025
        %v8041 = vpack.c.bf16 %v8028, %v8027
        %v8042 = vpack.c.bf16 %v8030, %v8029
        %v8043 = vpack.c.bf16 %v8032, %v8031
        %v8044 = vpack.c.bf16 %v8034, %v8033
        %v8045 = vpack.c.bf16 %v8036, %v8035
        %s8046 = scalar_lea.vmem %s2, 320
        %v8047 = vld [vmem:[%s8046] sm:$0xf]
        %v8048 = vld [vmem:[%s8046 + $0x4] sm:$0xf]
        %v8049 = vld [vmem:[%s8046 + $0x8] sm:$0xf]
        %v8050 = vld [vmem:[%s8046 + $0xc] sm:$0xf]
        %v8051 = vld [vmem:[%s8046 + $0x10] sm:$0xf]
        %v8052 = vld [vmem:[%s8046 + $0x14] sm:$0xf]
        %v8053 = vld [vmem:[%s8046 + $0x18] sm:$0xf]
        %v8054 = vld [vmem:[%s8046 + $0x1c] sm:$0xf]
        %v8063 = vunpack.c.l.b16 %v8047
        %v8064 = vunpack.c.l.b16 %v8048
        %v8065 = vunpack.c.l.b16 %v8049
        %v8066 = vunpack.c.l.b16 %v8050
        %v8067 = vunpack.c.l.b16 %v8051
        %v8068 = vunpack.c.l.b16 %v8052
        %v8069 = vunpack.c.l.b16 %v8053
        %v8070 = vunpack.c.l.b16 %v8054
        %v8071 = vpack.c.b16 %v8064, %v8063
        %v8072 = vpack.c.b16 %v8066, %v8065
        %v8073 = vpack.c.b16 %v8068, %v8067
        %v8074 = vpack.c.b16 %v8070, %v8069
        %v8080 = vsel %vm2712, %v8037, 0
        %v8083 = vsel %vm2712, %v8038, 0
        %v8086 = vsel %vm2712, %v8039, 0
        %v8089 = vsel %vm2712, %v8040, 0
        %v8092 = vsel %vm2712, %v8041, 0
        %v8095 = vsel %vm2712, %v8042, 0
        %v8098 = vsel %vm2712, %v8043, 0
        %v8101 = vsel %vm2712, %v8044, 0
        %v8104 = vsel %vm2712, %v8045, 0
        %8106 = vmatprep.subr.bf16.mxu0 0
        %8107 = vmatpush1.bf16.msra.mxu0 0
        %8108 = vmatprep.subr.bf16.mxu0 0
        %8109 = vmatpush1.bf16.msra.mxu0 0
        %8110 = vmatprep.subr.bf16.mxu0 0
        %8111 = vmatpush1.bf16.msra.mxu0 0
        %8112 = vmatprep.subr.bf16.mxu0 0
        %8113 = vmatpush1.bf16.msra.mxu0 0
        %8114 = vmatprep.subr.bf16.mxu0 0
        %8115 = vmatpush1.bf16.msra.mxu0 %v8074
        %8116 = vmatprep.subr.bf16.mxu0 0
        %8117 = vmatpush1.bf16.msra.mxu0 %v8073
        %8118 = vmatprep.subr.bf16.mxu0 0
        %8119 = vmatpush1.bf16.msra.mxu0 %v8072
        %8120 = vmatprep.subr.bf16.mxu0 0
        %8121 = vmatpush1.bf16.msra.mxu0 %v8071
        %8122 = vmatprep.subr.bf16.mxu0 0
        %8123 = vmatpush2.bf16.msra.mxu0 0
        %8124 = vmatprep.subr.bf16.mxu0 0
        %8125 = vmatpush2.bf16.msra.mxu0 0
        %8126 = vmatprep.subr.bf16.mxu0 0
        %8127 = vmatpush2.bf16.msra.mxu0 0
        %8128 = vmatprep.subr.bf16.mxu0 0
        %8129 = vmatpush2.bf16.msra.mxu0 0
        %8130 = vmatprep.subr.bf16.mxu0 0
        %8131 = vmatpush2.bf16.msra.mxu0 0
        %8132 = vmatprep.subr.bf16.mxu0 0
        %8133 = vmatpush2.bf16.msra.mxu0 0
        %8134 = vmatprep.subr.bf16.mxu0 0
        %8135 = vmatpush2.bf16.msra.mxu0 0
        %8136 = vmatprep.subr.bf16.mxu0 0
        %8137 = vmatpush2.bf16.msra.mxu0 0
        %8138 = vmatprep.mubr.bf16.mxu0 0
        %8139 = vmatmul.mubr.bf16.gmra.mxu0 %v8080
        %v8140 = vpop.f32.mrf.mxu0
        %v8141 = vadd.f32 0.0, %v8140
        %v8142 = vpop.f32.mrf.mxu0
        %v8143 = vpop.f32.mrf.mxu0
        %v8144 = vadd.f32 0.0, %v8143
        %v8145 = vpop.f32.mrf.mxu0
        %8146 = vmatprep.mubr.bf16.mxu0 0
        %8147 = vmatmul.mubr.bf16.gmra.mxu0 %v8083
        %v8148 = vpop.f32.mrf.mxu0
        %v8149 = vadd.f32 0.0, %v8148
        %v8150 = vpop.f32.mrf.mxu0
        %v8151 = vpop.f32.mrf.mxu0
        %v8152 = vadd.f32 0.0, %v8151
        %v8153 = vpop.f32.mrf.mxu0
        %8154 = vmatprep.mubr.bf16.mxu0 0
        %8155 = vmatmul.mubr.bf16.gmra.mxu0 %v8086
        %v8156 = vpop.f32.mrf.mxu0
        %v8157 = vadd.f32 0.0, %v8156
        %v8158 = vpop.f32.mrf.mxu0
        %v8159 = vpop.f32.mrf.mxu0
        %v8160 = vadd.f32 0.0, %v8159
        %v8161 = vpop.f32.mrf.mxu0
        %8162 = vmatprep.mubr.bf16.mxu0 0
        %8163 = vmatmul.mubr.bf16.gmra.mxu0 %v8089
        %v8164 = vpop.f32.mrf.mxu0
        %v8165 = vadd.f32 0.0, %v8164
        %v8166 = vpop.f32.mrf.mxu0
        %v8167 = vpop.f32.mrf.mxu0
        %v8168 = vadd.f32 0.0, %v8167
        %v8169 = vpop.f32.mrf.mxu0
        %8170 = vmatprep.mubr.bf16.mxu0 0
        %8171 = vmatmul.mubr.bf16.gmra.mxu0 %v8092
        %v8172 = vpop.f32.mrf.mxu0
        %v8173 = vadd.f32 0.0, %v8172
        %v8174 = vpop.f32.mrf.mxu0
        %v8175 = vpop.f32.mrf.mxu0
        %v8176 = vadd.f32 0.0, %v8175
        %v8177 = vpop.f32.mrf.mxu0
        %8178 = vmatprep.mubr.bf16.mxu0 0
        %8179 = vmatmul.mubr.bf16.gmra.mxu0 %v8095
        %v8180 = vpop.f32.mrf.mxu0
        %v8181 = vadd.f32 0.0, %v8180
        %v8182 = vpop.f32.mrf.mxu0
        %v8183 = vpop.f32.mrf.mxu0
        %v8184 = vadd.f32 0.0, %v8183
        %v8185 = vpop.f32.mrf.mxu0
        %8186 = vmatprep.mubr.bf16.mxu0 0
        %8187 = vmatmul.mubr.bf16.gmra.mxu0 %v8098
        %v8188 = vpop.f32.mrf.mxu0
        %v8189 = vadd.f32 0.0, %v8188
        %v8190 = vpop.f32.mrf.mxu0
        %v8191 = vpop.f32.mrf.mxu0
        %v8192 = vadd.f32 0.0, %v8191
        %v8193 = vpop.f32.mrf.mxu0
        %8194 = vmatprep.mubr.bf16.mxu0 0
        %8195 = vmatmul.mubr.bf16.gmra.mxu0 %v8101
        %v8196 = vpop.f32.mrf.mxu0
        %v8197 = vadd.f32 0.0, %v8196
        %v8198 = vpop.f32.mrf.mxu0
        %v8199 = vpop.f32.mrf.mxu0
        %v8200 = vadd.f32 0.0, %v8199
        %v8201 = vpop.f32.mrf.mxu0
        %8202 = vmatprep.mubr.bf16.mxu0 0
        %8203 = vmatmul.mubr.bf16.gmra.mxu0 %v8104
        %v8204 = vpop.f32.mrf.mxu0
        %v8205 = vadd.f32 0.0, %v8204
        %v8206 = vpop.f32.mrf.mxu0
        %v8207 = vpop.f32.mrf.mxu0
        %v8208 = vadd.f32 0.0, %v8207
        %v8209 = vpop.f32.mrf.mxu0
        %8210 = vdwg.mxu0
        %v8219 = vunpack.c.l.b16 %v8011
        %v8220 = vunpack.c.l.b16 %v8012
        %v8221 = vunpack.c.l.b16 %v8013
        %v8222 = vunpack.c.l.b16 %v8014
        %v8223 = vunpack.c.l.b16 %v8015
        %v8224 = vunpack.c.l.b16 %v8016
        %v8225 = vunpack.c.l.b16 %v8017
        %v8226 = vunpack.c.l.b16 %v8018
        %v8227 = vpack.c.b16 %v8220, %v8219
        %v8228 = vpack.c.b16 %v8222, %v8221
        %v8229 = vpack.c.b16 %v8224, %v8223
        %v8230 = vpack.c.b16 %v8226, %v8225
        %v8236 = vsel %vm2712, %v8001, 0
        %v8239 = vsel %vm2712, %v8002, 0
        %v8242 = vsel %vm2712, %v8003, 0
        %v8245 = vsel %vm2712, %v8004, 0
        %v8248 = vsel %vm2712, %v8005, 0
        %v8251 = vsel %vm2712, %v8006, 0
        %v8254 = vsel %vm2712, %v8007, 0
        %v8257 = vsel %vm2712, %v8008, 0
        %v8260 = vsel %vm2712, %v8009, 0
        %8262 = vmatprep.subr.bf16.mxu0 0
        %8263 = vmatpush1.bf16.msra.mxu0 0
        %8264 = vmatprep.subr.bf16.mxu0 0
        %8265 = vmatpush1.bf16.msra.mxu0 0
        %8266 = vmatprep.subr.bf16.mxu0 0
        %8267 = vmatpush1.bf16.msra.mxu0 0
        %8268 = vmatprep.subr.bf16.mxu0 0
        %8269 = vmatpush1.bf16.msra.mxu0 0
        %8270 = vmatprep.subr.bf16.mxu0 0
        %8271 = vmatpush1.bf16.msra.mxu0 %v8230
        %8272 = vmatprep.subr.bf16.mxu0 0
        %8273 = vmatpush1.bf16.msra.mxu0 %v8229
        %8274 = vmatprep.subr.bf16.mxu0 0
        %8275 = vmatpush1.bf16.msra.mxu0 %v8228
        %8276 = vmatprep.subr.bf16.mxu0 0
        %8277 = vmatpush1.bf16.msra.mxu0 %v8227
        %8278 = vmatprep.subr.bf16.mxu0 0
        %8279 = vmatpush2.bf16.msra.mxu0 0
        %8280 = vmatprep.subr.bf16.mxu0 0
        %8281 = vmatpush2.bf16.msra.mxu0 0
        %8282 = vmatprep.subr.bf16.mxu0 0
        %8283 = vmatpush2.bf16.msra.mxu0 0
        %8284 = vmatprep.subr.bf16.mxu0 0
        %8285 = vmatpush2.bf16.msra.mxu0 0
        %8286 = vmatprep.subr.bf16.mxu0 0
        %8287 = vmatpush2.bf16.msra.mxu0 0
        %8288 = vmatprep.subr.bf16.mxu0 0
        %8289 = vmatpush2.bf16.msra.mxu0 0
        %8290 = vmatprep.subr.bf16.mxu0 0
        %8291 = vmatpush2.bf16.msra.mxu0 0
        %8292 = vmatprep.subr.bf16.mxu0 0
        %8293 = vmatpush2.bf16.msra.mxu0 0
        %8294 = vmatprep.mubr.bf16.mxu0 0
        %8295 = vmatmul.mubr.bf16.gmra.mxu0 %v8236
        %v8296 = vpop.f32.mrf.mxu0
        %v8297 = vadd.f32 %v8141, %v8296
        %v8298 = vpop.f32.mrf.mxu0
        %v8299 = vpop.f32.mrf.mxu0
        %v8300 = vadd.f32 %v8144, %v8299
        %v8301 = vpop.f32.mrf.mxu0
        %8302 = vmatprep.mubr.bf16.mxu0 0
        %8303 = vmatmul.mubr.bf16.gmra.mxu0 %v8239
        %v8304 = vpop.f32.mrf.mxu0
        %v8305 = vadd.f32 %v8149, %v8304
        %v8306 = vpop.f32.mrf.mxu0
        %v8307 = vpop.f32.mrf.mxu0
        %v8308 = vadd.f32 %v8152, %v8307
        %v8309 = vpop.f32.mrf.mxu0
        %8310 = vmatprep.mubr.bf16.mxu0 0
        %8311 = vmatmul.mubr.bf16.gmra.mxu0 %v8242
        %v8312 = vpop.f32.mrf.mxu0
        %v8313 = vadd.f32 %v8157, %v8312
        %v8314 = vpop.f32.mrf.mxu0
        %v8315 = vpop.f32.mrf.mxu0
        %v8316 = vadd.f32 %v8160, %v8315
        %v8317 = vpop.f32.mrf.mxu0
        %8318 = vmatprep.mubr.bf16.mxu0 0
        %8319 = vmatmul.mubr.bf16.gmra.mxu0 %v8245
        %v8320 = vpop.f32.mrf.mxu0
        %v8321 = vadd.f32 %v8165, %v8320
        %v8322 = vpop.f32.mrf.mxu0
        %v8323 = vpop.f32.mrf.mxu0
        %v8324 = vadd.f32 %v8168, %v8323
        %v8325 = vpop.f32.mrf.mxu0
        %8326 = vmatprep.mubr.bf16.mxu0 0
        %8327 = vmatmul.mubr.bf16.gmra.mxu0 %v8248
        %v8328 = vpop.f32.mrf.mxu0
        %v8329 = vadd.f32 %v8173, %v8328
        %v8330 = vpop.f32.mrf.mxu0
        %v8331 = vpop.f32.mrf.mxu0
        %v8332 = vadd.f32 %v8176, %v8331
        %v8333 = vpop.f32.mrf.mxu0
        %8334 = vmatprep.mubr.bf16.mxu0 0
        %8335 = vmatmul.mubr.bf16.gmra.mxu0 %v8251
        %v8336 = vpop.f32.mrf.mxu0
        %v8337 = vadd.f32 %v8181, %v8336
        %v8338 = vpop.f32.mrf.mxu0
        %v8339 = vpop.f32.mrf.mxu0
        %v8340 = vadd.f32 %v8184, %v8339
        %v8341 = vpop.f32.mrf.mxu0
        %8342 = vmatprep.mubr.bf16.mxu0 0
        %8343 = vmatmul.mubr.bf16.gmra.mxu0 %v8254
        %v8344 = vpop.f32.mrf.mxu0
        %v8345 = vadd.f32 %v8189, %v8344
        %v8346 = vpop.f32.mrf.mxu0
        %v8347 = vpop.f32.mrf.mxu0
        %v8348 = vadd.f32 %v8192, %v8347
        %v8349 = vpop.f32.mrf.mxu0
        %8350 = vmatprep.mubr.bf16.mxu0 0
        %8351 = vmatmul.mubr.bf16.gmra.mxu0 %v8257
        %v8352 = vpop.f32.mrf.mxu0
        %v8353 = vadd.f32 %v8197, %v8352
        %v8354 = vpop.f32.mrf.mxu0
        %v8355 = vpop.f32.mrf.mxu0
        %v8356 = vadd.f32 %v8200, %v8355
        %v8357 = vpop.f32.mrf.mxu0
        %8358 = vmatprep.mubr.bf16.mxu0 0
        %8359 = vmatmul.mubr.bf16.gmra.mxu0 %v8260
        %v8360 = vpop.f32.mrf.mxu0
        %v8361 = vadd.f32 %v8205, %v8360
        %v8362 = vpop.f32.mrf.mxu0
        %v8363 = vpop.f32.mrf.mxu0
        %v8364 = vadd.f32 %v8208, %v8363
        %v8365 = vpop.f32.mrf.mxu0
        %8366 = vdwg.mxu0
        %v8367 = vld [vmem:[#allocation3 + $0x2] sm:$0xff]
        %v8368 = vld [vmem:[#allocation3 + $0xa] sm:$0xff]
        %v8369 = vld [vmem:[#allocation3 + $0x12] sm:$0xff]
        %v8370 = vld [vmem:[#allocation3 + $0x1a] sm:$0xff]
        %v8371 = vld [vmem:[#allocation3 + $0x22] sm:$0xff]
        %v8372 = vld [vmem:[#allocation3 + $0x2a] sm:$0xff]
        %v8373 = vld [vmem:[#allocation3 + $0x32] sm:$0xff]
        %v8374 = vld [vmem:[#allocation3 + $0x3a] sm:$0xff]
        %v8375 = vld [vmem:[#allocation3 + $0x42] sm:$0xff]
        %v8376 = vld [vmem:[#allocation3 + $0x4a] sm:$0xff]
        %v8377 = vld [vmem:[#allocation3 + $0x52] sm:$0xff]
        %v8378 = vld [vmem:[#allocation3 + $0x5a] sm:$0xff]
        %v8379 = vld [vmem:[#allocation3 + $0x62] sm:$0xff]
        %v8380 = vld [vmem:[#allocation3 + $0x6a] sm:$0xff]
        %v8381 = vld [vmem:[#allocation3 + $0x72] sm:$0xff]
        %v8382 = vld [vmem:[#allocation3 + $0x7a] sm:$0xff]
        %v8383 = vld [vmem:[#allocation3 + $0x82] sm:$0xff]
        %v8384 = vld [vmem:[#allocation3 + $0x8a] sm:$0x3f]
        %v8385 = vpack.c.bf16 %v8368, %v8367
        %v8386 = vpack.c.bf16 %v8370, %v8369
        %v8387 = vpack.c.bf16 %v8372, %v8371
        %v8388 = vpack.c.bf16 %v8374, %v8373
        %v8389 = vpack.c.bf16 %v8376, %v8375
        %v8390 = vpack.c.bf16 %v8378, %v8377
        %v8391 = vpack.c.bf16 %v8380, %v8379
        %v8392 = vpack.c.bf16 %v8382, %v8381
        %v8393 = vpack.c.bf16 %v8384, %v8383
        %s8394 = scalar_lea.vmem %s2, 352
        %v8395 = vld [vmem:[%s8394] sm:$0xf]
        %v8396 = vld [vmem:[%s8394 + $0x4] sm:$0xf]
        %v8397 = vld [vmem:[%s8394 + $0x8] sm:$0xf]
        %v8398 = vld [vmem:[%s8394 + $0xc] sm:$0xf]
        %v8399 = vld [vmem:[%s8394 + $0x10] sm:$0xf]
        %v8400 = vld [vmem:[%s8394 + $0x14] sm:$0xf]
        %v8401 = vld [vmem:[%s8394 + $0x18] sm:$0xf]
        %v8402 = vld [vmem:[%s8394 + $0x1c] sm:$0xf]
        %v8411 = vunpack.c.l.b16 %v8395
        %v8412 = vunpack.c.l.b16 %v8396
        %v8413 = vunpack.c.l.b16 %v8397
        %v8414 = vunpack.c.l.b16 %v8398
        %v8415 = vunpack.c.l.b16 %v8399
        %v8416 = vunpack.c.l.b16 %v8400
        %v8417 = vunpack.c.l.b16 %v8401
        %v8418 = vunpack.c.l.b16 %v8402
        %v8419 = vpack.c.b16 %v8412, %v8411
        %v8420 = vpack.c.b16 %v8414, %v8413
        %v8421 = vpack.c.b16 %v8416, %v8415
        %v8422 = vpack.c.b16 %v8418, %v8417
        %v8428 = vsel %vm2712, %v8385, 0
        %v8431 = vsel %vm2712, %v8386, 0
        %v8434 = vsel %vm2712, %v8387, 0
        %v8437 = vsel %vm2712, %v8388, 0
        %v8440 = vsel %vm2712, %v8389, 0
        %v8443 = vsel %vm2712, %v8390, 0
        %v8446 = vsel %vm2712, %v8391, 0
        %v8449 = vsel %vm2712, %v8392, 0
        %v8452 = vsel %vm2712, %v8393, 0
        %8454 = vmatprep.subr.bf16.mxu0 0
        %8455 = vmatpush1.bf16.msra.mxu0 0
        %8456 = vmatprep.subr.bf16.mxu0 0
        %8457 = vmatpush1.bf16.msra.mxu0 0
        %8458 = vmatprep.subr.bf16.mxu0 0
        %8459 = vmatpush1.bf16.msra.mxu0 0
        %8460 = vmatprep.subr.bf16.mxu0 0
        %8461 = vmatpush1.bf16.msra.mxu0 0
        %8462 = vmatprep.subr.bf16.mxu0 0
        %8463 = vmatpush1.bf16.msra.mxu0 %v8422
        %8464 = vmatprep.subr.bf16.mxu0 0
        %8465 = vmatpush1.bf16.msra.mxu0 %v8421
        %8466 = vmatprep.subr.bf16.mxu0 0
        %8467 = vmatpush1.bf16.msra.mxu0 %v8420
        %8468 = vmatprep.subr.bf16.mxu0 0
        %8469 = vmatpush1.bf16.msra.mxu0 %v8419
        %8470 = vmatprep.subr.bf16.mxu0 0
        %8471 = vmatpush2.bf16.msra.mxu0 0
        %8472 = vmatprep.subr.bf16.mxu0 0
        %8473 = vmatpush2.bf16.msra.mxu0 0
        %8474 = vmatprep.subr.bf16.mxu0 0
        %8475 = vmatpush2.bf16.msra.mxu0 0
        %8476 = vmatprep.subr.bf16.mxu0 0
        %8477 = vmatpush2.bf16.msra.mxu0 0
        %8478 = vmatprep.subr.bf16.mxu0 0
        %8479 = vmatpush2.bf16.msra.mxu0 0
        %8480 = vmatprep.subr.bf16.mxu0 0
        %8481 = vmatpush2.bf16.msra.mxu0 0
        %8482 = vmatprep.subr.bf16.mxu0 0
        %8483 = vmatpush2.bf16.msra.mxu0 0
        %8484 = vmatprep.subr.bf16.mxu0 0
        %8485 = vmatpush2.bf16.msra.mxu0 0
        %8486 = vmatprep.mubr.bf16.mxu0 0
        %8487 = vmatmul.mubr.bf16.gmra.mxu0 %v8428
        %v8488 = vpop.f32.mrf.mxu0
        %v8489 = vadd.f32 0.0, %v8488
        %v8490 = vpop.f32.mrf.mxu0
        %v8491 = vpop.f32.mrf.mxu0
        %v8492 = vadd.f32 0.0, %v8491
        %v8493 = vpop.f32.mrf.mxu0
        %8494 = vmatprep.mubr.bf16.mxu0 0
        %8495 = vmatmul.mubr.bf16.gmra.mxu0 %v8431
        %v8496 = vpop.f32.mrf.mxu0
        %v8497 = vadd.f32 0.0, %v8496
        %v8498 = vpop.f32.mrf.mxu0
        %v8499 = vpop.f32.mrf.mxu0
        %v8500 = vadd.f32 0.0, %v8499
        %v8501 = vpop.f32.mrf.mxu0
        %8502 = vmatprep.mubr.bf16.mxu0 0
        %8503 = vmatmul.mubr.bf16.gmra.mxu0 %v8434
        %v8504 = vpop.f32.mrf.mxu0
        %v8505 = vadd.f32 0.0, %v8504
        %v8506 = vpop.f32.mrf.mxu0
        %v8507 = vpop.f32.mrf.mxu0
        %v8508 = vadd.f32 0.0, %v8507
        %v8509 = vpop.f32.mrf.mxu0
        %8510 = vmatprep.mubr.bf16.mxu0 0
        %8511 = vmatmul.mubr.bf16.gmra.mxu0 %v8437
        %v8512 = vpop.f32.mrf.mxu0
        %v8513 = vadd.f32 0.0, %v8512
        %v8514 = vpop.f32.mrf.mxu0
        %v8515 = vpop.f32.mrf.mxu0
        %v8516 = vadd.f32 0.0, %v8515
        %v8517 = vpop.f32.mrf.mxu0
        %8518 = vmatprep.mubr.bf16.mxu0 0
        %8519 = vmatmul.mubr.bf16.gmra.mxu0 %v8440
        %v8520 = vpop.f32.mrf.mxu0
        %v8521 = vadd.f32 0.0, %v8520
        %v8522 = vpop.f32.mrf.mxu0
        %v8523 = vpop.f32.mrf.mxu0
        %v8524 = vadd.f32 0.0, %v8523
        %v8525 = vpop.f32.mrf.mxu0
        %8526 = vmatprep.mubr.bf16.mxu0 0
        %8527 = vmatmul.mubr.bf16.gmra.mxu0 %v8443
        %v8528 = vpop.f32.mrf.mxu0
        %v8529 = vadd.f32 0.0, %v8528
        %v8530 = vpop.f32.mrf.mxu0
        %v8531 = vpop.f32.mrf.mxu0
        %v8532 = vadd.f32 0.0, %v8531
        %v8533 = vpop.f32.mrf.mxu0
        %8534 = vmatprep.mubr.bf16.mxu0 0
        %8535 = vmatmul.mubr.bf16.gmra.mxu0 %v8446
        %v8536 = vpop.f32.mrf.mxu0
        %v8537 = vadd.f32 0.0, %v8536
        %v8538 = vpop.f32.mrf.mxu0
        %v8539 = vpop.f32.mrf.mxu0
        %v8540 = vadd.f32 0.0, %v8539
        %v8541 = vpop.f32.mrf.mxu0
        %8542 = vmatprep.mubr.bf16.mxu0 0
        %8543 = vmatmul.mubr.bf16.gmra.mxu0 %v8449
        %v8544 = vpop.f32.mrf.mxu0
        %v8545 = vadd.f32 0.0, %v8544
        %v8546 = vpop.f32.mrf.mxu0
        %v8547 = vpop.f32.mrf.mxu0
        %v8548 = vadd.f32 0.0, %v8547
        %v8549 = vpop.f32.mrf.mxu0
        %8550 = vmatprep.mubr.bf16.mxu0 0
        %8551 = vmatmul.mubr.bf16.gmra.mxu0 %v8452
        %v8552 = vpop.f32.mrf.mxu0
        %v8553 = vadd.f32 0.0, %v8552
        %v8554 = vpop.f32.mrf.mxu0
        %v8555 = vpop.f32.mrf.mxu0
        %v8556 = vadd.f32 0.0, %v8555
        %v8557 = vpop.f32.mrf.mxu0
        %8558 = vdwg.mxu0
        %v8559 = vadd.f32 %v8297, %v8489
        %v8560 = vadd.f32 %v8300, %v8492
        %v8561 = vadd.f32 %v8305, %v8497
        %v8562 = vadd.f32 %v8308, %v8500
        %v8563 = vadd.f32 %v8313, %v8505
        %v8564 = vadd.f32 %v8316, %v8508
        %v8565 = vadd.f32 %v8321, %v8513
        %v8566 = vadd.f32 %v8324, %v8516
        %v8567 = vadd.f32 %v8329, %v8521
        %v8568 = vadd.f32 %v8332, %v8524
        %v8569 = vadd.f32 %v8337, %v8529
        %v8570 = vadd.f32 %v8340, %v8532
        %v8571 = vadd.f32 %v8345, %v8537
        %v8572 = vadd.f32 %v8348, %v8540
        %v8573 = vadd.f32 %v8353, %v8545
        %v8574 = vadd.f32 %v8356, %v8548
        %v8575 = vadd.f32 %v8361, %v8553
        %v8576 = vadd.f32 %v8364, %v8556
        %v8577 = vld [vmem:[#allocation3 + $0x6] sm:$0xff]
        %v8578 = vld [vmem:[#allocation3 + $0xe] sm:$0xff]
        %v8579 = vld [vmem:[#allocation3 + $0x16] sm:$0xff]
        %v8580 = vld [vmem:[#allocation3 + $0x1e] sm:$0xff]
        %v8581 = vld [vmem:[#allocation3 + $0x26] sm:$0xff]
        %v8582 = vld [vmem:[#allocation3 + $0x2e] sm:$0xff]
        %v8583 = vld [vmem:[#allocation3 + $0x36] sm:$0xff]
        %v8584 = vld [vmem:[#allocation3 + $0x3e] sm:$0xff]
        %v8585 = vld [vmem:[#allocation3 + $0x46] sm:$0xff]
        %v8586 = vld [vmem:[#allocation3 + $0x4e] sm:$0xff]
        %v8587 = vld [vmem:[#allocation3 + $0x56] sm:$0xff]
        %v8588 = vld [vmem:[#allocation3 + $0x5e] sm:$0xff]
        %v8589 = vld [vmem:[#allocation3 + $0x66] sm:$0xff]
        %v8590 = vld [vmem:[#allocation3 + $0x6e] sm:$0xff]
        %v8591 = vld [vmem:[#allocation3 + $0x76] sm:$0xff]
        %v8592 = vld [vmem:[#allocation3 + $0x7e] sm:$0xff]
        %v8593 = vld [vmem:[#allocation3 + $0x86] sm:$0xff]
        %v8594 = vld [vmem:[#allocation3 + $0x8e] sm:$0x3f]
        %v8595 = vpack.c.bf16 %v8578, %v8577
        %v8596 = vpack.c.bf16 %v8580, %v8579
        %v8597 = vpack.c.bf16 %v8582, %v8581
        %v8598 = vpack.c.bf16 %v8584, %v8583
        %v8599 = vpack.c.bf16 %v8586, %v8585
        %v8600 = vpack.c.bf16 %v8588, %v8587
        %v8601 = vpack.c.bf16 %v8590, %v8589
        %v8602 = vpack.c.bf16 %v8592, %v8591
        %v8603 = vpack.c.bf16 %v8594, %v8593
        %s8604 = scalar_lea.vmem %s2, 384
        %v8605 = vld [vmem:[%s8604] sm:$0xf]
        %v8606 = vld [vmem:[%s8604 + $0x4] sm:$0xf]
        %v8607 = vld [vmem:[%s8604 + $0x8] sm:$0xf]
        %v8608 = vld [vmem:[%s8604 + $0xc] sm:$0xf]
        %v8609 = vld [vmem:[%s8604 + $0x10] sm:$0xf]
        %v8610 = vld [vmem:[%s8604 + $0x14] sm:$0xf]
        %v8611 = vld [vmem:[%s8604 + $0x18] sm:$0xf]
        %v8612 = vld [vmem:[%s8604 + $0x1c] sm:$0xf]
        %v8621 = vunpack.c.l.b16 %v8605
        %v8622 = vunpack.c.l.b16 %v8606
        %v8623 = vunpack.c.l.b16 %v8607
        %v8624 = vunpack.c.l.b16 %v8608
        %v8625 = vunpack.c.l.b16 %v8609
        %v8626 = vunpack.c.l.b16 %v8610
        %v8627 = vunpack.c.l.b16 %v8611
        %v8628 = vunpack.c.l.b16 %v8612
        %v8629 = vpack.c.b16 %v8622, %v8621
        %v8630 = vpack.c.b16 %v8624, %v8623
        %v8631 = vpack.c.b16 %v8626, %v8625
        %v8632 = vpack.c.b16 %v8628, %v8627
        %v8638 = vsel %vm2712, %v8595, 0
        %v8641 = vsel %vm2712, %v8596, 0
        %v8644 = vsel %vm2712, %v8597, 0
        %v8647 = vsel %vm2712, %v8598, 0
        %v8650 = vsel %vm2712, %v8599, 0
        %v8653 = vsel %vm2712, %v8600, 0
        %v8656 = vsel %vm2712, %v8601, 0
        %v8659 = vsel %vm2712, %v8602, 0
        %v8662 = vsel %vm2712, %v8603, 0
        %8664 = vmatprep.subr.bf16.mxu0 0
        %8665 = vmatpush1.bf16.msra.mxu0 0
        %8666 = vmatprep.subr.bf16.mxu0 0
        %8667 = vmatpush1.bf16.msra.mxu0 0
        %8668 = vmatprep.subr.bf16.mxu0 0
        %8669 = vmatpush1.bf16.msra.mxu0 0
        %8670 = vmatprep.subr.bf16.mxu0 0
        %8671 = vmatpush1.bf16.msra.mxu0 0
        %8672 = vmatprep.subr.bf16.mxu0 0
        %8673 = vmatpush1.bf16.msra.mxu0 %v8632
        %8674 = vmatprep.subr.bf16.mxu0 0
        %8675 = vmatpush1.bf16.msra.mxu0 %v8631
        %8676 = vmatprep.subr.bf16.mxu0 0
        %8677 = vmatpush1.bf16.msra.mxu0 %v8630
        %8678 = vmatprep.subr.bf16.mxu0 0
        %8679 = vmatpush1.bf16.msra.mxu0 %v8629
        %8680 = vmatprep.subr.bf16.mxu0 0
        %8681 = vmatpush2.bf16.msra.mxu0 0
        %8682 = vmatprep.subr.bf16.mxu0 0
        %8683 = vmatpush2.bf16.msra.mxu0 0
        %8684 = vmatprep.subr.bf16.mxu0 0
        %8685 = vmatpush2.bf16.msra.mxu0 0
        %8686 = vmatprep.subr.bf16.mxu0 0
        %8687 = vmatpush2.bf16.msra.mxu0 0
        %8688 = vmatprep.subr.bf16.mxu0 0
        %8689 = vmatpush2.bf16.msra.mxu0 0
        %8690 = vmatprep.subr.bf16.mxu0 0
        %8691 = vmatpush2.bf16.msra.mxu0 0
        %8692 = vmatprep.subr.bf16.mxu0 0
        %8693 = vmatpush2.bf16.msra.mxu0 0
        %8694 = vmatprep.subr.bf16.mxu0 0
        %8695 = vmatpush2.bf16.msra.mxu0 0
        %8696 = vmatprep.mubr.bf16.mxu0 0
        %8697 = vmatmul.mubr.bf16.gmra.mxu0 %v8638
        %v8698 = vpop.f32.mrf.mxu0
        %v8699 = vadd.f32 0.0, %v8698
        %v8700 = vpop.f32.mrf.mxu0
        %v8701 = vpop.f32.mrf.mxu0
        %v8702 = vadd.f32 0.0, %v8701
        %v8703 = vpop.f32.mrf.mxu0
        %8704 = vmatprep.mubr.bf16.mxu0 0
        %8705 = vmatmul.mubr.bf16.gmra.mxu0 %v8641
        %v8706 = vpop.f32.mrf.mxu0
        %v8707 = vadd.f32 0.0, %v8706
        %v8708 = vpop.f32.mrf.mxu0
        %v8709 = vpop.f32.mrf.mxu0
        %v8710 = vadd.f32 0.0, %v8709
        %v8711 = vpop.f32.mrf.mxu0
        %8712 = vmatprep.mubr.bf16.mxu0 0
        %8713 = vmatmul.mubr.bf16.gmra.mxu0 %v8644
        %v8714 = vpop.f32.mrf.mxu0
        %v8715 = vadd.f32 0.0, %v8714
        %v8716 = vpop.f32.mrf.mxu0
        %v8717 = vpop.f32.mrf.mxu0
        %v8718 = vadd.f32 0.0, %v8717
        %v8719 = vpop.f32.mrf.mxu0
        %8720 = vmatprep.mubr.bf16.mxu0 0
        %8721 = vmatmul.mubr.bf16.gmra.mxu0 %v8647
        %v8722 = vpop.f32.mrf.mxu0
        %v8723 = vadd.f32 0.0, %v8722
        %v8724 = vpop.f32.mrf.mxu0
        %v8725 = vpop.f32.mrf.mxu0
        %v8726 = vadd.f32 0.0, %v8725
        %v8727 = vpop.f32.mrf.mxu0
        %8728 = vmatprep.mubr.bf16.mxu0 0
        %8729 = vmatmul.mubr.bf16.gmra.mxu0 %v8650
        %v8730 = vpop.f32.mrf.mxu0
        %v8731 = vadd.f32 0.0, %v8730
        %v8732 = vpop.f32.mrf.mxu0
        %v8733 = vpop.f32.mrf.mxu0
        %v8734 = vadd.f32 0.0, %v8733
        %v8735 = vpop.f32.mrf.mxu0
        %8736 = vmatprep.mubr.bf16.mxu0 0
        %8737 = vmatmul.mubr.bf16.gmra.mxu0 %v8653
        %v8738 = vpop.f32.mrf.mxu0
        %v8739 = vadd.f32 0.0, %v8738
        %v8740 = vpop.f32.mrf.mxu0
        %v8741 = vpop.f32.mrf.mxu0
        %v8742 = vadd.f32 0.0, %v8741
        %v8743 = vpop.f32.mrf.mxu0
        %8744 = vmatprep.mubr.bf16.mxu0 0
        %8745 = vmatmul.mubr.bf16.gmra.mxu0 %v8656
        %v8746 = vpop.f32.mrf.mxu0
        %v8747 = vadd.f32 0.0, %v8746
        %v8748 = vpop.f32.mrf.mxu0
        %v8749 = vpop.f32.mrf.mxu0
        %v8750 = vadd.f32 0.0, %v8749
        %v8751 = vpop.f32.mrf.mxu0
        %8752 = vmatprep.mubr.bf16.mxu0 0
        %8753 = vmatmul.mubr.bf16.gmra.mxu0 %v8659
        %v8754 = vpop.f32.mrf.mxu0
        %v8755 = vadd.f32 0.0, %v8754
        %v8756 = vpop.f32.mrf.mxu0
        %v8757 = vpop.f32.mrf.mxu0
        %v8758 = vadd.f32 0.0, %v8757
        %v8759 = vpop.f32.mrf.mxu0
        %8760 = vmatprep.mubr.bf16.mxu0 0
        %8761 = vmatmul.mubr.bf16.gmra.mxu0 %v8662
        %v8762 = vpop.f32.mrf.mxu0
        %v8763 = vadd.f32 0.0, %v8762
        %v8764 = vpop.f32.mrf.mxu0
        %v8765 = vpop.f32.mrf.mxu0
        %v8766 = vadd.f32 0.0, %v8765
        %v8767 = vpop.f32.mrf.mxu0
        %8768 = vdwg.mxu0
        %v8769 = vadd.f32 %v8559, %v8699
        %v8770 = vadd.f32 %v8560, %v8702
        %v8771 = vadd.f32 %v8561, %v8707
        %v8772 = vadd.f32 %v8562, %v8710
        %v8773 = vadd.f32 %v8563, %v8715
        %v8774 = vadd.f32 %v8564, %v8718
        %v8775 = vadd.f32 %v8565, %v8723
        %v8776 = vadd.f32 %v8566, %v8726
        %v8777 = vadd.f32 %v8567, %v8731
        %v8778 = vadd.f32 %v8568, %v8734
        %v8779 = vadd.f32 %v8569, %v8739
        %v8780 = vadd.f32 %v8570, %v8742
        %v8781 = vadd.f32 %v8571, %v8747
        %v8782 = vadd.f32 %v8572, %v8750
        %v8783 = vadd.f32 %v8573, %v8755
        %v8784 = vadd.f32 %v8574, %v8758
        %v8785 = vadd.f32 %v8575, %v8763
        %v8786 = vadd.f32 %v8576, %v8766
        %v8787 = vld [vmem:[#allocation3 + $0x7] sm:$0xff]
        %v8788 = vld [vmem:[#allocation3 + $0xf] sm:$0xff]
        %v8789 = vld [vmem:[#allocation3 + $0x17] sm:$0xff]
        %v8790 = vld [vmem:[#allocation3 + $0x1f] sm:$0xff]
        %v8791 = vld [vmem:[#allocation3 + $0x27] sm:$0xff]
        %v8792 = vld [vmem:[#allocation3 + $0x2f] sm:$0xff]
        %v8793 = vld [vmem:[#allocation3 + $0x37] sm:$0xff]
        %v8794 = vld [vmem:[#allocation3 + $0x3f] sm:$0xff]
        %v8795 = vld [vmem:[#allocation3 + $0x47] sm:$0xff]
        %v8796 = vld [vmem:[#allocation3 + $0x4f] sm:$0xff]
        %v8797 = vld [vmem:[#allocation3 + $0x57] sm:$0xff]
        %v8798 = vld [vmem:[#allocation3 + $0x5f] sm:$0xff]
        %v8799 = vld [vmem:[#allocation3 + $0x67] sm:$0xff]
        %v8800 = vld [vmem:[#allocation3 + $0x6f] sm:$0xff]
        %v8801 = vld [vmem:[#allocation3 + $0x77] sm:$0xff]
        %v8802 = vld [vmem:[#allocation3 + $0x7f] sm:$0xff]
        %v8803 = vld [vmem:[#allocation3 + $0x87] sm:$0xff]
        %v8804 = vld [vmem:[#allocation3 + $0x8f] sm:$0x3f]
        %v8805 = vpack.c.bf16 %v8788, %v8787
        %v8806 = vpack.c.bf16 %v8790, %v8789
        %v8807 = vpack.c.bf16 %v8792, %v8791
        %v8808 = vpack.c.bf16 %v8794, %v8793
        %v8809 = vpack.c.bf16 %v8796, %v8795
        %v8810 = vpack.c.bf16 %v8798, %v8797
        %v8811 = vpack.c.bf16 %v8800, %v8799
        %v8812 = vpack.c.bf16 %v8802, %v8801
        %v8813 = vpack.c.bf16 %v8804, %v8803
        %s8814 = scalar_lea.vmem %s2, 416
        %v8815 = vld [vmem:[%s8814] sm:$0xf]
        %v8816 = vld [vmem:[%s8814 + $0x4] sm:$0xf]
        %v8817 = vld [vmem:[%s8814 + $0x8] sm:$0xf]
        %v8818 = vld [vmem:[%s8814 + $0xc] sm:$0xf]
        %v8819 = vld [vmem:[%s8814 + $0x10] sm:$0xf]
        %v8820 = vld [vmem:[%s8814 + $0x14] sm:$0xf]
        %v8821 = vld [vmem:[%s8814 + $0x18] sm:$0xf]
        %v8822 = vld [vmem:[%s8814 + $0x1c] sm:$0xf]
        %v8831 = vunpack.c.l.b16 %v8815
        %v8832 = vunpack.c.l.b16 %v8816
        %v8833 = vunpack.c.l.b16 %v8817
        %v8834 = vunpack.c.l.b16 %v8818
        %v8835 = vunpack.c.l.b16 %v8819
        %v8836 = vunpack.c.l.b16 %v8820
        %v8837 = vunpack.c.l.b16 %v8821
        %v8838 = vunpack.c.l.b16 %v8822
        %v8839 = vpack.c.b16 %v8832, %v8831
        %v8840 = vpack.c.b16 %v8834, %v8833
        %v8841 = vpack.c.b16 %v8836, %v8835
        %v8842 = vpack.c.b16 %v8838, %v8837
        %v8848 = vsel %vm2712, %v8805, 0
        %v8851 = vsel %vm2712, %v8806, 0
        %v8854 = vsel %vm2712, %v8807, 0
        %v8857 = vsel %vm2712, %v8808, 0
        %v8860 = vsel %vm2712, %v8809, 0
        %v8863 = vsel %vm2712, %v8810, 0
        %v8866 = vsel %vm2712, %v8811, 0
        %v8869 = vsel %vm2712, %v8812, 0
        %v8872 = vsel %vm2712, %v8813, 0
        %8874 = vmatprep.subr.bf16.mxu0 0
        %8875 = vmatpush1.bf16.msra.mxu0 0
        %8876 = vmatprep.subr.bf16.mxu0 0
        %8877 = vmatpush1.bf16.msra.mxu0 0
        %8878 = vmatprep.subr.bf16.mxu0 0
        %8879 = vmatpush1.bf16.msra.mxu0 0
        %8880 = vmatprep.subr.bf16.mxu0 0
        %8881 = vmatpush1.bf16.msra.mxu0 0
        %8882 = vmatprep.subr.bf16.mxu0 0
        %8883 = vmatpush1.bf16.msra.mxu0 %v8842
        %8884 = vmatprep.subr.bf16.mxu0 0
        %8885 = vmatpush1.bf16.msra.mxu0 %v8841
        %8886 = vmatprep.subr.bf16.mxu0 0
        %8887 = vmatpush1.bf16.msra.mxu0 %v8840
        %8888 = vmatprep.subr.bf16.mxu0 0
        %8889 = vmatpush1.bf16.msra.mxu0 %v8839
        %8890 = vmatprep.subr.bf16.mxu0 0
        %8891 = vmatpush2.bf16.msra.mxu0 0
        %8892 = vmatprep.subr.bf16.mxu0 0
        %8893 = vmatpush2.bf16.msra.mxu0 0
        %8894 = vmatprep.subr.bf16.mxu0 0
        %8895 = vmatpush2.bf16.msra.mxu0 0
        %8896 = vmatprep.subr.bf16.mxu0 0
        %8897 = vmatpush2.bf16.msra.mxu0 0
        %8898 = vmatprep.subr.bf16.mxu0 0
        %8899 = vmatpush2.bf16.msra.mxu0 0
        %8900 = vmatprep.subr.bf16.mxu0 0
        %8901 = vmatpush2.bf16.msra.mxu0 0
        %8902 = vmatprep.subr.bf16.mxu0 0
        %8903 = vmatpush2.bf16.msra.mxu0 0
        %8904 = vmatprep.subr.bf16.mxu0 0
        %8905 = vmatpush2.bf16.msra.mxu0 0
        %8906 = vmatprep.mubr.bf16.mxu0 0
        %8907 = vmatmul.mubr.bf16.gmra.mxu0 %v8848
        %v8908 = vpop.f32.mrf.mxu0
        %v8909 = vadd.f32 0.0, %v8908
        %v8910 = vpop.f32.mrf.mxu0
        %v8911 = vpop.f32.mrf.mxu0
        %v8912 = vadd.f32 0.0, %v8911
        %v8913 = vpop.f32.mrf.mxu0
        %8914 = vmatprep.mubr.bf16.mxu0 0
        %8915 = vmatmul.mubr.bf16.gmra.mxu0 %v8851
        %v8916 = vpop.f32.mrf.mxu0
        %v8917 = vadd.f32 0.0, %v8916
        %v8918 = vpop.f32.mrf.mxu0
        %v8919 = vpop.f32.mrf.mxu0
        %v8920 = vadd.f32 0.0, %v8919
        %v8921 = vpop.f32.mrf.mxu0
        %8922 = vmatprep.mubr.bf16.mxu0 0
        %8923 = vmatmul.mubr.bf16.gmra.mxu0 %v8854
        %v8924 = vpop.f32.mrf.mxu0
        %v8925 = vadd.f32 0.0, %v8924
        %v8926 = vpop.f32.mrf.mxu0
        %v8927 = vpop.f32.mrf.mxu0
        %v8928 = vadd.f32 0.0, %v8927
        %v8929 = vpop.f32.mrf.mxu0
        %8930 = vmatprep.mubr.bf16.mxu0 0
        %8931 = vmatmul.mubr.bf16.gmra.mxu0 %v8857
        %v8932 = vpop.f32.mrf.mxu0
        %v8933 = vadd.f32 0.0, %v8932
        %v8934 = vpop.f32.mrf.mxu0
        %v8935 = vpop.f32.mrf.mxu0
        %v8936 = vadd.f32 0.0, %v8935
        %v8937 = vpop.f32.mrf.mxu0
        %8938 = vmatprep.mubr.bf16.mxu0 0
        %8939 = vmatmul.mubr.bf16.gmra.mxu0 %v8860
        %v8940 = vpop.f32.mrf.mxu0
        %v8941 = vadd.f32 0.0, %v8940
        %v8942 = vpop.f32.mrf.mxu0
        %v8943 = vpop.f32.mrf.mxu0
        %v8944 = vadd.f32 0.0, %v8943
        %v8945 = vpop.f32.mrf.mxu0
        %8946 = vmatprep.mubr.bf16.mxu0 0
        %8947 = vmatmul.mubr.bf16.gmra.mxu0 %v8863
        %v8948 = vpop.f32.mrf.mxu0
        %v8949 = vadd.f32 0.0, %v8948
        %v8950 = vpop.f32.mrf.mxu0
        %v8951 = vpop.f32.mrf.mxu0
        %v8952 = vadd.f32 0.0, %v8951
        %v8953 = vpop.f32.mrf.mxu0
        %8954 = vmatprep.mubr.bf16.mxu0 0
        %8955 = vmatmul.mubr.bf16.gmra.mxu0 %v8866
        %v8956 = vpop.f32.mrf.mxu0
        %v8957 = vadd.f32 0.0, %v8956
        %v8958 = vpop.f32.mrf.mxu0
        %v8959 = vpop.f32.mrf.mxu0
        %v8960 = vadd.f32 0.0, %v8959
        %v8961 = vpop.f32.mrf.mxu0
        %8962 = vmatprep.mubr.bf16.mxu0 0
        %8963 = vmatmul.mubr.bf16.gmra.mxu0 %v8869
        %v8964 = vpop.f32.mrf.mxu0
        %v8965 = vadd.f32 0.0, %v8964
        %v8966 = vpop.f32.mrf.mxu0
        %v8967 = vpop.f32.mrf.mxu0
        %v8968 = vadd.f32 0.0, %v8967
        %v8969 = vpop.f32.mrf.mxu0
        %8970 = vmatprep.mubr.bf16.mxu0 0
        %8971 = vmatmul.mubr.bf16.gmra.mxu0 %v8872
        %v8972 = vpop.f32.mrf.mxu0
        %v8973 = vadd.f32 0.0, %v8972
        %v8974 = vpop.f32.mrf.mxu0
        %v8975 = vpop.f32.mrf.mxu0
        %v8976 = vadd.f32 0.0, %v8975
        %v8977 = vpop.f32.mrf.mxu0
        %8978 = vdwg.mxu0
        %v8979 = vadd.f32 %v8769, %v8909
        %v8980 = vadd.f32 %v8770, %v8912
        %v8981 = vadd.f32 %v8771, %v8917
        %v8982 = vadd.f32 %v8772, %v8920
        %v8983 = vadd.f32 %v8773, %v8925
        %v8984 = vadd.f32 %v8774, %v8928
        %v8985 = vadd.f32 %v8775, %v8933
        %v8986 = vadd.f32 %v8776, %v8936
        %v8987 = vadd.f32 %v8777, %v8941
        %v8988 = vadd.f32 %v8778, %v8944
        %v8989 = vadd.f32 %v8779, %v8949
        %v8990 = vadd.f32 %v8780, %v8952
        %v8991 = vadd.f32 %v8781, %v8957
        %v8992 = vadd.f32 %v8782, %v8960
        %v8993 = vadd.f32 %v8783, %v8965
        %v8994 = vadd.f32 %v8784, %v8968
        %v8995 = vadd.f32 %v8785, %v8973
        %v8996 = vadd.f32 %v8786, %v8976
        %v8997 = vld [vmem:[#allocation3 + $0x8] sm:$0xff]
        %v8998 = vld [vmem:[#allocation3 + $0x10] sm:$0xff]
        %v8999 = vld [vmem:[#allocation3 + $0x18] sm:$0xff]
        %v9000 = vld [vmem:[#allocation3 + $0x20] sm:$0xff]
        %v9001 = vld [vmem:[#allocation3 + $0x28] sm:$0xff]
        %v9002 = vld [vmem:[#allocation3 + $0x30] sm:$0xff]
        %v9003 = vld [vmem:[#allocation3 + $0x38] sm:$0xff]
        %v9004 = vld [vmem:[#allocation3 + $0x40] sm:$0xff]
        %v9005 = vld [vmem:[#allocation3 + $0x48] sm:$0xff]
        %v9006 = vld [vmem:[#allocation3 + $0x50] sm:$0xff]
        %v9007 = vld [vmem:[#allocation3 + $0x58] sm:$0xff]
        %v9008 = vld [vmem:[#allocation3 + $0x60] sm:$0xff]
        %v9009 = vld [vmem:[#allocation3 + $0x68] sm:$0xff]
        %v9010 = vld [vmem:[#allocation3 + $0x70] sm:$0xff]
        %v9011 = vld [vmem:[#allocation3 + $0x78] sm:$0xff]
        %v9012 = vld [vmem:[#allocation3 + $0x80] sm:$0xff]
        %v9013 = vld [vmem:[#allocation3 + $0x88] sm:$0xff]
        %v9014 = vld [vmem:[#allocation3 + $0x90] sm:$0x3f]
        %v9015 = vpack.c.bf16 %v8998, %v8997
        %v9016 = vpack.c.bf16 %v9000, %v8999
        %v9017 = vpack.c.bf16 %v9002, %v9001
        %v9018 = vpack.c.bf16 %v9004, %v9003
        %v9019 = vpack.c.bf16 %v9006, %v9005
        %v9020 = vpack.c.bf16 %v9008, %v9007
        %v9021 = vpack.c.bf16 %v9010, %v9009
        %v9022 = vpack.c.bf16 %v9012, %v9011
        %v9023 = vpack.c.bf16 %v9014, %v9013
        %s9024 = scalar_lea.vmem %s2, 448
        %v9025 = vld [vmem:[%s9024] sm:$0xf]
        %v9026 = vld [vmem:[%s9024 + $0x4] sm:$0xf]
        %v9027 = vld [vmem:[%s9024 + $0x8] sm:$0xf]
        %v9028 = vld [vmem:[%s9024 + $0xc] sm:$0xf]
        %v9029 = vld [vmem:[%s9024 + $0x10] sm:$0xf]
        %v9030 = vld [vmem:[%s9024 + $0x14] sm:$0xf]
        %v9031 = vld [vmem:[%s9024 + $0x18] sm:$0xf]
        %v9032 = vld [vmem:[%s9024 + $0x1c] sm:$0xf]
        %v9041 = vunpack.c.l.b16 %v9025
        %v9042 = vunpack.c.l.b16 %v9026
        %v9043 = vunpack.c.l.b16 %v9027
        %v9044 = vunpack.c.l.b16 %v9028
        %v9045 = vunpack.c.l.b16 %v9029
        %v9046 = vunpack.c.l.b16 %v9030
        %v9047 = vunpack.c.l.b16 %v9031
        %v9048 = vunpack.c.l.b16 %v9032
        %v9049 = vpack.c.b16 %v9042, %v9041
        %v9050 = vpack.c.b16 %v9044, %v9043
        %v9051 = vpack.c.b16 %v9046, %v9045
        %v9052 = vpack.c.b16 %v9048, %v9047
        %v9058 = vsel %vm2712, %v9015, 0
        %v9061 = vsel %vm2712, %v9016, 0
        %v9064 = vsel %vm2712, %v9017, 0
        %v9067 = vsel %vm2712, %v9018, 0
        %v9070 = vsel %vm2712, %v9019, 0
        %v9073 = vsel %vm2712, %v9020, 0
        %v9076 = vsel %vm2712, %v9021, 0
        %v9079 = vsel %vm2712, %v9022, 0
        %v9082 = vsel %vm2712, %v9023, 0
        %9084 = vmatprep.subr.bf16.mxu0 0
        %9085 = vmatpush1.bf16.msra.mxu0 0
        %9086 = vmatprep.subr.bf16.mxu0 0
        %9087 = vmatpush1.bf16.msra.mxu0 0
        %9088 = vmatprep.subr.bf16.mxu0 0
        %9089 = vmatpush1.bf16.msra.mxu0 0
        %9090 = vmatprep.subr.bf16.mxu0 0
        %9091 = vmatpush1.bf16.msra.mxu0 0
        %9092 = vmatprep.subr.bf16.mxu0 0
        %9093 = vmatpush1.bf16.msra.mxu0 %v9052
        %9094 = vmatprep.subr.bf16.mxu0 0
        %9095 = vmatpush1.bf16.msra.mxu0 %v9051
        %9096 = vmatprep.subr.bf16.mxu0 0
        %9097 = vmatpush1.bf16.msra.mxu0 %v9050
        %9098 = vmatprep.subr.bf16.mxu0 0
        %9099 = vmatpush1.bf16.msra.mxu0 %v9049
        %9100 = vmatprep.subr.bf16.mxu0 0
        %9101 = vmatpush2.bf16.msra.mxu0 0
        %9102 = vmatprep.subr.bf16.mxu0 0
        %9103 = vmatpush2.bf16.msra.mxu0 0
        %9104 = vmatprep.subr.bf16.mxu0 0
        %9105 = vmatpush2.bf16.msra.mxu0 0
        %9106 = vmatprep.subr.bf16.mxu0 0
        %9107 = vmatpush2.bf16.msra.mxu0 0
        %9108 = vmatprep.subr.bf16.mxu0 0
        %9109 = vmatpush2.bf16.msra.mxu0 0
        %9110 = vmatprep.subr.bf16.mxu0 0
        %9111 = vmatpush2.bf16.msra.mxu0 0
        %9112 = vmatprep.subr.bf16.mxu0 0
        %9113 = vmatpush2.bf16.msra.mxu0 0
        %9114 = vmatprep.subr.bf16.mxu0 0
        %9115 = vmatpush2.bf16.msra.mxu0 0
        %9116 = vmatprep.mubr.bf16.mxu0 0
        %9117 = vmatmul.mubr.bf16.gmra.mxu0 %v9058
        %v9118 = vpop.f32.mrf.mxu0
        %v9119 = vadd.f32 0.0, %v9118
        %v9120 = vpop.f32.mrf.mxu0
        %v9121 = vpop.f32.mrf.mxu0
        %v9122 = vadd.f32 0.0, %v9121
        %v9123 = vpop.f32.mrf.mxu0
        %9124 = vmatprep.mubr.bf16.mxu0 0
        %9125 = vmatmul.mubr.bf16.gmra.mxu0 %v9061
        %v9126 = vpop.f32.mrf.mxu0
        %v9127 = vadd.f32 0.0, %v9126
        %v9128 = vpop.f32.mrf.mxu0
        %v9129 = vpop.f32.mrf.mxu0
        %v9130 = vadd.f32 0.0, %v9129
        %v9131 = vpop.f32.mrf.mxu0
        %9132 = vmatprep.mubr.bf16.mxu0 0
        %9133 = vmatmul.mubr.bf16.gmra.mxu0 %v9064
        %v9134 = vpop.f32.mrf.mxu0
        %v9135 = vadd.f32 0.0, %v9134
        %v9136 = vpop.f32.mrf.mxu0
        %v9137 = vpop.f32.mrf.mxu0
        %v9138 = vadd.f32 0.0, %v9137
        %v9139 = vpop.f32.mrf.mxu0
        %9140 = vmatprep.mubr.bf16.mxu0 0
        %9141 = vmatmul.mubr.bf16.gmra.mxu0 %v9067
        %v9142 = vpop.f32.mrf.mxu0
        %v9143 = vadd.f32 0.0, %v9142
        %v9144 = vpop.f32.mrf.mxu0
        %v9145 = vpop.f32.mrf.mxu0
        %v9146 = vadd.f32 0.0, %v9145
        %v9147 = vpop.f32.mrf.mxu0
        %9148 = vmatprep.mubr.bf16.mxu0 0
        %9149 = vmatmul.mubr.bf16.gmra.mxu0 %v9070
        %v9150 = vpop.f32.mrf.mxu0
        %v9151 = vadd.f32 0.0, %v9150
        %v9152 = vpop.f32.mrf.mxu0
        %v9153 = vpop.f32.mrf.mxu0
        %v9154 = vadd.f32 0.0, %v9153
        %v9155 = vpop.f32.mrf.mxu0
        %9156 = vmatprep.mubr.bf16.mxu0 0
        %9157 = vmatmul.mubr.bf16.gmra.mxu0 %v9073
        %v9158 = vpop.f32.mrf.mxu0
        %v9159 = vadd.f32 0.0, %v9158
        %v9160 = vpop.f32.mrf.mxu0
        %v9161 = vpop.f32.mrf.mxu0
        %v9162 = vadd.f32 0.0, %v9161
        %v9163 = vpop.f32.mrf.mxu0
        %9164 = vmatprep.mubr.bf16.mxu0 0
        %9165 = vmatmul.mubr.bf16.gmra.mxu0 %v9076
        %v9166 = vpop.f32.mrf.mxu0
        %v9167 = vadd.f32 0.0, %v9166
        %v9168 = vpop.f32.mrf.mxu0
        %v9169 = vpop.f32.mrf.mxu0
        %v9170 = vadd.f32 0.0, %v9169
        %v9171 = vpop.f32.mrf.mxu0
        %9172 = vmatprep.mubr.bf16.mxu0 0
        %9173 = vmatmul.mubr.bf16.gmra.mxu0 %v9079
        %v9174 = vpop.f32.mrf.mxu0
        %v9175 = vadd.f32 0.0, %v9174
        %v9176 = vpop.f32.mrf.mxu0
        %v9177 = vpop.f32.mrf.mxu0
        %v9178 = vadd.f32 0.0, %v9177
        %v9179 = vpop.f32.mrf.mxu0
        %9180 = vmatprep.mubr.bf16.mxu0 0
        %9181 = vmatmul.mubr.bf16.gmra.mxu0 %v9082
        %v9182 = vpop.f32.mrf.mxu0
        %v9183 = vadd.f32 0.0, %v9182
        %v9184 = vpop.f32.mrf.mxu0
        %v9185 = vpop.f32.mrf.mxu0
        %v9186 = vadd.f32 0.0, %v9185
        %v9187 = vpop.f32.mrf.mxu0
        %9188 = vdwg.mxu0
        %v9189 = vadd.f32 %v8979, %v9119
        %v9190 = vadd.f32 %v8980, %v9122
        %v9191 = vadd.f32 %v8981, %v9127
        %v9192 = vadd.f32 %v8982, %v9130
        %v9193 = vadd.f32 %v8983, %v9135
        %v9194 = vadd.f32 %v8984, %v9138
        %v9195 = vadd.f32 %v8985, %v9143
        %v9196 = vadd.f32 %v8986, %v9146
        %v9197 = vadd.f32 %v8987, %v9151
        %v9198 = vadd.f32 %v8988, %v9154
        %v9199 = vadd.f32 %v8989, %v9159
        %v9200 = vadd.f32 %v8990, %v9162
        %v9201 = vadd.f32 %v8991, %v9167
        %v9202 = vadd.f32 %v8992, %v9170
        %v9203 = vadd.f32 %v8993, %v9175
        %v9204 = vadd.f32 %v8994, %v9178
        %v9205 = vadd.f32 %v8995, %v9183
        %v9206 = vadd.f32 %v8996, %v9186
        %v9207 = vld [vmem:[#allocation3 + $0xc] sm:$0xff]
        %v9208 = vld [vmem:[#allocation3 + $0x14] sm:$0xff]
        %v9209 = vld [vmem:[#allocation3 + $0x1c] sm:$0xff]
        %v9210 = vld [vmem:[#allocation3 + $0x24] sm:$0xff]
        %v9211 = vld [vmem:[#allocation3 + $0x2c] sm:$0xff]
        %v9212 = vld [vmem:[#allocation3 + $0x34] sm:$0xff]
        %v9213 = vld [vmem:[#allocation3 + $0x3c] sm:$0xff]
        %v9214 = vld [vmem:[#allocation3 + $0x44] sm:$0xff]
        %v9215 = vld [vmem:[#allocation3 + $0x4c] sm:$0xff]
        %v9216 = vld [vmem:[#allocation3 + $0x54] sm:$0xff]
        %v9217 = vld [vmem:[#allocation3 + $0x5c] sm:$0xff]
        %v9218 = vld [vmem:[#allocation3 + $0x64] sm:$0xff]
        %v9219 = vld [vmem:[#allocation3 + $0x6c] sm:$0xff]
        %v9220 = vld [vmem:[#allocation3 + $0x74] sm:$0xff]
        %v9221 = vld [vmem:[#allocation3 + $0x7c] sm:$0xff]
        %v9222 = vld [vmem:[#allocation3 + $0x84] sm:$0xff]
        %v9223 = vld [vmem:[#allocation3 + $0x8c] sm:$0xff]
        %v9224 = vld [vmem:[#allocation3 + $0x94] sm:$0x3f]
        %v9225 = vpack.c.bf16 %v9208, %v9207
        %v9226 = vpack.c.bf16 %v9210, %v9209
        %v9227 = vpack.c.bf16 %v9212, %v9211
        %v9228 = vpack.c.bf16 %v9214, %v9213
        %v9229 = vpack.c.bf16 %v9216, %v9215
        %v9230 = vpack.c.bf16 %v9218, %v9217
        %v9231 = vpack.c.bf16 %v9220, %v9219
        %v9232 = vpack.c.bf16 %v9222, %v9221
        %v9233 = vpack.c.bf16 %v9224, %v9223
        %s9234 = scalar_lea.vmem %s2, 480
        %v9235 = vld [vmem:[%s9234] sm:$0xf]
        %v9236 = vld [vmem:[%s9234 + $0x4] sm:$0xf]
        %v9237 = vld [vmem:[%s9234 + $0x8] sm:$0xf]
        %v9238 = vld [vmem:[%s9234 + $0xc] sm:$0xf]
        %v9239 = vld [vmem:[%s9234 + $0x10] sm:$0xf]
        %v9240 = vld [vmem:[%s9234 + $0x14] sm:$0xf]
        %v9241 = vld [vmem:[%s9234 + $0x18] sm:$0xf]
        %v9242 = vld [vmem:[%s9234 + $0x1c] sm:$0xf]
        %v9251 = vunpack.c.l.b16 %v9235
        %v9252 = vunpack.c.l.b16 %v9236
        %v9253 = vunpack.c.l.b16 %v9237
        %v9254 = vunpack.c.l.b16 %v9238
        %v9255 = vunpack.c.l.b16 %v9239
        %v9256 = vunpack.c.l.b16 %v9240
        %v9257 = vunpack.c.l.b16 %v9241
        %v9258 = vunpack.c.l.b16 %v9242
        %v9259 = vpack.c.b16 %v9252, %v9251
        %v9260 = vpack.c.b16 %v9254, %v9253
        %v9261 = vpack.c.b16 %v9256, %v9255
        %v9262 = vpack.c.b16 %v9258, %v9257
        %v9268 = vsel %vm2712, %v9225, 0
        %v9271 = vsel %vm2712, %v9226, 0
        %v9274 = vsel %vm2712, %v9227, 0
        %v9277 = vsel %vm2712, %v9228, 0
        %v9280 = vsel %vm2712, %v9229, 0
        %v9283 = vsel %vm2712, %v9230, 0
        %v9286 = vsel %vm2712, %v9231, 0
        %v9289 = vsel %vm2712, %v9232, 0
        %v9292 = vsel %vm2712, %v9233, 0
        %9294 = vmatprep.subr.bf16.mxu0 0
        %9295 = vmatpush1.bf16.msra.mxu0 0
        %9296 = vmatprep.subr.bf16.mxu0 0
        %9297 = vmatpush1.bf16.msra.mxu0 0
        %9298 = vmatprep.subr.bf16.mxu0 0
        %9299 = vmatpush1.bf16.msra.mxu0 0
        %9300 = vmatprep.subr.bf16.mxu0 0
        %9301 = vmatpush1.bf16.msra.mxu0 0
        %9302 = vmatprep.subr.bf16.mxu0 0
        %9303 = vmatpush1.bf16.msra.mxu0 %v9262
        %9304 = vmatprep.subr.bf16.mxu0 0
        %9305 = vmatpush1.bf16.msra.mxu0 %v9261
        %9306 = vmatprep.subr.bf16.mxu0 0
        %9307 = vmatpush1.bf16.msra.mxu0 %v9260
        %9308 = vmatprep.subr.bf16.mxu0 0
        %9309 = vmatpush1.bf16.msra.mxu0 %v9259
        %9310 = vmatprep.subr.bf16.mxu0 0
        %9311 = vmatpush2.bf16.msra.mxu0 0
        %9312 = vmatprep.subr.bf16.mxu0 0
        %9313 = vmatpush2.bf16.msra.mxu0 0
        %9314 = vmatprep.subr.bf16.mxu0 0
        %9315 = vmatpush2.bf16.msra.mxu0 0
        %9316 = vmatprep.subr.bf16.mxu0 0
        %9317 = vmatpush2.bf16.msra.mxu0 0
        %9318 = vmatprep.subr.bf16.mxu0 0
        %9319 = vmatpush2.bf16.msra.mxu0 0
        %9320 = vmatprep.subr.bf16.mxu0 0
        %9321 = vmatpush2.bf16.msra.mxu0 0
        %9322 = vmatprep.subr.bf16.mxu0 0
        %9323 = vmatpush2.bf16.msra.mxu0 0
        %9324 = vmatprep.subr.bf16.mxu0 0
        %9325 = vmatpush2.bf16.msra.mxu0 0
        %9326 = vmatprep.mubr.bf16.mxu0 0
        %9327 = vmatmul.mubr.bf16.gmra.mxu0 %v9268
        %v9328 = vpop.f32.mrf.mxu0
        %v9329 = vadd.f32 0.0, %v9328
        %v9330 = vpop.f32.mrf.mxu0
        %v9331 = vpop.f32.mrf.mxu0
        %v9332 = vadd.f32 0.0, %v9331
        %v9333 = vpop.f32.mrf.mxu0
        %9334 = vmatprep.mubr.bf16.mxu0 0
        %9335 = vmatmul.mubr.bf16.gmra.mxu0 %v9271
        %v9336 = vpop.f32.mrf.mxu0
        %v9337 = vadd.f32 0.0, %v9336
        %v9338 = vpop.f32.mrf.mxu0
        %v9339 = vpop.f32.mrf.mxu0
        %v9340 = vadd.f32 0.0, %v9339
        %v9341 = vpop.f32.mrf.mxu0
        %9342 = vmatprep.mubr.bf16.mxu0 0
        %9343 = vmatmul.mubr.bf16.gmra.mxu0 %v9274
        %v9344 = vpop.f32.mrf.mxu0
        %v9345 = vadd.f32 0.0, %v9344
        %v9346 = vpop.f32.mrf.mxu0
        %v9347 = vpop.f32.mrf.mxu0
        %v9348 = vadd.f32 0.0, %v9347
        %v9349 = vpop.f32.mrf.mxu0
        %9350 = vmatprep.mubr.bf16.mxu0 0
        %9351 = vmatmul.mubr.bf16.gmra.mxu0 %v9277
        %v9352 = vpop.f32.mrf.mxu0
        %v9353 = vadd.f32 0.0, %v9352
        %v9354 = vpop.f32.mrf.mxu0
        %v9355 = vpop.f32.mrf.mxu0
        %v9356 = vadd.f32 0.0, %v9355
        %v9357 = vpop.f32.mrf.mxu0
        %9358 = vmatprep.mubr.bf16.mxu0 0
        %9359 = vmatmul.mubr.bf16.gmra.mxu0 %v9280
        %v9360 = vpop.f32.mrf.mxu0
        %v9361 = vadd.f32 0.0, %v9360
        %v9362 = vpop.f32.mrf.mxu0
        %v9363 = vpop.f32.mrf.mxu0
        %v9364 = vadd.f32 0.0, %v9363
        %v9365 = vpop.f32.mrf.mxu0
        %9366 = vmatprep.mubr.bf16.mxu0 0
        %9367 = vmatmul.mubr.bf16.gmra.mxu0 %v9283
        %v9368 = vpop.f32.mrf.mxu0
        %v9369 = vadd.f32 0.0, %v9368
        %v9370 = vpop.f32.mrf.mxu0
        %v9371 = vpop.f32.mrf.mxu0
        %v9372 = vadd.f32 0.0, %v9371
        %v9373 = vpop.f32.mrf.mxu0
        %9374 = vmatprep.mubr.bf16.mxu0 0
        %9375 = vmatmul.mubr.bf16.gmra.mxu0 %v9286
        %v9376 = vpop.f32.mrf.mxu0
        %v9377 = vadd.f32 0.0, %v9376
        %v9378 = vpop.f32.mrf.mxu0
        %v9379 = vpop.f32.mrf.mxu0
        %v9380 = vadd.f32 0.0, %v9379
        %v9381 = vpop.f32.mrf.mxu0
        %9382 = vmatprep.mubr.bf16.mxu0 0
        %9383 = vmatmul.mubr.bf16.gmra.mxu0 %v9289
        %v9384 = vpop.f32.mrf.mxu0
        %v9385 = vadd.f32 0.0, %v9384
        %v9386 = vpop.f32.mrf.mxu0
        %v9387 = vpop.f32.mrf.mxu0
        %v9388 = vadd.f32 0.0, %v9387
        %v9389 = vpop.f32.mrf.mxu0
        %9390 = vmatprep.mubr.bf16.mxu0 0
        %9391 = vmatmul.mubr.bf16.gmra.mxu0 %v9292
        %v9392 = vpop.f32.mrf.mxu0
        %v9393 = vadd.f32 0.0, %v9392
        %v9394 = vpop.f32.mrf.mxu0
        %v9395 = vpop.f32.mrf.mxu0
        %v9396 = vadd.f32 0.0, %v9395
        %v9397 = vpop.f32.mrf.mxu0
        %9398 = vdwg.mxu0
        %v9399 = vadd.f32 %v9189, %v9329
        %v9400 = vadd.f32 %v9190, %v9332
        %v9401 = vadd.f32 %v9191, %v9337
        %v9402 = vadd.f32 %v9192, %v9340
        %v9403 = vadd.f32 %v9193, %v9345
        %v9404 = vadd.f32 %v9194, %v9348
        %v9405 = vadd.f32 %v9195, %v9353
        %v9406 = vadd.f32 %v9196, %v9356
        %v9407 = vadd.f32 %v9197, %v9361
        %v9408 = vadd.f32 %v9198, %v9364
        %v9409 = vadd.f32 %v9199, %v9369
        %v9410 = vadd.f32 %v9200, %v9372
        %v9411 = vadd.f32 %v9201, %v9377
        %v9412 = vadd.f32 %v9202, %v9380
        %v9413 = vadd.f32 %v9203, %v9385
        %v9414 = vadd.f32 %v9204, %v9388
        %v9415 = vadd.f32 %v9205, %v9393
        %v9416 = vadd.f32 %v9206, %v9396
        %v9417 = vld [vmem:[#allocation3 + $0xd] sm:$0xff]
        %v9418 = vld [vmem:[#allocation3 + $0x15] sm:$0xff]
        %v9419 = vld [vmem:[#allocation3 + $0x1d] sm:$0xff]
        %v9420 = vld [vmem:[#allocation3 + $0x25] sm:$0xff]
        %v9421 = vld [vmem:[#allocation3 + $0x2d] sm:$0xff]
        %v9422 = vld [vmem:[#allocation3 + $0x35] sm:$0xff]
        %v9423 = vld [vmem:[#allocation3 + $0x3d] sm:$0xff]
        %v9424 = vld [vmem:[#allocation3 + $0x45] sm:$0xff]
        %v9425 = vld [vmem:[#allocation3 + $0x4d] sm:$0xff]
        %v9426 = vld [vmem:[#allocation3 + $0x55] sm:$0xff]
        %v9427 = vld [vmem:[#allocation3 + $0x5d] sm:$0xff]
        %v9428 = vld [vmem:[#allocation3 + $0x65] sm:$0xff]
        %v9429 = vld [vmem:[#allocation3 + $0x6d] sm:$0xff]
        %v9430 = vld [vmem:[#allocation3 + $0x75] sm:$0xff]
        %v9431 = vld [vmem:[#allocation3 + $0x7d] sm:$0xff]
        %v9432 = vld [vmem:[#allocation3 + $0x85] sm:$0xff]
        %v9433 = vld [vmem:[#allocation3 + $0x8d] sm:$0xff]
        %v9434 = vld [vmem:[#allocation3 + $0x95] sm:$0x3f]
        %v9435 = vpack.c.bf16 %v9418, %v9417
        %v9436 = vpack.c.bf16 %v9420, %v9419
        %v9437 = vpack.c.bf16 %v9422, %v9421
        %v9438 = vpack.c.bf16 %v9424, %v9423
        %v9439 = vpack.c.bf16 %v9426, %v9425
        %v9440 = vpack.c.bf16 %v9428, %v9427
        %v9441 = vpack.c.bf16 %v9430, %v9429
        %v9442 = vpack.c.bf16 %v9432, %v9431
        %v9443 = vpack.c.bf16 %v9434, %v9433
        %s9444 = scalar_lea.vmem %s2, 512
        %v9445 = vld [vmem:[%s9444] sm:$0xf]
        %v9446 = vld [vmem:[%s9444 + $0x4] sm:$0xf]
        %v9447 = vld [vmem:[%s9444 + $0x8] sm:$0xf]
        %v9448 = vld [vmem:[%s9444 + $0xc] sm:$0xf]
        %v9449 = vld [vmem:[%s9444 + $0x10] sm:$0xf]
        %v9450 = vld [vmem:[%s9444 + $0x14] sm:$0xf]
        %v9451 = vld [vmem:[%s9444 + $0x18] sm:$0xf]
        %v9452 = vld [vmem:[%s9444 + $0x1c] sm:$0xf]
        %v9461 = vunpack.c.l.b16 %v9445
        %v9462 = vunpack.c.l.b16 %v9446
        %v9463 = vunpack.c.l.b16 %v9447
        %v9464 = vunpack.c.l.b16 %v9448
        %v9465 = vunpack.c.l.b16 %v9449
        %v9466 = vunpack.c.l.b16 %v9450
        %v9467 = vunpack.c.l.b16 %v9451
        %v9468 = vunpack.c.l.b16 %v9452
        %v9469 = vpack.c.b16 %v9462, %v9461
        %v9470 = vpack.c.b16 %v9464, %v9463
        %v9471 = vpack.c.b16 %v9466, %v9465
        %v9472 = vpack.c.b16 %v9468, %v9467
        %v9478 = vsel %vm2712, %v9435, 0
        %v9481 = vsel %vm2712, %v9436, 0
        %v9484 = vsel %vm2712, %v9437, 0
        %v9487 = vsel %vm2712, %v9438, 0
        %v9490 = vsel %vm2712, %v9439, 0
        %v9493 = vsel %vm2712, %v9440, 0
        %v9496 = vsel %vm2712, %v9441, 0
        %v9499 = vsel %vm2712, %v9442, 0
        %v9502 = vsel %vm2712, %v9443, 0
        %9504 = vmatprep.subr.bf16.mxu0 0
        %9505 = vmatpush1.bf16.msra.mxu0 0
        %9506 = vmatprep.subr.bf16.mxu0 0
        %9507 = vmatpush1.bf16.msra.mxu0 0
        %9508 = vmatprep.subr.bf16.mxu0 0
        %9509 = vmatpush1.bf16.msra.mxu0 0
        %9510 = vmatprep.subr.bf16.mxu0 0
        %9511 = vmatpush1.bf16.msra.mxu0 0
        %9512 = vmatprep.subr.bf16.mxu0 0
        %9513 = vmatpush1.bf16.msra.mxu0 %v9472
        %9514 = vmatprep.subr.bf16.mxu0 0
        %9515 = vmatpush1.bf16.msra.mxu0 %v9471
        %9516 = vmatprep.subr.bf16.mxu0 0
        %9517 = vmatpush1.bf16.msra.mxu0 %v9470
        %9518 = vmatprep.subr.bf16.mxu0 0
        %9519 = vmatpush1.bf16.msra.mxu0 %v9469
        %9520 = vmatprep.subr.bf16.mxu0 0
        %9521 = vmatpush2.bf16.msra.mxu0 0
        %9522 = vmatprep.subr.bf16.mxu0 0
        %9523 = vmatpush2.bf16.msra.mxu0 0
        %9524 = vmatprep.subr.bf16.mxu0 0
        %9525 = vmatpush2.bf16.msra.mxu0 0
        %9526 = vmatprep.subr.bf16.mxu0 0
        %9527 = vmatpush2.bf16.msra.mxu0 0
        %9528 = vmatprep.subr.bf16.mxu0 0
        %9529 = vmatpush2.bf16.msra.mxu0 0
        %9530 = vmatprep.subr.bf16.mxu0 0
        %9531 = vmatpush2.bf16.msra.mxu0 0
        %9532 = vmatprep.subr.bf16.mxu0 0
        %9533 = vmatpush2.bf16.msra.mxu0 0
        %9534 = vmatprep.subr.bf16.mxu0 0
        %9535 = vmatpush2.bf16.msra.mxu0 0
        %9536 = vmatprep.mubr.bf16.mxu0 0
        %9537 = vmatmul.mubr.bf16.gmra.mxu0 %v9478
        %v9538 = vpop.f32.mrf.mxu0
        %v9539 = vadd.f32 0.0, %v9538
        %v9540 = vpop.f32.mrf.mxu0
        %v9541 = vpop.f32.mrf.mxu0
        %v9542 = vadd.f32 0.0, %v9541
        %v9543 = vpop.f32.mrf.mxu0
        %9544 = vmatprep.mubr.bf16.mxu0 0
        %9545 = vmatmul.mubr.bf16.gmra.mxu0 %v9481
        %v9546 = vpop.f32.mrf.mxu0
        %v9547 = vadd.f32 0.0, %v9546
        %v9548 = vpop.f32.mrf.mxu0
        %v9549 = vpop.f32.mrf.mxu0
        %v9550 = vadd.f32 0.0, %v9549
        %v9551 = vpop.f32.mrf.mxu0
        %9552 = vmatprep.mubr.bf16.mxu0 0
        %9553 = vmatmul.mubr.bf16.gmra.mxu0 %v9484
        %v9554 = vpop.f32.mrf.mxu0
        %v9555 = vadd.f32 0.0, %v9554
        %v9556 = vpop.f32.mrf.mxu0
        %v9557 = vpop.f32.mrf.mxu0
        %v9558 = vadd.f32 0.0, %v9557
        %v9559 = vpop.f32.mrf.mxu0
        %9560 = vmatprep.mubr.bf16.mxu0 0
        %9561 = vmatmul.mubr.bf16.gmra.mxu0 %v9487
        %v9562 = vpop.f32.mrf.mxu0
        %v9563 = vadd.f32 0.0, %v9562
        %v9564 = vpop.f32.mrf.mxu0
        %v9565 = vpop.f32.mrf.mxu0
        %v9566 = vadd.f32 0.0, %v9565
        %v9567 = vpop.f32.mrf.mxu0
        %9568 = vmatprep.mubr.bf16.mxu0 0
        %9569 = vmatmul.mubr.bf16.gmra.mxu0 %v9490
        %v9570 = vpop.f32.mrf.mxu0
        %v9571 = vadd.f32 0.0, %v9570
        %v9572 = vpop.f32.mrf.mxu0
        %v9573 = vpop.f32.mrf.mxu0
        %v9574 = vadd.f32 0.0, %v9573
        %v9575 = vpop.f32.mrf.mxu0
        %9576 = vmatprep.mubr.bf16.mxu0 0
        %9577 = vmatmul.mubr.bf16.gmra.mxu0 %v9493
        %v9578 = vpop.f32.mrf.mxu0
        %v9579 = vadd.f32 0.0, %v9578
        %v9580 = vpop.f32.mrf.mxu0
        %v9581 = vpop.f32.mrf.mxu0
        %v9582 = vadd.f32 0.0, %v9581
        %v9583 = vpop.f32.mrf.mxu0
        %9584 = vmatprep.mubr.bf16.mxu0 0
        %9585 = vmatmul.mubr.bf16.gmra.mxu0 %v9496
        %v9586 = vpop.f32.mrf.mxu0
        %v9587 = vadd.f32 0.0, %v9586
        %v9588 = vpop.f32.mrf.mxu0
        %v9589 = vpop.f32.mrf.mxu0
        %v9590 = vadd.f32 0.0, %v9589
        %v9591 = vpop.f32.mrf.mxu0
        %9592 = vmatprep.mubr.bf16.mxu0 0
        %9593 = vmatmul.mubr.bf16.gmra.mxu0 %v9499
        %v9594 = vpop.f32.mrf.mxu0
        %v9595 = vadd.f32 0.0, %v9594
        %v9596 = vpop.f32.mrf.mxu0
        %v9597 = vpop.f32.mrf.mxu0
        %v9598 = vadd.f32 0.0, %v9597
        %v9599 = vpop.f32.mrf.mxu0
        %9600 = vmatprep.mubr.bf16.mxu0 0
        %9601 = vmatmul.mubr.bf16.gmra.mxu0 %v9502
        %v9602 = vpop.f32.mrf.mxu0
        %v9603 = vadd.f32 0.0, %v9602
        %v9604 = vpop.f32.mrf.mxu0
        %v9605 = vpop.f32.mrf.mxu0
        %v9606 = vadd.f32 0.0, %v9605
        %v9607 = vpop.f32.mrf.mxu0
        %9608 = vdwg.mxu0
        %v9609 = vadd.f32 %v9399, %v9539
        %v9610 = vadd.f32 %v9400, %v9542
        %v9611 = vadd.f32 %v9401, %v9547
        %v9612 = vadd.f32 %v9402, %v9550
        %v9613 = vadd.f32 %v9403, %v9555
        %v9614 = vadd.f32 %v9404, %v9558
        %v9615 = vadd.f32 %v9405, %v9563
        %v9616 = vadd.f32 %v9406, %v9566
        %v9617 = vadd.f32 %v9407, %v9571
        %v9618 = vadd.f32 %v9408, %v9574
        %v9619 = vadd.f32 %v9409, %v9579
        %v9620 = vadd.f32 %v9410, %v9582
        %v9621 = vadd.f32 %v9411, %v9587
        %v9622 = vadd.f32 %v9412, %v9590
        %v9623 = vadd.f32 %v9413, %v9595
        %v9624 = vadd.f32 %v9414, %v9598
        %v9625 = vadd.f32 %v9415, %v9603
        %v9626 = vadd.f32 %v9416, %v9606
        %v9627 = vld [vmem:[#allocation3 + $0xe] sm:$0xff]
        %v9628 = vld [vmem:[#allocation3 + $0x16] sm:$0xff]
        %v9629 = vld [vmem:[#allocation3 + $0x1e] sm:$0xff]
        %v9630 = vld [vmem:[#allocation3 + $0x26] sm:$0xff]
        %v9631 = vld [vmem:[#allocation3 + $0x2e] sm:$0xff]
        %v9632 = vld [vmem:[#allocation3 + $0x36] sm:$0xff]
        %v9633 = vld [vmem:[#allocation3 + $0x3e] sm:$0xff]
        %v9634 = vld [vmem:[#allocation3 + $0x46] sm:$0xff]
        %v9635 = vld [vmem:[#allocation3 + $0x4e] sm:$0xff]
        %v9636 = vld [vmem:[#allocation3 + $0x56] sm:$0xff]
        %v9637 = vld [vmem:[#allocation3 + $0x5e] sm:$0xff]
        %v9638 = vld [vmem:[#allocation3 + $0x66] sm:$0xff]
        %v9639 = vld [vmem:[#allocation3 + $0x6e] sm:$0xff]
        %v9640 = vld [vmem:[#allocation3 + $0x76] sm:$0xff]
        %v9641 = vld [vmem:[#allocation3 + $0x7e] sm:$0xff]
        %v9642 = vld [vmem:[#allocation3 + $0x86] sm:$0xff]
        %v9643 = vld [vmem:[#allocation3 + $0x8e] sm:$0xff]
        %v9644 = vld [vmem:[#allocation3 + $0x96] sm:$0x3f]
        %v9645 = vpack.c.bf16 %v9628, %v9627
        %v9646 = vpack.c.bf16 %v9630, %v9629
        %v9647 = vpack.c.bf16 %v9632, %v9631
        %v9648 = vpack.c.bf16 %v9634, %v9633
        %v9649 = vpack.c.bf16 %v9636, %v9635
        %v9650 = vpack.c.bf16 %v9638, %v9637
        %v9651 = vpack.c.bf16 %v9640, %v9639
        %v9652 = vpack.c.bf16 %v9642, %v9641
        %v9653 = vpack.c.bf16 %v9644, %v9643
        %s9654 = scalar_lea.vmem %s2, 544
        %v9655 = vld [vmem:[%s9654] sm:$0xf]
        %v9656 = vld [vmem:[%s9654 + $0x4] sm:$0xf]
        %v9657 = vld [vmem:[%s9654 + $0x8] sm:$0xf]
        %v9658 = vld [vmem:[%s9654 + $0xc] sm:$0xf]
        %v9659 = vld [vmem:[%s9654 + $0x10] sm:$0xf]
        %v9660 = vld [vmem:[%s9654 + $0x14] sm:$0xf]
        %v9661 = vld [vmem:[%s9654 + $0x18] sm:$0xf]
        %v9662 = vld [vmem:[%s9654 + $0x1c] sm:$0xf]
        %v9671 = vunpack.c.l.b16 %v9655
        %v9672 = vunpack.c.l.b16 %v9656
        %v9673 = vunpack.c.l.b16 %v9657
        %v9674 = vunpack.c.l.b16 %v9658
        %v9675 = vunpack.c.l.b16 %v9659
        %v9676 = vunpack.c.l.b16 %v9660
        %v9677 = vunpack.c.l.b16 %v9661
        %v9678 = vunpack.c.l.b16 %v9662
        %v9679 = vpack.c.b16 %v9672, %v9671
        %v9680 = vpack.c.b16 %v9674, %v9673
        %v9681 = vpack.c.b16 %v9676, %v9675
        %v9682 = vpack.c.b16 %v9678, %v9677
        %v9688 = vsel %vm2712, %v9645, 0
        %v9691 = vsel %vm2712, %v9646, 0
        %v9694 = vsel %vm2712, %v9647, 0
        %v9697 = vsel %vm2712, %v9648, 0
        %v9700 = vsel %vm2712, %v9649, 0
        %v9703 = vsel %vm2712, %v9650, 0
        %v9706 = vsel %vm2712, %v9651, 0
        %v9709 = vsel %vm2712, %v9652, 0
        %v9712 = vsel %vm2712, %v9653, 0
        %9714 = vmatprep.subr.bf16.mxu0 0
        %9715 = vmatpush1.bf16.msra.mxu0 0
        %9716 = vmatprep.subr.bf16.mxu0 0
        %9717 = vmatpush1.bf16.msra.mxu0 0
        %9718 = vmatprep.subr.bf16.mxu0 0
        %9719 = vmatpush1.bf16.msra.mxu0 0
        %9720 = vmatprep.subr.bf16.mxu0 0
        %9721 = vmatpush1.bf16.msra.mxu0 0
        %9722 = vmatprep.subr.bf16.mxu0 0
        %9723 = vmatpush1.bf16.msra.mxu0 %v9682
        %9724 = vmatprep.subr.bf16.mxu0 0
        %9725 = vmatpush1.bf16.msra.mxu0 %v9681
        %9726 = vmatprep.subr.bf16.mxu0 0
        %9727 = vmatpush1.bf16.msra.mxu0 %v9680
        %9728 = vmatprep.subr.bf16.mxu0 0
        %9729 = vmatpush1.bf16.msra.mxu0 %v9679
        %9730 = vmatprep.subr.bf16.mxu0 0
        %9731 = vmatpush2.bf16.msra.mxu0 0
        %9732 = vmatprep.subr.bf16.mxu0 0
        %9733 = vmatpush2.bf16.msra.mxu0 0
        %9734 = vmatprep.subr.bf16.mxu0 0
        %9735 = vmatpush2.bf16.msra.mxu0 0
        %9736 = vmatprep.subr.bf16.mxu0 0
        %9737 = vmatpush2.bf16.msra.mxu0 0
        %9738 = vmatprep.subr.bf16.mxu0 0
        %9739 = vmatpush2.bf16.msra.mxu0 0
        %9740 = vmatprep.subr.bf16.mxu0 0
        %9741 = vmatpush2.bf16.msra.mxu0 0
        %9742 = vmatprep.subr.bf16.mxu0 0
        %9743 = vmatpush2.bf16.msra.mxu0 0
        %9744 = vmatprep.subr.bf16.mxu0 0
        %9745 = vmatpush2.bf16.msra.mxu0 0
        %9746 = vmatprep.mubr.bf16.mxu0 0
        %9747 = vmatmul.mubr.bf16.gmra.mxu0 %v9688
        %v9748 = vpop.f32.mrf.mxu0
        %v9749 = vadd.f32 0.0, %v9748
        %v9750 = vpop.f32.mrf.mxu0
        %v9751 = vpop.f32.mrf.mxu0
        %v9752 = vadd.f32 0.0, %v9751
        %v9753 = vpop.f32.mrf.mxu0
        %9754 = vmatprep.mubr.bf16.mxu0 0
        %9755 = vmatmul.mubr.bf16.gmra.mxu0 %v9691
        %v9756 = vpop.f32.mrf.mxu0
        %v9757 = vadd.f32 0.0, %v9756
        %v9758 = vpop.f32.mrf.mxu0
        %v9759 = vpop.f32.mrf.mxu0
        %v9760 = vadd.f32 0.0, %v9759
        %v9761 = vpop.f32.mrf.mxu0
        %9762 = vmatprep.mubr.bf16.mxu0 0
        %9763 = vmatmul.mubr.bf16.gmra.mxu0 %v9694
        %v9764 = vpop.f32.mrf.mxu0
        %v9765 = vadd.f32 0.0, %v9764
        %v9766 = vpop.f32.mrf.mxu0
        %v9767 = vpop.f32.mrf.mxu0
        %v9768 = vadd.f32 0.0, %v9767
        %v9769 = vpop.f32.mrf.mxu0
        %9770 = vmatprep.mubr.bf16.mxu0 0
        %9771 = vmatmul.mubr.bf16.gmra.mxu0 %v9697
        %v9772 = vpop.f32.mrf.mxu0
        %v9773 = vadd.f32 0.0, %v9772
        %v9774 = vpop.f32.mrf.mxu0
        %v9775 = vpop.f32.mrf.mxu0
        %v9776 = vadd.f32 0.0, %v9775
        %v9777 = vpop.f32.mrf.mxu0
        %9778 = vmatprep.mubr.bf16.mxu0 0
        %9779 = vmatmul.mubr.bf16.gmra.mxu0 %v9700
        %v9780 = vpop.f32.mrf.mxu0
        %v9781 = vadd.f32 0.0, %v9780
        %v9782 = vpop.f32.mrf.mxu0
        %v9783 = vpop.f32.mrf.mxu0
        %v9784 = vadd.f32 0.0, %v9783
        %v9785 = vpop.f32.mrf.mxu0
        %9786 = vmatprep.mubr.bf16.mxu0 0
        %9787 = vmatmul.mubr.bf16.gmra.mxu0 %v9703
        %v9788 = vpop.f32.mrf.mxu0
        %v9789 = vadd.f32 0.0, %v9788
        %v9790 = vpop.f32.mrf.mxu0
        %v9791 = vpop.f32.mrf.mxu0
        %v9792 = vadd.f32 0.0, %v9791
        %v9793 = vpop.f32.mrf.mxu0
        %9794 = vmatprep.mubr.bf16.mxu0 0
        %9795 = vmatmul.mubr.bf16.gmra.mxu0 %v9706
        %v9796 = vpop.f32.mrf.mxu0
        %v9797 = vadd.f32 0.0, %v9796
        %v9798 = vpop.f32.mrf.mxu0
        %v9799 = vpop.f32.mrf.mxu0
        %v9800 = vadd.f32 0.0, %v9799
        %v9801 = vpop.f32.mrf.mxu0
        %9802 = vmatprep.mubr.bf16.mxu0 0
        %9803 = vmatmul.mubr.bf16.gmra.mxu0 %v9709
        %v9804 = vpop.f32.mrf.mxu0
        %v9805 = vadd.f32 0.0, %v9804
        %v9806 = vpop.f32.mrf.mxu0
        %v9807 = vpop.f32.mrf.mxu0
        %v9808 = vadd.f32 0.0, %v9807
        %v9809 = vpop.f32.mrf.mxu0
        %9810 = vmatprep.mubr.bf16.mxu0 0
        %9811 = vmatmul.mubr.bf16.gmra.mxu0 %v9712
        %v9812 = vpop.f32.mrf.mxu0
        %v9813 = vadd.f32 0.0, %v9812
        %v9814 = vpop.f32.mrf.mxu0
        %v9815 = vpop.f32.mrf.mxu0
        %v9816 = vadd.f32 0.0, %v9815
        %v9817 = vpop.f32.mrf.mxu0
        %9818 = vdwg.mxu0
        %v9819 = vadd.f32 %v9609, %v9749
        %v9820 = vadd.f32 %v9610, %v9752
        %v9821 = vadd.f32 %v9611, %v9757
        %v9822 = vadd.f32 %v9612, %v9760
        %v9823 = vadd.f32 %v9613, %v9765
        %v9824 = vadd.f32 %v9614, %v9768
        %v9825 = vadd.f32 %v9615, %v9773
        %v9826 = vadd.f32 %v9616, %v9776
        %v9827 = vadd.f32 %v9617, %v9781
        %v9828 = vadd.f32 %v9618, %v9784
        %v9829 = vadd.f32 %v9619, %v9789
        %v9830 = vadd.f32 %v9620, %v9792
        %v9831 = vadd.f32 %v9621, %v9797
        %v9832 = vadd.f32 %v9622, %v9800
        %v9833 = vadd.f32 %v9623, %v9805
        %v9834 = vadd.f32 %v9624, %v9808
        %v9835 = vadd.f32 %v9625, %v9813
        %v9836 = vadd.f32 %v9626, %v9816
        %v9838 = vlaneseq
        %v9839 = vshrl.u32 %v9838, 7
        %v9840 = vsub.s32 0, %v9839
        %v9841 = vrot.slane %v7982, %v9840
        %v9843 = vadd.f32 %v9819, %v9841
        %v9844 = vadd.f32 %v9820, %v9841
        %v9845 = vadd.f32 %v9821, %v9841
        %v9846 = vadd.f32 %v9822, %v9841
        %v9847 = vadd.f32 %v9823, %v9841
        %v9848 = vadd.f32 %v9824, %v9841
        %v9849 = vadd.f32 %v9825, %v9841
        %v9850 = vadd.f32 %v9826, %v9841
        %v9851 = vadd.f32 %v9827, %v9841
        %v9852 = vadd.f32 %v9828, %v9841
        %v9853 = vadd.f32 %v9829, %v9841
        %v9854 = vadd.f32 %v9830, %v9841
        %v9855 = vadd.f32 %v9831, %v9841
        %v9856 = vadd.f32 %v9832, %v9841
        %v9857 = vadd.f32 %v9833, %v9841
        %v9858 = vadd.f32 %v9834, %v9841
        %v9859 = vadd.f32 %v9835, %v9841
        %v9860 = vadd.f32 %v9836, %v9841
        %v9861 = vmax.f32 %v9843, 0.0
        %v9862 = vmax.f32 %v9844, 0.0
        %v9863 = vmax.f32 %v9845, 0.0
        %v9864 = vmax.f32 %v9846, 0.0
        %v9865 = vmax.f32 %v9847, 0.0
        %v9866 = vmax.f32 %v9848, 0.0
        %v9867 = vmax.f32 %v9849, 0.0
        %v9868 = vmax.f32 %v9850, 0.0
        %v9869 = vmax.f32 %v9851, 0.0
        %v9870 = vmax.f32 %v9852, 0.0
        %v9871 = vmax.f32 %v9853, 0.0
        %v9872 = vmax.f32 %v9854, 0.0
        %v9873 = vmax.f32 %v9855, 0.0
        %v9874 = vmax.f32 %v9856, 0.0
        %v9875 = vmax.f32 %v9857, 0.0
        %v9876 = vmax.f32 %v9858, 0.0
        %v9877 = vmax.f32 %v9859, 0.0
        %v9878 = vmax.f32 %v9860, 0.0
        %v9893 = vrot.slane %v9861, 1
        %v9894 = vrot.slane %v9862, 1
        %v9895 = vsel %vm1824, %v9893, %v9894
        %v9896 = vrot.slane %v9863, 1
        %v9897 = vsel %vm1824, %v9894, %v9896
        %v9898 = vrot.slane %v9865, 1
        %v9899 = vrot.slane %v9866, 1
        %v9900 = vsel %vm1824, %v9898, %v9899
        %v9901 = vrot.slane %v9867, 1
        %v9902 = vsel %vm1824, %v9899, %v9901
        %v9903 = vrot.slane %v9868, 1
        %v9904 = vsel %vm1824, %v9901, %v9903
        %v9905 = vrot.slane %v9869, 1
        %v9906 = vsel %vm1824, %v9903, %v9905
        %v9907 = vrot.slane %v9871, 1
        %v9908 = vrot.slane %v9872, 1
        %v9909 = vsel %vm1824, %v9907, %v9908
        %v9910 = vrot.slane %v9873, 1
        %v9911 = vsel %vm1824, %v9908, %v9910
        %v9912 = vrot.slane %v9875, 1
        %v9913 = vrot.slane %v9876, 1
        %v9914 = vsel %vm1824, %v9912, %v9913
        %v9915 = vrot.slane %v9877, 1
        %v9916 = vsel %vm1824, %v9913, %v9915
        %v9928 = vmax.f32 %v9861, %v9895
        %v9929 = vmax.f32 %v9862, %v9897
        %v9930 = vmax.f32 %v9865, %v9900
        %v9931 = vmax.f32 %v9866, %v9902
        %v9932 = vmax.f32 %v9867, %v9904
        %v9933 = vmax.f32 %v9868, %v9906
        %v9934 = vmax.f32 %v9871, %v9909
        %v9935 = vmax.f32 %v9872, %v9911
        %v9936 = vmax.f32 %v9875, %v9914
        %v9937 = vmax.f32 %v9876, %v9916
        %v9938 = vmax.f32 %v9877, %v9915
        %v9943 = vrot.slane %v9864, 1
        %v9944 = vsel %vm1824, %v9896, %v9943
        %v9945 = vrot.slane %v9870, 1
        %v9946 = vsel %vm1824, %v9905, %v9945
        %v9947 = vrot.slane %v9874, 1
        %v9948 = vsel %vm1824, %v9910, %v9947
        %v9949 = vrot.slane %v9878, 1
        %v9950 = vsel %vm1824, %v9915, %v9949
        %v9956 = vmax.f32 %v9863, %v9944
        %v9957 = vmax.f32 %v9869, %v9946
        %v9958 = vmax.f32 %v9873, %v9948
        %v9959 = vmax.f32 %v9877, %v9950
        %v9960 = vmax.f32 %v9878, %v9949
        %v9976 = vrot.slane %v9928, 6
        %v9977 = vrot.slane %v9929, 6
        %v9978 = vsel %vm7686, %v9976, %v9977
        %v9979 = vrot.slane %v9956, 6
        %v9980 = vsel %vm7686, %v9977, %v9979
        %v9981 = vrot.slane %v9930, 6
        %v9982 = vrot.slane %v9931, 6
        %v9983 = vsel %vm7686, %v9981, %v9982
        %v9984 = vrot.slane %v9932, 6
        %v9985 = vsel %vm7686, %v9982, %v9984
        %v9986 = vrot.slane %v9933, 6
        %v9987 = vsel %vm7686, %v9984, %v9986
        %v9988 = vrot.slane %v9957, 6
        %v9989 = vsel %vm7686, %v9986, %v9988
        %v9990 = vrot.slane %v9934, 6
        %v9991 = vrot.slane %v9935, 6
        %v9992 = vsel %vm7686, %v9990, %v9991
        %v9993 = vrot.slane %v9958, 6
        %v9994 = vsel %vm7686, %v9991, %v9993
        %v9995 = vrot.slane %v9936, 6
        %v9996 = vrot.slane %v9937, 6
        %v9997 = vsel %vm7686, %v9995, %v9996
        %v9998 = vrot.slane %v9959, 6
        %v9999 = vsel %vm7686, %v9996, %v9998
        %v10000 = vrot.slane %v9960, 6
        %v10001 = vsel %vm7686, %v9998, %v10000
        %v10013 = vmax.f32 %v9928, %v9978
        %v10014 = vmax.f32 %v9929, %v9980
        %v10015 = vmax.f32 %v9930, %v9983
        %v10016 = vmax.f32 %v9931, %v9985
        %v10017 = vmax.f32 %v9932, %v9987
        %v10018 = vmax.f32 %v9933, %v9989
        %v10019 = vmax.f32 %v9934, %v9992
        %v10020 = vmax.f32 %v9935, %v9994
        %v10021 = vmax.f32 %v9936, %v9997
        %v10022 = vmax.f32 %v9937, %v9999
        %v10023 = vmax.f32 %v9938, %v10001
        %v10024 = vpack.c.bf16 %v10014, %v10013
        %v10025 = vpack.c.bf16 %v10016, %v10015
        %v10026 = vpack.c.bf16 %v10018, %v10017
        %v10027 = vpack.c.bf16 %v10020, %v10019
        %v10028 = vpack.c.bf16 %v10022, %v10021
        %v10029 = vpack.c.bf16 %v10023, %v10023
        %v10030 = vld [vmem:[%s9] sm:$0xf]
        %v10031 = vld [vmem:[%s9 + $0x4] sm:$0xf]
        %v10034 = vunpack.c.l.b16 %v10030
        %v10035 = vunpack.c.l.b16 %v10031
        %v10036 = vpack.c.b16 %v10035, %v10034
        %vm10037 = vcmask 121856
        %v10039 = vsel %vm10037, %v10036, 0
        %v10042 = vand.u32 %v10024, %v2620
        %10044 = vmatprep.subr.bf16.mxu0 0
        %10045 = vmatpush1.bf16.msra.mxu0 0
        %10046 = vmatprep.subr.bf16.mxu0 0
        %10047 = vmatpush1.bf16.msra.mxu0 0
        %10048 = vmatprep.subr.bf16.mxu0 0
        %10049 = vmatpush1.bf16.msra.mxu0 0
        %10050 = vmatprep.subr.bf16.mxu0 0
        %10051 = vmatpush1.bf16.msra.mxu0 0
        %10052 = vmatprep.subr.bf16.mxu0 0
        %10053 = vmatpush1.bf16.msra.mxu0 0
        %10054 = vmatprep.subr.bf16.mxu0 0
        %10055 = vmatpush1.bf16.msra.mxu0 0
        %10056 = vmatprep.subr.bf16.mxu0 0
        %10057 = vmatpush1.bf16.msra.mxu0 0
        %10058 = vmatprep.subr.bf16.mxu0 0
        %10059 = vmatpush1.bf16.msra.mxu0 %v10042
        %10060 = vmatprep.subr.bf16.mxu0 0
        %10061 = vmatpush2.bf16.msra.mxu0 0
        %10062 = vmatprep.subr.bf16.mxu0 0
        %10063 = vmatpush2.bf16.msra.mxu0 0
        %10064 = vmatprep.subr.bf16.mxu0 0
        %10065 = vmatpush2.bf16.msra.mxu0 0
        %10066 = vmatprep.subr.bf16.mxu0 0
        %10067 = vmatpush2.bf16.msra.mxu0 0
        %10068 = vmatprep.subr.bf16.mxu0 0
        %10069 = vmatpush2.bf16.msra.mxu0 0
        %10070 = vmatprep.subr.bf16.mxu0 0
        %10071 = vmatpush2.bf16.msra.mxu0 0
        %10072 = vmatprep.subr.bf16.mxu0 0
        %10073 = vmatpush2.bf16.msra.mxu0 0
        %10074 = vmatprep.subr.bf16.mxu0 0
        %10075 = vmatpush2.bf16.msra.mxu0 0
        %10076 = vmatprep.mubr.bf16.mxu0 0
        %10077 = vmatmul.mubr.bf16.gmra.mxu0 %v10039
        %v10078 = vpop.f32.mrf.mxu0
        %v10079 = vadd.f32 0.0, %v10078
        %v10080 = vpop.f32.mrf.mxu0
        %v10081 = vpop.f32.mrf.mxu0
        %v10082 = vadd.f32 0.0, %v10081
        %v10083 = vpop.f32.mrf.mxu0
        %10084 = vdwg.mxu0
        %10085 = vst.msk [vmem:[#allocation4] sm:$0xff] %vm2712, %v10079
        %10086 = vst.msk [vmem:[#allocation4 + $0x8] sm:$0xff] %vm2712, %v10082
        %v10089 = vrot.slane %v10025, 4
        %v10090 = vrot.slane %v10026, 4
        %v10091 = vsel %vm7758, %v10089, %v10090
        %v10093 = vand.u32 %v10091, %v2620
        %10095 = vmatprep.subr.bf16.mxu0 0
        %10096 = vmatpush1.bf16.msra.mxu0 0
        %10097 = vmatprep.subr.bf16.mxu0 0
        %10098 = vmatpush1.bf16.msra.mxu0 0
        %10099 = vmatprep.subr.bf16.mxu0 0
        %10100 = vmatpush1.bf16.msra.mxu0 0
        %10101 = vmatprep.subr.bf16.mxu0 0
        %10102 = vmatpush1.bf16.msra.mxu0 0
        %10103 = vmatprep.subr.bf16.mxu0 0
        %10104 = vmatpush1.bf16.msra.mxu0 0
        %10105 = vmatprep.subr.bf16.mxu0 0
        %10106 = vmatpush1.bf16.msra.mxu0 0
        %10107 = vmatprep.subr.bf16.mxu0 0
        %10108 = vmatpush1.bf16.msra.mxu0 0
        %10109 = vmatprep.subr.bf16.mxu0 0
        %10110 = vmatpush1.bf16.msra.mxu0 %v10093
        %10111 = vmatprep.subr.bf16.mxu0 0
        %10112 = vmatpush2.bf16.msra.mxu0 0
        %10113 = vmatprep.subr.bf16.mxu0 0
        %10114 = vmatpush2.bf16.msra.mxu0 0
        %10115 = vmatprep.subr.bf16.mxu0 0
        %10116 = vmatpush2.bf16.msra.mxu0 0
        %10117 = vmatprep.subr.bf16.mxu0 0
        %10118 = vmatpush2.bf16.msra.mxu0 0
        %10119 = vmatprep.subr.bf16.mxu0 0
        %10120 = vmatpush2.bf16.msra.mxu0 0
        %10121 = vmatprep.subr.bf16.mxu0 0
        %10122 = vmatpush2.bf16.msra.mxu0 0
        %10123 = vmatprep.subr.bf16.mxu0 0
        %10124 = vmatpush2.bf16.msra.mxu0 0
        %10125 = vmatprep.subr.bf16.mxu0 0
        %10126 = vmatpush2.bf16.msra.mxu0 0
        %10127 = vmatprep.mubr.bf16.mxu0 0
        %10128 = vmatmul.mubr.bf16.gmra.mxu0 %v10039
        %v10129 = vpop.f32.mrf.mxu0
        %v10130 = vadd.f32 0.0, %v10129
        %v10131 = vpop.f32.mrf.mxu0
        %v10132 = vpop.f32.mrf.mxu0
        %v10133 = vadd.f32 0.0, %v10132
        %v10134 = vpop.f32.mrf.mxu0
        %10135 = vdwg.mxu0
        %10136 = vst.msk [vmem:[#allocation4 + $0x10] sm:$0xff] %vm2712, %v10130
        %10137 = vst.msk [vmem:[#allocation4 + $0x18] sm:$0xff] %vm2712, %v10133
        %v10139 = vand.u32 %v10027, %v2620
        %10141 = vmatprep.subr.bf16.mxu0 0
        %10142 = vmatpush1.bf16.msra.mxu0 0
        %10143 = vmatprep.subr.bf16.mxu0 0
        %10144 = vmatpush1.bf16.msra.mxu0 0
        %10145 = vmatprep.subr.bf16.mxu0 0
        %10146 = vmatpush1.bf16.msra.mxu0 0
        %10147 = vmatprep.subr.bf16.mxu0 0
        %10148 = vmatpush1.bf16.msra.mxu0 0
        %10149 = vmatprep.subr.bf16.mxu0 0
        %10150 = vmatpush1.bf16.msra.mxu0 0
        %10151 = vmatprep.subr.bf16.mxu0 0
        %10152 = vmatpush1.bf16.msra.mxu0 0
        %10153 = vmatprep.subr.bf16.mxu0 0
        %10154 = vmatpush1.bf16.msra.mxu0 0
        %10155 = vmatprep.subr.bf16.mxu0 0
        %10156 = vmatpush1.bf16.msra.mxu0 %v10139
        %10157 = vmatprep.subr.bf16.mxu0 0
        %10158 = vmatpush2.bf16.msra.mxu0 0
        %10159 = vmatprep.subr.bf16.mxu0 0
        %10160 = vmatpush2.bf16.msra.mxu0 0
        %10161 = vmatprep.subr.bf16.mxu0 0
        %10162 = vmatpush2.bf16.msra.mxu0 0
        %10163 = vmatprep.subr.bf16.mxu0 0
        %10164 = vmatpush2.bf16.msra.mxu0 0
        %10165 = vmatprep.subr.bf16.mxu0 0
        %10166 = vmatpush2.bf16.msra.mxu0 0
        %10167 = vmatprep.subr.bf16.mxu0 0
        %10168 = vmatpush2.bf16.msra.mxu0 0
        %10169 = vmatprep.subr.bf16.mxu0 0
        %10170 = vmatpush2.bf16.msra.mxu0 0
        %10171 = vmatprep.subr.bf16.mxu0 0
        %10172 = vmatpush2.bf16.msra.mxu0 0
        %10173 = vmatprep.mubr.bf16.mxu0 0
        %10174 = vmatmul.mubr.bf16.gmra.mxu0 %v10039
        %v10175 = vpop.f32.mrf.mxu0
        %v10176 = vadd.f32 0.0, %v10175
        %v10177 = vpop.f32.mrf.mxu0
        %v10178 = vpop.f32.mrf.mxu0
        %v10179 = vadd.f32 0.0, %v10178
        %v10180 = vpop.f32.mrf.mxu0
        %10181 = vdwg.mxu0
        %10182 = vst.msk [vmem:[#allocation4 + $0x20] sm:$0xff] %vm2712, %v10176
        %10183 = vst.msk [vmem:[#allocation4 + $0x28] sm:$0xff] %vm2712, %v10179
        %v10186 = vrot.slane %v10028, 4
        %v10187 = vrot.slane %v10029, 4
        %v10188 = vsel %vm7758, %v10186, %v10187
        %v10190 = vand.u32 %v10188, %v2620
        %10192 = vmatprep.subr.bf16.mxu0 0
        %10193 = vmatpush1.bf16.msra.mxu0 0
        %10194 = vmatprep.subr.bf16.mxu0 0
        %10195 = vmatpush1.bf16.msra.mxu0 0
        %10196 = vmatprep.subr.bf16.mxu0 0
        %10197 = vmatpush1.bf16.msra.mxu0 0
        %10198 = vmatprep.subr.bf16.mxu0 0
        %10199 = vmatpush1.bf16.msra.mxu0 0
        %10200 = vmatprep.subr.bf16.mxu0 0
        %10201 = vmatpush1.bf16.msra.mxu0 0
        %10202 = vmatprep.subr.bf16.mxu0 0
        %10203 = vmatpush1.bf16.msra.mxu0 0
        %10204 = vmatprep.subr.bf16.mxu0 0
        %10205 = vmatpush1.bf16.msra.mxu0 0
        %10206 = vmatprep.subr.bf16.mxu0 0
        %10207 = vmatpush1.bf16.msra.mxu0 %v10190
        %10208 = vmatprep.subr.bf16.mxu0 0
        %10209 = vmatpush2.bf16.msra.mxu0 0
        %10210 = vmatprep.subr.bf16.mxu0 0
        %10211 = vmatpush2.bf16.msra.mxu0 0
        %10212 = vmatprep.subr.bf16.mxu0 0
        %10213 = vmatpush2.bf16.msra.mxu0 0
        %10214 = vmatprep.subr.bf16.mxu0 0
        %10215 = vmatpush2.bf16.msra.mxu0 0
        %10216 = vmatprep.subr.bf16.mxu0 0
        %10217 = vmatpush2.bf16.msra.mxu0 0
        %10218 = vmatprep.subr.bf16.mxu0 0
        %10219 = vmatpush2.bf16.msra.mxu0 0
        %10220 = vmatprep.subr.bf16.mxu0 0
        %10221 = vmatpush2.bf16.msra.mxu0 0
        %10222 = vmatprep.subr.bf16.mxu0 0
        %10223 = vmatpush2.bf16.msra.mxu0 0
        %10224 = vmatprep.mubr.bf16.mxu0 0
        %10225 = vmatmul.mubr.bf16.gmra.mxu0 %v10039
        %v10226 = vpop.f32.mrf.mxu0
        %v10227 = vadd.f32 0.0, %v10226
        %v10228 = vpop.f32.mrf.mxu0
        %v10229 = vpop.f32.mrf.mxu0
        %v10230 = vadd.f32 0.0, %v10229
        %v10231 = vpop.f32.mrf.mxu0
        %10232 = vdwg.mxu0
        %10233 = vst.msk [vmem:[#allocation4 + $0x30] sm:$0xff] %vm2712, %v10227
        %10234 = vst.msk [vmem:[#allocation4 + $0x38] sm:$0xff] %vm2712, %v10230
        %v10235 = vld [vmem:[%s6] sm:$0x1]
        %v10236 = vld [vmem:[#allocation4] sm:$0xff]
        %v10237 = vld [vmem:[#allocation4 + $0x8] sm:$0xff]
        %v10238 = vld [vmem:[#allocation4 + $0x10] sm:$0xff]
        %v10239 = vld [vmem:[#allocation4 + $0x18] sm:$0xff]
        %v10240 = vld [vmem:[#allocation4 + $0x20] sm:$0xff]
        %v10241 = vld [vmem:[#allocation4 + $0x28] sm:$0xff]
        %v10242 = vld [vmem:[#allocation4 + $0x30] sm:$0x3f]
        %v10243 = vpack.c.bf16 %v10237, %v10236
        %v10244 = vpack.c.bf16 %v10239, %v10238
        %v10245 = vpack.c.bf16 %v10241, %v10240
        %v10246 = vpack.c.bf16 %v10242, %v10242
        %s10247 = scalar_lea.vmem %s2, 576
        %v10248 = vld [vmem:[%s10247] sm:$0xf]
        %v10249 = vld [vmem:[%s10247 + $0x4] sm:$0xf]
        %v10250 = vld [vmem:[%s10247 + $0x8] sm:$0xf]
        %v10251 = vld [vmem:[%s10247 + $0xc] sm:$0xf]
        %v10252 = vld [vmem:[%s10247 + $0x10] sm:$0xf]
        %v10253 = vld [vmem:[%s10247 + $0x14] sm:$0xf]
        %v10254 = vld [vmem:[%s10247 + $0x18] sm:$0xf]
        %v10255 = vld [vmem:[%s10247 + $0x1c] sm:$0xf]
        %v10256 = vld [vmem:[#allocation4 + $0x1] sm:$0xff]
        %v10257 = vld [vmem:[#allocation4 + $0x9] sm:$0xff]
        %v10258 = vld [vmem:[#allocation4 + $0x11] sm:$0xff]
        %v10259 = vld [vmem:[#allocation4 + $0x19] sm:$0xff]
        %v10260 = vld [vmem:[#allocation4 + $0x21] sm:$0xff]
        %v10261 = vld [vmem:[#allocation4 + $0x29] sm:$0xff]
        %v10262 = vld [vmem:[#allocation4 + $0x31] sm:$0x3f]
        %v10263 = vpack.c.bf16 %v10257, %v10256
        %v10264 = vpack.c.bf16 %v10259, %v10258
        %v10265 = vpack.c.bf16 %v10261, %v10260
        %v10266 = vpack.c.bf16 %v10262, %v10262
        %s10267 = scalar_lea.vmem %s2, 608
        %v10268 = vld [vmem:[%s10267] sm:$0xf]
        %v10269 = vld [vmem:[%s10267 + $0x4] sm:$0xf]
        %v10270 = vld [vmem:[%s10267 + $0x8] sm:$0xf]
        %v10271 = vld [vmem:[%s10267 + $0xc] sm:$0xf]
        %v10272 = vld [vmem:[%s10267 + $0x10] sm:$0xf]
        %v10273 = vld [vmem:[%s10267 + $0x14] sm:$0xf]
        %v10274 = vld [vmem:[%s10267 + $0x18] sm:$0xf]
        %v10275 = vld [vmem:[%s10267 + $0x1c] sm:$0xf]
        %v10284 = vunpack.c.l.b16 %v10268
        %v10285 = vunpack.c.l.b16 %v10269
        %v10286 = vunpack.c.l.b16 %v10270
        %v10287 = vunpack.c.l.b16 %v10271
        %v10288 = vunpack.c.l.b16 %v10272
        %v10289 = vunpack.c.l.b16 %v10273
        %v10290 = vunpack.c.l.b16 %v10274
        %v10291 = vunpack.c.l.b16 %v10275
        %v10292 = vpack.c.b16 %v10285, %v10284
        %v10293 = vpack.c.b16 %v10287, %v10286
        %v10294 = vpack.c.b16 %v10289, %v10288
        %v10295 = vpack.c.b16 %v10291, %v10290
        %v10301 = vsel %vm2712, %v10263, 0
        %v10304 = vsel %vm2712, %v10264, 0
        %v10307 = vsel %vm2712, %v10265, 0
        %v10310 = vsel %vm2712, %v10266, 0
        %10312 = vmatprep.subr.bf16.mxu0 0
        %10313 = vmatpush1.bf16.msra.mxu0 0
        %10314 = vmatprep.subr.bf16.mxu0 0
        %10315 = vmatpush1.bf16.msra.mxu0 0
        %10316 = vmatprep.subr.bf16.mxu0 0
        %10317 = vmatpush1.bf16.msra.mxu0 0
        %10318 = vmatprep.subr.bf16.mxu0 0
        %10319 = vmatpush1.bf16.msra.mxu0 0
        %10320 = vmatprep.subr.bf16.mxu0 0
        %10321 = vmatpush1.bf16.msra.mxu0 %v10295
        %10322 = vmatprep.subr.bf16.mxu0 0
        %10323 = vmatpush1.bf16.msra.mxu0 %v10294
        %10324 = vmatprep.subr.bf16.mxu0 0
        %10325 = vmatpush1.bf16.msra.mxu0 %v10293
        %10326 = vmatprep.subr.bf16.mxu0 0
        %10327 = vmatpush1.bf16.msra.mxu0 %v10292
        %10328 = vmatprep.subr.bf16.mxu0 0
        %10329 = vmatpush2.bf16.msra.mxu0 0
        %10330 = vmatprep.subr.bf16.mxu0 0
        %10331 = vmatpush2.bf16.msra.mxu0 0
        %10332 = vmatprep.subr.bf16.mxu0 0
        %10333 = vmatpush2.bf16.msra.mxu0 0
        %10334 = vmatprep.subr.bf16.mxu0 0
        %10335 = vmatpush2.bf16.msra.mxu0 0
        %10336 = vmatprep.subr.bf16.mxu0 0
        %10337 = vmatpush2.bf16.msra.mxu0 0
        %10338 = vmatprep.subr.bf16.mxu0 0
        %10339 = vmatpush2.bf16.msra.mxu0 0
        %10340 = vmatprep.subr.bf16.mxu0 0
        %10341 = vmatpush2.bf16.msra.mxu0 0
        %10342 = vmatprep.subr.bf16.mxu0 0
        %10343 = vmatpush2.bf16.msra.mxu0 0
        %10344 = vmatprep.mubr.bf16.mxu0 0
        %10345 = vmatmul.mubr.bf16.gmra.mxu0 %v10301
        %v10346 = vpop.f32.mrf.mxu0
        %v10347 = vadd.f32 0.0, %v10346
        %v10348 = vpop.f32.mrf.mxu0
        %v10349 = vpop.f32.mrf.mxu0
        %v10350 = vadd.f32 0.0, %v10349
        %v10351 = vpop.f32.mrf.mxu0
        %10352 = vmatprep.mubr.bf16.mxu0 0
        %10353 = vmatmul.mubr.bf16.gmra.mxu0 %v10304
        %v10354 = vpop.f32.mrf.mxu0
        %v10355 = vadd.f32 0.0, %v10354
        %v10356 = vpop.f32.mrf.mxu0
        %v10357 = vpop.f32.mrf.mxu0
        %v10358 = vadd.f32 0.0, %v10357
        %v10359 = vpop.f32.mrf.mxu0
        %10360 = vmatprep.mubr.bf16.mxu0 0
        %10361 = vmatmul.mubr.bf16.gmra.mxu0 %v10307
        %v10362 = vpop.f32.mrf.mxu0
        %v10363 = vadd.f32 0.0, %v10362
        %v10364 = vpop.f32.mrf.mxu0
        %v10365 = vpop.f32.mrf.mxu0
        %v10366 = vadd.f32 0.0, %v10365
        %v10367 = vpop.f32.mrf.mxu0
        %10368 = vmatprep.mubr.bf16.mxu0 0
        %10369 = vmatmul.mubr.bf16.gmra.mxu0 %v10310
        %v10370 = vpop.f32.mrf.mxu0
        %v10371 = vadd.f32 0.0, %v10370
        %v10372 = vpop.f32.mrf.mxu0
        %v10373 = vpop.f32.mrf.mxu0
        %v10374 = vpop.f32.mrf.mxu0
        %10375 = vdwg.mxu0
        %v10384 = vunpack.c.l.b16 %v10248
        %v10385 = vunpack.c.l.b16 %v10249
        %v10386 = vunpack.c.l.b16 %v10250
        %v10387 = vunpack.c.l.b16 %v10251
        %v10388 = vunpack.c.l.b16 %v10252
        %v10389 = vunpack.c.l.b16 %v10253
        %v10390 = vunpack.c.l.b16 %v10254
        %v10391 = vunpack.c.l.b16 %v10255
        %v10392 = vpack.c.b16 %v10385, %v10384
        %v10393 = vpack.c.b16 %v10387, %v10386
        %v10394 = vpack.c.b16 %v10389, %v10388
        %v10395 = vpack.c.b16 %v10391, %v10390
        %v10401 = vsel %vm2712, %v10243, 0
        %v10404 = vsel %vm2712, %v10244, 0
        %v10407 = vsel %vm2712, %v10245, 0
        %v10410 = vsel %vm2712, %v10246, 0
        %10412 = vmatprep.subr.bf16.mxu0 0
        %10413 = vmatpush1.bf16.msra.mxu0 0
        %10414 = vmatprep.subr.bf16.mxu0 0
        %10415 = vmatpush1.bf16.msra.mxu0 0
        %10416 = vmatprep.subr.bf16.mxu0 0
        %10417 = vmatpush1.bf16.msra.mxu0 0
        %10418 = vmatprep.subr.bf16.mxu0 0
        %10419 = vmatpush1.bf16.msra.mxu0 0
        %10420 = vmatprep.subr.bf16.mxu0 0
        %10421 = vmatpush1.bf16.msra.mxu0 %v10395
        %10422 = vmatprep.subr.bf16.mxu0 0
        %10423 = vmatpush1.bf16.msra.mxu0 %v10394
        %10424 = vmatprep.subr.bf16.mxu0 0
        %10425 = vmatpush1.bf16.msra.mxu0 %v10393
        %10426 = vmatprep.subr.bf16.mxu0 0
        %10427 = vmatpush1.bf16.msra.mxu0 %v10392
        %10428 = vmatprep.subr.bf16.mxu0 0
        %10429 = vmatpush2.bf16.msra.mxu0 0
        %10430 = vmatprep.subr.bf16.mxu0 0
        %10431 = vmatpush2.bf16.msra.mxu0 0
        %10432 = vmatprep.subr.bf16.mxu0 0
        %10433 = vmatpush2.bf16.msra.mxu0 0
        %10434 = vmatprep.subr.bf16.mxu0 0
        %10435 = vmatpush2.bf16.msra.mxu0 0
        %10436 = vmatprep.subr.bf16.mxu0 0
        %10437 = vmatpush2.bf16.msra.mxu0 0
        %10438 = vmatprep.subr.bf16.mxu0 0
        %10439 = vmatpush2.bf16.msra.mxu0 0
        %10440 = vmatprep.subr.bf16.mxu0 0
        %10441 = vmatpush2.bf16.msra.mxu0 0
        %10442 = vmatprep.subr.bf16.mxu0 0
        %10443 = vmatpush2.bf16.msra.mxu0 0
        %10444 = vmatprep.mubr.bf16.mxu0 0
        %10445 = vmatmul.mubr.bf16.gmra.mxu0 %v10401
        %v10446 = vpop.f32.mrf.mxu0
        %v10447 = vadd.f32 %v10347, %v10446
        %v10448 = vpop.f32.mrf.mxu0
        %v10449 = vpop.f32.mrf.mxu0
        %v10450 = vadd.f32 %v10350, %v10449
        %v10451 = vpop.f32.mrf.mxu0
        %10452 = vmatprep.mubr.bf16.mxu0 0
        %10453 = vmatmul.mubr.bf16.gmra.mxu0 %v10404
        %v10454 = vpop.f32.mrf.mxu0
        %v10455 = vadd.f32 %v10355, %v10454
        %v10456 = vpop.f32.mrf.mxu0
        %v10457 = vpop.f32.mrf.mxu0
        %v10458 = vadd.f32 %v10358, %v10457
        %v10459 = vpop.f32.mrf.mxu0
        %10460 = vmatprep.mubr.bf16.mxu0 0
        %10461 = vmatmul.mubr.bf16.gmra.mxu0 %v10407
        %v10462 = vpop.f32.mrf.mxu0
        %v10463 = vadd.f32 %v10363, %v10462
        %v10464 = vpop.f32.mrf.mxu0
        %v10465 = vpop.f32.mrf.mxu0
        %v10466 = vadd.f32 %v10366, %v10465
        %v10467 = vpop.f32.mrf.mxu0
        %10468 = vmatprep.mubr.bf16.mxu0 0
        %10469 = vmatmul.mubr.bf16.gmra.mxu0 %v10410
        %v10470 = vpop.f32.mrf.mxu0
        %v10471 = vadd.f32 %v10371, %v10470
        %v10472 = vpop.f32.mrf.mxu0
        %v10473 = vpop.f32.mrf.mxu0
        %v10474 = vpop.f32.mrf.mxu0
        %10475 = vdwg.mxu0
        %v10476 = vld [vmem:[#allocation4 + $0x2] sm:$0xff]
        %v10477 = vld [vmem:[#allocation4 + $0xa] sm:$0xff]
        %v10478 = vld [vmem:[#allocation4 + $0x12] sm:$0xff]
        %v10479 = vld [vmem:[#allocation4 + $0x1a] sm:$0xff]
        %v10480 = vld [vmem:[#allocation4 + $0x22] sm:$0xff]
        %v10481 = vld [vmem:[#allocation4 + $0x2a] sm:$0xff]
        %v10482 = vld [vmem:[#allocation4 + $0x32] sm:$0x3f]
        %v10483 = vpack.c.bf16 %v10477, %v10476
        %v10484 = vpack.c.bf16 %v10479, %v10478
        %v10485 = vpack.c.bf16 %v10481, %v10480
        %v10486 = vpack.c.bf16 %v10482, %v10482
        %s10487 = scalar_lea.vmem %s2, 640
        %v10488 = vld [vmem:[%s10487] sm:$0xf]
        %v10489 = vld [vmem:[%s10487 + $0x4] sm:$0xf]
        %v10490 = vld [vmem:[%s10487 + $0x8] sm:$0xf]
        %v10491 = vld [vmem:[%s10487 + $0xc] sm:$0xf]
        %v10492 = vld [vmem:[%s10487 + $0x10] sm:$0xf]
        %v10493 = vld [vmem:[%s10487 + $0x14] sm:$0xf]
        %v10494 = vld [vmem:[%s10487 + $0x18] sm:$0xf]
        %v10495 = vld [vmem:[%s10487 + $0x1c] sm:$0xf]
        %v10504 = vunpack.c.l.b16 %v10488
        %v10505 = vunpack.c.l.b16 %v10489
        %v10506 = vunpack.c.l.b16 %v10490
        %v10507 = vunpack.c.l.b16 %v10491
        %v10508 = vunpack.c.l.b16 %v10492
        %v10509 = vunpack.c.l.b16 %v10493
        %v10510 = vunpack.c.l.b16 %v10494
        %v10511 = vunpack.c.l.b16 %v10495
        %v10512 = vpack.c.b16 %v10505, %v10504
        %v10513 = vpack.c.b16 %v10507, %v10506
        %v10514 = vpack.c.b16 %v10509, %v10508
        %v10515 = vpack.c.b16 %v10511, %v10510
        %v10521 = vsel %vm2712, %v10483, 0
        %v10524 = vsel %vm2712, %v10484, 0
        %v10527 = vsel %vm2712, %v10485, 0
        %v10530 = vsel %vm2712, %v10486, 0
        %10532 = vmatprep.subr.bf16.mxu0 0
        %10533 = vmatpush1.bf16.msra.mxu0 0
        %10534 = vmatprep.subr.bf16.mxu0 0
        %10535 = vmatpush1.bf16.msra.mxu0 0
        %10536 = vmatprep.subr.bf16.mxu0 0
        %10537 = vmatpush1.bf16.msra.mxu0 0
        %10538 = vmatprep.subr.bf16.mxu0 0
        %10539 = vmatpush1.bf16.msra.mxu0 0
        %10540 = vmatprep.subr.bf16.mxu0 0
        %10541 = vmatpush1.bf16.msra.mxu0 %v10515
        %10542 = vmatprep.subr.bf16.mxu0 0
        %10543 = vmatpush1.bf16.msra.mxu0 %v10514
        %10544 = vmatprep.subr.bf16.mxu0 0
        %10545 = vmatpush1.bf16.msra.mxu0 %v10513
        %10546 = vmatprep.subr.bf16.mxu0 0
        %10547 = vmatpush1.bf16.msra.mxu0 %v10512
        %10548 = vmatprep.subr.bf16.mxu0 0
        %10549 = vmatpush2.bf16.msra.mxu0 0
        %10550 = vmatprep.subr.bf16.mxu0 0
        %10551 = vmatpush2.bf16.msra.mxu0 0
        %10552 = vmatprep.subr.bf16.mxu0 0
        %10553 = vmatpush2.bf16.msra.mxu0 0
        %10554 = vmatprep.subr.bf16.mxu0 0
        %10555 = vmatpush2.bf16.msra.mxu0 0
        %10556 = vmatprep.subr.bf16.mxu0 0
        %10557 = vmatpush2.bf16.msra.mxu0 0
        %10558 = vmatprep.subr.bf16.mxu0 0
        %10559 = vmatpush2.bf16.msra.mxu0 0
        %10560 = vmatprep.subr.bf16.mxu0 0
        %10561 = vmatpush2.bf16.msra.mxu0 0
        %10562 = vmatprep.subr.bf16.mxu0 0
        %10563 = vmatpush2.bf16.msra.mxu0 0
        %10564 = vmatprep.mubr.bf16.mxu0 0
        %10565 = vmatmul.mubr.bf16.gmra.mxu0 %v10521
        %v10566 = vpop.f32.mrf.mxu0
        %v10567 = vadd.f32 0.0, %v10566
        %v10568 = vpop.f32.mrf.mxu0
        %v10569 = vpop.f32.mrf.mxu0
        %v10570 = vadd.f32 0.0, %v10569
        %v10571 = vpop.f32.mrf.mxu0
        %10572 = vmatprep.mubr.bf16.mxu0 0
        %10573 = vmatmul.mubr.bf16.gmra.mxu0 %v10524
        %v10574 = vpop.f32.mrf.mxu0
        %v10575 = vadd.f32 0.0, %v10574
        %v10576 = vpop.f32.mrf.mxu0
        %v10577 = vpop.f32.mrf.mxu0
        %v10578 = vadd.f32 0.0, %v10577
        %v10579 = vpop.f32.mrf.mxu0
        %10580 = vmatprep.mubr.bf16.mxu0 0
        %10581 = vmatmul.mubr.bf16.gmra.mxu0 %v10527
        %v10582 = vpop.f32.mrf.mxu0
        %v10583 = vadd.f32 0.0, %v10582
        %v10584 = vpop.f32.mrf.mxu0
        %v10585 = vpop.f32.mrf.mxu0
        %v10586 = vadd.f32 0.0, %v10585
        %v10587 = vpop.f32.mrf.mxu0
        %10588 = vmatprep.mubr.bf16.mxu0 0
        %10589 = vmatmul.mubr.bf16.gmra.mxu0 %v10530
        %v10590 = vpop.f32.mrf.mxu0
        %v10591 = vadd.f32 0.0, %v10590
        %v10592 = vpop.f32.mrf.mxu0
        %v10593 = vpop.f32.mrf.mxu0
        %v10594 = vpop.f32.mrf.mxu0
        %10595 = vdwg.mxu0
        %v10596 = vadd.f32 %v10447, %v10567
        %v10597 = vadd.f32 %v10450, %v10570
        %v10598 = vadd.f32 %v10455, %v10575
        %v10599 = vadd.f32 %v10458, %v10578
        %v10600 = vadd.f32 %v10463, %v10583
        %v10601 = vadd.f32 %v10466, %v10586
        %v10602 = vadd.f32 %v10471, %v10591
        %v10603 = vld [vmem:[#allocation4 + $0x4] sm:$0xff]
        %v10604 = vld [vmem:[#allocation4 + $0xc] sm:$0xff]
        %v10605 = vld [vmem:[#allocation4 + $0x14] sm:$0xff]
        %v10606 = vld [vmem:[#allocation4 + $0x1c] sm:$0xff]
        %v10607 = vld [vmem:[#allocation4 + $0x24] sm:$0xff]
        %v10608 = vld [vmem:[#allocation4 + $0x2c] sm:$0xff]
        %v10609 = vld [vmem:[#allocation4 + $0x34] sm:$0x3f]
        %v10610 = vpack.c.bf16 %v10604, %v10603
        %v10611 = vpack.c.bf16 %v10606, %v10605
        %v10612 = vpack.c.bf16 %v10608, %v10607
        %v10613 = vpack.c.bf16 %v10609, %v10609
        %s10614 = scalar_lea.vmem %s2, 672
        %v10615 = vld [vmem:[%s10614] sm:$0xf]
        %v10616 = vld [vmem:[%s10614 + $0x4] sm:$0xf]
        %v10617 = vld [vmem:[%s10614 + $0x8] sm:$0xf]
        %v10618 = vld [vmem:[%s10614 + $0xc] sm:$0xf]
        %v10619 = vld [vmem:[%s10614 + $0x10] sm:$0xf]
        %v10620 = vld [vmem:[%s10614 + $0x14] sm:$0xf]
        %v10621 = vld [vmem:[%s10614 + $0x18] sm:$0xf]
        %v10622 = vld [vmem:[%s10614 + $0x1c] sm:$0xf]
        %v10631 = vunpack.c.l.b16 %v10615
        %v10632 = vunpack.c.l.b16 %v10616
        %v10633 = vunpack.c.l.b16 %v10617
        %v10634 = vunpack.c.l.b16 %v10618
        %v10635 = vunpack.c.l.b16 %v10619
        %v10636 = vunpack.c.l.b16 %v10620
        %v10637 = vunpack.c.l.b16 %v10621
        %v10638 = vunpack.c.l.b16 %v10622
        %v10639 = vpack.c.b16 %v10632, %v10631
        %v10640 = vpack.c.b16 %v10634, %v10633
        %v10641 = vpack.c.b16 %v10636, %v10635
        %v10642 = vpack.c.b16 %v10638, %v10637
        %v10648 = vsel %vm2712, %v10610, 0
        %v10651 = vsel %vm2712, %v10611, 0
        %v10654 = vsel %vm2712, %v10612, 0
        %v10657 = vsel %vm2712, %v10613, 0
        %10659 = vmatprep.subr.bf16.mxu0 0
        %10660 = vmatpush1.bf16.msra.mxu0 0
        %10661 = vmatprep.subr.bf16.mxu0 0
        %10662 = vmatpush1.bf16.msra.mxu0 0
        %10663 = vmatprep.subr.bf16.mxu0 0
        %10664 = vmatpush1.bf16.msra.mxu0 0
        %10665 = vmatprep.subr.bf16.mxu0 0
        %10666 = vmatpush1.bf16.msra.mxu0 0
        %10667 = vmatprep.subr.bf16.mxu0 0
        %10668 = vmatpush1.bf16.msra.mxu0 %v10642
        %10669 = vmatprep.subr.bf16.mxu0 0
        %10670 = vmatpush1.bf16.msra.mxu0 %v10641
        %10671 = vmatprep.subr.bf16.mxu0 0
        %10672 = vmatpush1.bf16.msra.mxu0 %v10640
        %10673 = vmatprep.subr.bf16.mxu0 0
        %10674 = vmatpush1.bf16.msra.mxu0 %v10639
        %10675 = vmatprep.subr.bf16.mxu0 0
        %10676 = vmatpush2.bf16.msra.mxu0 0
        %10677 = vmatprep.subr.bf16.mxu0 0
        %10678 = vmatpush2.bf16.msra.mxu0 0
        %10679 = vmatprep.subr.bf16.mxu0 0
        %10680 = vmatpush2.bf16.msra.mxu0 0
        %10681 = vmatprep.subr.bf16.mxu0 0
        %10682 = vmatpush2.bf16.msra.mxu0 0
        %10683 = vmatprep.subr.bf16.mxu0 0
        %10684 = vmatpush2.bf16.msra.mxu0 0
        %10685 = vmatprep.subr.bf16.mxu0 0
        %10686 = vmatpush2.bf16.msra.mxu0 0
        %10687 = vmatprep.subr.bf16.mxu0 0
        %10688 = vmatpush2.bf16.msra.mxu0 0
        %10689 = vmatprep.subr.bf16.mxu0 0
        %10690 = vmatpush2.bf16.msra.mxu0 0
        %10691 = vmatprep.mubr.bf16.mxu0 0
        %10692 = vmatmul.mubr.bf16.gmra.mxu0 %v10648
        %v10693 = vpop.f32.mrf.mxu0
        %v10694 = vadd.f32 0.0, %v10693
        %v10695 = vpop.f32.mrf.mxu0
        %v10696 = vpop.f32.mrf.mxu0
        %v10697 = vadd.f32 0.0, %v10696
        %v10698 = vpop.f32.mrf.mxu0
        %10699 = vmatprep.mubr.bf16.mxu0 0
        %10700 = vmatmul.mubr.bf16.gmra.mxu0 %v10651
        %v10701 = vpop.f32.mrf.mxu0
        %v10702 = vadd.f32 0.0, %v10701
        %v10703 = vpop.f32.mrf.mxu0
        %v10704 = vpop.f32.mrf.mxu0
        %v10705 = vadd.f32 0.0, %v10704
        %v10706 = vpop.f32.mrf.mxu0
        %10707 = vmatprep.mubr.bf16.mxu0 0
        %10708 = vmatmul.mubr.bf16.gmra.mxu0 %v10654
        %v10709 = vpop.f32.mrf.mxu0
        %v10710 = vadd.f32 0.0, %v10709
        %v10711 = vpop.f32.mrf.mxu0
        %v10712 = vpop.f32.mrf.mxu0
        %v10713 = vadd.f32 0.0, %v10712
        %v10714 = vpop.f32.mrf.mxu0
        %10715 = vmatprep.mubr.bf16.mxu0 0
        %10716 = vmatmul.mubr.bf16.gmra.mxu0 %v10657
        %v10717 = vpop.f32.mrf.mxu0
        %v10718 = vadd.f32 0.0, %v10717
        %v10719 = vpop.f32.mrf.mxu0
        %v10720 = vpop.f32.mrf.mxu0
        %v10721 = vpop.f32.mrf.mxu0
        %10722 = vdwg.mxu0
        %v10723 = vadd.f32 %v10596, %v10694
        %v10724 = vadd.f32 %v10597, %v10697
        %v10725 = vadd.f32 %v10598, %v10702
        %v10726 = vadd.f32 %v10599, %v10705
        %v10727 = vadd.f32 %v10600, %v10710
        %v10728 = vadd.f32 %v10601, %v10713
        %v10729 = vadd.f32 %v10602, %v10718
        %v10730 = vld [vmem:[#allocation4 + $0x5] sm:$0xff]
        %v10731 = vld [vmem:[#allocation4 + $0xd] sm:$0xff]
        %v10732 = vld [vmem:[#allocation4 + $0x15] sm:$0xff]
        %v10733 = vld [vmem:[#allocation4 + $0x1d] sm:$0xff]
        %v10734 = vld [vmem:[#allocation4 + $0x25] sm:$0xff]
        %v10735 = vld [vmem:[#allocation4 + $0x2d] sm:$0xff]
        %v10736 = vld [vmem:[#allocation4 + $0x35] sm:$0x3f]
        %v10737 = vpack.c.bf16 %v10731, %v10730
        %v10738 = vpack.c.bf16 %v10733, %v10732
        %v10739 = vpack.c.bf16 %v10735, %v10734
        %v10740 = vpack.c.bf16 %v10736, %v10736
        %s10741 = scalar_lea.vmem %s2, 704
        %v10742 = vld [vmem:[%s10741] sm:$0xf]
        %v10743 = vld [vmem:[%s10741 + $0x4] sm:$0xf]
        %v10744 = vld [vmem:[%s10741 + $0x8] sm:$0xf]
        %v10745 = vld [vmem:[%s10741 + $0xc] sm:$0xf]
        %v10746 = vld [vmem:[%s10741 + $0x10] sm:$0xf]
        %v10747 = vld [vmem:[%s10741 + $0x14] sm:$0xf]
        %v10748 = vld [vmem:[%s10741 + $0x18] sm:$0xf]
        %v10749 = vld [vmem:[%s10741 + $0x1c] sm:$0xf]
        %v10758 = vunpack.c.l.b16 %v10742
        %v10759 = vunpack.c.l.b16 %v10743
        %v10760 = vunpack.c.l.b16 %v10744
        %v10761 = vunpack.c.l.b16 %v10745
        %v10762 = vunpack.c.l.b16 %v10746
        %v10763 = vunpack.c.l.b16 %v10747
        %v10764 = vunpack.c.l.b16 %v10748
        %v10765 = vunpack.c.l.b16 %v10749
        %v10766 = vpack.c.b16 %v10759, %v10758
        %v10767 = vpack.c.b16 %v10761, %v10760
        %v10768 = vpack.c.b16 %v10763, %v10762
        %v10769 = vpack.c.b16 %v10765, %v10764
        %v10775 = vsel %vm2712, %v10737, 0
        %v10778 = vsel %vm2712, %v10738, 0
        %v10781 = vsel %vm2712, %v10739, 0
        %v10784 = vsel %vm2712, %v10740, 0
        %10786 = vmatprep.subr.bf16.mxu0 0
        %10787 = vmatpush1.bf16.msra.mxu0 0
        %10788 = vmatprep.subr.bf16.mxu0 0
        %10789 = vmatpush1.bf16.msra.mxu0 0
        %10790 = vmatprep.subr.bf16.mxu0 0
        %10791 = vmatpush1.bf16.msra.mxu0 0
        %10792 = vmatprep.subr.bf16.mxu0 0
        %10793 = vmatpush1.bf16.msra.mxu0 0
        %10794 = vmatprep.subr.bf16.mxu0 0
        %10795 = vmatpush1.bf16.msra.mxu0 %v10769
        %10796 = vmatprep.subr.bf16.mxu0 0
        %10797 = vmatpush1.bf16.msra.mxu0 %v10768
        %10798 = vmatprep.subr.bf16.mxu0 0
        %10799 = vmatpush1.bf16.msra.mxu0 %v10767
        %10800 = vmatprep.subr.bf16.mxu0 0
        %10801 = vmatpush1.bf16.msra.mxu0 %v10766
        %10802 = vmatprep.subr.bf16.mxu0 0
        %10803 = vmatpush2.bf16.msra.mxu0 0
        %10804 = vmatprep.subr.bf16.mxu0 0
        %10805 = vmatpush2.bf16.msra.mxu0 0
        %10806 = vmatprep.subr.bf16.mxu0 0
        %10807 = vmatpush2.bf16.msra.mxu0 0
        %10808 = vmatprep.subr.bf16.mxu0 0
        %10809 = vmatpush2.bf16.msra.mxu0 0
        %10810 = vmatprep.subr.bf16.mxu0 0
        %10811 = vmatpush2.bf16.msra.mxu0 0
        %10812 = vmatprep.subr.bf16.mxu0 0
        %10813 = vmatpush2.bf16.msra.mxu0 0
        %10814 = vmatprep.subr.bf16.mxu0 0
        %10815 = vmatpush2.bf16.msra.mxu0 0
        %10816 = vmatprep.subr.bf16.mxu0 0
        %10817 = vmatpush2.bf16.msra.mxu0 0
        %10818 = vmatprep.mubr.bf16.mxu0 0
        %10819 = vmatmul.mubr.bf16.gmra.mxu0 %v10775
        %v10820 = vpop.f32.mrf.mxu0
        %v10821 = vadd.f32 0.0, %v10820
        %v10822 = vpop.f32.mrf.mxu0
        %v10823 = vpop.f32.mrf.mxu0
        %v10824 = vadd.f32 0.0, %v10823
        %v10825 = vpop.f32.mrf.mxu0
        %10826 = vmatprep.mubr.bf16.mxu0 0
        %10827 = vmatmul.mubr.bf16.gmra.mxu0 %v10778
        %v10828 = vpop.f32.mrf.mxu0
        %v10829 = vadd.f32 0.0, %v10828
        %v10830 = vpop.f32.mrf.mxu0
        %v10831 = vpop.f32.mrf.mxu0
        %v10832 = vadd.f32 0.0, %v10831
        %v10833 = vpop.f32.mrf.mxu0
        %10834 = vmatprep.mubr.bf16.mxu0 0
        %10835 = vmatmul.mubr.bf16.gmra.mxu0 %v10781
        %v10836 = vpop.f32.mrf.mxu0
        %v10837 = vadd.f32 0.0, %v10836
        %v10838 = vpop.f32.mrf.mxu0
        %v10839 = vpop.f32.mrf.mxu0
        %v10840 = vadd.f32 0.0, %v10839
        %v10841 = vpop.f32.mrf.mxu0
        %10842 = vmatprep.mubr.bf16.mxu0 0
        %10843 = vmatmul.mubr.bf16.gmra.mxu0 %v10784
        %v10844 = vpop.f32.mrf.mxu0
        %v10845 = vadd.f32 0.0, %v10844
        %v10846 = vpop.f32.mrf.mxu0
        %v10847 = vpop.f32.mrf.mxu0
        %v10848 = vpop.f32.mrf.mxu0
        %10849 = vdwg.mxu0
        %v10850 = vadd.f32 %v10723, %v10821
        %v10851 = vadd.f32 %v10724, %v10824
        %v10852 = vadd.f32 %v10725, %v10829
        %v10853 = vadd.f32 %v10726, %v10832
        %v10854 = vadd.f32 %v10727, %v10837
        %v10855 = vadd.f32 %v10728, %v10840
        %v10856 = vadd.f32 %v10729, %v10845
        %v10857 = vld [vmem:[#allocation4 + $0x6] sm:$0xff]
        %v10858 = vld [vmem:[#allocation4 + $0xe] sm:$0xff]
        %v10859 = vld [vmem:[#allocation4 + $0x16] sm:$0xff]
        %v10860 = vld [vmem:[#allocation4 + $0x1e] sm:$0xff]
        %v10861 = vld [vmem:[#allocation4 + $0x26] sm:$0xff]
        %v10862 = vld [vmem:[#allocation4 + $0x2e] sm:$0xff]
        %v10863 = vld [vmem:[#allocation4 + $0x36] sm:$0x3f]
        %v10864 = vpack.c.bf16 %v10858, %v10857
        %v10865 = vpack.c.bf16 %v10860, %v10859
        %v10866 = vpack.c.bf16 %v10862, %v10861
        %v10867 = vpack.c.bf16 %v10863, %v10863
        %s10868 = scalar_lea.vmem %s2, 736
        %v10869 = vld [vmem:[%s10868] sm:$0xf]
        %v10870 = vld [vmem:[%s10868 + $0x4] sm:$0xf]
        %v10871 = vld [vmem:[%s10868 + $0x8] sm:$0xf]
        %v10872 = vld [vmem:[%s10868 + $0xc] sm:$0xf]
        %v10873 = vld [vmem:[%s10868 + $0x10] sm:$0xf]
        %v10874 = vld [vmem:[%s10868 + $0x14] sm:$0xf]
        %v10875 = vld [vmem:[%s10868 + $0x18] sm:$0xf]
        %v10876 = vld [vmem:[%s10868 + $0x1c] sm:$0xf]
        %v10885 = vunpack.c.l.b16 %v10869
        %v10886 = vunpack.c.l.b16 %v10870
        %v10887 = vunpack.c.l.b16 %v10871
        %v10888 = vunpack.c.l.b16 %v10872
        %v10889 = vunpack.c.l.b16 %v10873
        %v10890 = vunpack.c.l.b16 %v10874
        %v10891 = vunpack.c.l.b16 %v10875
        %v10892 = vunpack.c.l.b16 %v10876
        %v10893 = vpack.c.b16 %v10886, %v10885
        %v10894 = vpack.c.b16 %v10888, %v10887
        %v10895 = vpack.c.b16 %v10890, %v10889
        %v10896 = vpack.c.b16 %v10892, %v10891
        %v10902 = vsel %vm2712, %v10864, 0
        %v10905 = vsel %vm2712, %v10865, 0
        %v10908 = vsel %vm2712, %v10866, 0
        %v10911 = vsel %vm2712, %v10867, 0
        %10913 = vmatprep.subr.bf16.mxu0 0
        %10914 = vmatpush1.bf16.msra.mxu0 0
        %10915 = vmatprep.subr.bf16.mxu0 0
        %10916 = vmatpush1.bf16.msra.mxu0 0
        %10917 = vmatprep.subr.bf16.mxu0 0
        %10918 = vmatpush1.bf16.msra.mxu0 0
        %10919 = vmatprep.subr.bf16.mxu0 0
        %10920 = vmatpush1.bf16.msra.mxu0 0
        %10921 = vmatprep.subr.bf16.mxu0 0
        %10922 = vmatpush1.bf16.msra.mxu0 %v10896
        %10923 = vmatprep.subr.bf16.mxu0 0
        %10924 = vmatpush1.bf16.msra.mxu0 %v10895
        %10925 = vmatprep.subr.bf16.mxu0 0
        %10926 = vmatpush1.bf16.msra.mxu0 %v10894
        %10927 = vmatprep.subr.bf16.mxu0 0
        %10928 = vmatpush1.bf16.msra.mxu0 %v10893
        %10929 = vmatprep.subr.bf16.mxu0 0
        %10930 = vmatpush2.bf16.msra.mxu0 0
        %10931 = vmatprep.subr.bf16.mxu0 0
        %10932 = vmatpush2.bf16.msra.mxu0 0
        %10933 = vmatprep.subr.bf16.mxu0 0
        %10934 = vmatpush2.bf16.msra.mxu0 0
        %10935 = vmatprep.subr.bf16.mxu0 0
        %10936 = vmatpush2.bf16.msra.mxu0 0
        %10937 = vmatprep.subr.bf16.mxu0 0
        %10938 = vmatpush2.bf16.msra.mxu0 0
        %10939 = vmatprep.subr.bf16.mxu0 0
        %10940 = vmatpush2.bf16.msra.mxu0 0
        %10941 = vmatprep.subr.bf16.mxu0 0
        %10942 = vmatpush2.bf16.msra.mxu0 0
        %10943 = vmatprep.subr.bf16.mxu0 0
        %10944 = vmatpush2.bf16.msra.mxu0 0
        %10945 = vmatprep.mubr.bf16.mxu0 0
        %10946 = vmatmul.mubr.bf16.gmra.mxu0 %v10902
        %v10947 = vpop.f32.mrf.mxu0
        %v10948 = vadd.f32 0.0, %v10947
        %v10949 = vpop.f32.mrf.mxu0
        %v10950 = vpop.f32.mrf.mxu0
        %v10951 = vadd.f32 0.0, %v10950
        %v10952 = vpop.f32.mrf.mxu0
        %10953 = vmatprep.mubr.bf16.mxu0 0
        %10954 = vmatmul.mubr.bf16.gmra.mxu0 %v10905
        %v10955 = vpop.f32.mrf.mxu0
        %v10956 = vadd.f32 0.0, %v10955
        %v10957 = vpop.f32.mrf.mxu0
        %v10958 = vpop.f32.mrf.mxu0
        %v10959 = vadd.f32 0.0, %v10958
        %v10960 = vpop.f32.mrf.mxu0
        %10961 = vmatprep.mubr.bf16.mxu0 0
        %10962 = vmatmul.mubr.bf16.gmra.mxu0 %v10908
        %v10963 = vpop.f32.mrf.mxu0
        %v10964 = vadd.f32 0.0, %v10963
        %v10965 = vpop.f32.mrf.mxu0
        %v10966 = vpop.f32.mrf.mxu0
        %v10967 = vadd.f32 0.0, %v10966
        %v10968 = vpop.f32.mrf.mxu0
        %10969 = vmatprep.mubr.bf16.mxu0 0
        %10970 = vmatmul.mubr.bf16.gmra.mxu0 %v10911
        %v10971 = vpop.f32.mrf.mxu0
        %v10972 = vadd.f32 0.0, %v10971
        %v10973 = vpop.f32.mrf.mxu0
        %v10974 = vpop.f32.mrf.mxu0
        %v10975 = vpop.f32.mrf.mxu0
        %10976 = vdwg.mxu0
        %v10977 = vadd.f32 %v10850, %v10948
        %v10978 = vadd.f32 %v10851, %v10951
        %v10979 = vadd.f32 %v10852, %v10956
        %v10980 = vadd.f32 %v10853, %v10959
        %v10981 = vadd.f32 %v10854, %v10964
        %v10982 = vadd.f32 %v10855, %v10967
        %v10983 = vadd.f32 %v10856, %v10972
        %v10984 = vld [vmem:[#allocation4 + $0x8] sm:$0xff]
        %v10985 = vld [vmem:[#allocation4 + $0x10] sm:$0xff]
        %v10986 = vld [vmem:[#allocation4 + $0x18] sm:$0xff]
        %v10987 = vld [vmem:[#allocation4 + $0x20] sm:$0xff]
        %v10988 = vld [vmem:[#allocation4 + $0x28] sm:$0xff]
        %v10989 = vld [vmem:[#allocation4 + $0x30] sm:$0xff]
        %v10990 = vld [vmem:[#allocation4 + $0x38] sm:$0x3f]
        %v10991 = vpack.c.bf16 %v10985, %v10984
        %v10992 = vpack.c.bf16 %v10987, %v10986
        %v10993 = vpack.c.bf16 %v10989, %v10988
        %v10994 = vpack.c.bf16 %v10990, %v10990
        %s10995 = scalar_lea.vmem %s2, 768
        %v10996 = vld [vmem:[%s10995] sm:$0xf]
        %v10997 = vld [vmem:[%s10995 + $0x4] sm:$0xf]
        %v10998 = vld [vmem:[%s10995 + $0x8] sm:$0xf]
        %v10999 = vld [vmem:[%s10995 + $0xc] sm:$0xf]
        %v11000 = vld [vmem:[%s10995 + $0x10] sm:$0xf]
        %v11001 = vld [vmem:[%s10995 + $0x14] sm:$0xf]
        %v11002 = vld [vmem:[%s10995 + $0x18] sm:$0xf]
        %v11003 = vld [vmem:[%s10995 + $0x1c] sm:$0xf]
        %v11012 = vunpack.c.l.b16 %v10996
        %v11013 = vunpack.c.l.b16 %v10997
        %v11014 = vunpack.c.l.b16 %v10998
        %v11015 = vunpack.c.l.b16 %v10999
        %v11016 = vunpack.c.l.b16 %v11000
        %v11017 = vunpack.c.l.b16 %v11001
        %v11018 = vunpack.c.l.b16 %v11002
        %v11019 = vunpack.c.l.b16 %v11003
        %v11020 = vpack.c.b16 %v11013, %v11012
        %v11021 = vpack.c.b16 %v11015, %v11014
        %v11022 = vpack.c.b16 %v11017, %v11016
        %v11023 = vpack.c.b16 %v11019, %v11018
        %v11029 = vsel %vm2712, %v10991, 0
        %v11032 = vsel %vm2712, %v10992, 0
        %v11035 = vsel %vm2712, %v10993, 0
        %v11038 = vsel %vm2712, %v10994, 0
        %11040 = vmatprep.subr.bf16.mxu0 0
        %11041 = vmatpush1.bf16.msra.mxu0 0
        %11042 = vmatprep.subr.bf16.mxu0 0
        %11043 = vmatpush1.bf16.msra.mxu0 0
        %11044 = vmatprep.subr.bf16.mxu0 0
        %11045 = vmatpush1.bf16.msra.mxu0 0
        %11046 = vmatprep.subr.bf16.mxu0 0
        %11047 = vmatpush1.bf16.msra.mxu0 0
        %11048 = vmatprep.subr.bf16.mxu0 0
        %11049 = vmatpush1.bf16.msra.mxu0 %v11023
        %11050 = vmatprep.subr.bf16.mxu0 0
        %11051 = vmatpush1.bf16.msra.mxu0 %v11022
        %11052 = vmatprep.subr.bf16.mxu0 0
        %11053 = vmatpush1.bf16.msra.mxu0 %v11021
        %11054 = vmatprep.subr.bf16.mxu0 0
        %11055 = vmatpush1.bf16.msra.mxu0 %v11020
        %11056 = vmatprep.subr.bf16.mxu0 0
        %11057 = vmatpush2.bf16.msra.mxu0 0
        %11058 = vmatprep.subr.bf16.mxu0 0
        %11059 = vmatpush2.bf16.msra.mxu0 0
        %11060 = vmatprep.subr.bf16.mxu0 0
        %11061 = vmatpush2.bf16.msra.mxu0 0
        %11062 = vmatprep.subr.bf16.mxu0 0
        %11063 = vmatpush2.bf16.msra.mxu0 0
        %11064 = vmatprep.subr.bf16.mxu0 0
        %11065 = vmatpush2.bf16.msra.mxu0 0
        %11066 = vmatprep.subr.bf16.mxu0 0
        %11067 = vmatpush2.bf16.msra.mxu0 0
        %11068 = vmatprep.subr.bf16.mxu0 0
        %11069 = vmatpush2.bf16.msra.mxu0 0
        %11070 = vmatprep.subr.bf16.mxu0 0
        %11071 = vmatpush2.bf16.msra.mxu0 0
        %11072 = vmatprep.mubr.bf16.mxu0 0
        %11073 = vmatmul.mubr.bf16.gmra.mxu0 %v11029
        %v11074 = vpop.f32.mrf.mxu0
        %v11075 = vadd.f32 0.0, %v11074
        %v11076 = vpop.f32.mrf.mxu0
        %v11077 = vpop.f32.mrf.mxu0
        %v11078 = vadd.f32 0.0, %v11077
        %v11079 = vpop.f32.mrf.mxu0
        %11080 = vmatprep.mubr.bf16.mxu0 0
        %11081 = vmatmul.mubr.bf16.gmra.mxu0 %v11032
        %v11082 = vpop.f32.mrf.mxu0
        %v11083 = vadd.f32 0.0, %v11082
        %v11084 = vpop.f32.mrf.mxu0
        %v11085 = vpop.f32.mrf.mxu0
        %v11086 = vadd.f32 0.0, %v11085
        %v11087 = vpop.f32.mrf.mxu0
        %11088 = vmatprep.mubr.bf16.mxu0 0
        %11089 = vmatmul.mubr.bf16.gmra.mxu0 %v11035
        %v11090 = vpop.f32.mrf.mxu0
        %v11091 = vadd.f32 0.0, %v11090
        %v11092 = vpop.f32.mrf.mxu0
        %v11093 = vpop.f32.mrf.mxu0
        %v11094 = vadd.f32 0.0, %v11093
        %v11095 = vpop.f32.mrf.mxu0
        %11096 = vmatprep.mubr.bf16.mxu0 0
        %11097 = vmatmul.mubr.bf16.gmra.mxu0 %v11038
        %v11098 = vpop.f32.mrf.mxu0
        %v11099 = vadd.f32 0.0, %v11098
        %v11100 = vpop.f32.mrf.mxu0
        %v11101 = vpop.f32.mrf.mxu0
        %v11102 = vpop.f32.mrf.mxu0
        %11103 = vdwg.mxu0
        %v11104 = vadd.f32 %v10977, %v11075
        %v11105 = vadd.f32 %v10978, %v11078
        %v11106 = vadd.f32 %v10979, %v11083
        %v11107 = vadd.f32 %v10980, %v11086
        %v11108 = vadd.f32 %v10981, %v11091
        %v11109 = vadd.f32 %v10982, %v11094
        %v11110 = vadd.f32 %v10983, %v11099
        %v11111 = vld [vmem:[#allocation4 + $0x9] sm:$0xff]
        %v11112 = vld [vmem:[#allocation4 + $0x11] sm:$0xff]
        %v11113 = vld [vmem:[#allocation4 + $0x19] sm:$0xff]
        %v11114 = vld [vmem:[#allocation4 + $0x21] sm:$0xff]
        %v11115 = vld [vmem:[#allocation4 + $0x29] sm:$0xff]
        %v11116 = vld [vmem:[#allocation4 + $0x31] sm:$0xff]
        %v11117 = vld [vmem:[#allocation4 + $0x39] sm:$0x3f]
        %v11118 = vpack.c.bf16 %v11112, %v11111
        %v11119 = vpack.c.bf16 %v11114, %v11113
        %v11120 = vpack.c.bf16 %v11116, %v11115
        %v11121 = vpack.c.bf16 %v11117, %v11117
        %s11122 = scalar_lea.vmem %s2, 800
        %v11123 = vld [vmem:[%s11122] sm:$0xf]
        %v11124 = vld [vmem:[%s11122 + $0x4] sm:$0xf]
        %v11125 = vld [vmem:[%s11122 + $0x8] sm:$0xf]
        %v11126 = vld [vmem:[%s11122 + $0xc] sm:$0xf]
        %v11127 = vld [vmem:[%s11122 + $0x10] sm:$0xf]
        %v11128 = vld [vmem:[%s11122 + $0x14] sm:$0xf]
        %v11129 = vld [vmem:[%s11122 + $0x18] sm:$0xf]
        %v11130 = vld [vmem:[%s11122 + $0x1c] sm:$0xf]
        %v11139 = vunpack.c.l.b16 %v11123
        %v11140 = vunpack.c.l.b16 %v11124
        %v11141 = vunpack.c.l.b16 %v11125
        %v11142 = vunpack.c.l.b16 %v11126
        %v11143 = vunpack.c.l.b16 %v11127
        %v11144 = vunpack.c.l.b16 %v11128
        %v11145 = vunpack.c.l.b16 %v11129
        %v11146 = vunpack.c.l.b16 %v11130
        %v11147 = vpack.c.b16 %v11140, %v11139
        %v11148 = vpack.c.b16 %v11142, %v11141
        %v11149 = vpack.c.b16 %v11144, %v11143
        %v11150 = vpack.c.b16 %v11146, %v11145
        %v11156 = vsel %vm2712, %v11118, 0
        %v11159 = vsel %vm2712, %v11119, 0
        %v11162 = vsel %vm2712, %v11120, 0
        %v11165 = vsel %vm2712, %v11121, 0
        %11167 = vmatprep.subr.bf16.mxu0 0
        %11168 = vmatpush1.bf16.msra.mxu0 0
        %11169 = vmatprep.subr.bf16.mxu0 0
        %11170 = vmatpush1.bf16.msra.mxu0 0
        %11171 = vmatprep.subr.bf16.mxu0 0
        %11172 = vmatpush1.bf16.msra.mxu0 0
        %11173 = vmatprep.subr.bf16.mxu0 0
        %11174 = vmatpush1.bf16.msra.mxu0 0
        %11175 = vmatprep.subr.bf16.mxu0 0
        %11176 = vmatpush1.bf16.msra.mxu0 %v11150
        %11177 = vmatprep.subr.bf16.mxu0 0
        %11178 = vmatpush1.bf16.msra.mxu0 %v11149
        %11179 = vmatprep.subr.bf16.mxu0 0
        %11180 = vmatpush1.bf16.msra.mxu0 %v11148
        %11181 = vmatprep.subr.bf16.mxu0 0
        %11182 = vmatpush1.bf16.msra.mxu0 %v11147
        %11183 = vmatprep.subr.bf16.mxu0 0
        %11184 = vmatpush2.bf16.msra.mxu0 0
        %11185 = vmatprep.subr.bf16.mxu0 0
        %11186 = vmatpush2.bf16.msra.mxu0 0
        %11187 = vmatprep.subr.bf16.mxu0 0
        %11188 = vmatpush2.bf16.msra.mxu0 0
        %11189 = vmatprep.subr.bf16.mxu0 0
        %11190 = vmatpush2.bf16.msra.mxu0 0
        %11191 = vmatprep.subr.bf16.mxu0 0
        %11192 = vmatpush2.bf16.msra.mxu0 0
        %11193 = vmatprep.subr.bf16.mxu0 0
        %11194 = vmatpush2.bf16.msra.mxu0 0
        %11195 = vmatprep.subr.bf16.mxu0 0
        %11196 = vmatpush2.bf16.msra.mxu0 0
        %11197 = vmatprep.subr.bf16.mxu0 0
        %11198 = vmatpush2.bf16.msra.mxu0 0
        %11199 = vmatprep.mubr.bf16.mxu0 0
        %11200 = vmatmul.mubr.bf16.gmra.mxu0 %v11156
        %v11201 = vpop.f32.mrf.mxu0
        %v11202 = vadd.f32 0.0, %v11201
        %v11203 = vpop.f32.mrf.mxu0
        %v11204 = vpop.f32.mrf.mxu0
        %v11205 = vadd.f32 0.0, %v11204
        %v11206 = vpop.f32.mrf.mxu0
        %11207 = vmatprep.mubr.bf16.mxu0 0
        %11208 = vmatmul.mubr.bf16.gmra.mxu0 %v11159
        %v11209 = vpop.f32.mrf.mxu0
        %v11210 = vadd.f32 0.0, %v11209
        %v11211 = vpop.f32.mrf.mxu0
        %v11212 = vpop.f32.mrf.mxu0
        %v11213 = vadd.f32 0.0, %v11212
        %v11214 = vpop.f32.mrf.mxu0
        %11215 = vmatprep.mubr.bf16.mxu0 0
        %11216 = vmatmul.mubr.bf16.gmra.mxu0 %v11162
        %v11217 = vpop.f32.mrf.mxu0
        %v11218 = vadd.f32 0.0, %v11217
        %v11219 = vpop.f32.mrf.mxu0
        %v11220 = vpop.f32.mrf.mxu0
        %v11221 = vadd.f32 0.0, %v11220
        %v11222 = vpop.f32.mrf.mxu0
        %11223 = vmatprep.mubr.bf16.mxu0 0
        %11224 = vmatmul.mubr.bf16.gmra.mxu0 %v11165
        %v11225 = vpop.f32.mrf.mxu0
        %v11226 = vadd.f32 0.0, %v11225
        %v11227 = vpop.f32.mrf.mxu0
        %v11228 = vpop.f32.mrf.mxu0
        %v11229 = vpop.f32.mrf.mxu0
        %11230 = vdwg.mxu0
        %v11231 = vadd.f32 %v11104, %v11202
        %v11232 = vadd.f32 %v11105, %v11205
        %v11233 = vadd.f32 %v11106, %v11210
        %v11234 = vadd.f32 %v11107, %v11213
        %v11235 = vadd.f32 %v11108, %v11218
        %v11236 = vadd.f32 %v11109, %v11221
        %v11237 = vadd.f32 %v11110, %v11226
        %v11238 = vld [vmem:[#allocation4 + $0xa] sm:$0xff]
        %v11239 = vld [vmem:[#allocation4 + $0x12] sm:$0xff]
        %v11240 = vld [vmem:[#allocation4 + $0x1a] sm:$0xff]
        %v11241 = vld [vmem:[#allocation4 + $0x22] sm:$0xff]
        %v11242 = vld [vmem:[#allocation4 + $0x2a] sm:$0xff]
        %v11243 = vld [vmem:[#allocation4 + $0x32] sm:$0xff]
        %v11244 = vld [vmem:[#allocation4 + $0x3a] sm:$0x3f]
        %v11245 = vpack.c.bf16 %v11239, %v11238
        %v11246 = vpack.c.bf16 %v11241, %v11240
        %v11247 = vpack.c.bf16 %v11243, %v11242
        %v11248 = vpack.c.bf16 %v11244, %v11244
        %s11249 = scalar_lea.vmem %s2, 832
        %v11250 = vld [vmem:[%s11249] sm:$0xf]
        %v11251 = vld [vmem:[%s11249 + $0x4] sm:$0xf]
        %v11252 = vld [vmem:[%s11249 + $0x8] sm:$0xf]
        %v11253 = vld [vmem:[%s11249 + $0xc] sm:$0xf]
        %v11254 = vld [vmem:[%s11249 + $0x10] sm:$0xf]
        %v11255 = vld [vmem:[%s11249 + $0x14] sm:$0xf]
        %v11256 = vld [vmem:[%s11249 + $0x18] sm:$0xf]
        %v11257 = vld [vmem:[%s11249 + $0x1c] sm:$0xf]
        %v11266 = vunpack.c.l.b16 %v11250
        %v11267 = vunpack.c.l.b16 %v11251
        %v11268 = vunpack.c.l.b16 %v11252
        %v11269 = vunpack.c.l.b16 %v11253
        %v11270 = vunpack.c.l.b16 %v11254
        %v11271 = vunpack.c.l.b16 %v11255
        %v11272 = vunpack.c.l.b16 %v11256
        %v11273 = vunpack.c.l.b16 %v11257
        %v11274 = vpack.c.b16 %v11267, %v11266
        %v11275 = vpack.c.b16 %v11269, %v11268
        %v11276 = vpack.c.b16 %v11271, %v11270
        %v11277 = vpack.c.b16 %v11273, %v11272
        %v11283 = vsel %vm2712, %v11245, 0
        %v11286 = vsel %vm2712, %v11246, 0
        %v11289 = vsel %vm2712, %v11247, 0
        %v11292 = vsel %vm2712, %v11248, 0
        %11294 = vmatprep.subr.bf16.mxu0 0
        %11295 = vmatpush1.bf16.msra.mxu0 0
        %11296 = vmatprep.subr.bf16.mxu0 0
        %11297 = vmatpush1.bf16.msra.mxu0 0
        %11298 = vmatprep.subr.bf16.mxu0 0
        %11299 = vmatpush1.bf16.msra.mxu0 0
        %11300 = vmatprep.subr.bf16.mxu0 0
        %11301 = vmatpush1.bf16.msra.mxu0 0
        %11302 = vmatprep.subr.bf16.mxu0 0
        %11303 = vmatpush1.bf16.msra.mxu0 %v11277
        %11304 = vmatprep.subr.bf16.mxu0 0
        %11305 = vmatpush1.bf16.msra.mxu0 %v11276
        %11306 = vmatprep.subr.bf16.mxu0 0
        %11307 = vmatpush1.bf16.msra.mxu0 %v11275
        %11308 = vmatprep.subr.bf16.mxu0 0
        %11309 = vmatpush1.bf16.msra.mxu0 %v11274
        %11310 = vmatprep.subr.bf16.mxu0 0
        %11311 = vmatpush2.bf16.msra.mxu0 0
        %11312 = vmatprep.subr.bf16.mxu0 0
        %11313 = vmatpush2.bf16.msra.mxu0 0
        %11314 = vmatprep.subr.bf16.mxu0 0
        %11315 = vmatpush2.bf16.msra.mxu0 0
        %11316 = vmatprep.subr.bf16.mxu0 0
        %11317 = vmatpush2.bf16.msra.mxu0 0
        %11318 = vmatprep.subr.bf16.mxu0 0
        %11319 = vmatpush2.bf16.msra.mxu0 0
        %11320 = vmatprep.subr.bf16.mxu0 0
        %11321 = vmatpush2.bf16.msra.mxu0 0
        %11322 = vmatprep.subr.bf16.mxu0 0
        %11323 = vmatpush2.bf16.msra.mxu0 0
        %11324 = vmatprep.subr.bf16.mxu0 0
        %11325 = vmatpush2.bf16.msra.mxu0 0
        %11326 = vmatprep.mubr.bf16.mxu0 0
        %11327 = vmatmul.mubr.bf16.gmra.mxu0 %v11283
        %v11328 = vpop.f32.mrf.mxu0
        %v11329 = vadd.f32 0.0, %v11328
        %v11330 = vpop.f32.mrf.mxu0
        %v11331 = vpop.f32.mrf.mxu0
        %v11332 = vadd.f32 0.0, %v11331
        %v11333 = vpop.f32.mrf.mxu0
        %11334 = vmatprep.mubr.bf16.mxu0 0
        %11335 = vmatmul.mubr.bf16.gmra.mxu0 %v11286
        %v11336 = vpop.f32.mrf.mxu0
        %v11337 = vadd.f32 0.0, %v11336
        %v11338 = vpop.f32.mrf.mxu0
        %v11339 = vpop.f32.mrf.mxu0
        %v11340 = vadd.f32 0.0, %v11339
        %v11341 = vpop.f32.mrf.mxu0
        %11342 = vmatprep.mubr.bf16.mxu0 0
        %11343 = vmatmul.mubr.bf16.gmra.mxu0 %v11289
        %v11344 = vpop.f32.mrf.mxu0
        %v11345 = vadd.f32 0.0, %v11344
        %v11346 = vpop.f32.mrf.mxu0
        %v11347 = vpop.f32.mrf.mxu0
        %v11348 = vadd.f32 0.0, %v11347
        %v11349 = vpop.f32.mrf.mxu0
        %11350 = vmatprep.mubr.bf16.mxu0 0
        %11351 = vmatmul.mubr.bf16.gmra.mxu0 %v11292
        %v11352 = vpop.f32.mrf.mxu0
        %v11353 = vadd.f32 0.0, %v11352
        %v11354 = vpop.f32.mrf.mxu0
        %v11355 = vpop.f32.mrf.mxu0
        %v11356 = vpop.f32.mrf.mxu0
        %11357 = vdwg.mxu0
        %v11358 = vadd.f32 %v11231, %v11329
        %v11359 = vadd.f32 %v11232, %v11332
        %v11360 = vadd.f32 %v11233, %v11337
        %v11361 = vadd.f32 %v11234, %v11340
        %v11362 = vadd.f32 %v11235, %v11345
        %v11363 = vadd.f32 %v11236, %v11348
        %v11364 = vadd.f32 %v11237, %v11353
        %v11366 = vlaneseq
        %v11367 = vshrl.u32 %v11366, 7
        %v11368 = vsub.s32 0, %v11367
        %v11369 = vrot.slane %v10235, %v11368
        %v11371 = vadd.f32 %v11358, %v11369
        %v11372 = vadd.f32 %v11359, %v11369
        %v11373 = vadd.f32 %v11360, %v11369
        %v11374 = vadd.f32 %v11361, %v11369
        %v11375 = vadd.f32 %v11362, %v11369
        %v11376 = vadd.f32 %v11363, %v11369
        %v11377 = vadd.f32 %v11364, %v11369
        %v11378 = vmax.f32 %v11371, 0.0
        %v11379 = vmax.f32 %v11372, 0.0
        %v11380 = vmax.f32 %v11373, 0.0
        %v11381 = vmax.f32 %v11374, 0.0
        %v11382 = vmax.f32 %v11375, 0.0
        %v11383 = vmax.f32 %v11376, 0.0
        %v11384 = vmax.f32 %v11377, 0.0
        %v11392 = vrot.slane %v11378, 1
        %v11393 = vrot.slane %v11379, 1
        %v11394 = vsel %vm1824, %v11392, %v11393
        %v11395 = vrot.slane %v11380, 1
        %v11396 = vrot.slane %v11381, 1
        %v11397 = vsel %vm1824, %v11395, %v11396
        %v11398 = vrot.slane %v11382, 1
        %v11399 = vrot.slane %v11383, 1
        %v11400 = vsel %vm1824, %v11398, %v11399
        %v11401 = vrot.slane %v11384, 1
        %v11406 = vmax.f32 %v11378, %v11394
        %v11407 = vmax.f32 %v11380, %v11397
        %v11408 = vmax.f32 %v11382, %v11400
        %v11409 = vmax.f32 %v11384, %v11401
        %v11410 = vsel %vm1824, %v11393, %v11395
        %v11411 = vsel %vm1824, %v11396, %v11398
        %v11412 = vsel %vm1824, %v11399, %v11401
        %v11416 = vmax.f32 %v11379, %v11410
        %v11417 = vmax.f32 %v11381, %v11411
        %v11418 = vmax.f32 %v11383, %v11412
        %vm11426 = vcmask 1043456
        %v11427 = vrot.slane %v11406, 4
        %v11428 = vrot.slane %v11416, 4
        %v11429 = vsel %vm11426, %v11427, %v11428
        %v11430 = vrot.slane %v11407, 4
        %v11431 = vrot.slane %v11417, 4
        %v11432 = vsel %vm11426, %v11430, %v11431
        %v11433 = vrot.slane %v11408, 4
        %v11434 = vrot.slane %v11418, 4
        %v11435 = vsel %vm11426, %v11433, %v11434
        %v11436 = vrot.slane %v11409, 4
        %v11441 = vmax.f32 %v11406, %v11429
        %v11442 = vmax.f32 %v11407, %v11432
        %v11443 = vmax.f32 %v11408, %v11435
        %v11444 = vmax.f32 %v11409, %v11436
        %v11446 = vrot.slane %v11442, 7
        %v11449 = vrot.slane %v11443, 6
        %v11452 = vrot.slane %v11444, 5
        %v11454 = vsel %vm7685, %v11441, %v11446
        %v11455 = vsel %vm7686, %v11454, %v11449
        %vm11456 = vcmask 1042432
        %v11457 = vsel %vm11456, %v11455, %v11452
        %vm11458 = vcmask 519168
        %11459 = vst.msk [vmem:[%s355] sm:$0xf] %vm11458, %v11457
        %s11460 = sand.u32 %s247, 1
        %s11461 = scalar_lea.sflag [#allocation6], %s11460
        %s11462 = sand.u32 %s247, 1
        %s11463 = smul.addr %s11462, 4
        %s11464 = scalar_lea.vmem [#allocation5], %s11463
        // Predicated region
        $region61: #{encoder_c4_pallas.1} parent=59 // pred_check
          %p11465 = pneg %p257
        $region62: #{encoder_c4_pallas.1} parent=59 // pred_check_branch
          %11467 = sbr.rel (%p11465) target = $region64
        $region63: #{encoder_c4_pallas.1} parent=59 // pred_region
          %s11469 = ssub.s32 64, 64
          %11470 = vsyncadd %s11461, %s11469
          %s11471 = smul.addr %s24, 64
          %s11472 = scalar_lea.hbm %s10, %s11471
          %s11474 = sshll.u32 %s11464, 4
          %s11475 = int_to_ptr.vmem [resolvable:$true] %s11474
          %11477 = dma.vmem_to_hbm [thread:$0]  %s11475, 64, %s11472, %s11461
        $region64: #{encoder_c4_pallas.1} parent=59 // pred_fallthru
          _
      $region60: #{encoder_c4_pallas.1} parent=5 // pred_fallthru
        _
      %p11478 = scmp.le.s32.totalorder 2, %s19
      // Predicated region
      $region65: #{encoder_c4_pallas.1} parent=5 // pred_check
        %p11479 = pneg %p11478
      $region66: #{encoder_c4_pallas.1} parent=5 // pred_check_branch
        %11481 = sbr.rel (%p11479) target = $region68
      $region67: #{encoder_c4_pallas.1} parent=5 // pred_region
        %s11482 = ssub.s32 %s19, 2
        // Predicated region
        $region69: #{encoder_c4_pallas.1} parent=67 // pred_check
          %p11483 = pneg %p263
        $region70: #{encoder_c4_pallas.1} parent=67 // pred_check_branch
          %11485 = sbr.rel (%p11483) target = $region72
        $region71: #{encoder_c4_pallas.1} parent=67 // pred_region
          %s11486 = sand.u32 %s248, 1
          %s11487 = scalar_lea.sflag [#allocation6], %s11486
          %s11488 = sand.u32 %s248, 1
          %s11489 = smul.addr %s11488, 4
          %s11490 = scalar_lea.vmem [#allocation5], %s11489
          %11491 = dma.done %s11487, 64
        $region72: #{encoder_c4_pallas.1} parent=67 // pred_fallthru
          _
      $region68: #{encoder_c4_pallas.1} parent=5 // pred_fallthru
        _
    $region6: #{encoder_c4_pallas.1} parent=1 // loop_footer
      %s23 = sadd.s32 1, %s19
    $region7: #{encoder_c4_pallas.1} parent=1 // loop_footer_branch
      %18 = sbr.rel target = $region3
    $region8: #{encoder_c4_pallas.1} parent=1 // loop_exit
      _
    %11492 = vsyncpa [#allocation6], 1
    %s11493 = scalar_lea.sflag [#allocation6], 1
    %11494 = vsyncpa %s11493, 1

</llo_original>
